<compile_context>
chip_gen: v7x
topology: tpu7x:2x2x1
jax: 0.10.0
libtpu: 0.0.40
codegen_flags: <defaults>
</compile_context>

<pallas_src>
import jax
import jax.numpy as jnp
import numpy as np
from jax.experimental import pallas as pl
from jax.experimental.pallas import tpu as pltpu

VMEM = pl.BlockSpec(memory_space=pltpu.MemorySpace.VMEM)


# -----------------------------------------------------------------------------
# Fused forward kernel
# -----------------------------------------------------------------------------
def _fused_kernel(
    # layout extractor (3-layer LSTM)
    xcol_ref,        # (T*Bp, 1)   time-major column: row t*Bp+b = x_layout[b, t]
    wih0_ref,        # (1, 4H)     W_ih_l0^T
    wih_ref,         # (2, H, 4H)  W_ih_l1^T / W_ih_l2^T
    whh_ref,         # (3, H, 4H)  W_hh^T per layer
    blay_ref,        # (3, 4H)     b_ih + b_hh per layer
    # lexical extractor
    xlex_ref,        # (Bp, Dlex)
    wlex_ref,        # (Dlex, C*Hl)  channel-replicated Linear weight
    blex_ref,        # (1, C*Hl)     channel-replicated Linear bias
    w1lex_ref,       # (1, C*Hl)     Linear(1,C) weight, repeated H-wise
    b1lex_ref,       # (1, C*Hl)
    w2lex_ref,       # (C*Hl, C*Hl)  kron(W2^T, I_H)
    b2lex_ref,       # (1, C*Hl)
    # syntactic extractor (same layout)
    xsyn_ref, wsyn_ref, bsyn_ref, w1syn_ref, b1syn_ref, w2syn_ref, b2syn_ref,
    # classifier (bias-free), split into per-extractor row blocks, 128-lane padded
    wclay_ref,       # (H,     NC_pad)
    wclex_ref,       # (C*Hl,  NC_pad) row-tiled C times -> channel sum fused in
    wcsyn_ref,       # (C*Hs,  NC_pad)
    # output
    out_ref,         # (Bp, NC_pad) logits (lane-dense)
    # scratch
    gi_ref,          # (T*Bp, 4H)  hoisted LSTM input projections
    hs_ref,          # (T*Bp, H)   per-layer hidden-state stash
):
    Bp = xlex_ref.shape[0]
    TB = xcol_ref.shape[0]
    T = TB // Bp
    H = wih0_ref.shape[-1] // 4

    # ------------------ LayoutExtractor: 3-layer LSTM -> relu -> sum over time -----
    # Layer-0 input projection + combined bias for ALL timesteps: one broadcast FMA,
    # hoisted off the serial recurrence.
    gi_ref[...] = xcol_ref[...] * wih0_ref[...] + blay_ref[0:1, :]          # (T*Bp, 4H)

    acc = None
    for layer in range(3):
        whh = whh_ref[layer]                                                # (H, 4H), hoisted
        last = layer == 2
        h = jnp.zeros((Bp, H), jnp.float32)
        c = jnp.zeros((Bp, H), jnp.float32)
        if last:
            acc = jnp.zeros((Bp, H), jnp.float32)
        for t in range(T):
            # Bp is a multiple of 8 -> this slice is sublane-tile aligned (unmasked).
            gates = gi_ref[t * Bp:(t + 1) * Bp, :] + jnp.dot(
                h, whh, preferred_element_type=jnp.float32)                 # (Bp, 4H)
            sig = jax.nn.sigmoid(gates)      # packed i/f/o gates: one EUP pass
            tg = jnp.tanh(gates)             # packed g gate:      one EUP pass
            # PyTorch gate order: i, f, g, o
            c = sig[:, H:2 * H] * c + sig[:, 0:H] * tg[:, 2 * H:3 * H]
            h = sig[:, 3 * H:4 * H] * jnp.tanh(c)
            if last:
                acc = acc + jnp.maximum(h, 0.0)       # relu + time-sum fused in
            else:
                hs_ref[t * Bp:(t + 1) * Bp, :] = h    # aligned stash for next layer
        if not last:
            # Next layer's input projection for ALL timesteps: one batched matmul.
            gi_ref[...] = (
                jnp.dot(hs_ref[...], wih_ref[layer], preferred_element_type=jnp.float32)
                + blay_ref[layer + 1:layer + 2, :])

    # Classifier contribution of the layout features, straight into the logits.
    logits = jnp.dot(acc, wclay_ref[...], preferred_element_type=jnp.float32)

    # ------------------ Lexical / Syntactic extractor (vectorized channel MLP) -----
    def channel_mlp_logits(x_ref, wrep_ref, brep_ref, w1e_ref, b1e_ref,
                           w2k_ref, b2e_ref, wcexp_ref):
        # relu(Linear(Din, H)) computed directly in channel-replicated form -> (Bp, C*H)
        hrep = jnp.maximum(
            jnp.dot(x_ref[...], wrep_ref[...], preferred_element_type=jnp.float32)
            + brep_ref[...], 0.0)
        # per-element Linear(1, C) + ReLU: one broadcast FMA, no scalar splats
        a = jnp.maximum(hrep * w1e_ref[...] + b1e_ref[...], 0.0)
        # per-element Linear(C, C): one MXU matmul against kron(W2^T, I_H)
        z = jnp.dot(a, w2k_ref[...], preferred_element_type=jnp.float32) + b2e_ref[...]
        # relu, then channel-sum + classifier fused into one matmul against the
        # C-times row-tiled classifier block (no lane-slice loop).
        return jnp.dot(jnp.maximum(z, 0.0), wcexp_ref[...],
                       preferred_element_type=jnp.float32)

    logits = logits + channel_mlp_logits(xlex_ref, wlex_ref, blex_ref, w1lex_ref,
                                         b1lex_ref, w2lex_ref, b2lex_ref, wclex_ref)
    logits = logits + channel_mlp_logits(xsyn_ref, wsyn_ref, bsyn_ref, w1syn_ref,
                                         b1syn_ref, w2syn_ref, b2syn_ref, wcsyn_ref)

    # Lane-dense, unmasked store of the padded logits.
    out_ref[...] = logits


# -----------------------------------------------------------------------------
# Parameter re-layout (done once) + wrapper
# -----------------------------------------------------------------------------
def pack_params(params):
    """One-time re-layout of the natural parameters into the fused kernel's format."""
    def expand(p):
        H = p["w"].shape[1]
        C = p["w1"].shape[1]
        return {
            "wrep": jnp.tile(p["w"], (1, C)),                                   # (Din, C*H)
            "brep": jnp.tile(p["b"], (1, C)),                                   # (1,   C*H)
            "w1e":  jnp.repeat(p["w1"][0], H)[None, :],                         # (1,   C*H)
            "b1e":  jnp.repeat(p["b1"][0], H)[None, :],                         # (1,   C*H)
            "w2k":  jnp.kron(p["w2"].T, jnp.eye(H, dtype=jnp.float32)),         # (C*H, C*H)
            "b2e":  jnp.repeat(p["b2"][0], H)[None, :],                         # (1,   C*H)
            "hidden": H,
            "channel": C,
        }

    lex = expand(params["lexical"])
    syn = expand(params["syntactic"])

    H_lay = params["layout"]["whh"].shape[1]
    H_lex, C_lex = lex["hidden"], lex["channel"]
    H_syn, C_syn = syn["hidden"], syn["channel"]

    F, NC = params["wc"].shape
    NCp = ((NC + 127) // 128) * 128          # lane-dense (unmasked) output store
    wc_pad = jnp.zeros((F, NCp), jnp.float32).at[:, :NC].set(params["wc"])
    # Split classifier into per-extractor row blocks; row-tile the lexical/syntactic
    # blocks C times so the channel sum is absorbed into the classifier matmul.
    wc_lay = wc_pad[0:H_lay]                                                    # (H,    NCp)
    wc_lex = jnp.tile(wc_pad[H_lay:H_lay + H_lex], (C_lex, 1))                  # (C*Hl, NCp)
    wc_syn = jnp.tile(wc_pad[H_lay + H_lex:H_lay + H_lex + H_syn], (C_syn, 1))  # (C*Hs, NCp)

    return {"layout": params["layout"],
            "lexical": lex,
            "syntactic": syn,
            "wc_lay": wc_lay, "wc_lex": wc_lex, "wc_syn": wc_syn,
            "n_classes": NC}


def partial_preference_forward(x_layout, x_lexical, x_syntactic, packed):
    B, T = x_layout.shape
    lay = packed["layout"]
    lx = packed["lexical"]
    sy = packed["syntactic"]
    H_lay = lay["whh"].shape[1]
    NCp = packed["wc_lay"].shape[1]

    # Pad batch to a sublane multiple so all in-kernel slices/stores are tile aligned.
    Bp = max(8, ((B + 7) // 8) * 8)

    def pad_b(x):
        if Bp == B:
            return x.astype(jnp.float32)
        return jnp.zeros((Bp, x.shape[1]), jnp.float32).at[:B].set(x)

    x_lay_p = pad_b(x_layout)
    x_lex_p = pad_b(x_lexical)
    x_syn_p = pad_b(x_syntactic)

    # time-major column so the whole layer-0 LSTM input projection is one broadcast
    x_col = x_lay_p.T.reshape(T * Bp, 1)

    logits_pad = pl.pallas_call(
        _fused_kernel,
        out_shape=jax.ShapeDtypeStruct((Bp, NCp), jnp.float32),
        in_specs=[VMEM] * 22,
        out_specs=VMEM,
        scratch_shapes=[
            pltpu.VMEM((T * Bp, 4 * H_lay), jnp.float32),   # hoisted LSTM input projections
            pltpu.VMEM((T * Bp, H_lay), jnp.float32),       # per-layer hidden-state stash
        ],
        # TODO(synk): for large B, add grid=(pl.cdiv(B, tile_b),) with
        # dimension_semantics=("parallel",) so work shards across v7x's 2 TensorCores;
        # grid-less is optimal at tiny B.
    )(x_col, lay["wih0"], lay["wih"], lay["whh"], lay["b"],
      x_lex_p, lx["wrep"], lx["brep"], lx["w1e"], lx["b1e"], lx["w2k"], lx["b2e"],
      x_syn_p, sy["wrep"], sy["brep"], sy["w1e"], sy["b1e"], sy["w2k"], sy["b2e"],
      packed["wc_lay"], packed["wc_lex"], packed["wc_syn"])

    # TODO(synk): torch.dropout(0.5, self.training) random mask not reproduced;
    # inference (identity) is assumed here.
    return logits_pad[:B, :packed["n_classes"]]


# -----------------------------------------------------------------------------
# Pure-JAX reference (for correctness checking)
# -----------------------------------------------------------------------------
def _layout_ref(x, p):
    B, T = x.shape
    H = p["whh"].shape[1]
    seq = [x[:, t:t + 1] for t in range(T)]
    for layer in range(3):
        h = jnp.zeros((B, H)); c = jnp.zeros((B, H))
        outs = []
        for t in range(T):
            gi = seq[t] * p["wih0"] if layer == 0 else seq[t] @ p["wih"][layer - 1]
            gates = gi + h @ p["whh"][layer] + p["b"][layer]
            i = jax.nn.sigmoid(gates[:, :H])
            f = jax.nn.sigmoid(gates[:, H:2 * H])
            g = jnp.tanh(gates[:, 2 * H:3 * H])
            o = jax.nn.sigmoid(gates[:, 3 * H:])
            c = f * c + i * g
            h = o * jnp.tanh(c)
            outs.append(h)
        seq = outs
    return sum(jnp.maximum(o, 0.0) for o in seq)


def _lex_syn_ref(x, p):
    h = jnp.maximum(x @ p["w"] + p["b"], 0.0)                             # (B, H)
    z = jnp.maximum(h[:, :, None] * p["w1"][0][None, None, :] + p["b1"][0], 0.0)
    z2 = jnp.einsum("bhc,oc->bho", z, p["w2"]) + p["b2"][0]
    return jnp.maximum(z2, 0.0).sum(-1)


def _ref_forward(x_lay, x_lex, x_syn, params):
    style = jnp.concatenate(
        [_layout_ref(x_lay, params["layout"]),
         _lex_syn_ref(x_lex, params["lexical"]),
         _lex_syn_ref(x_syn, params["syntactic"])], axis=1)
    return style @ params["wc"]


# -----------------------------------------------------------------------------
# Deterministic parameter init (shapes follow the PyTorch module __init__)
# -----------------------------------------------------------------------------
def init_params(key, *, lay_H, lex_dim, lex_H, lex_C, syn_dim, syn_H, syn_C,
                feature_dim, n_classes):
    ks = iter(jax.random.split(key, 32))

    def u(k, shape, fan_in):
        s = 1.0 / np.sqrt(max(fan_in, 1))
        return jax.random.uniform(k, shape, jnp.float32, -s, s)

    layout = {
        "wih0": u(next(ks), (1, 4 * lay_H), lay_H),
        "wih":  u(next(ks), (2, lay_H, 4 * lay_H), lay_H),
        "whh":  u(next(ks), (3, lay_H, 4 * lay_H), lay_H),
        "b":    u(next(ks), (3, 4 * lay_H), lay_H),
    }

    def lex_syn(dim, H, C):
        return {
            "w":  u(next(ks), (dim, H), dim),
            "b":  u(next(ks), (1, H), dim),
            "w1": u(next(ks), (1, C), 1),
            "b1": u(next(ks), (1, C), 1),
            "w2": u(next(ks), (C, C), C),
            "b2": u(next(ks), (1, C), C),
        }

    return {
        "layout": layout,
        "lexical": lex_syn(lex_dim, lex_H, lex_C),
        "syntactic": lex_syn(syn_dim, syn_H, syn_C),
        "wc": u(next(ks), (feature_dim, n_classes), feature_dim),
    }


if __name__ == "__main__":
    B = 2
    layout_dim, lay_H = 16, 32          # sp.layout_vector_dim, sp.lay_hidden_dim
    lex_dim, lex_H, lex_C = 16, 32, 8   # sp.lexical_*
    syn_dim, syn_H, syn_C = 16, 32, 8   # sp.syntactic_*
    n_classes = 10
    feature_dim = lay_H + lex_H + syn_H

    key = jax.random.PRNGKey(0)
    k_p, k1, k2, k3 = jax.random.split(key, 4)
    params = init_params(k_p, lay_H=lay_H, lex_dim=lex_dim, lex_H=lex_H, lex_C=lex_C,
                         syn_dim=syn_dim, syn_H=syn_H, syn_C=syn_C,
                         feature_dim=feature_dim, n_classes=n_classes)
    packed = pack_params(params)

    x_layout = jax.random.normal(k1, (B, layout_dim), jnp.float32)
    x_lexical = jax.random.normal(k2, (B, lex_dim), jnp.float32)
    x_syntactic = jax.random.normal(k3, (B, syn_dim), jnp.float32)

    out = partial_preference_forward(x_layout, x_lexical, x_syntactic, packed)
    out = jax.block_until_ready(out)

    ref = _ref_forward(x_layout, x_lexical, x_syntactic, params)
    np.testing.assert_allclose(np.asarray(out), np.asarray(ref), rtol=2e-2, atol=2e-2)

    print("KERNEL_OK")
</pallas_src>

<mosaic_0001>
module attributes {stable_mosaic.version = 11 : i64} {
  func.func @_fused_kernel(%arg0: memref<128x1xf32, #tpu.memory_space<vmem>>, %arg1: memref<1x128xf32, #tpu.memory_space<vmem>>, %arg2: memref<2x32x128xf32, #tpu.memory_space<vmem>>, %arg3: memref<3x32x128xf32, #tpu.memory_space<vmem>>, %arg4: memref<3x128xf32, #tpu.memory_space<vmem>>, %arg5: memref<8x16xf32, #tpu.memory_space<vmem>>, %arg6: memref<16x256xf32, #tpu.memory_space<vmem>>, %arg7: memref<1x256xf32, #tpu.memory_space<vmem>>, %arg8: memref<1x256xf32, #tpu.memory_space<vmem>>, %arg9: memref<1x256xf32, #tpu.memory_space<vmem>>, %arg10: memref<256x256xf32, #tpu.memory_space<vmem>>, %arg11: memref<1x256xf32, #tpu.memory_space<vmem>>, %arg12: memref<8x16xf32, #tpu.memory_space<vmem>>, %arg13: memref<16x256xf32, #tpu.memory_space<vmem>>, %arg14: memref<1x256xf32, #tpu.memory_space<vmem>>, %arg15: memref<1x256xf32, #tpu.memory_space<vmem>>, %arg16: memref<1x256xf32, #tpu.memory_space<vmem>>, %arg17: memref<256x256xf32, #tpu.memory_space<vmem>>, %arg18: memref<1x256xf32, #tpu.memory_space<vmem>>, %arg19: memref<32x128xf32, #tpu.memory_space<vmem>>, %arg20: memref<256x128xf32, #tpu.memory_space<vmem>>, %arg21: memref<256x128xf32, #tpu.memory_space<vmem>>, %arg22: memref<8x128xf32, #tpu.memory_space<vmem>>, %arg23: memref<128x128xf32, #tpu.memory_space<vmem>>, %arg24: memref<128x32xf32, #tpu.memory_space<vmem>>) attributes {dimension_semantics = [], scalar_prefetch = 0 : i64, scratch_operands = 2 : i64, tpu.core_type = #tpu.core_type<tc>} {
    %c0 = arith.constant 0 : index
    %c0_0 = arith.constant 0 : index
    %0 = vector.load %arg0[%c0, %c0_0] : memref<128x1xf32, #tpu.memory_space<vmem>>, vector<128x1xf32>
    %c0_1 = arith.constant 0 : index
    %c0_2 = arith.constant 0 : index
    %1 = vector.load %arg1[%c0_1, %c0_2] : memref<1x128xf32, #tpu.memory_space<vmem>>, vector<1x128xf32>
    %2 = vector.broadcast %0 : vector<128x1xf32> to vector<128x128xf32>
    %3 = vector.broadcast %1 : vector<1x128xf32> to vector<128x128xf32>
    %4 = arith.mulf %2, %3 : vector<128x128xf32>
    %c0_3 = arith.constant 0 : index
    %c0_4 = arith.constant 0 : index
    %5 = vector.load %arg4[%c0_3, %c0_4] : memref<3x128xf32, #tpu.memory_space<vmem>>, vector<1x128xf32>
    %6 = vector.broadcast %5 : vector<1x128xf32> to vector<128x128xf32>
    %7 = arith.addf %4, %6 : vector<128x128xf32>
    %c0_5 = arith.constant 0 : index
    %c0_6 = arith.constant 0 : index
    %8 = vector.load %arg23[%c0_5, %c0_6] : memref<128x128xf32, #tpu.memory_space<vmem>>, vector<128x128xf32>
    tpu.vector_store %arg23[%c0_5, %c0_6], %7 {strides = array<i32>} : memref<128x128xf32, #tpu.memory_space<vmem>>, vector<128x128xf32>,
    %c0_7 = arith.constant 0 : index
    %c0_8 = arith.constant 0 : index
    %c0_9 = arith.constant 0 : index
    %9 = vector.load %arg3[%c0_7, %c0_8, %c0_9] : memref<3x32x128xf32, #tpu.memory_space<vmem>>, vector<1x32x128xf32>
    %10 = vector.shape_cast %9 : vector<1x32x128xf32> to vector<32x128xf32>
    %cst = arith.constant 0.000000e+00 : f32
    %11 = vector.broadcast %cst : f32 to vector<8x32xf32>
    %cst_10 = arith.constant 0.000000e+00 : f32
    %12 = vector.broadcast %cst_10 : f32 to vector<8x32xf32>
    %c0_11 = arith.constant 0 : index
    %c0_12 = arith.constant 0 : index
    %13 = vector.load %arg23[%c0_11, %c0_12] : memref<128x128xf32, #tpu.memory_space<vmem>>, vector<8x128xf32>
    %cst_13 = arith.constant dense<0.000000e+00> : vector<8x128xf32>
    %14 = tpu.matmul %11, %10, %cst_13 {dimension_numbers = #tpu.dot_dimension_numbers<[1], [0], [0], [1], [0, 0, 1, 1], [], []>} : vector<8x32xf32>, vector<32x128xf32>, vector<8x128xf32> -> vector<8x128xf32>
    %15 = arith.addf %13, %14 : vector<8x128xf32>
    %16 = arith.negf %15 : vector<8x128xf32>
    %17 = math.exp %16 : vector<8x128xf32>
    %cst_14 = arith.constant 1.000000e+00 : f32
    %18 = vector.broadcast %cst_14 : f32 to vector<8x128xf32>
    %19 = arith.addf %18, %17 : vector<8x128xf32>
    %20 = arith.divf %18, %19 : vector<8x128xf32>
    %21 = math.tanh %15 : vector<8x128xf32>
    %22 = vector.extract_strided_slice %20 {offsets = [0, 32], sizes = [8, 32], strides = [1, 1]} : vector<8x128xf32> to vector<8x32xf32>
    %23 = arith.mulf %22, %12 : vector<8x32xf32>
    %24 = vector.extract_strided_slice %20 {offsets = [0, 0], sizes = [8, 32], strides = [1, 1]} : vector<8x128xf32> to vector<8x32xf32>
    %25 = vector.extract_strided_slice %21 {offsets = [0, 64], sizes = [8, 32], strides = [1, 1]} : vector<8x128xf32> to vector<8x32xf32>
    %26 = arith.mulf %24, %25 : vector<8x32xf32>
    %27 = arith.addf %23, %26 : vector<8x32xf32>
    %28 = vector.extract_strided_slice %20 {offsets = [0, 96], sizes = [8, 32], strides = [1, 1]} : vector<8x128xf32> to vector<8x32xf32>
    %29 = math.tanh %27 : vector<8x32xf32>
    %30 = arith.mulf %28, %29 : vector<8x32xf32>
    %c0_15 = arith.constant 0 : index
    %c0_16 = arith.constant 0 : index
    %31 = vector.load %arg24[%c0_15, %c0_16] : memref<128x32xf32, #tpu.memory_space<vmem>>, vector<8x32xf32>
    tpu.vector_store %arg24[%c0_15, %c0_16], %30 {strides = array<i32>} : memref<128x32xf32, #tpu.memory_space<vmem>>, vector<8x32xf32>,
    %c8 = arith.constant 8 : index
    %c0_17 = arith.constant 0 : index
    %32 = vector.load %arg23[%c8, %c0_17] : memref<128x128xf32, #tpu.memory_space<vmem>>, vector<8x128xf32>
    %cst_18 = arith.constant dense<0.000000e+00> : vector<8x128xf32>
    %33 = tpu.matmul %30, %10, %cst_18 {dimension_numbers = #tpu.dot_dimension_numbers<[1], [0], [0], [1], [0, 0, 1, 1], [], []>} : vector<8x32xf32>, vector<32x128xf32>, vector<8x128xf32> -> vector<8x128xf32>
    %34 = arith.addf %32, %33 : vector<8x128xf32>
    %35 = arith.negf %34 : vector<8x128xf32>
    %36 = math.exp %35 : vector<8x128xf32>
    %cst_19 = arith.constant 1.000000e+00 : f32
    %37 = vector.broadcast %cst_19 : f32 to vector<8x128xf32>
    %38 = arith.addf %37, %36 : vector<8x128xf32>
    %39 = arith.divf %37, %38 : vector<8x128xf32>
    %40 = math.tanh %34 : vector<8x128xf32>
    %41 = vector.extract_strided_slice %39 {offsets = [0, 32], sizes = [8, 32], strides = [1, 1]} : vector<8x128xf32> to vector<8x32xf32>
    %42 = arith.mulf %41, %27 : vector<8x32xf32>
    %43 = vector.extract_strided_slice %39 {offsets = [0, 0], sizes = [8, 32], strides = [1, 1]} : vector<8x128xf32> to vector<8x32xf32>
    %44 = vector.extract_strided_slice %40 {offsets = [0, 64], sizes = [8, 32], strides = [1, 1]} : vector<8x128xf32> to vector<8x32xf32>
    %45 = arith.mulf %43, %44 : vector<8x32xf32>
    %46 = arith.addf %42, %45 : vector<8x32xf32>
    %47 = vector.extract_strided_slice %39 {offsets = [0, 96], sizes = [8, 32], strides = [1, 1]} : vector<8x128xf32> to vector<8x32xf32>
    %48 = math.tanh %46 : vector<8x32xf32>
    %49 = arith.mulf %47, %48 : vector<8x32xf32>
    %c8_20 = arith.constant 8 : index
    %c0_21 = arith.constant 0 : index
    %50 = vector.load %arg24[%c8_20, %c0_21] : memref<128x32xf32, #tpu.memory_space<vmem>>, vector<8x32xf32>
    tpu.vector_store %arg24[%c8_20, %c0_21], %49 {strides = array<i32>} : memref<128x32xf32, #tpu.memory_space<vmem>>, vector<8x32xf32>,
    %c16 = arith.constant 16 : index
    %c0_22 = arith.constant 0 : index
    %51 = vector.load %arg23[%c16, %c0_22] : memref<128x128xf32, #tpu.memory_space<vmem>>, vector<8x128xf32>
    %cst_23 = arith.constant dense<0.000000e+00> : vector<8x128xf32>
    %52 = tpu.matmul %49, %10, %cst_23 {dimension_numbers = #tpu.dot_dimension_numbers<[1], [0], [0], [1], [0, 0, 1, 1], [], []>} : vector<8x32xf32>, vector<32x128xf32>, vector<8x128xf32> -> vector<8x128xf32>
    %53 = arith.addf %51, %52 : vector<8x128xf32>
    %54 = arith.negf %53 : vector<8x128xf32>
    %55 = math.exp %54 : vector<8x128xf32>
    %cst_24 = arith.constant 1.000000e+00 : f32
    %56 = vector.broadcast %cst_24 : f32 to vector<8x128xf32>
    %57 = arith.addf %56, %55 : vector<8x128xf32>
    %58 = arith.divf %56, %57 : vector<8x128xf32>
    %59 = math.tanh %53 : vector<8x128xf32>
    %60 = vector.extract_strided_slice %58 {offsets = [0, 32], sizes = [8, 32], strides = [1, 1]} : vector<8x128xf32> to vector<8x32xf32>
    %61 = arith.mulf %60, %46 : vector<8x32xf32>
    %62 = vector.extract_strided_slice %58 {offsets = [0, 0], sizes = [8, 32], strides = [1, 1]} : vector<8x128xf32> to vector<8x32xf32>
    %63 = vector.extract_strided_slice %59 {offsets = [0, 64], sizes = [8, 32], strides = [1, 1]} : vector<8x128xf32> to vector<8x32xf32>
    %64 = arith.mulf %62, %63 : vector<8x32xf32>
    %65 = arith.addf %61, %64 : vector<8x32xf32>
    %66 = vector.extract_strided_slice %58 {offsets = [0, 96], sizes = [8, 32], strides = [1, 1]} : vector<8x128xf32> to vector<8x32xf32>
    %67 = math.tanh %65 : vector<8x32xf32>
    %68 = arith.mulf %66, %67 : vector<8x32xf32>
    %c16_25 = arith.constant 16 : index
    %c0_26 = arith.constant 0 : index
    %69 = vector.load %arg24[%c16_25, %c0_26] : memref<128x32xf32, #tpu.memory_space<vmem>>, vector<8x32xf32>
    tpu.vector_store %arg24[%c16_25, %c0_26], %68 {strides = array<i32>} : memref<128x32xf32, #tpu.memory_space<vmem>>, vector<8x32xf32>,
    %c24 = arith.constant 24 : index
    %c0_27 = arith.constant 0 : index
    %70 = vector.load %arg23[%c24, %c0_27] : memref<128x128xf32, #tpu.memory_space<vmem>>, vector<8x128xf32>
    %cst_28 = arith.constant dense<0.000000e+00> : vector<8x128xf32>
    %71 = tpu.matmul %68, %10, %cst_28 {dimension_numbers = #tpu.dot_dimension_numbers<[1], [0], [0], [1], [0, 0, 1, 1], [], []>} : vector<8x32xf32>, vector<32x128xf32>, vector<8x128xf32> -> vector<8x128xf32>
    %72 = arith.addf %70, %71 : vector<8x128xf32>
    %73 = arith.negf %72 : vector<8x128xf32>
    %74 = math.exp %73 : vector<8x128xf32>
    %cst_29 = arith.constant 1.000000e+00 : f32
    %75 = vector.broadcast %cst_29 : f32 to vector<8x128xf32>
    %76 = arith.addf %75, %74 : vector<8x128xf32>
    %77 = arith.divf %75, %76 : vector<8x128xf32>
    %78 = math.tanh %72 : vector<8x128xf32>
    %79 = vector.extract_strided_slice %77 {offsets = [0, 32], sizes = [8, 32], strides = [1, 1]} : vector<8x128xf32> to vector<8x32xf32>
    %80 = arith.mulf %79, %65 : vector<8x32xf32>
    %81 = vector.extract_strided_slice %77 {offsets = [0, 0], sizes = [8, 32], strides = [1, 1]} : vector<8x128xf32> to vector<8x32xf32>
    %82 = vector.extract_strided_slice %78 {offsets = [0, 64], sizes = [8, 32], strides = [1, 1]} : vector<8x128xf32> to vector<8x32xf32>
    %83 = arith.mulf %81, %82 : vector<8x32xf32>
    %84 = arith.addf %80, %83 : vector<8x32xf32>
    %85 = vector.extract_strided_slice %77 {offsets = [0, 96], sizes = [8, 32], strides = [1, 1]} : vector<8x128xf32> to vector<8x32xf32>
    %86 = math.tanh %84 : vector<8x32xf32>
    %87 = arith.mulf %85, %86 : vector<8x32xf32>
    %c24_30 = arith.constant 24 : index
    %c0_31 = arith.constant 0 : index
    %88 = vector.load %arg24[%c24_30, %c0_31] : memref<128x32xf32, #tpu.memory_space<vmem>>, vector<8x32xf32>
    tpu.vector_store %arg24[%c24_30, %c0_31], %87 {strides = array<i32>} : memref<128x32xf32, #tpu.memory_space<vmem>>, vector<8x32xf32>,
    %c32 = arith.constant 32 : index
    %c0_32 = arith.constant 0 : index
    %89 = vector.load %arg23[%c32, %c0_32] : memref<128x128xf32, #tpu.memory_space<vmem>>, vector<8x128xf32>
    %cst_33 = arith.constant dense<0.000000e+00> : vector<8x128xf32>
    %90 = tpu.matmul %87, %10, %cst_33 {dimension_numbers = #tpu.dot_dimension_numbers<[1], [0], [0], [1], [0, 0, 1, 1], [], []>} : vector<8x32xf32>, vector<32x128xf32>, vector<8x128xf32> -> vector<8x128xf32>
    %91 = arith.addf %89, %90 : vector<8x128xf32>
    %92 = arith.negf %91 : vector<8x128xf32>
    %93 = math.exp %92 : vector<8x128xf32>
    %cst_34 = arith.constant 1.000000e+00 : f32
    %94 = vector.broadcast %cst_34 : f32 to vector<8x128xf32>
    %95 = arith.addf %94, %93 : vector<8x128xf32>
    %96 = arith.divf %94, %95 : vector<8x128xf32>
    %97 = math.tanh %91 : vector<8x128xf32>
    %98 = vector.extract_strided_slice %96 {offsets = [0, 32], sizes = [8, 32], strides = [1, 1]} : vector<8x128xf32> to vector<8x32xf32>
    %99 = arith.mulf %98, %84 : vector<8x32xf32>
    %100 = vector.extract_strided_slice %96 {offsets = [0, 0], sizes = [8, 32], strides = [1, 1]} : vector<8x128xf32> to vector<8x32xf32>
    %101 = vector.extract_strided_slice %97 {offsets = [0, 64], sizes = [8, 32], strides = [1, 1]} : vector<8x128xf32> to vector<8x32xf32>
    %102 = arith.mulf %100, %101 : vector<8x32xf32>
    %103 = arith.addf %99, %102 : vector<8x32xf32>
    %104 = vector.extract_strided_slice %96 {offsets = [0, 96], sizes = [8, 32], strides = [1, 1]} : vector<8x128xf32> to vector<8x32xf32>
    %105 = math.tanh %103 : vector<8x32xf32>
    %106 = arith.mulf %104, %105 : vector<8x32xf32>
    %c32_35 = arith.constant 32 : index
    %c0_36 = arith.constant 0 : index
    %107 = vector.load %arg24[%c32_35, %c0_36] : memref<128x32xf32, #tpu.memory_space<vmem>>, vector<8x32xf32>
    tpu.vector_store %arg24[%c32_35, %c0_36], %106 {strides = array<i32>} : memref<128x32xf32, #tpu.memory_space<vmem>>, vector<8x32xf32>,
    %c40 = arith.constant 40 : index
    %c0_37 = arith.constant 0 : index
    %108 = vector.load %arg23[%c40, %c0_37] : memref<128x128xf32, #tpu.memory_space<vmem>>, vector<8x128xf32>
    %cst_38 = arith.constant dense<0.000000e+00> : vector<8x128xf32>
    %109 = tpu.matmul %106, %10, %cst_38 {dimension_numbers = #tpu.dot_dimension_numbers<[1], [0], [0], [1], [0, 0, 1, 1], [], []>} : vector<8x32xf32>, vector<32x128xf32>, vector<8x128xf32> -> vector<8x128xf32>
    %110 = arith.addf %108, %109 : vector<8x128xf32>
    %111 = arith.negf %110 : vector<8x128xf32>
    %112 = math.exp %111 : vector<8x128xf32>
    %cst_39 = arith.constant 1.000000e+00 : f32
    %113 = vector.broadcast %cst_39 : f32 to vector<8x128xf32>
    %114 = arith.addf %113, %112 : vector<8x128xf32>
    %115 = arith.divf %113, %114 : vector<8x128xf32>
    %116 = math.tanh %110 : vector<8x128xf32>
    %117 = vector.extract_strided_slice %115 {offsets = [0, 32], sizes = [8, 32], strides = [1, 1]} : vector<8x128xf32> to vector<8x32xf32>
    %118 = arith.mulf %117, %103 : vector<8x32xf32>
    %119 = vector.extract_strided_slice %115 {offsets = [0, 0], sizes = [8, 32], strides = [1, 1]} : vector<8x128xf32> to vector<8x32xf32>
    %120 = vector.extract_strided_slice %116 {offsets = [0, 64], sizes = [8, 32], strides = [1, 1]} : vector<8x128xf32> to vector<8x32xf32>
    %121 = arith.mulf %119, %120 : vector<8x32xf32>
    %122 = arith.addf %118, %121 : vector<8x32xf32>
    %123 = vector.extract_strided_slice %115 {offsets = [0, 96], sizes = [8, 32], strides = [1, 1]} : vector<8x128xf32> to vector<8x32xf32>
    %124 = math.tanh %122 : vector<8x32xf32>
    %125 = arith.mulf %123, %124 : vector<8x32xf32>
    %c40_40 = arith.constant 40 : index
    %c0_41 = arith.constant 0 : index
    %126 = vector.load %arg24[%c40_40, %c0_41] : memref<128x32xf32, #tpu.memory_space<vmem>>, vector<8x32xf32>
    tpu.vector_store %arg24[%c40_40, %c0_41], %125 {strides = array<i32>} : memref<128x32xf32, #tpu.memory_space<vmem>>, vector<8x32xf32>,
    %c48 = arith.constant 48 : index
    %c0_42 = arith.constant 0 : index
    %127 = vector.load %arg23[%c48, %c0_42] : memref<128x128xf32, #tpu.memory_space<vmem>>, vector<8x128xf32>
    %cst_43 = arith.constant dense<0.000000e+00> : vector<8x128xf32>
    %128 = tpu.matmul %125, %10, %cst_43 {dimension_numbers = #tpu.dot_dimension_numbers<[1], [0], [0], [1], [0, 0, 1, 1], [], []>} : vector<8x32xf32>, vector<32x128xf32>, vector<8x128xf32> -> vector<8x128xf32>
    %129 = arith.addf %127, %128 : vector<8x128xf32>
    %130 = arith.negf %129 : vector<8x128xf32>
    %131 = math.exp %130 : vector<8x128xf32>
    %cst_44 = arith.constant 1.000000e+00 : f32
    %132 = vector.broadcast %cst_44 : f32 to vector<8x128xf32>
    %133 = arith.addf %132, %131 : vector<8x128xf32>
    %134 = arith.divf %132, %133 : vector<8x128xf32>
    %135 = math.tanh %129 : vector<8x128xf32>
    %136 = vector.extract_strided_slice %134 {offsets = [0, 32], sizes = [8, 32], strides = [1, 1]} : vector<8x128xf32> to vector<8x32xf32>
    %137 = arith.mulf %136, %122 : vector<8x32xf32>
    %138 = vector.extract_strided_slice %134 {offsets = [0, 0], sizes = [8, 32], strides = [1, 1]} : vector<8x128xf32> to vector<8x32xf32>
    %139 = vector.extract_strided_slice %135 {offsets = [0, 64], sizes = [8, 32], strides = [1, 1]} : vector<8x128xf32> to vector<8x32xf32>
    %140 = arith.mulf %138, %139 : vector<8x32xf32>
    %141 = arith.addf %137, %140 : vector<8x32xf32>
    %142 = vector.extract_strided_slice %134 {offsets = [0, 96], sizes = [8, 32], strides = [1, 1]} : vector<8x128xf32> to vector<8x32xf32>
    %143 = math.tanh %141 : vector<8x32xf32>
    %144 = arith.mulf %142, %143 : vector<8x32xf32>
    %c48_45 = arith.constant 48 : index
    %c0_46 = arith.constant 0 : index
    %145 = vector.load %arg24[%c48_45, %c0_46] : memref<128x32xf32, #tpu.memory_space<vmem>>, vector<8x32xf32>
    tpu.vector_store %arg24[%c48_45, %c0_46], %144 {strides = array<i32>} : memref<128x32xf32, #tpu.memory_space<vmem>>, vector<8x32xf32>,
    %c56 = arith.constant 56 : index
    %c0_47 = arith.constant 0 : index
    %146 = vector.load %arg23[%c56, %c0_47] : memref<128x128xf32, #tpu.memory_space<vmem>>, vector<8x128xf32>
    %cst_48 = arith.constant dense<0.000000e+00> : vector<8x128xf32>
    %147 = tpu.matmul %144, %10, %cst_48 {dimension_numbers = #tpu.dot_dimension_numbers<[1], [0], [0], [1], [0, 0, 1, 1], [], []>} : vector<8x32xf32>, vector<32x128xf32>, vector<8x128xf32> -> vector<8x128xf32>
    %148 = arith.addf %146, %147 : vector<8x128xf32>
    %149 = arith.negf %148 : vector<8x128xf32>
    %150 = math.exp %149 : vector<8x128xf32>
    %cst_49 = arith.constant 1.000000e+00 : f32
    %151 = vector.broadcast %cst_49 : f32 to vector<8x128xf32>
    %152 = arith.addf %151, %150 : vector<8x128xf32>
    %153 = arith.divf %151, %152 : vector<8x128xf32>
    %154 = math.tanh %148 : vector<8x128xf32>
    %155 = vector.extract_strided_slice %153 {offsets = [0, 32], sizes = [8, 32], strides = [1, 1]} : vector<8x128xf32> to vector<8x32xf32>
    %156 = arith.mulf %155, %141 : vector<8x32xf32>
    %157 = vector.extract_strided_slice %153 {offsets = [0, 0], sizes = [8, 32], strides = [1, 1]} : vector<8x128xf32> to vector<8x32xf32>
    %158 = vector.extract_strided_slice %154 {offsets = [0, 64], sizes = [8, 32], strides = [1, 1]} : vector<8x128xf32> to vector<8x32xf32>
    %159 = arith.mulf %157, %158 : vector<8x32xf32>
    %160 = arith.addf %156, %159 : vector<8x32xf32>
    %161 = vector.extract_strided_slice %153 {offsets = [0, 96], sizes = [8, 32], strides = [1, 1]} : vector<8x128xf32> to vector<8x32xf32>
    %162 = math.tanh %160 : vector<8x32xf32>
    %163 = arith.mulf %161, %162 : vector<8x32xf32>
    %c56_50 = arith.constant 56 : index
    %c0_51 = arith.constant 0 : index
    %164 = vector.load %arg24[%c56_50, %c0_51] : memref<128x32xf32, #tpu.memory_space<vmem>>, vector<8x32xf32>
    tpu.vector_store %arg24[%c56_50, %c0_51], %163 {strides = array<i32>} : memref<128x32xf32, #tpu.memory_space<vmem>>, vector<8x32xf32>,
    %c64 = arith.constant 64 : index
    %c0_52 = arith.constant 0 : index
    %165 = vector.load %arg23[%c64, %c0_52] : memref<128x128xf32, #tpu.memory_space<vmem>>, vector<8x128xf32>
    %cst_53 = arith.constant dense<0.000000e+00> : vector<8x128xf32>
    %166 = tpu.matmul %163, %10, %cst_53 {dimension_numbers = #tpu.dot_dimension_numbers<[1], [0], [0], [1], [0, 0, 1, 1], [], []>} : vector<8x32xf32>, vector<32x128xf32>, vector<8x128xf32> -> vector<8x128xf32>
    %167 = arith.addf %165, %166 : vector<8x128xf32>
    %168 = arith.negf %167 : vector<8x128xf32>
    %169 = math.exp %168 : vector<8x128xf32>
    %cst_54 = arith.constant 1.000000e+00 : f32
    %170 = vector.broadcast %cst_54 : f32 to vector<8x128xf32>
    %171 = arith.addf %170, %169 : vector<8x128xf32>
    %172 = arith.divf %170, %171 : vector<8x128xf32>
    %173 = math.tanh %167 : vector<8x128xf32>
    %174 = vector.extract_strided_slice %172 {offsets = [0, 32], sizes = [8, 32], strides = [1, 1]} : vector<8x128xf32> to vector<8x32xf32>
    %175 = arith.mulf %174, %160 : vector<8x32xf32>
    %176 = vector.extract_strided_slice %172 {offsets = [0, 0], sizes = [8, 32], strides = [1, 1]} : vector<8x128xf32> to vector<8x32xf32>
    %177 = vector.extract_strided_slice %173 {offsets = [0, 64], sizes = [8, 32], strides = [1, 1]} : vector<8x128xf32> to vector<8x32xf32>
    %178 = arith.mulf %176, %177 : vector<8x32xf32>
    %179 = arith.addf %175, %178 : vector<8x32xf32>
    %180 = vector.extract_strided_slice %172 {offsets = [0, 96], sizes = [8, 32], strides = [1, 1]} : vector<8x128xf32> to vector<8x32xf32>
    %181 = math.tanh %179 : vector<8x32xf32>
    %182 = arith.mulf %180, %181 : vector<8x32xf32>
    %c64_55 = arith.constant 64 : index
    %c0_56 = arith.constant 0 : index
    %183 = vector.load %arg24[%c64_55, %c0_56] : memref<128x32xf32, #tpu.memory_space<vmem>>, vector<8x32xf32>
    tpu.vector_store %arg24[%c64_55, %c0_56], %182 {strides = array<i32>} : memref<128x32xf32, #tpu.memory_space<vmem>>, vector<8x32xf32>,
    %c72 = arith.constant 72 : index
    %c0_57 = arith.constant 0 : index
    %184 = vector.load %arg23[%c72, %c0_57] : memref<128x128xf32, #tpu.memory_space<vmem>>, vector<8x128xf32>
    %cst_58 = arith.constant dense<0.000000e+00> : vector<8x128xf32>
    %185 = tpu.matmul %182, %10, %cst_58 {dimension_numbers = #tpu.dot_dimension_numbers<[1], [0], [0], [1], [0, 0, 1, 1], [], []>} : vector<8x32xf32>, vector<32x128xf32>, vector<8x128xf32> -> vector<8x128xf32>
    %186 = arith.addf %184, %185 : vector<8x128xf32>
    %187 = arith.negf %186 : vector<8x128xf32>
    %188 = math.exp %187 : vector<8x128xf32>
    %cst_59 = arith.constant 1.000000e+00 : f32
    %189 = vector.broadcast %cst_59 : f32 to vector<8x128xf32>
    %190 = arith.addf %189, %188 : vector<8x128xf32>
    %191 = arith.divf %189, %190 : vector<8x128xf32>
    %192 = math.tanh %186 : vector<8x128xf32>
    %193 = vector.extract_strided_slice %191 {offsets = [0, 32], sizes = [8, 32], strides = [1, 1]} : vector<8x128xf32> to vector<8x32xf32>
    %194 = arith.mulf %193, %179 : vector<8x32xf32>
    %195 = vector.extract_strided_slice %191 {offsets = [0, 0], sizes = [8, 32], strides = [1, 1]} : vector<8x128xf32> to vector<8x32xf32>
    %196 = vector.extract_strided_slice %192 {offsets = [0, 64], sizes = [8, 32], strides = [1, 1]} : vector<8x128xf32> to vector<8x32xf32>
    %197 = arith.mulf %195, %196 : vector<8x32xf32>
    %198 = arith.addf %194, %197 : vector<8x32xf32>
    %199 = vector.extract_strided_slice %191 {offsets = [0, 96], sizes = [8, 32], strides = [1, 1]} : vector<8x128xf32> to vector<8x32xf32>
    %200 = math.tanh %198 : vector<8x32xf32>
    %201 = arith.mulf %199, %200 : vector<8x32xf32>
    %c72_60 = arith.constant 72 : index
    %c0_61 = arith.constant 0 : index
    %202 = vector.load %arg24[%c72_60, %c0_61] : memref<128x32xf32, #tpu.memory_space<vmem>>, vector<8x32xf32>
    tpu.vector_store %arg24[%c72_60, %c0_61], %201 {strides = array<i32>} : memref<128x32xf32, #tpu.memory_space<vmem>>, vector<8x32xf32>,
    %c80 = arith.constant 80 : index
    %c0_62 = arith.constant 0 : index
    %203 = vector.load %arg23[%c80, %c0_62] : memref<128x128xf32, #tpu.memory_space<vmem>>, vector<8x128xf32>
    %cst_63 = arith.constant dense<0.000000e+00> : vector<8x128xf32>
    %204 = tpu.matmul %201, %10, %cst_63 {dimension_numbers = #tpu.dot_dimension_numbers<[1], [0], [0], [1], [0, 0, 1, 1], [], []>} : vector<8x32xf32>, vector<32x128xf32>, vector<8x128xf32> -> vector<8x128xf32>
    %205 = arith.addf %203, %204 : vector<8x128xf32>
    %206 = arith.negf %205 : vector<8x128xf32>
    %207 = math.exp %206 : vector<8x128xf32>
    %cst_64 = arith.constant 1.000000e+00 : f32
    %208 = vector.broadcast %cst_64 : f32 to vector<8x128xf32>
    %209 = arith.addf %208, %207 : vector<8x128xf32>
    %210 = arith.divf %208, %209 : vector<8x128xf32>
    %211 = math.tanh %205 : vector<8x128xf32>
    %212 = vector.extract_strided_slice %210 {offsets = [0, 32], sizes = [8, 32], strides = [1, 1]} : vector<8x128xf32> to vector<8x32xf32>
    %213 = arith.mulf %212, %198 : vector<8x32xf32>
    %214 = vector.extract_strided_slice %210 {offsets = [0, 0], sizes = [8, 32], strides = [1, 1]} : vector<8x128xf32> to vector<8x32xf32>
    %215 = vector.extract_strided_slice %211 {offsets = [0, 64], sizes = [8, 32], strides = [1, 1]} : vector<8x128xf32> to vector<8x32xf32>
    %216 = arith.mulf %214, %215 : vector<8x32xf32>
    %217 = arith.addf %213, %216 : vector<8x32xf32>
    %218 = vector.extract_strided_slice %210 {offsets = [0, 96], sizes = [8, 32], strides = [1, 1]} : vector<8x128xf32> to vector<8x32xf32>
    %219 = math.tanh %217 : vector<8x32xf32>
    %220 = arith.mulf %218, %219 : vector<8x32xf32>
    %c80_65 = arith.constant 80 : index
    %c0_66 = arith.constant 0 : index
    %221 = vector.load %arg24[%c80_65, %c0_66] : memref<128x32xf32, #tpu.memory_space<vmem>>, vector<8x32xf32>
    tpu.vector_store %arg24[%c80_65, %c0_66], %220 {strides = array<i32>} : memref<128x32xf32, #tpu.memory_space<vmem>>, vector<8x32xf32>,
    %c88 = arith.constant 88 : index
    %c0_67 = arith.constant 0 : index
    %222 = vector.load %arg23[%c88, %c0_67] : memref<128x128xf32, #tpu.memory_space<vmem>>, vector<8x128xf32>
    %cst_68 = arith.constant dense<0.000000e+00> : vector<8x128xf32>
    %223 = tpu.matmul %220, %10, %cst_68 {dimension_numbers = #tpu.dot_dimension_numbers<[1], [0], [0], [1], [0, 0, 1, 1], [], []>} : vector<8x32xf32>, vector<32x128xf32>, vector<8x128xf32> -> vector<8x128xf32>
    %224 = arith.addf %222, %223 : vector<8x128xf32>
    %225 = arith.negf %224 : vector<8x128xf32>
    %226 = math.exp %225 : vector<8x128xf32>
    %cst_69 = arith.constant 1.000000e+00 : f32
    %227 = vector.broadcast %cst_69 : f32 to vector<8x128xf32>
    %228 = arith.addf %227, %226 : vector<8x128xf32>
    %229 = arith.divf %227, %228 : vector<8x128xf32>
    %230 = math.tanh %224 : vector<8x128xf32>
    %231 = vector.extract_strided_slice %229 {offsets = [0, 32], sizes = [8, 32], strides = [1, 1]} : vector<8x128xf32> to vector<8x32xf32>
    %232 = arith.mulf %231, %217 : vector<8x32xf32>
    %233 = vector.extract_strided_slice %229 {offsets = [0, 0], sizes = [8, 32], strides = [1, 1]} : vector<8x128xf32> to vector<8x32xf32>
    %234 = vector.extract_strided_slice %230 {offsets = [0, 64], sizes = [8, 32], strides = [1, 1]} : vector<8x128xf32> to vector<8x32xf32>
    %235 = arith.mulf %233, %234 : vector<8x32xf32>
    %236 = arith.addf %232, %235 : vector<8x32xf32>
    %237 = vector.extract_strided_slice %229 {offsets = [0, 96], sizes = [8, 32], strides = [1, 1]} : vector<8x128xf32> to vector<8x32xf32>
    %238 = math.tanh %236 : vector<8x32xf32>
    %239 = arith.mulf %237, %238 : vector<8x32xf32>
    %c88_70 = arith.constant 88 : index
    %c0_71 = arith.constant 0 : index
    %240 = vector.load %arg24[%c88_70, %c0_71] : memref<128x32xf32, #tpu.memory_space<vmem>>, vector<8x32xf32>
    tpu.vector_store %arg24[%c88_70, %c0_71], %239 {strides = array<i32>} : memref<128x32xf32, #tpu.memory_space<vmem>>, vector<8x32xf32>,
    %c96 = arith.constant 96 : index
    %c0_72 = arith.constant 0 : index
    %241 = vector.load %arg23[%c96, %c0_72] : memref<128x128xf32, #tpu.memory_space<vmem>>, vector<8x128xf32>
    %cst_73 = arith.constant dense<0.000000e+00> : vector<8x128xf32>
    %242 = tpu.matmul %239, %10, %cst_73 {dimension_numbers = #tpu.dot_dimension_numbers<[1], [0], [0], [1], [0, 0, 1, 1], [], []>} : vector<8x32xf32>, vector<32x128xf32>, vector<8x128xf32> -> vector<8x128xf32>
    %243 = arith.addf %241, %242 : vector<8x128xf32>
    %244 = arith.negf %243 : vector<8x128xf32>
    %245 = math.exp %244 : vector<8x128xf32>
    %cst_74 = arith.constant 1.000000e+00 : f32
    %246 = vector.broadcast %cst_74 : f32 to vector<8x128xf32>
    %247 = arith.addf %246, %245 : vector<8x128xf32>
    %248 = arith.divf %246, %247 : vector<8x128xf32>
    %249 = math.tanh %243 : vector<8x128xf32>
    %250 = vector.extract_strided_slice %248 {offsets = [0, 32], sizes = [8, 32], strides = [1, 1]} : vector<8x128xf32> to vector<8x32xf32>
    %251 = arith.mulf %250, %236 : vector<8x32xf32>
    %252 = vector.extract_strided_slice %248 {offsets = [0, 0], sizes = [8, 32], strides = [1, 1]} : vector<8x128xf32> to vector<8x32xf32>
    %253 = vector.extract_strided_slice %249 {offsets = [0, 64], sizes = [8, 32], strides = [1, 1]} : vector<8x128xf32> to vector<8x32xf32>
    %254 = arith.mulf %252, %253 : vector<8x32xf32>
    %255 = arith.addf %251, %254 : vector<8x32xf32>
    %256 = vector.extract_strided_slice %248 {offsets = [0, 96], sizes = [8, 32], strides = [1, 1]} : vector<8x128xf32> to vector<8x32xf32>
    %257 = math.tanh %255 : vector<8x32xf32>
    %258 = arith.mulf %256, %257 : vector<8x32xf32>
    %c96_75 = arith.constant 96 : index
    %c0_76 = arith.constant 0 : index
    %259 = vector.load %arg24[%c96_75, %c0_76] : memref<128x32xf32, #tpu.memory_space<vmem>>, vector<8x32xf32>
    tpu.vector_store %arg24[%c96_75, %c0_76], %258 {strides = array<i32>} : memref<128x32xf32, #tpu.memory_space<vmem>>, vector<8x32xf32>,
    %c104 = arith.constant 104 : index
    %c0_77 = arith.constant 0 : index
    %260 = vector.load %arg23[%c104, %c0_77] : memref<128x128xf32, #tpu.memory_space<vmem>>, vector<8x128xf32>
    %cst_78 = arith.constant dense<0.000000e+00> : vector<8x128xf32>
    %261 = tpu.matmul %258, %10, %cst_78 {dimension_numbers = #tpu.dot_dimension_numbers<[1], [0], [0], [1], [0, 0, 1, 1], [], []>} : vector<8x32xf32>, vector<32x128xf32>, vector<8x128xf32> -> vector<8x128xf32>
    %262 = arith.addf %260, %261 : vector<8x128xf32>
    %263 = arith.negf %262 : vector<8x128xf32>
    %264 = math.exp %263 : vector<8x128xf32>
    %cst_79 = arith.constant 1.000000e+00 : f32
    %265 = vector.broadcast %cst_79 : f32 to vector<8x128xf32>
    %266 = arith.addf %265, %264 : vector<8x128xf32>
    %267 = arith.divf %265, %266 : vector<8x128xf32>
    %268 = math.tanh %262 : vector<8x128xf32>
    %269 = vector.extract_strided_slice %267 {offsets = [0, 32], sizes = [8, 32], strides = [1, 1]} : vector<8x128xf32> to vector<8x32xf32>
    %270 = arith.mulf %269, %255 : vector<8x32xf32>
    %271 = vector.extract_strided_slice %267 {offsets = [0, 0], sizes = [8, 32], strides = [1, 1]} : vector<8x128xf32> to vector<8x32xf32>
    %272 = vector.extract_strided_slice %268 {offsets = [0, 64], sizes = [8, 32], strides = [1, 1]} : vector<8x128xf32> to vector<8x32xf32>
    %273 = arith.mulf %271, %272 : vector<8x32xf32>
    %274 = arith.addf %270, %273 : vector<8x32xf32>
    %275 = vector.extract_strided_slice %267 {offsets = [0, 96], sizes = [8, 32], strides = [1, 1]} : vector<8x128xf32> to vector<8x32xf32>
    %276 = math.tanh %274 : vector<8x32xf32>
    %277 = arith.mulf %275, %276 : vector<8x32xf32>
    %c104_80 = arith.constant 104 : index
    %c0_81 = arith.constant 0 : index
    %278 = vector.load %arg24[%c104_80, %c0_81] : memref<128x32xf32, #tpu.memory_space<vmem>>, vector<8x32xf32>
    tpu.vector_store %arg24[%c104_80, %c0_81], %277 {strides = array<i32>} : memref<128x32xf32, #tpu.memory_space<vmem>>, vector<8x32xf32>,
    %c112 = arith.constant 112 : index
    %c0_82 = arith.constant 0 : index
    %279 = vector.load %arg23[%c112, %c0_82] : memref<128x128xf32, #tpu.memory_space<vmem>>, vector<8x128xf32>
    %cst_83 = arith.constant dense<0.000000e+00> : vector<8x128xf32>
    %280 = tpu.matmul %277, %10, %cst_83 {dimension_numbers = #tpu.dot_dimension_numbers<[1], [0], [0], [1], [0, 0, 1, 1], [], []>} : vector<8x32xf32>, vector<32x128xf32>, vector<8x128xf32> -> vector<8x128xf32>
    %281 = arith.addf %279, %280 : vector<8x128xf32>
    %282 = arith.negf %281 : vector<8x128xf32>
    %283 = math.exp %282 : vector<8x128xf32>
    %cst_84 = arith.constant 1.000000e+00 : f32
    %284 = vector.broadcast %cst_84 : f32 to vector<8x128xf32>
    %285 = arith.addf %284, %283 : vector<8x128xf32>
    %286 = arith.divf %284, %285 : vector<8x128xf32>
    %287 = math.tanh %281 : vector<8x128xf32>
    %288 = vector.extract_strided_slice %286 {offsets = [0, 32], sizes = [8, 32], strides = [1, 1]} : vector<8x128xf32> to vector<8x32xf32>
    %289 = arith.mulf %288, %274 : vector<8x32xf32>
    %290 = vector.extract_strided_slice %286 {offsets = [0, 0], sizes = [8, 32], strides = [1, 1]} : vector<8x128xf32> to vector<8x32xf32>
    %291 = vector.extract_strided_slice %287 {offsets = [0, 64], sizes = [8, 32], strides = [1, 1]} : vector<8x128xf32> to vector<8x32xf32>
    %292 = arith.mulf %290, %291 : vector<8x32xf32>
    %293 = arith.addf %289, %292 : vector<8x32xf32>
    %294 = vector.extract_strided_slice %286 {offsets = [0, 96], sizes = [8, 32], strides = [1, 1]} : vector<8x128xf32> to vector<8x32xf32>
    %295 = math.tanh %293 : vector<8x32xf32>
    %296 = arith.mulf %294, %295 : vector<8x32xf32>
    %c112_85 = arith.constant 112 : index
    %c0_86 = arith.constant 0 : index
    %297 = vector.load %arg24[%c112_85, %c0_86] : memref<128x32xf32, #tpu.memory_space<vmem>>, vector<8x32xf32>
    tpu.vector_store %arg24[%c112_85, %c0_86], %296 {strides = array<i32>} : memref<128x32xf32, #tpu.memory_space<vmem>>, vector<8x32xf32>,
    %c120 = arith.constant 120 : index
    %c0_87 = arith.constant 0 : index
    %298 = vector.load %arg23[%c120, %c0_87] : memref<128x128xf32, #tpu.memory_space<vmem>>, vector<8x128xf32>
    %cst_88 = arith.constant dense<0.000000e+00> : vector<8x128xf32>
    %299 = tpu.matmul %296, %10, %cst_88 {dimension_numbers = #tpu.dot_dimension_numbers<[1], [0], [0], [1], [0, 0, 1, 1], [], []>} : vector<8x32xf32>, vector<32x128xf32>, vector<8x128xf32> -> vector<8x128xf32>
    %300 = arith.addf %298, %299 : vector<8x128xf32>
    %301 = arith.negf %300 : vector<8x128xf32>
    %302 = math.exp %301 : vector<8x128xf32>
    %cst_89 = arith.constant 1.000000e+00 : f32
    %303 = vector.broadcast %cst_89 : f32 to vector<8x128xf32>
    %304 = arith.addf %303, %302 : vector<8x128xf32>
    %305 = arith.divf %303, %304 : vector<8x128xf32>
    %306 = math.tanh %300 : vector<8x128xf32>
    %307 = vector.extract_strided_slice %305 {offsets = [0, 32], sizes = [8, 32], strides = [1, 1]} : vector<8x128xf32> to vector<8x32xf32>
    %308 = arith.mulf %307, %293 : vector<8x32xf32>
    %309 = vector.extract_strided_slice %305 {offsets = [0, 0], sizes = [8, 32], strides = [1, 1]} : vector<8x128xf32> to vector<8x32xf32>
    %310 = vector.extract_strided_slice %306 {offsets = [0, 64], sizes = [8, 32], strides = [1, 1]} : vector<8x128xf32> to vector<8x32xf32>
    %311 = arith.mulf %309, %310 : vector<8x32xf32>
    %312 = arith.addf %308, %311 : vector<8x32xf32>
    %313 = vector.extract_strided_slice %305 {offsets = [0, 96], sizes = [8, 32], strides = [1, 1]} : vector<8x128xf32> to vector<8x32xf32>
    %314 = math.tanh %312 : vector<8x32xf32>
    %315 = arith.mulf %313, %314 : vector<8x32xf32>
    %c120_90 = arith.constant 120 : index
    %c0_91 = arith.constant 0 : index
    %316 = vector.load %arg24[%c120_90, %c0_91] : memref<128x32xf32, #tpu.memory_space<vmem>>, vector<8x32xf32>
    tpu.vector_store %arg24[%c120_90, %c0_91], %315 {strides = array<i32>} : memref<128x32xf32, #tpu.memory_space<vmem>>, vector<8x32xf32>,
    %c0_92 = arith.constant 0 : index
    %c0_93 = arith.constant 0 : index
    %317 = vector.load %arg24[%c0_92, %c0_93] : memref<128x32xf32, #tpu.memory_space<vmem>>, vector<128x32xf32>
    %c0_94 = arith.constant 0 : index
    %c0_95 = arith.constant 0 : index
    %c0_96 = arith.constant 0 : index
    %318 = vector.load %arg2[%c0_94, %c0_95, %c0_96] : memref<2x32x128xf32, #tpu.memory_space<vmem>>, vector<1x32x128xf32>
    %319 = vector.shape_cast %318 : vector<1x32x128xf32> to vector<32x128xf32>
    %cst_97 = arith.constant dense<0.000000e+00> : vector<128x128xf32>
    %320 = tpu.matmul %317, %319, %cst_97 {dimension_numbers = #tpu.dot_dimension_numbers<[1], [0], [0], [1], [0, 0, 1, 1], [], []>} : vector<128x32xf32>, vector<32x128xf32>, vector<128x128xf32> -> vector<128x128xf32>
    %c1 = arith.constant 1 : index
    %c0_98 = arith.constant 0 : index
    %321 = vector.load %arg4[%c1, %c0_98] : memref<3x128xf32, #tpu.memory_space<vmem>>, vector<1x128xf32>
    %322 = vector.broadcast %321 : vector<1x128xf32> to vector<128x128xf32>
    %323 = arith.addf %320, %322 : vector<128x128xf32>
    %c0_99 = arith.constant 0 : index
    %c0_100 = arith.constant 0 : index
    %324 = vector.load %arg23[%c0_99, %c0_100] : memref<128x128xf32, #tpu.memory_space<vmem>>, vector<128x128xf32>
    tpu.vector_store %arg23[%c0_99, %c0_100], %323 {strides = array<i32>} : memref<128x128xf32, #tpu.memory_space<vmem>>, vector<128x128xf32>,
    %c1_101 = arith.constant 1 : index
    %c0_102 = arith.constant 0 : index
    %c0_103 = arith.constant 0 : index
    %325 = vector.load %arg3[%c1_101, %c0_102, %c0_103] : memref<3x32x128xf32, #tpu.memory_space<vmem>>, vector<1x32x128xf32>
    %326 = vector.shape_cast %325 : vector<1x32x128xf32> to vector<32x128xf32>
    %cst_104 = arith.constant 0.000000e+00 : f32
    %327 = vector.broadcast %cst_104 : f32 to vector<8x32xf32>
    %cst_105 = arith.constant 0.000000e+00 : f32
    %328 = vector.broadcast %cst_105 : f32 to vector<8x32xf32>
    %c0_106 = arith.constant 0 : index
    %c0_107 = arith.constant 0 : index
    %329 = vector.load %arg23[%c0_106, %c0_107] : memref<128x128xf32, #tpu.memory_space<vmem>>, vector<8x128xf32>
    %cst_108 = arith.constant dense<0.000000e+00> : vector<8x128xf32>
    %330 = tpu.matmul %327, %326, %cst_108 {dimension_numbers = #tpu.dot_dimension_numbers<[1], [0], [0], [1], [0, 0, 1, 1], [], []>} : vector<8x32xf32>, vector<32x128xf32>, vector<8x128xf32> -> vector<8x128xf32>
    %331 = arith.addf %329, %330 : vector<8x128xf32>
    %332 = arith.negf %331 : vector<8x128xf32>
    %333 = math.exp %332 : vector<8x128xf32>
    %cst_109 = arith.constant 1.000000e+00 : f32
    %334 = vector.broadcast %cst_109 : f32 to vector<8x128xf32>
    %335 = arith.addf %334, %333 : vector<8x128xf32>
    %336 = arith.divf %334, %335 : vector<8x128xf32>
    %337 = math.tanh %331 : vector<8x128xf32>
    %338 = vector.extract_strided_slice %336 {offsets = [0, 32], sizes = [8, 32], strides = [1, 1]} : vector<8x128xf32> to vector<8x32xf32>
    %339 = arith.mulf %338, %328 : vector<8x32xf32>
    %340 = vector.extract_strided_slice %336 {offsets = [0, 0], sizes = [8, 32], strides = [1, 1]} : vector<8x128xf32> to vector<8x32xf32>
    %341 = vector.extract_strided_slice %337 {offsets = [0, 64], sizes = [8, 32], strides = [1, 1]} : vector<8x128xf32> to vector<8x32xf32>
    %342 = arith.mulf %340, %341 : vector<8x32xf32>
    %343 = arith.addf %339, %342 : vector<8x32xf32>
    %344 = vector.extract_strided_slice %336 {offsets = [0, 96], sizes = [8, 32], strides = [1, 1]} : vector<8x128xf32> to vector<8x32xf32>
    %345 = math.tanh %343 : vector<8x32xf32>
    %346 = arith.mulf %344, %345 : vector<8x32xf32>
    %c0_110 = arith.constant 0 : index
    %c0_111 = arith.constant 0 : index
    %347 = vector.load %arg24[%c0_110, %c0_111] : memref<128x32xf32, #tpu.memory_space<vmem>>, vector<8x32xf32>
    tpu.vector_store %arg24[%c0_110, %c0_111], %346 {strides = array<i32>} : memref<128x32xf32, #tpu.memory_space<vmem>>, vector<8x32xf32>,
    %c8_112 = arith.constant 8 : index
    %c0_113 = arith.constant 0 : index
    %348 = vector.load %arg23[%c8_112, %c0_113] : memref<128x128xf32, #tpu.memory_space<vmem>>, vector<8x128xf32>
    %cst_114 = arith.constant dense<0.000000e+00> : vector<8x128xf32>
    %349 = tpu.matmul %346, %326, %cst_114 {dimension_numbers = #tpu.dot_dimension_numbers<[1], [0], [0], [1], [0, 0, 1, 1], [], []>} : vector<8x32xf32>, vector<32x128xf32>, vector<8x128xf32> -> vector<8x128xf32>
    %350 = arith.addf %348, %349 : vector<8x128xf32>
    %351 = arith.negf %350 : vector<8x128xf32>
    %352 = math.exp %351 : vector<8x128xf32>
    %cst_115 = arith.constant 1.000000e+00 : f32
    %353 = vector.broadcast %cst_115 : f32 to vector<8x128xf32>
    %354 = arith.addf %353, %352 : vector<8x128xf32>
    %355 = arith.divf %353, %354 : vector<8x128xf32>
    %356 = math.tanh %350 : vector<8x128xf32>
    %357 = vector.extract_strided_slice %355 {offsets = [0, 32], sizes = [8, 32], strides = [1, 1]} : vector<8x128xf32> to vector<8x32xf32>
    %358 = arith.mulf %357, %343 : vector<8x32xf32>
    %359 = vector.extract_strided_slice %355 {offsets = [0, 0], sizes = [8, 32], strides = [1, 1]} : vector<8x128xf32> to vector<8x32xf32>
    %360 = vector.extract_strided_slice %356 {offsets = [0, 64], sizes = [8, 32], strides = [1, 1]} : vector<8x128xf32> to vector<8x32xf32>
    %361 = arith.mulf %359, %360 : vector<8x32xf32>
    %362 = arith.addf %358, %361 : vector<8x32xf32>
    %363 = vector.extract_strided_slice %355 {offsets = [0, 96], sizes = [8, 32], strides = [1, 1]} : vector<8x128xf32> to vector<8x32xf32>
    %364 = math.tanh %362 : vector<8x32xf32>
    %365 = arith.mulf %363, %364 : vector<8x32xf32>
    %c8_116 = arith.constant 8 : index
    %c0_117 = arith.constant 0 : index
    %366 = vector.load %arg24[%c8_116, %c0_117] : memref<128x32xf32, #tpu.memory_space<vmem>>, vector<8x32xf32>
    tpu.vector_store %arg24[%c8_116, %c0_117], %365 {strides = array<i32>} : memref<128x32xf32, #tpu.memory_space<vmem>>, vector<8x32xf32>,
    %c16_118 = arith.constant 16 : index
    %c0_119 = arith.constant 0 : index
    %367 = vector.load %arg23[%c16_118, %c0_119] : memref<128x128xf32, #tpu.memory_space<vmem>>, vector<8x128xf32>
    %cst_120 = arith.constant dense<0.000000e+00> : vector<8x128xf32>
    %368 = tpu.matmul %365, %326, %cst_120 {dimension_numbers = #tpu.dot_dimension_numbers<[1], [0], [0], [1], [0, 0, 1, 1], [], []>} : vector<8x32xf32>, vector<32x128xf32>, vector<8x128xf32> -> vector<8x128xf32>
    %369 = arith.addf %367, %368 : vector<8x128xf32>
    %370 = arith.negf %369 : vector<8x128xf32>
    %371 = math.exp %370 : vector<8x128xf32>
    %cst_121 = arith.constant 1.000000e+00 : f32
    %372 = vector.broadcast %cst_121 : f32 to vector<8x128xf32>
    %373 = arith.addf %372, %371 : vector<8x128xf32>
    %374 = arith.divf %372, %373 : vector<8x128xf32>
    %375 = math.tanh %369 : vector<8x128xf32>
    %376 = vector.extract_strided_slice %374 {offsets = [0, 32], sizes = [8, 32], strides = [1, 1]} : vector<8x128xf32> to vector<8x32xf32>
    %377 = arith.mulf %376, %362 : vector<8x32xf32>
    %378 = vector.extract_strided_slice %374 {offsets = [0, 0], sizes = [8, 32], strides = [1, 1]} : vector<8x128xf32> to vector<8x32xf32>
    %379 = vector.extract_strided_slice %375 {offsets = [0, 64], sizes = [8, 32], strides = [1, 1]} : vector<8x128xf32> to vector<8x32xf32>
    %380 = arith.mulf %378, %379 : vector<8x32xf32>
    %381 = arith.addf %377, %380 : vector<8x32xf32>
    %382 = vector.extract_strided_slice %374 {offsets = [0, 96], sizes = [8, 32], strides = [1, 1]} : vector<8x128xf32> to vector<8x32xf32>
    %383 = math.tanh %381 : vector<8x32xf32>
    %384 = arith.mulf %382, %383 : vector<8x32xf32>
    %c16_122 = arith.constant 16 : index
    %c0_123 = arith.constant 0 : index
    %385 = vector.load %arg24[%c16_122, %c0_123] : memref<128x32xf32, #tpu.memory_space<vmem>>, vector<8x32xf32>
    tpu.vector_store %arg24[%c16_122, %c0_123], %384 {strides = array<i32>} : memref<128x32xf32, #tpu.memory_space<vmem>>, vector<8x32xf32>,
    %c24_124 = arith.constant 24 : index
    %c0_125 = arith.constant 0 : index
    %386 = vector.load %arg23[%c24_124, %c0_125] : memref<128x128xf32, #tpu.memory_space<vmem>>, vector<8x128xf32>
    %cst_126 = arith.constant dense<0.000000e+00> : vector<8x128xf32>
    %387 = tpu.matmul %384, %326, %cst_126 {dimension_numbers = #tpu.dot_dimension_numbers<[1], [0], [0], [1], [0, 0, 1, 1], [], []>} : vector<8x32xf32>, vector<32x128xf32>, vector<8x128xf32> -> vector<8x128xf32>
    %388 = arith.addf %386, %387 : vector<8x128xf32>
    %389 = arith.negf %388 : vector<8x128xf32>
    %390 = math.exp %389 : vector<8x128xf32>
    %cst_127 = arith.constant 1.000000e+00 : f32
    %391 = vector.broadcast %cst_127 : f32 to vector<8x128xf32>
    %392 = arith.addf %391, %390 : vector<8x128xf32>
    %393 = arith.divf %391, %392 : vector<8x128xf32>
    %394 = math.tanh %388 : vector<8x128xf32>
    %395 = vector.extract_strided_slice %393 {offsets = [0, 32], sizes = [8, 32], strides = [1, 1]} : vector<8x128xf32> to vector<8x32xf32>
    %396 = arith.mulf %395, %381 : vector<8x32xf32>
    %397 = vector.extract_strided_slice %393 {offsets = [0, 0], sizes = [8, 32], strides = [1, 1]} : vector<8x128xf32> to vector<8x32xf32>
    %398 = vector.extract_strided_slice %394 {offsets = [0, 64], sizes = [8, 32], strides = [1, 1]} : vector<8x128xf32> to vector<8x32xf32>
    %399 = arith.mulf %397, %398 : vector<8x32xf32>
    %400 = arith.addf %396, %399 : vector<8x32xf32>
    %401 = vector.extract_strided_slice %393 {offsets = [0, 96], sizes = [8, 32], strides = [1, 1]} : vector<8x128xf32> to vector<8x32xf32>
    %402 = math.tanh %400 : vector<8x32xf32>
    %403 = arith.mulf %401, %402 : vector<8x32xf32>
    %c24_128 = arith.constant 24 : index
    %c0_129 = arith.constant 0 : index
    %404 = vector.load %arg24[%c24_128, %c0_129] : memref<128x32xf32, #tpu.memory_space<vmem>>, vector<8x32xf32>
    tpu.vector_store %arg24[%c24_128, %c0_129], %403 {strides = array<i32>} : memref<128x32xf32, #tpu.memory_space<vmem>>, vector<8x32xf32>,
    %c32_130 = arith.constant 32 : index
    %c0_131 = arith.constant 0 : index
    %405 = vector.load %arg23[%c32_130, %c0_131] : memref<128x128xf32, #tpu.memory_space<vmem>>, vector<8x128xf32>
    %cst_132 = arith.constant dense<0.000000e+00> : vector<8x128xf32>
    %406 = tpu.matmul %403, %326, %cst_132 {dimension_numbers = #tpu.dot_dimension_numbers<[1], [0], [0], [1], [0, 0, 1, 1], [], []>} : vector<8x32xf32>, vector<32x128xf32>, vector<8x128xf32> -> vector<8x128xf32>
    %407 = arith.addf %405, %406 : vector<8x128xf32>
    %408 = arith.negf %407 : vector<8x128xf32>
    %409 = math.exp %408 : vector<8x128xf32>
    %cst_133 = arith.constant 1.000000e+00 : f32
    %410 = vector.broadcast %cst_133 : f32 to vector<8x128xf32>
    %411 = arith.addf %410, %409 : vector<8x128xf32>
    %412 = arith.divf %410, %411 : vector<8x128xf32>
    %413 = math.tanh %407 : vector<8x128xf32>
    %414 = vector.extract_strided_slice %412 {offsets = [0, 32], sizes = [8, 32], strides = [1, 1]} : vector<8x128xf32> to vector<8x32xf32>
    %415 = arith.mulf %414, %400 : vector<8x32xf32>
    %416 = vector.extract_strided_slice %412 {offsets = [0, 0], sizes = [8, 32], strides = [1, 1]} : vector<8x128xf32> to vector<8x32xf32>
    %417 = vector.extract_strided_slice %413 {offsets = [0, 64], sizes = [8, 32], strides = [1, 1]} : vector<8x128xf32> to vector<8x32xf32>
    %418 = arith.mulf %416, %417 : vector<8x32xf32>
    %419 = arith.addf %415, %418 : vector<8x32xf32>
    %420 = vector.extract_strided_slice %412 {offsets = [0, 96], sizes = [8, 32], strides = [1, 1]} : vector<8x128xf32> to vector<8x32xf32>
    %421 = math.tanh %419 : vector<8x32xf32>
    %422 = arith.mulf %420, %421 : vector<8x32xf32>
    %c32_134 = arith.constant 32 : index
    %c0_135 = arith.constant 0 : index
    %423 = vector.load %arg24[%c32_134, %c0_135] : memref<128x32xf32, #tpu.memory_space<vmem>>, vector<8x32xf32>
    tpu.vector_store %arg24[%c32_134, %c0_135], %422 {strides = array<i32>} : memref<128x32xf32, #tpu.memory_space<vmem>>, vector<8x32xf32>,
    %c40_136 = arith.constant 40 : index
    %c0_137 = arith.constant 0 : index
    %424 = vector.load %arg23[%c40_136, %c0_137] : memref<128x128xf32, #tpu.memory_space<vmem>>, vector<8x128xf32>
    %cst_138 = arith.constant dense<0.000000e+00> : vector<8x128xf32>
    %425 = tpu.matmul %422, %326, %cst_138 {dimension_numbers = #tpu.dot_dimension_numbers<[1], [0], [0], [1], [0, 0, 1, 1], [], []>} : vector<8x32xf32>, vector<32x128xf32>, vector<8x128xf32> -> vector<8x128xf32>
    %426 = arith.addf %424, %425 : vector<8x128xf32>
    %427 = arith.negf %426 : vector<8x128xf32>
    %428 = math.exp %427 : vector<8x128xf32>
    %cst_139 = arith.constant 1.000000e+00 : f32
    %429 = vector.broadcast %cst_139 : f32 to vector<8x128xf32>
    %430 = arith.addf %429, %428 : vector<8x128xf32>
    %431 = arith.divf %429, %430 : vector<8x128xf32>
    %432 = math.tanh %426 : vector<8x128xf32>
    %433 = vector.extract_strided_slice %431 {offsets = [0, 32], sizes = [8, 32], strides = [1, 1]} : vector<8x128xf32> to vector<8x32xf32>
    %434 = arith.mulf %433, %419 : vector<8x32xf32>
    %435 = vector.extract_strided_slice %431 {offsets = [0, 0], sizes = [8, 32], strides = [1, 1]} : vector<8x128xf32> to vector<8x32xf32>
    %436 = vector.extract_strided_slice %432 {offsets = [0, 64], sizes = [8, 32], strides = [1, 1]} : vector<8x128xf32> to vector<8x32xf32>
    %437 = arith.mulf %435, %436 : vector<8x32xf32>
    %438 = arith.addf %434, %437 : vector<8x32xf32>
    %439 = vector.extract_strided_slice %431 {offsets = [0, 96], sizes = [8, 32], strides = [1, 1]} : vector<8x128xf32> to vector<8x32xf32>
    %440 = math.tanh %438 : vector<8x32xf32>
    %441 = arith.mulf %439, %440 : vector<8x32xf32>
    %c40_140 = arith.constant 40 : index
    %c0_141 = arith.constant 0 : index
    %442 = vector.load %arg24[%c40_140, %c0_141] : memref<128x32xf32, #tpu.memory_space<vmem>>, vector<8x32xf32>
    tpu.vector_store %arg24[%c40_140, %c0_141], %441 {strides = array<i32>} : memref<128x32xf32, #tpu.memory_space<vmem>>, vector<8x32xf32>,
    %c48_142 = arith.constant 48 : index
    %c0_143 = arith.constant 0 : index
    %443 = vector.load %arg23[%c48_142, %c0_143] : memref<128x128xf32, #tpu.memory_space<vmem>>, vector<8x128xf32>
    %cst_144 = arith.constant dense<0.000000e+00> : vector<8x128xf32>
    %444 = tpu.matmul %441, %326, %cst_144 {dimension_numbers = #tpu.dot_dimension_numbers<[1], [0], [0], [1], [0, 0, 1, 1], [], []>} : vector<8x32xf32>, vector<32x128xf32>, vector<8x128xf32> -> vector<8x128xf32>
    %445 = arith.addf %443, %444 : vector<8x128xf32>
    %446 = arith.negf %445 : vector<8x128xf32>
    %447 = math.exp %446 : vector<8x128xf32>
    %cst_145 = arith.constant 1.000000e+00 : f32
    %448 = vector.broadcast %cst_145 : f32 to vector<8x128xf32>
    %449 = arith.addf %448, %447 : vector<8x128xf32>
    %450 = arith.divf %448, %449 : vector<8x128xf32>
    %451 = math.tanh %445 : vector<8x128xf32>
    %452 = vector.extract_strided_slice %450 {offsets = [0, 32], sizes = [8, 32], strides = [1, 1]} : vector<8x128xf32> to vector<8x32xf32>
    %453 = arith.mulf %452, %438 : vector<8x32xf32>
    %454 = vector.extract_strided_slice %450 {offsets = [0, 0], sizes = [8, 32], strides = [1, 1]} : vector<8x128xf32> to vector<8x32xf32>
    %455 = vector.extract_strided_slice %451 {offsets = [0, 64], sizes = [8, 32], strides = [1, 1]} : vector<8x128xf32> to vector<8x32xf32>
    %456 = arith.mulf %454, %455 : vector<8x32xf32>
    %457 = arith.addf %453, %456 : vector<8x32xf32>
    %458 = vector.extract_strided_slice %450 {offsets = [0, 96], sizes = [8, 32], strides = [1, 1]} : vector<8x128xf32> to vector<8x32xf32>
    %459 = math.tanh %457 : vector<8x32xf32>
    %460 = arith.mulf %458, %459 : vector<8x32xf32>
    %c48_146 = arith.constant 48 : index
    %c0_147 = arith.constant 0 : index
    %461 = vector.load %arg24[%c48_146, %c0_147] : memref<128x32xf32, #tpu.memory_space<vmem>>, vector<8x32xf32>
    tpu.vector_store %arg24[%c48_146, %c0_147], %460 {strides = array<i32>} : memref<128x32xf32, #tpu.memory_space<vmem>>, vector<8x32xf32>,
    %c56_148 = arith.constant 56 : index
    %c0_149 = arith.constant 0 : index
    %462 = vector.load %arg23[%c56_148, %c0_149] : memref<128x128xf32, #tpu.memory_space<vmem>>, vector<8x128xf32>
    %cst_150 = arith.constant dense<0.000000e+00> : vector<8x128xf32>
    %463 = tpu.matmul %460, %326, %cst_150 {dimension_numbers = #tpu.dot_dimension_numbers<[1], [0], [0], [1], [0, 0, 1, 1], [], []>} : vector<8x32xf32>, vector<32x128xf32>, vector<8x128xf32> -> vector<8x128xf32>
    %464 = arith.addf %462, %463 : vector<8x128xf32>
    %465 = arith.negf %464 : vector<8x128xf32>
    %466 = math.exp %465 : vector<8x128xf32>
    %cst_151 = arith.constant 1.000000e+00 : f32
    %467 = vector.broadcast %cst_151 : f32 to vector<8x128xf32>
    %468 = arith.addf %467, %466 : vector<8x128xf32>
    %469 = arith.divf %467, %468 : vector<8x128xf32>
    %470 = math.tanh %464 : vector<8x128xf32>
    %471 = vector.extract_strided_slice %469 {offsets = [0, 32], sizes = [8, 32], strides = [1, 1]} : vector<8x128xf32> to vector<8x32xf32>
    %472 = arith.mulf %471, %457 : vector<8x32xf32>
    %473 = vector.extract_strided_slice %469 {offsets = [0, 0], sizes = [8, 32], strides = [1, 1]} : vector<8x128xf32> to vector<8x32xf32>
    %474 = vector.extract_strided_slice %470 {offsets = [0, 64], sizes = [8, 32], strides = [1, 1]} : vector<8x128xf32> to vector<8x32xf32>
    %475 = arith.mulf %473, %474 : vector<8x32xf32>
    %476 = arith.addf %472, %475 : vector<8x32xf32>
    %477 = vector.extract_strided_slice %469 {offsets = [0, 96], sizes = [8, 32], strides = [1, 1]} : vector<8x128xf32> to vector<8x32xf32>
    %478 = math.tanh %476 : vector<8x32xf32>
    %479 = arith.mulf %477, %478 : vector<8x32xf32>
    %c56_152 = arith.constant 56 : index
    %c0_153 = arith.constant 0 : index
    %480 = vector.load %arg24[%c56_152, %c0_153] : memref<128x32xf32, #tpu.memory_space<vmem>>, vector<8x32xf32>
    tpu.vector_store %arg24[%c56_152, %c0_153], %479 {strides = array<i32>} : memref<128x32xf32, #tpu.memory_space<vmem>>, vector<8x32xf32>,
    %c64_154 = arith.constant 64 : index
    %c0_155 = arith.constant 0 : index
    %481 = vector.load %arg23[%c64_154, %c0_155] : memref<128x128xf32, #tpu.memory_space<vmem>>, vector<8x128xf32>
    %cst_156 = arith.constant dense<0.000000e+00> : vector<8x128xf32>
    %482 = tpu.matmul %479, %326, %cst_156 {dimension_numbers = #tpu.dot_dimension_numbers<[1], [0], [0], [1], [0, 0, 1, 1], [], []>} : vector<8x32xf32>, vector<32x128xf32>, vector<8x128xf32> -> vector<8x128xf32>
    %483 = arith.addf %481, %482 : vector<8x128xf32>
    %484 = arith.negf %483 : vector<8x128xf32>
    %485 = math.exp %484 : vector<8x128xf32>
    %cst_157 = arith.constant 1.000000e+00 : f32
    %486 = vector.broadcast %cst_157 : f32 to vector<8x128xf32>
    %487 = arith.addf %486, %485 : vector<8x128xf32>
    %488 = arith.divf %486, %487 : vector<8x128xf32>
    %489 = math.tanh %483 : vector<8x128xf32>
    %490 = vector.extract_strided_slice %488 {offsets = [0, 32], sizes = [8, 32], strides = [1, 1]} : vector<8x128xf32> to vector<8x32xf32>
    %491 = arith.mulf %490, %476 : vector<8x32xf32>
    %492 = vector.extract_strided_slice %488 {offsets = [0, 0], sizes = [8, 32], strides = [1, 1]} : vector<8x128xf32> to vector<8x32xf32>
    %493 = vector.extract_strided_slice %489 {offsets = [0, 64], sizes = [8, 32], strides = [1, 1]} : vector<8x128xf32> to vector<8x32xf32>
    %494 = arith.mulf %492, %493 : vector<8x32xf32>
    %495 = arith.addf %491, %494 : vector<8x32xf32>
    %496 = vector.extract_strided_slice %488 {offsets = [0, 96], sizes = [8, 32], strides = [1, 1]} : vector<8x128xf32> to vector<8x32xf32>
    %497 = math.tanh %495 : vector<8x32xf32>
    %498 = arith.mulf %496, %497 : vector<8x32xf32>
    %c64_158 = arith.constant 64 : index
    %c0_159 = arith.constant 0 : index
    %499 = vector.load %arg24[%c64_158, %c0_159] : memref<128x32xf32, #tpu.memory_space<vmem>>, vector<8x32xf32>
    tpu.vector_store %arg24[%c64_158, %c0_159], %498 {strides = array<i32>} : memref<128x32xf32, #tpu.memory_space<vmem>>, vector<8x32xf32>,
    %c72_160 = arith.constant 72 : index
    %c0_161 = arith.constant 0 : index
    %500 = vector.load %arg23[%c72_160, %c0_161] : memref<128x128xf32, #tpu.memory_space<vmem>>, vector<8x128xf32>
    %cst_162 = arith.constant dense<0.000000e+00> : vector<8x128xf32>
    %501 = tpu.matmul %498, %326, %cst_162 {dimension_numbers = #tpu.dot_dimension_numbers<[1], [0], [0], [1], [0, 0, 1, 1], [], []>} : vector<8x32xf32>, vector<32x128xf32>, vector<8x128xf32> -> vector<8x128xf32>
    %502 = arith.addf %500, %501 : vector<8x128xf32>
    %503 = arith.negf %502 : vector<8x128xf32>
    %504 = math.exp %503 : vector<8x128xf32>
    %cst_163 = arith.constant 1.000000e+00 : f32
    %505 = vector.broadcast %cst_163 : f32 to vector<8x128xf32>
    %506 = arith.addf %505, %504 : vector<8x128xf32>
    %507 = arith.divf %505, %506 : vector<8x128xf32>
    %508 = math.tanh %502 : vector<8x128xf32>
    %509 = vector.extract_strided_slice %507 {offsets = [0, 32], sizes = [8, 32], strides = [1, 1]} : vector<8x128xf32> to vector<8x32xf32>
    %510 = arith.mulf %509, %495 : vector<8x32xf32>
    %511 = vector.extract_strided_slice %507 {offsets = [0, 0], sizes = [8, 32], strides = [1, 1]} : vector<8x128xf32> to vector<8x32xf32>
    %512 = vector.extract_strided_slice %508 {offsets = [0, 64], sizes = [8, 32], strides = [1, 1]} : vector<8x128xf32> to vector<8x32xf32>
    %513 = arith.mulf %511, %512 : vector<8x32xf32>
    %514 = arith.addf %510, %513 : vector<8x32xf32>
    %515 = vector.extract_strided_slice %507 {offsets = [0, 96], sizes = [8, 32], strides = [1, 1]} : vector<8x128xf32> to vector<8x32xf32>
    %516 = math.tanh %514 : vector<8x32xf32>
    %517 = arith.mulf %515, %516 : vector<8x32xf32>
    %c72_164 = arith.constant 72 : index
    %c0_165 = arith.constant 0 : index
    %518 = vector.load %arg24[%c72_164, %c0_165] : memref<128x32xf32, #tpu.memory_space<vmem>>, vector<8x32xf32>
    tpu.vector_store %arg24[%c72_164, %c0_165], %517 {strides = array<i32>} : memref<128x32xf32, #tpu.memory_space<vmem>>, vector<8x32xf32>,
    %c80_166 = arith.constant 80 : index
    %c0_167 = arith.constant 0 : index
    %519 = vector.load %arg23[%c80_166, %c0_167] : memref<128x128xf32, #tpu.memory_space<vmem>>, vector<8x128xf32>
    %cst_168 = arith.constant dense<0.000000e+00> : vector<8x128xf32>
    %520 = tpu.matmul %517, %326, %cst_168 {dimension_numbers = #tpu.dot_dimension_numbers<[1], [0], [0], [1], [0, 0, 1, 1], [], []>} : vector<8x32xf32>, vector<32x128xf32>, vector<8x128xf32> -> vector<8x128xf32>
    %521 = arith.addf %519, %520 : vector<8x128xf32>
    %522 = arith.negf %521 : vector<8x128xf32>
    %523 = math.exp %522 : vector<8x128xf32>
    %cst_169 = arith.constant 1.000000e+00 : f32
    %524 = vector.broadcast %cst_169 : f32 to vector<8x128xf32>
    %525 = arith.addf %524, %523 : vector<8x128xf32>
    %526 = arith.divf %524, %525 : vector<8x128xf32>
    %527 = math.tanh %521 : vector<8x128xf32>
    %528 = vector.extract_strided_slice %526 {offsets = [0, 32], sizes = [8, 32], strides = [1, 1]} : vector<8x128xf32> to vector<8x32xf32>
    %529 = arith.mulf %528, %514 : vector<8x32xf32>
    %530 = vector.extract_strided_slice %526 {offsets = [0, 0], sizes = [8, 32], strides = [1, 1]} : vector<8x128xf32> to vector<8x32xf32>
    %531 = vector.extract_strided_slice %527 {offsets = [0, 64], sizes = [8, 32], strides = [1, 1]} : vector<8x128xf32> to vector<8x32xf32>
    %532 = arith.mulf %530, %531 : vector<8x32xf32>
    %533 = arith.addf %529, %532 : vector<8x32xf32>
    %534 = vector.extract_strided_slice %526 {offsets = [0, 96], sizes = [8, 32], strides = [1, 1]} : vector<8x128xf32> to vector<8x32xf32>
    %535 = math.tanh %533 : vector<8x32xf32>
    %536 = arith.mulf %534, %535 : vector<8x32xf32>
    %c80_170 = arith.constant 80 : index
    %c0_171 = arith.constant 0 : index
    %537 = vector.load %arg24[%c80_170, %c0_171] : memref<128x32xf32, #tpu.memory_space<vmem>>, vector<8x32xf32>
    tpu.vector_store %arg24[%c80_170, %c0_171], %536 {strides = array<i32>} : memref<128x32xf32, #tpu.memory_space<vmem>>, vector<8x32xf32>,
    %c88_172 = arith.constant 88 : index
    %c0_173 = arith.constant 0 : index
    %538 = vector.load %arg23[%c88_172, %c0_173] : memref<128x128xf32, #tpu.memory_space<vmem>>, vector<8x128xf32>
    %cst_174 = arith.constant dense<0.000000e+00> : vector<8x128xf32>
    %539 = tpu.matmul %536, %326, %cst_174 {dimension_numbers = #tpu.dot_dimension_numbers<[1], [0], [0], [1], [0, 0, 1, 1], [], []>} : vector<8x32xf32>, vector<32x128xf32>, vector<8x128xf32> -> vector<8x128xf32>
    %540 = arith.addf %538, %539 : vector<8x128xf32>
    %541 = arith.negf %540 : vector<8x128xf32>
    %542 = math.exp %541 : vector<8x128xf32>
    %cst_175 = arith.constant 1.000000e+00 : f32
    %543 = vector.broadcast %cst_175 : f32 to vector<8x128xf32>
    %544 = arith.addf %543, %542 : vector<8x128xf32>
    %545 = arith.divf %543, %544 : vector<8x128xf32>
    %546 = math.tanh %540 : vector<8x128xf32>
    %547 = vector.extract_strided_slice %545 {offsets = [0, 32], sizes = [8, 32], strides = [1, 1]} : vector<8x128xf32> to vector<8x32xf32>
    %548 = arith.mulf %547, %533 : vector<8x32xf32>
    %549 = vector.extract_strided_slice %545 {offsets = [0, 0], sizes = [8, 32], strides = [1, 1]} : vector<8x128xf32> to vector<8x32xf32>
    %550 = vector.extract_strided_slice %546 {offsets = [0, 64], sizes = [8, 32], strides = [1, 1]} : vector<8x128xf32> to vector<8x32xf32>
    %551 = arith.mulf %549, %550 : vector<8x32xf32>
    %552 = arith.addf %548, %551 : vector<8x32xf32>
    %553 = vector.extract_strided_slice %545 {offsets = [0, 96], sizes = [8, 32], strides = [1, 1]} : vector<8x128xf32> to vector<8x32xf32>
    %554 = math.tanh %552 : vector<8x32xf32>
    %555 = arith.mulf %553, %554 : vector<8x32xf32>
    %c88_176 = arith.constant 88 : index
    %c0_177 = arith.constant 0 : index
    %556 = vector.load %arg24[%c88_176, %c0_177] : memref<128x32xf32, #tpu.memory_space<vmem>>, vector<8x32xf32>
    tpu.vector_store %arg24[%c88_176, %c0_177], %555 {strides = array<i32>} : memref<128x32xf32, #tpu.memory_space<vmem>>, vector<8x32xf32>,
    %c96_178 = arith.constant 96 : index
    %c0_179 = arith.constant 0 : index
    %557 = vector.load %arg23[%c96_178, %c0_179] : memref<128x128xf32, #tpu.memory_space<vmem>>, vector<8x128xf32>
    %cst_180 = arith.constant dense<0.000000e+00> : vector<8x128xf32>
    %558 = tpu.matmul %555, %326, %cst_180 {dimension_numbers = #tpu.dot_dimension_numbers<[1], [0], [0], [1], [0, 0, 1, 1], [], []>} : vector<8x32xf32>, vector<32x128xf32>, vector<8x128xf32> -> vector<8x128xf32>
    %559 = arith.addf %557, %558 : vector<8x128xf32>
    %560 = arith.negf %559 : vector<8x128xf32>
    %561 = math.exp %560 : vector<8x128xf32>
    %cst_181 = arith.constant 1.000000e+00 : f32
    %562 = vector.broadcast %cst_181 : f32 to vector<8x128xf32>
    %563 = arith.addf %562, %561 : vector<8x128xf32>
    %564 = arith.divf %562, %563 : vector<8x128xf32>
    %565 = math.tanh %559 : vector<8x128xf32>
    %566 = vector.extract_strided_slice %564 {offsets = [0, 32], sizes = [8, 32], strides = [1, 1]} : vector<8x128xf32> to vector<8x32xf32>
    %567 = arith.mulf %566, %552 : vector<8x32xf32>
    %568 = vector.extract_strided_slice %564 {offsets = [0, 0], sizes = [8, 32], strides = [1, 1]} : vector<8x128xf32> to vector<8x32xf32>
    %569 = vector.extract_strided_slice %565 {offsets = [0, 64], sizes = [8, 32], strides = [1, 1]} : vector<8x128xf32> to vector<8x32xf32>
    %570 = arith.mulf %568, %569 : vector<8x32xf32>
    %571 = arith.addf %567, %570 : vector<8x32xf32>
    %572 = vector.extract_strided_slice %564 {offsets = [0, 96], sizes = [8, 32], strides = [1, 1]} : vector<8x128xf32> to vector<8x32xf32>
    %573 = math.tanh %571 : vector<8x32xf32>
    %574 = arith.mulf %572, %573 : vector<8x32xf32>
    %c96_182 = arith.constant 96 : index
    %c0_183 = arith.constant 0 : index
    %575 = vector.load %arg24[%c96_182, %c0_183] : memref<128x32xf32, #tpu.memory_space<vmem>>, vector<8x32xf32>
    tpu.vector_store %arg24[%c96_182, %c0_183], %574 {strides = array<i32>} : memref<128x32xf32, #tpu.memory_space<vmem>>, vector<8x32xf32>,
    %c104_184 = arith.constant 104 : index
    %c0_185 = arith.constant 0 : index
    %576 = vector.load %arg23[%c104_184, %c0_185] : memref<128x128xf32, #tpu.memory_space<vmem>>, vector<8x128xf32>
    %cst_186 = arith.constant dense<0.000000e+00> : vector<8x128xf32>
    %577 = tpu.matmul %574, %326, %cst_186 {dimension_numbers = #tpu.dot_dimension_numbers<[1], [0], [0], [1], [0, 0, 1, 1], [], []>} : vector<8x32xf32>, vector<32x128xf32>, vector<8x128xf32> -> vector<8x128xf32>
    %578 = arith.addf %576, %577 : vector<8x128xf32>
    %579 = arith.negf %578 : vector<8x128xf32>
    %580 = math.exp %579 : vector<8x128xf32>
    %cst_187 = arith.constant 1.000000e+00 : f32
    %581 = vector.broadcast %cst_187 : f32 to vector<8x128xf32>
    %582 = arith.addf %581, %580 : vector<8x128xf32>
    %583 = arith.divf %581, %582 : vector<8x128xf32>
    %584 = math.tanh %578 : vector<8x128xf32>
    %585 = vector.extract_strided_slice %583 {offsets = [0, 32], sizes = [8, 32], strides = [1, 1]} : vector<8x128xf32> to vector<8x32xf32>
    %586 = arith.mulf %585, %571 : vector<8x32xf32>
    %587 = vector.extract_strided_slice %583 {offsets = [0, 0], sizes = [8, 32], strides = [1, 1]} : vector<8x128xf32> to vector<8x32xf32>
    %588 = vector.extract_strided_slice %584 {offsets = [0, 64], sizes = [8, 32], strides = [1, 1]} : vector<8x128xf32> to vector<8x32xf32>
    %589 = arith.mulf %587, %588 : vector<8x32xf32>
    %590 = arith.addf %586, %589 : vector<8x32xf32>
    %591 = vector.extract_strided_slice %583 {offsets = [0, 96], sizes = [8, 32], strides = [1, 1]} : vector<8x128xf32> to vector<8x32xf32>
    %592 = math.tanh %590 : vector<8x32xf32>
    %593 = arith.mulf %591, %592 : vector<8x32xf32>
    %c104_188 = arith.constant 104 : index
    %c0_189 = arith.constant 0 : index
    %594 = vector.load %arg24[%c104_188, %c0_189] : memref<128x32xf32, #tpu.memory_space<vmem>>, vector<8x32xf32>
    tpu.vector_store %arg24[%c104_188, %c0_189], %593 {strides = array<i32>} : memref<128x32xf32, #tpu.memory_space<vmem>>, vector<8x32xf32>,
    %c112_190 = arith.constant 112 : index
    %c0_191 = arith.constant 0 : index
    %595 = vector.load %arg23[%c112_190, %c0_191] : memref<128x128xf32, #tpu.memory_space<vmem>>, vector<8x128xf32>
    %cst_192 = arith.constant dense<0.000000e+00> : vector<8x128xf32>
    %596 = tpu.matmul %593, %326, %cst_192 {dimension_numbers = #tpu.dot_dimension_numbers<[1], [0], [0], [1], [0, 0, 1, 1], [], []>} : vector<8x32xf32>, vector<32x128xf32>, vector<8x128xf32> -> vector<8x128xf32>
    %597 = arith.addf %595, %596 : vector<8x128xf32>
    %598 = arith.negf %597 : vector<8x128xf32>
    %599 = math.exp %598 : vector<8x128xf32>
    %cst_193 = arith.constant 1.000000e+00 : f32
    %600 = vector.broadcast %cst_193 : f32 to vector<8x128xf32>
    %601 = arith.addf %600, %599 : vector<8x128xf32>
    %602 = arith.divf %600, %601 : vector<8x128xf32>
    %603 = math.tanh %597 : vector<8x128xf32>
    %604 = vector.extract_strided_slice %602 {offsets = [0, 32], sizes = [8, 32], strides = [1, 1]} : vector<8x128xf32> to vector<8x32xf32>
    %605 = arith.mulf %604, %590 : vector<8x32xf32>
    %606 = vector.extract_strided_slice %602 {offsets = [0, 0], sizes = [8, 32], strides = [1, 1]} : vector<8x128xf32> to vector<8x32xf32>
    %607 = vector.extract_strided_slice %603 {offsets = [0, 64], sizes = [8, 32], strides = [1, 1]} : vector<8x128xf32> to vector<8x32xf32>
    %608 = arith.mulf %606, %607 : vector<8x32xf32>
    %609 = arith.addf %605, %608 : vector<8x32xf32>
    %610 = vector.extract_strided_slice %602 {offsets = [0, 96], sizes = [8, 32], strides = [1, 1]} : vector<8x128xf32> to vector<8x32xf32>
    %611 = math.tanh %609 : vector<8x32xf32>
    %612 = arith.mulf %610, %611 : vector<8x32xf32>
    %c112_194 = arith.constant 112 : index
    %c0_195 = arith.constant 0 : index
    %613 = vector.load %arg24[%c112_194, %c0_195] : memref<128x32xf32, #tpu.memory_space<vmem>>, vector<8x32xf32>
    tpu.vector_store %arg24[%c112_194, %c0_195], %612 {strides = array<i32>} : memref<128x32xf32, #tpu.memory_space<vmem>>, vector<8x32xf32>,
    %c120_196 = arith.constant 120 : index
    %c0_197 = arith.constant 0 : index
    %614 = vector.load %arg23[%c120_196, %c0_197] : memref<128x128xf32, #tpu.memory_space<vmem>>, vector<8x128xf32>
    %cst_198 = arith.constant dense<0.000000e+00> : vector<8x128xf32>
    %615 = tpu.matmul %612, %326, %cst_198 {dimension_numbers = #tpu.dot_dimension_numbers<[1], [0], [0], [1], [0, 0, 1, 1], [], []>} : vector<8x32xf32>, vector<32x128xf32>, vector<8x128xf32> -> vector<8x128xf32>
    %616 = arith.addf %614, %615 : vector<8x128xf32>
    %617 = arith.negf %616 : vector<8x128xf32>
    %618 = math.exp %617 : vector<8x128xf32>
    %cst_199 = arith.constant 1.000000e+00 : f32
    %619 = vector.broadcast %cst_199 : f32 to vector<8x128xf32>
    %620 = arith.addf %619, %618 : vector<8x128xf32>
    %621 = arith.divf %619, %620 : vector<8x128xf32>
    %622 = math.tanh %616 : vector<8x128xf32>
    %623 = vector.extract_strided_slice %621 {offsets = [0, 32], sizes = [8, 32], strides = [1, 1]} : vector<8x128xf32> to vector<8x32xf32>
    %624 = arith.mulf %623, %609 : vector<8x32xf32>
    %625 = vector.extract_strided_slice %621 {offsets = [0, 0], sizes = [8, 32], strides = [1, 1]} : vector<8x128xf32> to vector<8x32xf32>
    %626 = vector.extract_strided_slice %622 {offsets = [0, 64], sizes = [8, 32], strides = [1, 1]} : vector<8x128xf32> to vector<8x32xf32>
    %627 = arith.mulf %625, %626 : vector<8x32xf32>
    %628 = arith.addf %624, %627 : vector<8x32xf32>
    %629 = vector.extract_strided_slice %621 {offsets = [0, 96], sizes = [8, 32], strides = [1, 1]} : vector<8x128xf32> to vector<8x32xf32>
    %630 = math.tanh %628 : vector<8x32xf32>
    %631 = arith.mulf %629, %630 : vector<8x32xf32>
    %c120_200 = arith.constant 120 : index
    %c0_201 = arith.constant 0 : index
    %632 = vector.load %arg24[%c120_200, %c0_201] : memref<128x32xf32, #tpu.memory_space<vmem>>, vector<8x32xf32>
    tpu.vector_store %arg24[%c120_200, %c0_201], %631 {strides = array<i32>} : memref<128x32xf32, #tpu.memory_space<vmem>>, vector<8x32xf32>,
    %c0_202 = arith.constant 0 : index
    %c0_203 = arith.constant 0 : index
    %633 = vector.load %arg24[%c0_202, %c0_203] : memref<128x32xf32, #tpu.memory_space<vmem>>, vector<128x32xf32>
    %c1_204 = arith.constant 1 : index
    %c0_205 = arith.constant 0 : index
    %c0_206 = arith.constant 0 : index
    %634 = vector.load %arg2[%c1_204, %c0_205, %c0_206] : memref<2x32x128xf32, #tpu.memory_space<vmem>>, vector<1x32x128xf32>
    %635 = vector.shape_cast %634 : vector<1x32x128xf32> to vector<32x128xf32>
    %cst_207 = arith.constant dense<0.000000e+00> : vector<128x128xf32>
    %636 = tpu.matmul %633, %635, %cst_207 {dimension_numbers = #tpu.dot_dimension_numbers<[1], [0], [0], [1], [0, 0, 1, 1], [], []>} : vector<128x32xf32>, vector<32x128xf32>, vector<128x128xf32> -> vector<128x128xf32>
    %c2 = arith.constant 2 : index
    %c0_208 = arith.constant 0 : index
    %637 = vector.load %arg4[%c2, %c0_208] : memref<3x128xf32, #tpu.memory_space<vmem>>, vector<1x128xf32>
    %638 = vector.broadcast %637 : vector<1x128xf32> to vector<128x128xf32>
    %639 = arith.addf %636, %638 : vector<128x128xf32>
    %c0_209 = arith.constant 0 : index
    %c0_210 = arith.constant 0 : index
    %640 = vector.load %arg23[%c0_209, %c0_210] : memref<128x128xf32, #tpu.memory_space<vmem>>, vector<128x128xf32>
    tpu.vector_store %arg23[%c0_209, %c0_210], %639 {strides = array<i32>} : memref<128x128xf32, #tpu.memory_space<vmem>>, vector<128x128xf32>,
    %c2_211 = arith.constant 2 : index
    %c0_212 = arith.constant 0 : index
    %c0_213 = arith.constant 0 : index
    %641 = vector.load %arg3[%c2_211, %c0_212, %c0_213] : memref<3x32x128xf32, #tpu.memory_space<vmem>>, vector<1x32x128xf32>
    %642 = vector.shape_cast %641 : vector<1x32x128xf32> to vector<32x128xf32>
    %cst_214 = arith.constant 0.000000e+00 : f32
    %643 = vector.broadcast %cst_214 : f32 to vector<8x32xf32>
    %cst_215 = arith.constant 0.000000e+00 : f32
    %644 = vector.broadcast %cst_215 : f32 to vector<8x32xf32>
    %cst_216 = arith.constant 0.000000e+00 : f32
    %645 = vector.broadcast %cst_216 : f32 to vector<8x32xf32>
    %c0_217 = arith.constant 0 : index
    %c0_218 = arith.constant 0 : index
    %646 = vector.load %arg23[%c0_217, %c0_218] : memref<128x128xf32, #tpu.memory_space<vmem>>, vector<8x128xf32>
    %cst_219 = arith.constant dense<0.000000e+00> : vector<8x128xf32>
    %647 = tpu.matmul %643, %642, %cst_219 {dimension_numbers = #tpu.dot_dimension_numbers<[1], [0], [0], [1], [0, 0, 1, 1], [], []>} : vector<8x32xf32>, vector<32x128xf32>, vector<8x128xf32> -> vector<8x128xf32>
    %648 = arith.addf %646, %647 : vector<8x128xf32>
    %649 = arith.negf %648 : vector<8x128xf32>
    %650 = math.exp %649 : vector<8x128xf32>
    %cst_220 = arith.constant 1.000000e+00 : f32
    %651 = vector.broadcast %cst_220 : f32 to vector<8x128xf32>
    %652 = arith.addf %651, %650 : vector<8x128xf32>
    %653 = arith.divf %651, %652 : vector<8x128xf32>
    %654 = math.tanh %648 : vector<8x128xf32>
    %655 = vector.extract_strided_slice %653 {offsets = [0, 32], sizes = [8, 32], strides = [1, 1]} : vector<8x128xf32> to vector<8x32xf32>
    %656 = arith.mulf %655, %644 : vector<8x32xf32>
    %657 = vector.extract_strided_slice %653 {offsets = [0, 0], sizes = [8, 32], strides = [1, 1]} : vector<8x128xf32> to vector<8x32xf32>
    %658 = vector.extract_strided_slice %654 {offsets = [0, 64], sizes = [8, 32], strides = [1, 1]} : vector<8x128xf32> to vector<8x32xf32>
    %659 = arith.mulf %657, %658 : vector<8x32xf32>
    %660 = arith.addf %656, %659 : vector<8x32xf32>
    %661 = vector.extract_strided_slice %653 {offsets = [0, 96], sizes = [8, 32], strides = [1, 1]} : vector<8x128xf32> to vector<8x32xf32>
    %662 = math.tanh %660 : vector<8x32xf32>
    %663 = arith.mulf %661, %662 : vector<8x32xf32>
    %cst_221 = arith.constant 0.000000e+00 : f32
    %664 = vector.broadcast %cst_221 : f32 to vector<8x32xf32>
    %665 = arith.maximumf %663, %664 : vector<8x32xf32>
    %666 = arith.addf %645, %665 : vector<8x32xf32>
    %c8_222 = arith.constant 8 : index
    %c0_223 = arith.constant 0 : index
    %667 = vector.load %arg23[%c8_222, %c0_223] : memref<128x128xf32, #tpu.memory_space<vmem>>, vector<8x128xf32>
    %cst_224 = arith.constant dense<0.000000e+00> : vector<8x128xf32>
    %668 = tpu.matmul %663, %642, %cst_224 {dimension_numbers = #tpu.dot_dimension_numbers<[1], [0], [0], [1], [0, 0, 1, 1], [], []>} : vector<8x32xf32>, vector<32x128xf32>, vector<8x128xf32> -> vector<8x128xf32>
    %669 = arith.addf %667, %668 : vector<8x128xf32>
    %670 = arith.negf %669 : vector<8x128xf32>
    %671 = math.exp %670 : vector<8x128xf32>
    %cst_225 = arith.constant 1.000000e+00 : f32
    %672 = vector.broadcast %cst_225 : f32 to vector<8x128xf32>
    %673 = arith.addf %672, %671 : vector<8x128xf32>
    %674 = arith.divf %672, %673 : vector<8x128xf32>
    %675 = math.tanh %669 : vector<8x128xf32>
    %676 = vector.extract_strided_slice %674 {offsets = [0, 32], sizes = [8, 32], strides = [1, 1]} : vector<8x128xf32> to vector<8x32xf32>
    %677 = arith.mulf %676, %660 : vector<8x32xf32>
    %678 = vector.extract_strided_slice %674 {offsets = [0, 0], sizes = [8, 32], strides = [1, 1]} : vector<8x128xf32> to vector<8x32xf32>
    %679 = vector.extract_strided_slice %675 {offsets = [0, 64], sizes = [8, 32], strides = [1, 1]} : vector<8x128xf32> to vector<8x32xf32>
    %680 = arith.mulf %678, %679 : vector<8x32xf32>
    %681 = arith.addf %677, %680 : vector<8x32xf32>
    %682 = vector.extract_strided_slice %674 {offsets = [0, 96], sizes = [8, 32], strides = [1, 1]} : vector<8x128xf32> to vector<8x32xf32>
    %683 = math.tanh %681 : vector<8x32xf32>
    %684 = arith.mulf %682, %683 : vector<8x32xf32>
    %cst_226 = arith.constant 0.000000e+00 : f32
    %685 = vector.broadcast %cst_226 : f32 to vector<8x32xf32>
    %686 = arith.maximumf %684, %685 : vector<8x32xf32>
    %687 = arith.addf %666, %686 : vector<8x32xf32>
    %c16_227 = arith.constant 16 : index
    %c0_228 = arith.constant 0 : index
    %688 = vector.load %arg23[%c16_227, %c0_228] : memref<128x128xf32, #tpu.memory_space<vmem>>, vector<8x128xf32>
    %cst_229 = arith.constant dense<0.000000e+00> : vector<8x128xf32>
    %689 = tpu.matmul %684, %642, %cst_229 {dimension_numbers = #tpu.dot_dimension_numbers<[1], [0], [0], [1], [0, 0, 1, 1], [], []>} : vector<8x32xf32>, vector<32x128xf32>, vector<8x128xf32> -> vector<8x128xf32>
    %690 = arith.addf %688, %689 : vector<8x128xf32>
    %691 = arith.negf %690 : vector<8x128xf32>
    %692 = math.exp %691 : vector<8x128xf32>
    %cst_230 = arith.constant 1.000000e+00 : f32
    %693 = vector.broadcast %cst_230 : f32 to vector<8x128xf32>
    %694 = arith.addf %693, %692 : vector<8x128xf32>
    %695 = arith.divf %693, %694 : vector<8x128xf32>
    %696 = math.tanh %690 : vector<8x128xf32>
    %697 = vector.extract_strided_slice %695 {offsets = [0, 32], sizes = [8, 32], strides = [1, 1]} : vector<8x128xf32> to vector<8x32xf32>
    %698 = arith.mulf %697, %681 : vector<8x32xf32>
    %699 = vector.extract_strided_slice %695 {offsets = [0, 0], sizes = [8, 32], strides = [1, 1]} : vector<8x128xf32> to vector<8x32xf32>
    %700 = vector.extract_strided_slice %696 {offsets = [0, 64], sizes = [8, 32], strides = [1, 1]} : vector<8x128xf32> to vector<8x32xf32>
    %701 = arith.mulf %699, %700 : vector<8x32xf32>
    %702 = arith.addf %698, %701 : vector<8x32xf32>
    %703 = vector.extract_strided_slice %695 {offsets = [0, 96], sizes = [8, 32], strides = [1, 1]} : vector<8x128xf32> to vector<8x32xf32>
    %704 = math.tanh %702 : vector<8x32xf32>
    %705 = arith.mulf %703, %704 : vector<8x32xf32>
    %cst_231 = arith.constant 0.000000e+00 : f32
    %706 = vector.broadcast %cst_231 : f32 to vector<8x32xf32>
    %707 = arith.maximumf %705, %706 : vector<8x32xf32>
    %708 = arith.addf %687, %707 : vector<8x32xf32>
    %c24_232 = arith.constant 24 : index
    %c0_233 = arith.constant 0 : index
    %709 = vector.load %arg23[%c24_232, %c0_233] : memref<128x128xf32, #tpu.memory_space<vmem>>, vector<8x128xf32>
    %cst_234 = arith.constant dense<0.000000e+00> : vector<8x128xf32>
    %710 = tpu.matmul %705, %642, %cst_234 {dimension_numbers = #tpu.dot_dimension_numbers<[1], [0], [0], [1], [0, 0, 1, 1], [], []>} : vector<8x32xf32>, vector<32x128xf32>, vector<8x128xf32> -> vector<8x128xf32>
    %711 = arith.addf %709, %710 : vector<8x128xf32>
    %712 = arith.negf %711 : vector<8x128xf32>
    %713 = math.exp %712 : vector<8x128xf32>
    %cst_235 = arith.constant 1.000000e+00 : f32
    %714 = vector.broadcast %cst_235 : f32 to vector<8x128xf32>
    %715 = arith.addf %714, %713 : vector<8x128xf32>
    %716 = arith.divf %714, %715 : vector<8x128xf32>
    %717 = math.tanh %711 : vector<8x128xf32>
    %718 = vector.extract_strided_slice %716 {offsets = [0, 32], sizes = [8, 32], strides = [1, 1]} : vector<8x128xf32> to vector<8x32xf32>
    %719 = arith.mulf %718, %702 : vector<8x32xf32>
    %720 = vector.extract_strided_slice %716 {offsets = [0, 0], sizes = [8, 32], strides = [1, 1]} : vector<8x128xf32> to vector<8x32xf32>
    %721 = vector.extract_strided_slice %717 {offsets = [0, 64], sizes = [8, 32], strides = [1, 1]} : vector<8x128xf32> to vector<8x32xf32>
    %722 = arith.mulf %720, %721 : vector<8x32xf32>
    %723 = arith.addf %719, %722 : vector<8x32xf32>
    %724 = vector.extract_strided_slice %716 {offsets = [0, 96], sizes = [8, 32], strides = [1, 1]} : vector<8x128xf32> to vector<8x32xf32>
    %725 = math.tanh %723 : vector<8x32xf32>
    %726 = arith.mulf %724, %725 : vector<8x32xf32>
    %cst_236 = arith.constant 0.000000e+00 : f32
    %727 = vector.broadcast %cst_236 : f32 to vector<8x32xf32>
    %728 = arith.maximumf %726, %727 : vector<8x32xf32>
    %729 = arith.addf %708, %728 : vector<8x32xf32>
    %c32_237 = arith.constant 32 : index
    %c0_238 = arith.constant 0 : index
    %730 = vector.load %arg23[%c32_237, %c0_238] : memref<128x128xf32, #tpu.memory_space<vmem>>, vector<8x128xf32>
    %cst_239 = arith.constant dense<0.000000e+00> : vector<8x128xf32>
    %731 = tpu.matmul %726, %642, %cst_239 {dimension_numbers = #tpu.dot_dimension_numbers<[1], [0], [0], [1], [0, 0, 1, 1], [], []>} : vector<8x32xf32>, vector<32x128xf32>, vector<8x128xf32> -> vector<8x128xf32>
    %732 = arith.addf %730, %731 : vector<8x128xf32>
    %733 = arith.negf %732 : vector<8x128xf32>
    %734 = math.exp %733 : vector<8x128xf32>
    %cst_240 = arith.constant 1.000000e+00 : f32
    %735 = vector.broadcast %cst_240 : f32 to vector<8x128xf32>
    %736 = arith.addf %735, %734 : vector<8x128xf32>
    %737 = arith.divf %735, %736 : vector<8x128xf32>
    %738 = math.tanh %732 : vector<8x128xf32>
    %739 = vector.extract_strided_slice %737 {offsets = [0, 32], sizes = [8, 32], strides = [1, 1]} : vector<8x128xf32> to vector<8x32xf32>
    %740 = arith.mulf %739, %723 : vector<8x32xf32>
    %741 = vector.extract_strided_slice %737 {offsets = [0, 0], sizes = [8, 32], strides = [1, 1]} : vector<8x128xf32> to vector<8x32xf32>
    %742 = vector.extract_strided_slice %738 {offsets = [0, 64], sizes = [8, 32], strides = [1, 1]} : vector<8x128xf32> to vector<8x32xf32>
    %743 = arith.mulf %741, %742 : vector<8x32xf32>
    %744 = arith.addf %740, %743 : vector<8x32xf32>
    %745 = vector.extract_strided_slice %737 {offsets = [0, 96], sizes = [8, 32], strides = [1, 1]} : vector<8x128xf32> to vector<8x32xf32>
    %746 = math.tanh %744 : vector<8x32xf32>
    %747 = arith.mulf %745, %746 : vector<8x32xf32>
    %cst_241 = arith.constant 0.000000e+00 : f32
    %748 = vector.broadcast %cst_241 : f32 to vector<8x32xf32>
    %749 = arith.maximumf %747, %748 : vector<8x32xf32>
    %750 = arith.addf %729, %749 : vector<8x32xf32>
    %c40_242 = arith.constant 40 : index
    %c0_243 = arith.constant 0 : index
    %751 = vector.load %arg23[%c40_242, %c0_243] : memref<128x128xf32, #tpu.memory_space<vmem>>, vector<8x128xf32>
    %cst_244 = arith.constant dense<0.000000e+00> : vector<8x128xf32>
    %752 = tpu.matmul %747, %642, %cst_244 {dimension_numbers = #tpu.dot_dimension_numbers<[1], [0], [0], [1], [0, 0, 1, 1], [], []>} : vector<8x32xf32>, vector<32x128xf32>, vector<8x128xf32> -> vector<8x128xf32>
    %753 = arith.addf %751, %752 : vector<8x128xf32>
    %754 = arith.negf %753 : vector<8x128xf32>
    %755 = math.exp %754 : vector<8x128xf32>
    %cst_245 = arith.constant 1.000000e+00 : f32
    %756 = vector.broadcast %cst_245 : f32 to vector<8x128xf32>
    %757 = arith.addf %756, %755 : vector<8x128xf32>
    %758 = arith.divf %756, %757 : vector<8x128xf32>
    %759 = math.tanh %753 : vector<8x128xf32>
    %760 = vector.extract_strided_slice %758 {offsets = [0, 32], sizes = [8, 32], strides = [1, 1]} : vector<8x128xf32> to vector<8x32xf32>
    %761 = arith.mulf %760, %744 : vector<8x32xf32>
    %762 = vector.extract_strided_slice %758 {offsets = [0, 0], sizes = [8, 32], strides = [1, 1]} : vector<8x128xf32> to vector<8x32xf32>
    %763 = vector.extract_strided_slice %759 {offsets = [0, 64], sizes = [8, 32], strides = [1, 1]} : vector<8x128xf32> to vector<8x32xf32>
    %764 = arith.mulf %762, %763 : vector<8x32xf32>
    %765 = arith.addf %761, %764 : vector<8x32xf32>
    %766 = vector.extract_strided_slice %758 {offsets = [0, 96], sizes = [8, 32], strides = [1, 1]} : vector<8x128xf32> to vector<8x32xf32>
    %767 = math.tanh %765 : vector<8x32xf32>
    %768 = arith.mulf %766, %767 : vector<8x32xf32>
    %cst_246 = arith.constant 0.000000e+00 : f32
    %769 = vector.broadcast %cst_246 : f32 to vector<8x32xf32>
    %770 = arith.maximumf %768, %769 : vector<8x32xf32>
    %771 = arith.addf %750, %770 : vector<8x32xf32>
    %c48_247 = arith.constant 48 : index
    %c0_248 = arith.constant 0 : index
    %772 = vector.load %arg23[%c48_247, %c0_248] : memref<128x128xf32, #tpu.memory_space<vmem>>, vector<8x128xf32>
    %cst_249 = arith.constant dense<0.000000e+00> : vector<8x128xf32>
    %773 = tpu.matmul %768, %642, %cst_249 {dimension_numbers = #tpu.dot_dimension_numbers<[1], [0], [0], [1], [0, 0, 1, 1], [], []>} : vector<8x32xf32>, vector<32x128xf32>, vector<8x128xf32> -> vector<8x128xf32>
    %774 = arith.addf %772, %773 : vector<8x128xf32>
    %775 = arith.negf %774 : vector<8x128xf32>
    %776 = math.exp %775 : vector<8x128xf32>
    %cst_250 = arith.constant 1.000000e+00 : f32
    %777 = vector.broadcast %cst_250 : f32 to vector<8x128xf32>
    %778 = arith.addf %777, %776 : vector<8x128xf32>
    %779 = arith.divf %777, %778 : vector<8x128xf32>
    %780 = math.tanh %774 : vector<8x128xf32>
    %781 = vector.extract_strided_slice %779 {offsets = [0, 32], sizes = [8, 32], strides = [1, 1]} : vector<8x128xf32> to vector<8x32xf32>
    %782 = arith.mulf %781, %765 : vector<8x32xf32>
    %783 = vector.extract_strided_slice %779 {offsets = [0, 0], sizes = [8, 32], strides = [1, 1]} : vector<8x128xf32> to vector<8x32xf32>
    %784 = vector.extract_strided_slice %780 {offsets = [0, 64], sizes = [8, 32], strides = [1, 1]} : vector<8x128xf32> to vector<8x32xf32>
    %785 = arith.mulf %783, %784 : vector<8x32xf32>
    %786 = arith.addf %782, %785 : vector<8x32xf32>
    %787 = vector.extract_strided_slice %779 {offsets = [0, 96], sizes = [8, 32], strides = [1, 1]} : vector<8x128xf32> to vector<8x32xf32>
    %788 = math.tanh %786 : vector<8x32xf32>
    %789 = arith.mulf %787, %788 : vector<8x32xf32>
    %cst_251 = arith.constant 0.000000e+00 : f32
    %790 = vector.broadcast %cst_251 : f32 to vector<8x32xf32>
    %791 = arith.maximumf %789, %790 : vector<8x32xf32>
    %792 = arith.addf %771, %791 : vector<8x32xf32>
    %c56_252 = arith.constant 56 : index
    %c0_253 = arith.constant 0 : index
    %793 = vector.load %arg23[%c56_252, %c0_253] : memref<128x128xf32, #tpu.memory_space<vmem>>, vector<8x128xf32>
    %cst_254 = arith.constant dense<0.000000e+00> : vector<8x128xf32>
    %794 = tpu.matmul %789, %642, %cst_254 {dimension_numbers = #tpu.dot_dimension_numbers<[1], [0], [0], [1], [0, 0, 1, 1], [], []>} : vector<8x32xf32>, vector<32x128xf32>, vector<8x128xf32> -> vector<8x128xf32>
    %795 = arith.addf %793, %794 : vector<8x128xf32>
    %796 = arith.negf %795 : vector<8x128xf32>
    %797 = math.exp %796 : vector<8x128xf32>
    %cst_255 = arith.constant 1.000000e+00 : f32
    %798 = vector.broadcast %cst_255 : f32 to vector<8x128xf32>
    %799 = arith.addf %798, %797 : vector<8x128xf32>
    %800 = arith.divf %798, %799 : vector<8x128xf32>
    %801 = math.tanh %795 : vector<8x128xf32>
    %802 = vector.extract_strided_slice %800 {offsets = [0, 32], sizes = [8, 32], strides = [1, 1]} : vector<8x128xf32> to vector<8x32xf32>
    %803 = arith.mulf %802, %786 : vector<8x32xf32>
    %804 = vector.extract_strided_slice %800 {offsets = [0, 0], sizes = [8, 32], strides = [1, 1]} : vector<8x128xf32> to vector<8x32xf32>
    %805 = vector.extract_strided_slice %801 {offsets = [0, 64], sizes = [8, 32], strides = [1, 1]} : vector<8x128xf32> to vector<8x32xf32>
    %806 = arith.mulf %804, %805 : vector<8x32xf32>
    %807 = arith.addf %803, %806 : vector<8x32xf32>
    %808 = vector.extract_strided_slice %800 {offsets = [0, 96], sizes = [8, 32], strides = [1, 1]} : vector<8x128xf32> to vector<8x32xf32>
    %809 = math.tanh %807 : vector<8x32xf32>
    %810 = arith.mulf %808, %809 : vector<8x32xf32>
    %cst_256 = arith.constant 0.000000e+00 : f32
    %811 = vector.broadcast %cst_256 : f32 to vector<8x32xf32>
    %812 = arith.maximumf %810, %811 : vector<8x32xf32>
    %813 = arith.addf %792, %812 : vector<8x32xf32>
    %c64_257 = arith.constant 64 : index
    %c0_258 = arith.constant 0 : index
    %814 = vector.load %arg23[%c64_257, %c0_258] : memref<128x128xf32, #tpu.memory_space<vmem>>, vector<8x128xf32>
    %cst_259 = arith.constant dense<0.000000e+00> : vector<8x128xf32>
    %815 = tpu.matmul %810, %642, %cst_259 {dimension_numbers = #tpu.dot_dimension_numbers<[1], [0], [0], [1], [0, 0, 1, 1], [], []>} : vector<8x32xf32>, vector<32x128xf32>, vector<8x128xf32> -> vector<8x128xf32>
    %816 = arith.addf %814, %815 : vector<8x128xf32>
    %817 = arith.negf %816 : vector<8x128xf32>
    %818 = math.exp %817 : vector<8x128xf32>
    %cst_260 = arith.constant 1.000000e+00 : f32
    %819 = vector.broadcast %cst_260 : f32 to vector<8x128xf32>
    %820 = arith.addf %819, %818 : vector<8x128xf32>
    %821 = arith.divf %819, %820 : vector<8x128xf32>
    %822 = math.tanh %816 : vector<8x128xf32>
    %823 = vector.extract_strided_slice %821 {offsets = [0, 32], sizes = [8, 32], strides = [1, 1]} : vector<8x128xf32> to vector<8x32xf32>
    %824 = arith.mulf %823, %807 : vector<8x32xf32>
    %825 = vector.extract_strided_slice %821 {offsets = [0, 0], sizes = [8, 32], strides = [1, 1]} : vector<8x128xf32> to vector<8x32xf32>
    %826 = vector.extract_strided_slice %822 {offsets = [0, 64], sizes = [8, 32], strides = [1, 1]} : vector<8x128xf32> to vector<8x32xf32>
    %827 = arith.mulf %825, %826 : vector<8x32xf32>
    %828 = arith.addf %824, %827 : vector<8x32xf32>
    %829 = vector.extract_strided_slice %821 {offsets = [0, 96], sizes = [8, 32], strides = [1, 1]} : vector<8x128xf32> to vector<8x32xf32>
    %830 = math.tanh %828 : vector<8x32xf32>
    %831 = arith.mulf %829, %830 : vector<8x32xf32>
    %cst_261 = arith.constant 0.000000e+00 : f32
    %832 = vector.broadcast %cst_261 : f32 to vector<8x32xf32>
    %833 = arith.maximumf %831, %832 : vector<8x32xf32>
    %834 = arith.addf %813, %833 : vector<8x32xf32>
    %c72_262 = arith.constant 72 : index
    %c0_263 = arith.constant 0 : index
    %835 = vector.load %arg23[%c72_262, %c0_263] : memref<128x128xf32, #tpu.memory_space<vmem>>, vector<8x128xf32>
    %cst_264 = arith.constant dense<0.000000e+00> : vector<8x128xf32>
    %836 = tpu.matmul %831, %642, %cst_264 {dimension_numbers = #tpu.dot_dimension_numbers<[1], [0], [0], [1], [0, 0, 1, 1], [], []>} : vector<8x32xf32>, vector<32x128xf32>, vector<8x128xf32> -> vector<8x128xf32>
    %837 = arith.addf %835, %836 : vector<8x128xf32>
    %838 = arith.negf %837 : vector<8x128xf32>
    %839 = math.exp %838 : vector<8x128xf32>
    %cst_265 = arith.constant 1.000000e+00 : f32
    %840 = vector.broadcast %cst_265 : f32 to vector<8x128xf32>
    %841 = arith.addf %840, %839 : vector<8x128xf32>
    %842 = arith.divf %840, %841 : vector<8x128xf32>
    %843 = math.tanh %837 : vector<8x128xf32>
    %844 = vector.extract_strided_slice %842 {offsets = [0, 32], sizes = [8, 32], strides = [1, 1]} : vector<8x128xf32> to vector<8x32xf32>
    %845 = arith.mulf %844, %828 : vector<8x32xf32>
    %846 = vector.extract_strided_slice %842 {offsets = [0, 0], sizes = [8, 32], strides = [1, 1]} : vector<8x128xf32> to vector<8x32xf32>
    %847 = vector.extract_strided_slice %843 {offsets = [0, 64], sizes = [8, 32], strides = [1, 1]} : vector<8x128xf32> to vector<8x32xf32>
    %848 = arith.mulf %846, %847 : vector<8x32xf32>
    %849 = arith.addf %845, %848 : vector<8x32xf32>
    %850 = vector.extract_strided_slice %842 {offsets = [0, 96], sizes = [8, 32], strides = [1, 1]} : vector<8x128xf32> to vector<8x32xf32>
    %851 = math.tanh %849 : vector<8x32xf32>
    %852 = arith.mulf %850, %851 : vector<8x32xf32>
    %cst_266 = arith.constant 0.000000e+00 : f32
    %853 = vector.broadcast %cst_266 : f32 to vector<8x32xf32>
    %854 = arith.maximumf %852, %853 : vector<8x32xf32>
    %855 = arith.addf %834, %854 : vector<8x32xf32>
    %c80_267 = arith.constant 80 : index
    %c0_268 = arith.constant 0 : index
    %856 = vector.load %arg23[%c80_267, %c0_268] : memref<128x128xf32, #tpu.memory_space<vmem>>, vector<8x128xf32>
    %cst_269 = arith.constant dense<0.000000e+00> : vector<8x128xf32>
    %857 = tpu.matmul %852, %642, %cst_269 {dimension_numbers = #tpu.dot_dimension_numbers<[1], [0], [0], [1], [0, 0, 1, 1], [], []>} : vector<8x32xf32>, vector<32x128xf32>, vector<8x128xf32> -> vector<8x128xf32>
    %858 = arith.addf %856, %857 : vector<8x128xf32>
    %859 = arith.negf %858 : vector<8x128xf32>
    %860 = math.exp %859 : vector<8x128xf32>
    %cst_270 = arith.constant 1.000000e+00 : f32
    %861 = vector.broadcast %cst_270 : f32 to vector<8x128xf32>
    %862 = arith.addf %861, %860 : vector<8x128xf32>
    %863 = arith.divf %861, %862 : vector<8x128xf32>
    %864 = math.tanh %858 : vector<8x128xf32>
    %865 = vector.extract_strided_slice %863 {offsets = [0, 32], sizes = [8, 32], strides = [1, 1]} : vector<8x128xf32> to vector<8x32xf32>
    %866 = arith.mulf %865, %849 : vector<8x32xf32>
    %867 = vector.extract_strided_slice %863 {offsets = [0, 0], sizes = [8, 32], strides = [1, 1]} : vector<8x128xf32> to vector<8x32xf32>
    %868 = vector.extract_strided_slice %864 {offsets = [0, 64], sizes = [8, 32], strides = [1, 1]} : vector<8x128xf32> to vector<8x32xf32>
    %869 = arith.mulf %867, %868 : vector<8x32xf32>
    %870 = arith.addf %866, %869 : vector<8x32xf32>
    %871 = vector.extract_strided_slice %863 {offsets = [0, 96], sizes = [8, 32], strides = [1, 1]} : vector<8x128xf32> to vector<8x32xf32>
    %872 = math.tanh %870 : vector<8x32xf32>
    %873 = arith.mulf %871, %872 : vector<8x32xf32>
    %cst_271 = arith.constant 0.000000e+00 : f32
    %874 = vector.broadcast %cst_271 : f32 to vector<8x32xf32>
    %875 = arith.maximumf %873, %874 : vector<8x32xf32>
    %876 = arith.addf %855, %875 : vector<8x32xf32>
    %c88_272 = arith.constant 88 : index
    %c0_273 = arith.constant 0 : index
    %877 = vector.load %arg23[%c88_272, %c0_273] : memref<128x128xf32, #tpu.memory_space<vmem>>, vector<8x128xf32>
    %cst_274 = arith.constant dense<0.000000e+00> : vector<8x128xf32>
    %878 = tpu.matmul %873, %642, %cst_274 {dimension_numbers = #tpu.dot_dimension_numbers<[1], [0], [0], [1], [0, 0, 1, 1], [], []>} : vector<8x32xf32>, vector<32x128xf32>, vector<8x128xf32> -> vector<8x128xf32>
    %879 = arith.addf %877, %878 : vector<8x128xf32>
    %880 = arith.negf %879 : vector<8x128xf32>
    %881 = math.exp %880 : vector<8x128xf32>
    %cst_275 = arith.constant 1.000000e+00 : f32
    %882 = vector.broadcast %cst_275 : f32 to vector<8x128xf32>
    %883 = arith.addf %882, %881 : vector<8x128xf32>
    %884 = arith.divf %882, %883 : vector<8x128xf32>
    %885 = math.tanh %879 : vector<8x128xf32>
    %886 = vector.extract_strided_slice %884 {offsets = [0, 32], sizes = [8, 32], strides = [1, 1]} : vector<8x128xf32> to vector<8x32xf32>
    %887 = arith.mulf %886, %870 : vector<8x32xf32>
    %888 = vector.extract_strided_slice %884 {offsets = [0, 0], sizes = [8, 32], strides = [1, 1]} : vector<8x128xf32> to vector<8x32xf32>
    %889 = vector.extract_strided_slice %885 {offsets = [0, 64], sizes = [8, 32], strides = [1, 1]} : vector<8x128xf32> to vector<8x32xf32>
    %890 = arith.mulf %888, %889 : vector<8x32xf32>
    %891 = arith.addf %887, %890 : vector<8x32xf32>
    %892 = vector.extract_strided_slice %884 {offsets = [0, 96], sizes = [8, 32], strides = [1, 1]} : vector<8x128xf32> to vector<8x32xf32>
    %893 = math.tanh %891 : vector<8x32xf32>
    %894 = arith.mulf %892, %893 : vector<8x32xf32>
    %cst_276 = arith.constant 0.000000e+00 : f32
    %895 = vector.broadcast %cst_276 : f32 to vector<8x32xf32>
    %896 = arith.maximumf %894, %895 : vector<8x32xf32>
    %897 = arith.addf %876, %896 : vector<8x32xf32>
    %c96_277 = arith.constant 96 : index
    %c0_278 = arith.constant 0 : index
    %898 = vector.load %arg23[%c96_277, %c0_278] : memref<128x128xf32, #tpu.memory_space<vmem>>, vector<8x128xf32>
    %cst_279 = arith.constant dense<0.000000e+00> : vector<8x128xf32>
    %899 = tpu.matmul %894, %642, %cst_279 {dimension_numbers = #tpu.dot_dimension_numbers<[1], [0], [0], [1], [0, 0, 1, 1], [], []>} : vector<8x32xf32>, vector<32x128xf32>, vector<8x128xf32> -> vector<8x128xf32>
    %900 = arith.addf %898, %899 : vector<8x128xf32>
    %901 = arith.negf %900 : vector<8x128xf32>
    %902 = math.exp %901 : vector<8x128xf32>
    %cst_280 = arith.constant 1.000000e+00 : f32
    %903 = vector.broadcast %cst_280 : f32 to vector<8x128xf32>
    %904 = arith.addf %903, %902 : vector<8x128xf32>
    %905 = arith.divf %903, %904 : vector<8x128xf32>
    %906 = math.tanh %900 : vector<8x128xf32>
    %907 = vector.extract_strided_slice %905 {offsets = [0, 32], sizes = [8, 32], strides = [1, 1]} : vector<8x128xf32> to vector<8x32xf32>
    %908 = arith.mulf %907, %891 : vector<8x32xf32>
    %909 = vector.extract_strided_slice %905 {offsets = [0, 0], sizes = [8, 32], strides = [1, 1]} : vector<8x128xf32> to vector<8x32xf32>
    %910 = vector.extract_strided_slice %906 {offsets = [0, 64], sizes = [8, 32], strides = [1, 1]} : vector<8x128xf32> to vector<8x32xf32>
    %911 = arith.mulf %909, %910 : vector<8x32xf32>
    %912 = arith.addf %908, %911 : vector<8x32xf32>
    %913 = vector.extract_strided_slice %905 {offsets = [0, 96], sizes = [8, 32], strides = [1, 1]} : vector<8x128xf32> to vector<8x32xf32>
    %914 = math.tanh %912 : vector<8x32xf32>
    %915 = arith.mulf %913, %914 : vector<8x32xf32>
    %cst_281 = arith.constant 0.000000e+00 : f32
    %916 = vector.broadcast %cst_281 : f32 to vector<8x32xf32>
    %917 = arith.maximumf %915, %916 : vector<8x32xf32>
    %918 = arith.addf %897, %917 : vector<8x32xf32>
    %c104_282 = arith.constant 104 : index
    %c0_283 = arith.constant 0 : index
    %919 = vector.load %arg23[%c104_282, %c0_283] : memref<128x128xf32, #tpu.memory_space<vmem>>, vector<8x128xf32>
    %cst_284 = arith.constant dense<0.000000e+00> : vector<8x128xf32>
    %920 = tpu.matmul %915, %642, %cst_284 {dimension_numbers = #tpu.dot_dimension_numbers<[1], [0], [0], [1], [0, 0, 1, 1], [], []>} : vector<8x32xf32>, vector<32x128xf32>, vector<8x128xf32> -> vector<8x128xf32>
    %921 = arith.addf %919, %920 : vector<8x128xf32>
    %922 = arith.negf %921 : vector<8x128xf32>
    %923 = math.exp %922 : vector<8x128xf32>
    %cst_285 = arith.constant 1.000000e+00 : f32
    %924 = vector.broadcast %cst_285 : f32 to vector<8x128xf32>
    %925 = arith.addf %924, %923 : vector<8x128xf32>
    %926 = arith.divf %924, %925 : vector<8x128xf32>
    %927 = math.tanh %921 : vector<8x128xf32>
    %928 = vector.extract_strided_slice %926 {offsets = [0, 32], sizes = [8, 32], strides = [1, 1]} : vector<8x128xf32> to vector<8x32xf32>
    %929 = arith.mulf %928, %912 : vector<8x32xf32>
    %930 = vector.extract_strided_slice %926 {offsets = [0, 0], sizes = [8, 32], strides = [1, 1]} : vector<8x128xf32> to vector<8x32xf32>
    %931 = vector.extract_strided_slice %927 {offsets = [0, 64], sizes = [8, 32], strides = [1, 1]} : vector<8x128xf32> to vector<8x32xf32>
    %932 = arith.mulf %930, %931 : vector<8x32xf32>
    %933 = arith.addf %929, %932 : vector<8x32xf32>
    %934 = vector.extract_strided_slice %926 {offsets = [0, 96], sizes = [8, 32], strides = [1, 1]} : vector<8x128xf32> to vector<8x32xf32>
    %935 = math.tanh %933 : vector<8x32xf32>
    %936 = arith.mulf %934, %935 : vector<8x32xf32>
    %cst_286 = arith.constant 0.000000e+00 : f32
    %937 = vector.broadcast %cst_286 : f32 to vector<8x32xf32>
    %938 = arith.maximumf %936, %937 : vector<8x32xf32>
    %939 = arith.addf %918, %938 : vector<8x32xf32>
    %c112_287 = arith.constant 112 : index
    %c0_288 = arith.constant 0 : index
    %940 = vector.load %arg23[%c112_287, %c0_288] : memref<128x128xf32, #tpu.memory_space<vmem>>, vector<8x128xf32>
    %cst_289 = arith.constant dense<0.000000e+00> : vector<8x128xf32>
    %941 = tpu.matmul %936, %642, %cst_289 {dimension_numbers = #tpu.dot_dimension_numbers<[1], [0], [0], [1], [0, 0, 1, 1], [], []>} : vector<8x32xf32>, vector<32x128xf32>, vector<8x128xf32> -> vector<8x128xf32>
    %942 = arith.addf %940, %941 : vector<8x128xf32>
    %943 = arith.negf %942 : vector<8x128xf32>
    %944 = math.exp %943 : vector<8x128xf32>
    %cst_290 = arith.constant 1.000000e+00 : f32
    %945 = vector.broadcast %cst_290 : f32 to vector<8x128xf32>
    %946 = arith.addf %945, %944 : vector<8x128xf32>
    %947 = arith.divf %945, %946 : vector<8x128xf32>
    %948 = math.tanh %942 : vector<8x128xf32>
    %949 = vector.extract_strided_slice %947 {offsets = [0, 32], sizes = [8, 32], strides = [1, 1]} : vector<8x128xf32> to vector<8x32xf32>
    %950 = arith.mulf %949, %933 : vector<8x32xf32>
    %951 = vector.extract_strided_slice %947 {offsets = [0, 0], sizes = [8, 32], strides = [1, 1]} : vector<8x128xf32> to vector<8x32xf32>
    %952 = vector.extract_strided_slice %948 {offsets = [0, 64], sizes = [8, 32], strides = [1, 1]} : vector<8x128xf32> to vector<8x32xf32>
    %953 = arith.mulf %951, %952 : vector<8x32xf32>
    %954 = arith.addf %950, %953 : vector<8x32xf32>
    %955 = vector.extract_strided_slice %947 {offsets = [0, 96], sizes = [8, 32], strides = [1, 1]} : vector<8x128xf32> to vector<8x32xf32>
    %956 = math.tanh %954 : vector<8x32xf32>
    %957 = arith.mulf %955, %956 : vector<8x32xf32>
    %cst_291 = arith.constant 0.000000e+00 : f32
    %958 = vector.broadcast %cst_291 : f32 to vector<8x32xf32>
    %959 = arith.maximumf %957, %958 : vector<8x32xf32>
    %960 = arith.addf %939, %959 : vector<8x32xf32>
    %c120_292 = arith.constant 120 : index
    %c0_293 = arith.constant 0 : index
    %961 = vector.load %arg23[%c120_292, %c0_293] : memref<128x128xf32, #tpu.memory_space<vmem>>, vector<8x128xf32>
    %cst_294 = arith.constant dense<0.000000e+00> : vector<8x128xf32>
    %962 = tpu.matmul %957, %642, %cst_294 {dimension_numbers = #tpu.dot_dimension_numbers<[1], [0], [0], [1], [0, 0, 1, 1], [], []>} : vector<8x32xf32>, vector<32x128xf32>, vector<8x128xf32> -> vector<8x128xf32>
    %963 = arith.addf %961, %962 : vector<8x128xf32>
    %964 = arith.negf %963 : vector<8x128xf32>
    %965 = math.exp %964 : vector<8x128xf32>
    %cst_295 = arith.constant 1.000000e+00 : f32
    %966 = vector.broadcast %cst_295 : f32 to vector<8x128xf32>
    %967 = arith.addf %966, %965 : vector<8x128xf32>
    %968 = arith.divf %966, %967 : vector<8x128xf32>
    %969 = math.tanh %963 : vector<8x128xf32>
    %970 = vector.extract_strided_slice %968 {offsets = [0, 32], sizes = [8, 32], strides = [1, 1]} : vector<8x128xf32> to vector<8x32xf32>
    %971 = arith.mulf %970, %954 : vector<8x32xf32>
    %972 = vector.extract_strided_slice %968 {offsets = [0, 0], sizes = [8, 32], strides = [1, 1]} : vector<8x128xf32> to vector<8x32xf32>
    %973 = vector.extract_strided_slice %969 {offsets = [0, 64], sizes = [8, 32], strides = [1, 1]} : vector<8x128xf32> to vector<8x32xf32>
    %974 = arith.mulf %972, %973 : vector<8x32xf32>
    %975 = arith.addf %971, %974 : vector<8x32xf32>
    %976 = vector.extract_strided_slice %968 {offsets = [0, 96], sizes = [8, 32], strides = [1, 1]} : vector<8x128xf32> to vector<8x32xf32>
    %977 = math.tanh %975 : vector<8x32xf32>
    %978 = arith.mulf %976, %977 : vector<8x32xf32>
    %cst_296 = arith.constant 0.000000e+00 : f32
    %979 = vector.broadcast %cst_296 : f32 to vector<8x32xf32>
    %980 = arith.maximumf %978, %979 : vector<8x32xf32>
    %981 = arith.addf %960, %980 : vector<8x32xf32>
    %c0_297 = arith.constant 0 : index
    %c0_298 = arith.constant 0 : index
    %982 = vector.load %arg19[%c0_297, %c0_298] : memref<32x128xf32, #tpu.memory_space<vmem>>, vector<32x128xf32>
    %cst_299 = arith.constant dense<0.000000e+00> : vector<8x128xf32>
    %983 = tpu.matmul %981, %982, %cst_299 {dimension_numbers = #tpu.dot_dimension_numbers<[1], [0], [0], [1], [0, 0, 1, 1], [], []>} : vector<8x32xf32>, vector<32x128xf32>, vector<8x128xf32> -> vector<8x128xf32>
    %c0_300 = arith.constant 0 : index
    %c0_301 = arith.constant 0 : index
    %984 = vector.load %arg5[%c0_300, %c0_301] : memref<8x16xf32, #tpu.memory_space<vmem>>, vector<8x16xf32>
    %c0_302 = arith.constant 0 : index
    %c0_303 = arith.constant 0 : index
    %985 = vector.load %arg6[%c0_302, %c0_303] : memref<16x256xf32, #tpu.memory_space<vmem>>, vector<16x256xf32>
    %cst_304 = arith.constant dense<0.000000e+00> : vector<8x256xf32>
    %986 = tpu.matmul %984, %985, %cst_304 {dimension_numbers = #tpu.dot_dimension_numbers<[1], [0], [0], [1], [0, 0, 1, 1], [], []>} : vector<8x16xf32>, vector<16x256xf32>, vector<8x256xf32> -> vector<8x256xf32>
    %c0_305 = arith.constant 0 : index
    %c0_306 = arith.constant 0 : index
    %987 = vector.load %arg7[%c0_305, %c0_306] : memref<1x256xf32, #tpu.memory_space<vmem>>, vector<1x256xf32>
    %988 = vector.broadcast %987 : vector<1x256xf32> to vector<8x256xf32>
    %989 = arith.addf %986, %988 : vector<8x256xf32>
    %cst_307 = arith.constant 0.000000e+00 : f32
    %990 = vector.broadcast %cst_307 : f32 to vector<8x256xf32>
    %991 = arith.maximumf %989, %990 : vector<8x256xf32>
    %c0_308 = arith.constant 0 : index
    %c0_309 = arith.constant 0 : index
    %992 = vector.load %arg8[%c0_308, %c0_309] : memref<1x256xf32, #tpu.memory_space<vmem>>, vector<1x256xf32>
    %993 = vector.broadcast %992 : vector<1x256xf32> to vector<8x256xf32>
    %994 = arith.mulf %991, %993 : vector<8x256xf32>
    %c0_310 = arith.constant 0 : index
    %c0_311 = arith.constant 0 : index
    %995 = vector.load %arg9[%c0_310, %c0_311] : memref<1x256xf32, #tpu.memory_space<vmem>>, vector<1x256xf32>
    %996 = vector.broadcast %995 : vector<1x256xf32> to vector<8x256xf32>
    %997 = arith.addf %994, %996 : vector<8x256xf32>
    %cst_312 = arith.constant 0.000000e+00 : f32
    %998 = vector.broadcast %cst_312 : f32 to vector<8x256xf32>
    %999 = arith.maximumf %997, %998 : vector<8x256xf32>
    %c0_313 = arith.constant 0 : index
    %c0_314 = arith.constant 0 : index
    %1000 = vector.load %arg10[%c0_313, %c0_314] : memref<256x256xf32, #tpu.memory_space<vmem>>, vector<256x256xf32>
    %cst_315 = arith.constant dense<0.000000e+00> : vector<8x256xf32>
    %1001 = tpu.matmul %999, %1000, %cst_315 {dimension_numbers = #tpu.dot_dimension_numbers<[1], [0], [0], [1], [0, 0, 1, 1], [], []>} : vector<8x256xf32>, vector<256x256xf32>, vector<8x256xf32> -> vector<8x256xf32>
    %c0_316 = arith.constant 0 : index
    %c0_317 = arith.constant 0 : index
    %1002 = vector.load %arg11[%c0_316, %c0_317] : memref<1x256xf32, #tpu.memory_space<vmem>>, vector<1x256xf32>
    %1003 = vector.broadcast %1002 : vector<1x256xf32> to vector<8x256xf32>
    %1004 = arith.addf %1001, %1003 : vector<8x256xf32>
    %cst_318 = arith.constant 0.000000e+00 : f32
    %1005 = vector.broadcast %cst_318 : f32 to vector<8x256xf32>
    %1006 = arith.maximumf %1004, %1005 : vector<8x256xf32>
    %c0_319 = arith.constant 0 : index
    %c0_320 = arith.constant 0 : index
    %1007 = vector.load %arg20[%c0_319, %c0_320] : memref<256x128xf32, #tpu.memory_space<vmem>>, vector<256x128xf32>
    %cst_321 = arith.constant dense<0.000000e+00> : vector<8x128xf32>
    %1008 = tpu.matmul %1006, %1007, %cst_321 {dimension_numbers = #tpu.dot_dimension_numbers<[1], [0], [0], [1], [0, 0, 1, 1], [], []>} : vector<8x256xf32>, vector<256x128xf32>, vector<8x128xf32> -> vector<8x128xf32>
    %1009 = arith.addf %983, %1008 : vector<8x128xf32>
    %c0_322 = arith.constant 0 : index
    %c0_323 = arith.constant 0 : index
    %1010 = vector.load %arg12[%c0_322, %c0_323] : memref<8x16xf32, #tpu.memory_space<vmem>>, vector<8x16xf32>
    %c0_324 = arith.constant 0 : index
    %c0_325 = arith.constant 0 : index
    %1011 = vector.load %arg13[%c0_324, %c0_325] : memref<16x256xf32, #tpu.memory_space<vmem>>, vector<16x256xf32>
    %cst_326 = arith.constant dense<0.000000e+00> : vector<8x256xf32>
    %1012 = tpu.matmul %1010, %1011, %cst_326 {dimension_numbers = #tpu.dot_dimension_numbers<[1], [0], [0], [1], [0, 0, 1, 1], [], []>} : vector<8x16xf32>, vector<16x256xf32>, vector<8x256xf32> -> vector<8x256xf32>
    %c0_327 = arith.constant 0 : index
    %c0_328 = arith.constant 0 : index
    %1013 = vector.load %arg14[%c0_327, %c0_328] : memref<1x256xf32, #tpu.memory_space<vmem>>, vector<1x256xf32>
    %1014 = vector.broadcast %1013 : vector<1x256xf32> to vector<8x256xf32>
    %1015 = arith.addf %1012, %1014 : vector<8x256xf32>
    %cst_329 = arith.constant 0.000000e+00 : f32
    %1016 = vector.broadcast %cst_329 : f32 to vector<8x256xf32>
    %1017 = arith.maximumf %1015, %1016 : vector<8x256xf32>
    %c0_330 = arith.constant 0 : index
    %c0_331 = arith.constant 0 : index
    %1018 = vector.load %arg15[%c0_330, %c0_331] : memref<1x256xf32, #tpu.memory_space<vmem>>, vector<1x256xf32>
    %1019 = vector.broadcast %1018 : vector<1x256xf32> to vector<8x256xf32>
    %1020 = arith.mulf %1017, %1019 : vector<8x256xf32>
    %c0_332 = arith.constant 0 : index
    %c0_333 = arith.constant 0 : index
    %1021 = vector.load %arg16[%c0_332, %c0_333] : memref<1x256xf32, #tpu.memory_space<vmem>>, vector<1x256xf32>
    %1022 = vector.broadcast %1021 : vector<1x256xf32> to vector<8x256xf32>
    %1023 = arith.addf %1020, %1022 : vector<8x256xf32>
    %cst_334 = arith.constant 0.000000e+00 : f32
    %1024 = vector.broadcast %cst_334 : f32 to vector<8x256xf32>
    %1025 = arith.maximumf %1023, %1024 : vector<8x256xf32>
    %c0_335 = arith.constant 0 : index
    %c0_336 = arith.constant 0 : index
    %1026 = vector.load %arg17[%c0_335, %c0_336] : memref<256x256xf32, #tpu.memory_space<vmem>>, vector<256x256xf32>
    %cst_337 = arith.constant dense<0.000000e+00> : vector<8x256xf32>
    %1027 = tpu.matmul %1025, %1026, %cst_337 {dimension_numbers = #tpu.dot_dimension_numbers<[1], [0], [0], [1], [0, 0, 1, 1], [], []>} : vector<8x256xf32>, vector<256x256xf32>, vector<8x256xf32> -> vector<8x256xf32>
    %c0_338 = arith.constant 0 : index
    %c0_339 = arith.constant 0 : index
    %1028 = vector.load %arg18[%c0_338, %c0_339] : memref<1x256xf32, #tpu.memory_space<vmem>>, vector<1x256xf32>
    %1029 = vector.broadcast %1028 : vector<1x256xf32> to vector<8x256xf32>
    %1030 = arith.addf %1027, %1029 : vector<8x256xf32>
    %cst_340 = arith.constant 0.000000e+00 : f32
    %1031 = vector.broadcast %cst_340 : f32 to vector<8x256xf32>
    %1032 = arith.maximumf %1030, %1031 : vector<8x256xf32>
    %c0_341 = arith.constant 0 : index
    %c0_342 = arith.constant 0 : index
    %1033 = vector.load %arg21[%c0_341, %c0_342] : memref<256x128xf32, #tpu.memory_space<vmem>>, vector<256x128xf32>
    %cst_343 = arith.constant dense<0.000000e+00> : vector<8x128xf32>
    %1034 = tpu.matmul %1032, %1033, %cst_343 {dimension_numbers = #tpu.dot_dimension_numbers<[1], [0], [0], [1], [0, 0, 1, 1], [], []>} : vector<8x256xf32>, vector<256x128xf32>, vector<8x128xf32> -> vector<8x128xf32>
    %1035 = arith.addf %1009, %1034 : vector<8x128xf32>
    %c0_344 = arith.constant 0 : index
    %c0_345 = arith.constant 0 : index
    %1036 = vector.load %arg22[%c0_344, %c0_345] : memref<8x128xf32, #tpu.memory_space<vmem>>, vector<8x128xf32>
    tpu.vector_store %arg22[%c0_344, %c0_345], %1035 {strides = array<i32>} : memref<8x128xf32, #tpu.memory_space<vmem>>, vector<8x128xf32>,
    return
  }
}

</mosaic_0001>

<llo_original>
// kernel: tpu_custom_call.1
$region0: #{tpu_custom_call.1}
  #allocation0 [shape = 'u32[]', space=smem, size = 0x4, offset = 0x4, fixed_abs, tag = 'smem constant byte address 0x4 - core index']
  #allocation1 [shape = 'u32[144,128]{1,0:T(1,128)}', space=vmem, size = 0x12000, scoped, tag = 'internal scratch']
  #allocation2 [shape = 'f32[128,128]{1,0:T(8,128)}', space=vmem, size = 0x10000, scoped, tag = 'scratch operand']
  #allocation3 [shape = 'f32[128,32]{1,0:T(8,128)}', space=vmem, size = 0x10000, scoped, tag = 'scratch operand']
  %s0 = inlined_call_operand.vmem [shape: f32[128,1], index: 0, kind: input, shape index: {}]
  %s1 = inlined_call_operand.vmem [shape: f32[1,128], index: 1, kind: input, shape index: {}]
  %s2 = inlined_call_operand.hbm [shape: f32[2,32,128], index: 2, kind: input, shape index: {}]
  %s3 = inlined_call_operand.vmem [shape: f32[3,32,128], index: 3, kind: input, shape index: {}]
  %s4 = inlined_call_operand.hbm [shape: f32[3,128], index: 4, kind: input, shape index: {}]
  %s5 = inlined_call_operand.hbm [shape: f32[8,16], index: 5, kind: input, shape index: {}]
  %s6 = inlined_call_operand.vmem [shape: f32[16,256], index: 6, kind: input, shape index: {}]
  %s7 = inlined_call_operand.hbm [shape: f32[1,256], index: 7, kind: input, shape index: {}]
  %s8 = inlined_call_operand.hbm [shape: f32[1,256], index: 8, kind: input, shape index: {}]
  %s9 = inlined_call_operand.hbm [shape: f32[1,256], index: 9, kind: input, shape index: {}]
  %s10 = inlined_call_operand.hbm [shape: f32[256,256], index: 10, kind: input, shape index: {}]
  %s11 = inlined_call_operand.hbm [shape: f32[1,256], index: 11, kind: input, shape index: {}]
  %s12 = inlined_call_operand.hbm [shape: f32[8,16], index: 12, kind: input, shape index: {}]
  %s13 = inlined_call_operand.vmem [shape: f32[16,256], index: 13, kind: input, shape index: {}]
  %s14 = inlined_call_operand.hbm [shape: f32[1,256], index: 14, kind: input, shape index: {}]
  %s15 = inlined_call_operand.hbm [shape: f32[1,256], index: 15, kind: input, shape index: {}]
  %s16 = inlined_call_operand.hbm [shape: f32[1,256], index: 16, kind: input, shape index: {}]
  %s17 = inlined_call_operand.hbm [shape: f32[256,256], index: 17, kind: input, shape index: {}]
  %s18 = inlined_call_operand.vmem [shape: f32[1,256], index: 18, kind: input, shape index: {}]
  %s19 = inlined_call_operand.vmem [shape: f32[32,128], index: 19, kind: input, shape index: {}]
  %s20 = inlined_call_operand.hbm [shape: f32[256,128], index: 20, kind: input, shape index: {}]
  %s21 = inlined_call_operand.hbm [shape: f32[256,128], index: 21, kind: input, shape index: {}]
  %s22 = inlined_call_operand.hbm [shape: f32[8,128], index: 22, kind: output, shape index: {}]
  %s23 = sld [smem:[#allocation0]]
  $region158: #{tpu_custom_call.1} parent=0
    _
  %s25 = ssub.s32 1, %s23
  %s26 = scalar_select 0, %s25, %s23
  $region1: #{tpu_custom_call.1} parent=0
    #allocation4 [shape = 'u8[32768]{0}', space=vmem, size = 0x8000, scoped, tag = 'input window, operand 2, single buffered']
    #allocation5 [shape = 's32[1]{0}', space=sflag, size = 0x4, scoped, tag = 'scoped memory for tpu_custom_call.1']
    #allocation6 [shape = 's32[1]{0}', space=sflag, size = 0x4, scoped, tag = 'scoped memory for tpu_custom_call.1']
    #allocation7 [shape = 'u8[2048]{0}', space=vmem, size = 0x800, scoped, tag = 'input window, operand 4, single buffered']
    #allocation8 [shape = 's32[1]{0}', space=sflag, size = 0x4, scoped, tag = 'scoped memory for tpu_custom_call.1']
    #allocation9 [shape = 'u8[4096]{0}', space=vmem, size = 0x1000, scoped, tag = 'input window, operand 5, single buffered']
    #allocation10 [shape = 'u8[1024]{0}', space=vmem, size = 0x400, scoped, tag = 'input window, operand 7, single buffered']
    #allocation11 [shape = 's32[1]{0}', space=sflag, size = 0x4, scoped, tag = 'scoped memory for tpu_custom_call.1']
    #allocation12 [shape = 'u8[1024]{0}', space=vmem, size = 0x400, scoped, tag = 'input window, operand 8, single buffered']
    #allocation13 [shape = 'u8[1024]{0}', space=vmem, size = 0x400, scoped, tag = 'input window, operand 9, single buffered']
    #allocation14 [shape = 's32[1]{0}', space=sflag, size = 0x4, scoped, tag = 'scoped memory for tpu_custom_call.1']
    #allocation15 [shape = 'u8[262144]{0}', space=vmem, size = 0x40000, scoped, tag = 'input window, operand 10, single buffered']
    #allocation16 [shape = 'u8[1024]{0}', space=vmem, size = 0x400, scoped, tag = 'input window, operand 11, single buffered']
    #allocation17 [shape = 's32[1]{0}', space=sflag, size = 0x4, scoped, tag = 'scoped memory for tpu_custom_call.1']
    #allocation18 [shape = 'u8[4096]{0}', space=vmem, size = 0x1000, scoped, tag = 'input window, operand 12, single buffered']
    #allocation19 [shape = 'u8[1024]{0}', space=vmem, size = 0x400, scoped, tag = 'input window, operand 14, single buffered']
    #allocation20 [shape = 's32[1]{0}', space=sflag, size = 0x4, scoped, tag = 'scoped memory for tpu_custom_call.1']
    #allocation21 [shape = 'u8[1024]{0}', space=vmem, size = 0x400, scoped, tag = 'input window, operand 15, single buffered']
    #allocation22 [shape = 'u8[1024]{0}', space=vmem, size = 0x400, scoped, tag = 'input window, operand 16, single buffered']
    #allocation23 [shape = 's32[1]{0}', space=sflag, size = 0x4, scoped, tag = 'scoped memory for tpu_custom_call.1']
    #allocation24 [shape = 'u8[262144]{0}', space=vmem, size = 0x40000, scoped, tag = 'input window, operand 17, single buffered']
    #allocation25 [shape = 'u8[131072]{0}', space=vmem, size = 0x20000, scoped, tag = 'input window, operand 20, single buffered']
    #allocation26 [shape = 's32[1]{0}', space=sflag, size = 0x4, scoped, tag = 'scoped memory for tpu_custom_call.1']
    #allocation27 [shape = 'u8[131072]{0}', space=vmem, size = 0x20000, scoped, tag = 'input window, operand 21, single buffered']
    #allocation28 [shape = 'u8[4096]{0}', space=vmem, size = 0x1000, scoped, tag = 'output window, operand 0, single buffered']
    %27 = vsyncpa [#allocation5], 0
    %28 = vsyncpa [#allocation8], 0
    %29 = vsyncpa [#allocation11], 0
    %30 = vsyncpa [#allocation14], 0
    %31 = vsyncpa [#allocation17], 0
    %32 = vsyncpa [#allocation20], 0
    %33 = vsyncpa [#allocation23], 0
    %34 = vsyncpa [#allocation26], 0
    %35 = vsyncpa [#allocation6], 0
    // Predicated region
    $region2: #{tpu_custom_call.1} parent=1 // pred_check
      _
    $region3: #{tpu_custom_call.1} parent=1 // pred_check_branch
      %37 = sbr.rel (0) target = $region5
    $region4: #{tpu_custom_call.1} parent=1 // pred_region
      _
    $region5: #{tpu_custom_call.1} parent=1 // pred_fallthru
      _
    // Predicated region
    $region6: #{tpu_custom_call.1} parent=1 // pred_check
      _
    $region7: #{tpu_custom_call.1} parent=1 // pred_check_branch
      %39 = sbr.rel (0) target = $region9
    $region8: #{tpu_custom_call.1} parent=1 // pred_region
      _
    $region9: #{tpu_custom_call.1} parent=1 // pred_fallthru
      _
    // Predicated region
    $region10: #{tpu_custom_call.1} parent=1 // pred_check
      _
    $region11: #{tpu_custom_call.1} parent=1 // pred_check_branch
      %41 = sbr.rel (0) target = $region13
    $region12: #{tpu_custom_call.1} parent=1 // pred_region
      %s43 = ssub.s32 1024, 1024
      %44 = vsyncadd [#allocation5], %s43
      %s45 = sshll.u32 [#allocation4], 4
      %s46 = int_to_ptr.vmem [resolvable:$true] %s45
      %51 = dma.hbm_to_vmem [thread:$0]  %s2, 1024, %s46, [#allocation5], 128, 128, 8
    $region13: #{tpu_custom_call.1} parent=1 // pred_fallthru
      _
    // Predicated region
    $region14: #{tpu_custom_call.1} parent=1 // pred_check
      _
    $region15: #{tpu_custom_call.1} parent=1 // pred_check_branch
      %53 = sbr.rel (0) target = $region17
    $region16: #{tpu_custom_call.1} parent=1 // pred_region
      _
    $region17: #{tpu_custom_call.1} parent=1 // pred_fallthru
      _
    // Predicated region
    $region18: #{tpu_custom_call.1} parent=1 // pred_check
      _
    $region19: #{tpu_custom_call.1} parent=1 // pred_check_branch
      %55 = sbr.rel (0) target = $region21
    $region20: #{tpu_custom_call.1} parent=1 // pred_region
      %s57 = ssub.s32 64, 64
      %58 = vsyncadd [#allocation8], %s57
      %s60 = sshll.u32 [#allocation7], 4
      %s61 = int_to_ptr.vmem [resolvable:$true] %s60
      %63 = dma.hbm_to_vmem [thread:$0]  %s4, 64, %s61, [#allocation8]
    $region21: #{tpu_custom_call.1} parent=1 // pred_fallthru
      _
    // Predicated region
    $region22: #{tpu_custom_call.1} parent=1 // pred_check
      _
    $region23: #{tpu_custom_call.1} parent=1 // pred_check_branch
      %65 = sbr.rel (0) target = $region25
    $region24: #{tpu_custom_call.1} parent=1 // pred_region
      %s67 = ssub.s32 128, 128
      %68 = vsyncadd [#allocation8], %s67
      %s70 = sshll.u32 [#allocation9], 4
      %s71 = int_to_ptr.vmem [resolvable:$true] %s70
      %73 = dma.hbm_to_vmem [thread:$0]  %s5, 128, %s71, [#allocation8]
    $region25: #{tpu_custom_call.1} parent=1 // pred_fallthru
      _
    // Predicated region
    $region26: #{tpu_custom_call.1} parent=1 // pred_check
      _
    $region27: #{tpu_custom_call.1} parent=1 // pred_check_branch
      %75 = sbr.rel (0) target = $region29
    $region28: #{tpu_custom_call.1} parent=1 // pred_region
      _
    $region29: #{tpu_custom_call.1} parent=1 // pred_fallthru
      _
    // Predicated region
    $region30: #{tpu_custom_call.1} parent=1 // pred_check
      _
    $region31: #{tpu_custom_call.1} parent=1 // pred_check_branch
      %77 = sbr.rel (0) target = $region33
    $region32: #{tpu_custom_call.1} parent=1 // pred_region
      %s79 = ssub.s32 32, 32
      %80 = vsyncadd [#allocation11], %s79
      %s82 = sshll.u32 [#allocation10], 4
      %s83 = int_to_ptr.vmem [resolvable:$true] %s82
      %85 = dma.hbm_to_vmem [thread:$0]  %s7, 32, %s83, [#allocation11]
    $region33: #{tpu_custom_call.1} parent=1 // pred_fallthru
      _
    // Predicated region
    $region34: #{tpu_custom_call.1} parent=1 // pred_check
      _
    $region35: #{tpu_custom_call.1} parent=1 // pred_check_branch
      %87 = sbr.rel (0) target = $region37
    $region36: #{tpu_custom_call.1} parent=1 // pred_region
      %s89 = ssub.s32 32, 32
      %90 = vsyncadd [#allocation11], %s89
      %s92 = sshll.u32 [#allocation12], 4
      %s93 = int_to_ptr.vmem [resolvable:$true] %s92
      %95 = dma.hbm_to_vmem [thread:$0]  %s8, 32, %s93, [#allocation11]
    $region37: #{tpu_custom_call.1} parent=1 // pred_fallthru
      _
    // Predicated region
    $region38: #{tpu_custom_call.1} parent=1 // pred_check
      _
    $region39: #{tpu_custom_call.1} parent=1 // pred_check_branch
      %97 = sbr.rel (0) target = $region41
    $region40: #{tpu_custom_call.1} parent=1 // pred_region
      %s99 = ssub.s32 32, 32
      %100 = vsyncadd [#allocation14], %s99
      %s102 = sshll.u32 [#allocation13], 4
      %s103 = int_to_ptr.vmem [resolvable:$true] %s102
      %105 = dma.hbm_to_vmem [thread:$0]  %s9, 32, %s103, [#allocation14]
    $region41: #{tpu_custom_call.1} parent=1 // pred_fallthru
      _
    // Predicated region
    $region42: #{tpu_custom_call.1} parent=1 // pred_check
      _
    $region43: #{tpu_custom_call.1} parent=1 // pred_check_branch
      %107 = sbr.rel (0) target = $region45
    $region44: #{tpu_custom_call.1} parent=1 // pred_region
      %s109 = ssub.s32 8192, 8192
      %110 = vsyncadd [#allocation14], %s109
      %s111 = sshll.u32 [#allocation15], 4
      %s112 = int_to_ptr.vmem [resolvable:$true] %s111
      %117 = dma.hbm_to_vmem [thread:$0]  %s10, 8192, %s112, [#allocation14], 256, 256, 16
    $region45: #{tpu_custom_call.1} parent=1 // pred_fallthru
      _
    // Predicated region
    $region46: #{tpu_custom_call.1} parent=1 // pred_check
      _
    $region47: #{tpu_custom_call.1} parent=1 // pred_check_branch
      %119 = sbr.rel (0) target = $region49
    $region48: #{tpu_custom_call.1} parent=1 // pred_region
      %s121 = ssub.s32 32, 32
      %122 = vsyncadd [#allocation17], %s121
      %s124 = sshll.u32 [#allocation16], 4
      %s125 = int_to_ptr.vmem [resolvable:$true] %s124
      %127 = dma.hbm_to_vmem [thread:$0]  %s11, 32, %s125, [#allocation17]
    $region49: #{tpu_custom_call.1} parent=1 // pred_fallthru
      _
    // Predicated region
    $region50: #{tpu_custom_call.1} parent=1 // pred_check
      _
    $region51: #{tpu_custom_call.1} parent=1 // pred_check_branch
      %129 = sbr.rel (0) target = $region53
    $region52: #{tpu_custom_call.1} parent=1 // pred_region
      %s131 = ssub.s32 128, 128
      %132 = vsyncadd [#allocation17], %s131
      %s134 = sshll.u32 [#allocation18], 4
      %s135 = int_to_ptr.vmem [resolvable:$true] %s134
      %137 = dma.hbm_to_vmem [thread:$0]  %s12, 128, %s135, [#allocation17]
    $region53: #{tpu_custom_call.1} parent=1 // pred_fallthru
      _
    // Predicated region
    $region54: #{tpu_custom_call.1} parent=1 // pred_check
      _
    $region55: #{tpu_custom_call.1} parent=1 // pred_check_branch
      %139 = sbr.rel (0) target = $region57
    $region56: #{tpu_custom_call.1} parent=1 // pred_region
      _
    $region57: #{tpu_custom_call.1} parent=1 // pred_fallthru
      _
    // Predicated region
    $region58: #{tpu_custom_call.1} parent=1 // pred_check
      _
    $region59: #{tpu_custom_call.1} parent=1 // pred_check_branch
      %141 = sbr.rel (0) target = $region61
    $region60: #{tpu_custom_call.1} parent=1 // pred_region
      %s143 = ssub.s32 32, 32
      %144 = vsyncadd [#allocation20], %s143
      %s146 = sshll.u32 [#allocation19], 4
      %s147 = int_to_ptr.vmem [resolvable:$true] %s146
      %149 = dma.hbm_to_vmem [thread:$0]  %s14, 32, %s147, [#allocation20]
    $region61: #{tpu_custom_call.1} parent=1 // pred_fallthru
      _
    // Predicated region
    $region62: #{tpu_custom_call.1} parent=1 // pred_check
      _
    $region63: #{tpu_custom_call.1} parent=1 // pred_check_branch
      %151 = sbr.rel (0) target = $region65
    $region64: #{tpu_custom_call.1} parent=1 // pred_region
      %s153 = ssub.s32 32, 32
      %154 = vsyncadd [#allocation20], %s153
      %s156 = sshll.u32 [#allocation21], 4
      %s157 = int_to_ptr.vmem [resolvable:$true] %s156
      %159 = dma.hbm_to_vmem [thread:$0]  %s15, 32, %s157, [#allocation20]
    $region65: #{tpu_custom_call.1} parent=1 // pred_fallthru
      _
    // Predicated region
    $region66: #{tpu_custom_call.1} parent=1 // pred_check
      _
    $region67: #{tpu_custom_call.1} parent=1 // pred_check_branch
      %161 = sbr.rel (0) target = $region69
    $region68: #{tpu_custom_call.1} parent=1 // pred_region
      %s163 = ssub.s32 32, 32
      %164 = vsyncadd [#allocation23], %s163
      %s166 = sshll.u32 [#allocation22], 4
      %s167 = int_to_ptr.vmem [resolvable:$true] %s166
      %169 = dma.hbm_to_vmem [thread:$0]  %s16, 32, %s167, [#allocation23]
    $region69: #{tpu_custom_call.1} parent=1 // pred_fallthru
      _
    // Predicated region
    $region70: #{tpu_custom_call.1} parent=1 // pred_check
      _
    $region71: #{tpu_custom_call.1} parent=1 // pred_check_branch
      %171 = sbr.rel (0) target = $region73
    $region72: #{tpu_custom_call.1} parent=1 // pred_region
      %s173 = ssub.s32 8192, 8192
      %174 = vsyncadd [#allocation23], %s173
      %s175 = sshll.u32 [#allocation24], 4
      %s176 = int_to_ptr.vmem [resolvable:$true] %s175
      %181 = dma.hbm_to_vmem [thread:$0]  %s17, 8192, %s176, [#allocation23], 256, 256, 16
    $region73: #{tpu_custom_call.1} parent=1 // pred_fallthru
      _
    // Predicated region
    $region74: #{tpu_custom_call.1} parent=1 // pred_check
      _
    $region75: #{tpu_custom_call.1} parent=1 // pred_check_branch
      %183 = sbr.rel (0) target = $region77
    $region76: #{tpu_custom_call.1} parent=1 // pred_region
      _
    $region77: #{tpu_custom_call.1} parent=1 // pred_fallthru
      _
    // Predicated region
    $region78: #{tpu_custom_call.1} parent=1 // pred_check
      _
    $region79: #{tpu_custom_call.1} parent=1 // pred_check_branch
      %185 = sbr.rel (0) target = $region81
    $region80: #{tpu_custom_call.1} parent=1 // pred_region
      _
    $region81: #{tpu_custom_call.1} parent=1 // pred_fallthru
      _
    // Predicated region
    $region82: #{tpu_custom_call.1} parent=1 // pred_check
      _
    $region83: #{tpu_custom_call.1} parent=1 // pred_check_branch
      %187 = sbr.rel (0) target = $region85
    $region84: #{tpu_custom_call.1} parent=1 // pred_region
      %s189 = ssub.s32 4096, 4096
      %190 = vsyncadd [#allocation26], %s189
      %s191 = sshll.u32 [#allocation25], 4
      %s192 = int_to_ptr.vmem [resolvable:$true] %s191
      %197 = dma.hbm_to_vmem [thread:$0]  %s20, 4096, %s192, [#allocation26], 128, 128, 8
    $region85: #{tpu_custom_call.1} parent=1 // pred_fallthru
      _
    // Predicated region
    $region86: #{tpu_custom_call.1} parent=1 // pred_check
      _
    $region87: #{tpu_custom_call.1} parent=1 // pred_check_branch
      %199 = sbr.rel (0) target = $region89
    $region88: #{tpu_custom_call.1} parent=1 // pred_region
      %s201 = ssub.s32 4096, 4096
      %202 = vsyncadd [#allocation26], %s201
      %s203 = sshll.u32 [#allocation27], 4
      %s204 = int_to_ptr.vmem [resolvable:$true] %s203
      %209 = dma.hbm_to_vmem [thread:$0]  %s21, 4096, %s204, [#allocation26], 128, 128, 8
    $region89: #{tpu_custom_call.1} parent=1 // pred_fallthru
      _
    // Predicated region
    $region90: #{tpu_custom_call.1} parent=1 // pred_check
      _
    $region91: #{tpu_custom_call.1} parent=1 // pred_check_branch
      %211 = sbr.rel (0) target = $region93
    $region92: #{tpu_custom_call.1} parent=1 // pred_region
      %212 = dma.done [#allocation5], 1024
    $region93: #{tpu_custom_call.1} parent=1 // pred_fallthru
      _
    // Predicated region
    $region94: #{tpu_custom_call.1} parent=1 // pred_check
      _
    $region95: #{tpu_custom_call.1} parent=1 // pred_check_branch
      %214 = sbr.rel (0) target = $region97
    $region96: #{tpu_custom_call.1} parent=1 // pred_region
      %215 = dma.done [#allocation8], 64
    $region97: #{tpu_custom_call.1} parent=1 // pred_fallthru
      _
    // Predicated region
    $region98: #{tpu_custom_call.1} parent=1 // pred_check
      _
    $region99: #{tpu_custom_call.1} parent=1 // pred_check_branch
      %217 = sbr.rel (0) target = $region101
    $region100: #{tpu_custom_call.1} parent=1 // pred_region
      %218 = dma.done [#allocation8], 128
    $region101: #{tpu_custom_call.1} parent=1 // pred_fallthru
      _
    // Predicated region
    $region102: #{tpu_custom_call.1} parent=1 // pred_check
      _
    $region103: #{tpu_custom_call.1} parent=1 // pred_check_branch
      %220 = sbr.rel (0) target = $region105
    $region104: #{tpu_custom_call.1} parent=1 // pred_region
      %221 = dma.done [#allocation11], 32
    $region105: #{tpu_custom_call.1} parent=1 // pred_fallthru
      _
    // Predicated region
    $region106: #{tpu_custom_call.1} parent=1 // pred_check
      _
    $region107: #{tpu_custom_call.1} parent=1 // pred_check_branch
      %223 = sbr.rel (0) target = $region109
    $region108: #{tpu_custom_call.1} parent=1 // pred_region
      %224 = dma.done [#allocation11], 32
    $region109: #{tpu_custom_call.1} parent=1 // pred_fallthru
      _
    // Predicated region
    $region110: #{tpu_custom_call.1} parent=1 // pred_check
      _
    $region111: #{tpu_custom_call.1} parent=1 // pred_check_branch
      %226 = sbr.rel (0) target = $region113
    $region112: #{tpu_custom_call.1} parent=1 // pred_region
      %227 = dma.done [#allocation14], 32
    $region113: #{tpu_custom_call.1} parent=1 // pred_fallthru
      _
    // Predicated region
    $region114: #{tpu_custom_call.1} parent=1 // pred_check
      _
    $region115: #{tpu_custom_call.1} parent=1 // pred_check_branch
      %229 = sbr.rel (0) target = $region117
    $region116: #{tpu_custom_call.1} parent=1 // pred_region
      %230 = dma.done [#allocation14], 8192
    $region117: #{tpu_custom_call.1} parent=1 // pred_fallthru
      _
    // Predicated region
    $region118: #{tpu_custom_call.1} parent=1 // pred_check
      _
    $region119: #{tpu_custom_call.1} parent=1 // pred_check_branch
      %232 = sbr.rel (0) target = $region121
    $region120: #{tpu_custom_call.1} parent=1 // pred_region
      %233 = dma.done [#allocation17], 32
    $region121: #{tpu_custom_call.1} parent=1 // pred_fallthru
      _
    // Predicated region
    $region122: #{tpu_custom_call.1} parent=1 // pred_check
      _
    $region123: #{tpu_custom_call.1} parent=1 // pred_check_branch
      %235 = sbr.rel (0) target = $region125
    $region124: #{tpu_custom_call.1} parent=1 // pred_region
      %236 = dma.done [#allocation17], 128
    $region125: #{tpu_custom_call.1} parent=1 // pred_fallthru
      _
    // Predicated region
    $region126: #{tpu_custom_call.1} parent=1 // pred_check
      _
    $region127: #{tpu_custom_call.1} parent=1 // pred_check_branch
      %238 = sbr.rel (0) target = $region129
    $region128: #{tpu_custom_call.1} parent=1 // pred_region
      %239 = dma.done [#allocation20], 32
    $region129: #{tpu_custom_call.1} parent=1 // pred_fallthru
      _
    // Predicated region
    $region130: #{tpu_custom_call.1} parent=1 // pred_check
      _
    $region131: #{tpu_custom_call.1} parent=1 // pred_check_branch
      %241 = sbr.rel (0) target = $region133
    $region132: #{tpu_custom_call.1} parent=1 // pred_region
      %242 = dma.done [#allocation20], 32
    $region133: #{tpu_custom_call.1} parent=1 // pred_fallthru
      _
    // Predicated region
    $region134: #{tpu_custom_call.1} parent=1 // pred_check
      _
    $region135: #{tpu_custom_call.1} parent=1 // pred_check_branch
      %244 = sbr.rel (0) target = $region137
    $region136: #{tpu_custom_call.1} parent=1 // pred_region
      %245 = dma.done [#allocation23], 32
    $region137: #{tpu_custom_call.1} parent=1 // pred_fallthru
      _
    // Predicated region
    $region138: #{tpu_custom_call.1} parent=1 // pred_check
      _
    $region139: #{tpu_custom_call.1} parent=1 // pred_check_branch
      %247 = sbr.rel (0) target = $region141
    $region140: #{tpu_custom_call.1} parent=1 // pred_region
      %248 = dma.done [#allocation23], 8192
    $region141: #{tpu_custom_call.1} parent=1 // pred_fallthru
      _
    // Predicated region
    $region142: #{tpu_custom_call.1} parent=1 // pred_check
      _
    $region143: #{tpu_custom_call.1} parent=1 // pred_check_branch
      %250 = sbr.rel (0) target = $region145
    $region144: #{tpu_custom_call.1} parent=1 // pred_region
      %251 = dma.done [#allocation26], 4096
    $region145: #{tpu_custom_call.1} parent=1 // pred_fallthru
      _
    // Predicated region
    $region146: #{tpu_custom_call.1} parent=1 // pred_check
      _
    $region147: #{tpu_custom_call.1} parent=1 // pred_check_branch
      %253 = sbr.rel (0) target = $region149
    $region148: #{tpu_custom_call.1} parent=1 // pred_region
      %254 = dma.done [#allocation26], 4096
    $region149: #{tpu_custom_call.1} parent=1 // pred_fallthru
      _
    %v255 = vld [vmem:[%s0] sm:$0xff]
    %v256 = vld [vmem:[%s0 + $0x8] sm:$0xff]
    %v257 = vld [vmem:[%s0 + $0x10] sm:$0xff]
    %v258 = vld [vmem:[%s0 + $0x18] sm:$0xff]
    %v259 = vld [vmem:[%s0 + $0x20] sm:$0xff]
    %v260 = vld [vmem:[%s0 + $0x28] sm:$0xff]
    %v261 = vld [vmem:[%s0 + $0x30] sm:$0xff]
    %v262 = vld [vmem:[%s0 + $0x38] sm:$0xff]
    %v263 = vld [vmem:[%s0 + $0x40] sm:$0xff]
    %v264 = vld [vmem:[%s0 + $0x48] sm:$0xff]
    %v265 = vld [vmem:[%s0 + $0x50] sm:$0xff]
    %v266 = vld [vmem:[%s0 + $0x58] sm:$0xff]
    %v267 = vld [vmem:[%s0 + $0x60] sm:$0xff]
    %v268 = vld [vmem:[%s0 + $0x68] sm:$0xff]
    %v269 = vld [vmem:[%s0 + $0x70] sm:$0xff]
    %v270 = vld [vmem:[%s0 + $0x78] sm:$0xff]
    %v271 = vld [vmem:[%s1] sm:$0x1]
    %273 = vset.pattern.permute.xlu0 0
    %274 = vperm.xlu0 %273, %v255
    %v275 = vpop.permute.xlu0 %274
    %278 = vset.pattern.permute.xlu0 0
    %279 = vperm.xlu0 %278, %v256
    %v280 = vpop.permute.xlu0 %279
    %283 = vset.pattern.permute.xlu0 0
    %284 = vperm.xlu0 %283, %v257
    %v285 = vpop.permute.xlu0 %284
    %288 = vset.pattern.permute.xlu0 0
    %289 = vperm.xlu0 %288, %v258
    %v290 = vpop.permute.xlu0 %289
    %293 = vset.pattern.permute.xlu0 0
    %294 = vperm.xlu0 %293, %v259
    %v295 = vpop.permute.xlu0 %294
    %298 = vset.pattern.permute.xlu0 0
    %299 = vperm.xlu0 %298, %v260
    %v300 = vpop.permute.xlu0 %299
    %303 = vset.pattern.permute.xlu0 0
    %304 = vperm.xlu0 %303, %v261
    %v305 = vpop.permute.xlu0 %304
    %308 = vset.pattern.permute.xlu0 0
    %309 = vperm.xlu0 %308, %v262
    %v310 = vpop.permute.xlu0 %309
    %313 = vset.pattern.permute.xlu0 0
    %314 = vperm.xlu0 %313, %v263
    %v315 = vpop.permute.xlu0 %314
    %318 = vset.pattern.permute.xlu0 0
    %319 = vperm.xlu0 %318, %v264
    %v320 = vpop.permute.xlu0 %319
    %323 = vset.pattern.permute.xlu0 0
    %324 = vperm.xlu0 %323, %v265
    %v325 = vpop.permute.xlu0 %324
    %328 = vset.pattern.permute.xlu0 0
    %329 = vperm.xlu0 %328, %v266
    %v330 = vpop.permute.xlu0 %329
    %333 = vset.pattern.permute.xlu0 0
    %334 = vperm.xlu0 %333, %v267
    %v335 = vpop.permute.xlu0 %334
    %338 = vset.pattern.permute.xlu0 0
    %339 = vperm.xlu0 %338, %v268
    %v340 = vpop.permute.xlu0 %339
    %343 = vset.pattern.permute.xlu0 0
    %344 = vperm.xlu0 %343, %v269
    %v345 = vpop.permute.xlu0 %344
    %348 = vset.pattern.permute.xlu0 0
    %349 = vperm.xlu0 %348, %v270
    %v350 = vpop.permute.xlu0 %349
    %v353 = vlaneseq
    %v354 = vshrl.u32 %v353, 7
    %v355 = vsub.s32 0, %v354
    %v356 = vrot.slane %v271, %v355
    %v358 = vmul.f32 %v275, %v356
    %v359 = vmul.f32 %v280, %v356
    %v360 = vmul.f32 %v285, %v356
    %v361 = vmul.f32 %v290, %v356
    %v362 = vmul.f32 %v295, %v356
    %v363 = vmul.f32 %v300, %v356
    %v364 = vmul.f32 %v305, %v356
    %v365 = vmul.f32 %v310, %v356
    %v366 = vmul.f32 %v315, %v356
    %v367 = vmul.f32 %v320, %v356
    %v368 = vmul.f32 %v325, %v356
    %v369 = vmul.f32 %v330, %v356
    %v370 = vmul.f32 %v335, %v356
    %v371 = vmul.f32 %v340, %v356
    %v372 = vmul.f32 %v345, %v356
    %v373 = vmul.f32 %v350, %v356
    %v374 = vld [vmem:[#allocation7] sm:$0x1]
    %v375 = vlaneseq
    %v376 = vshrl.u32 %v375, 7
    %v377 = vsub.s32 0, %v376
    %v378 = vrot.slane %v374, %v377
    %v379 = vadd.f32 %v358, %v378
    %v380 = vadd.f32 %v359, %v378
    %v381 = vadd.f32 %v360, %v378
    %v382 = vadd.f32 %v361, %v378
    %v383 = vadd.f32 %v362, %v378
    %v384 = vadd.f32 %v363, %v378
    %v385 = vadd.f32 %v364, %v378
    %v386 = vadd.f32 %v365, %v378
    %v387 = vadd.f32 %v366, %v378
    %v388 = vadd.f32 %v367, %v378
    %v389 = vadd.f32 %v368, %v378
    %v390 = vadd.f32 %v369, %v378
    %v391 = vadd.f32 %v370, %v378
    %v392 = vadd.f32 %v371, %v378
    %v393 = vadd.f32 %v372, %v378
    %v394 = vadd.f32 %v373, %v378
    %395 = vst [vmem:[#allocation2] sm:$0xff] %v379
    %396 = vst [vmem:[#allocation2 + $0x8] sm:$0xff] %v380
    %397 = vst [vmem:[#allocation2 + $0x10] sm:$0xff] %v381
    %398 = vst [vmem:[#allocation2 + $0x18] sm:$0xff] %v382
    %399 = vst [vmem:[#allocation2 + $0x20] sm:$0xff] %v383
    %400 = vst [vmem:[#allocation2 + $0x28] sm:$0xff] %v384
    %401 = vst [vmem:[#allocation2 + $0x30] sm:$0xff] %v385
    %402 = vst [vmem:[#allocation2 + $0x38] sm:$0xff] %v386
    %403 = vst [vmem:[#allocation2 + $0x40] sm:$0xff] %v387
    %404 = vst [vmem:[#allocation2 + $0x48] sm:$0xff] %v388
    %405 = vst [vmem:[#allocation2 + $0x50] sm:$0xff] %v389
    %406 = vst [vmem:[#allocation2 + $0x58] sm:$0xff] %v390
    %407 = vst [vmem:[#allocation2 + $0x60] sm:$0xff] %v391
    %408 = vst [vmem:[#allocation2 + $0x68] sm:$0xff] %v392
    %409 = vst [vmem:[#allocation2 + $0x70] sm:$0xff] %v393
    %410 = vst [vmem:[#allocation2 + $0x78] sm:$0xff] %v394
    %v411 = vld [vmem:[%s3] sm:$0xff]
    %v412 = vld [vmem:[%s3 + $0x8] sm:$0xff]
    %v413 = vld [vmem:[%s3 + $0x10] sm:$0xff]
    %v414 = vld [vmem:[%s3 + $0x18] sm:$0xff]
    %v415 = vld [vmem:[#allocation2] sm:$0xff]
    %vm416 = vcmask 261120
    %v418 = vsel %vm416, 0.0, 0
    %420 = vmatprep.subr.mxu0 0.0
    %421 = vmatpush1.msra.mxu0 %v411
    %422 = vmatprep.subr.mxu0 0.0
    %423 = vmatpush1.msra.mxu0 %v412
    %424 = vmatprep.subr.mxu0 0.0
    %425 = vmatpush1.msra.mxu0 %v413
    %426 = vmatprep.subr.mxu0 0.0
    %427 = vmatpush1.msra.mxu0 %v414
    %428 = vmatprep.subr.mxu0 0.0
    %429 = vmatpush1.msra.mxu0 0.0
    %430 = vmatprep.subr.mxu0 0.0
    %431 = vmatpush1.msra.mxu0 0.0
    %432 = vmatprep.subr.mxu0 0.0
    %433 = vmatpush1.msra.mxu0 0.0
    %434 = vmatprep.subr.mxu0 0.0
    %435 = vmatpush1.msra.mxu0 0.0
    %436 = vmatprep.subr.mxu0 0.0
    %437 = vmatpush1.msra.mxu0 0.0
    %438 = vmatprep.subr.mxu0 0.0
    %439 = vmatpush1.msra.mxu0 0.0
    %440 = vmatprep.subr.mxu0 0.0
    %441 = vmatpush1.msra.mxu0 0.0
    %442 = vmatprep.subr.mxu0 0.0
    %443 = vmatpush1.msra.mxu0 0.0
    %444 = vmatprep.subr.mxu0 0.0
    %445 = vmatpush1.msra.mxu0 0.0
    %446 = vmatprep.subr.mxu0 0.0
    %447 = vmatpush1.msra.mxu0 0.0
    %448 = vmatprep.subr.mxu0 0.0
    %449 = vmatpush1.msra.mxu0 0.0
    %450 = vmatprep.subr.mxu0 0.0
    %451 = vmatpush1.msra.mxu0 0.0
    %452 = vmatprep.subr.mxu0 0.0
    %453 = vmatpush1.msra.mxu0 0.0
    %454 = vmatprep.subr.mxu0 0.0
    %455 = vmatpush1.msra.mxu0 0.0
    %456 = vmatprep.subr.mxu0 0.0
    %457 = vmatpush1.msra.mxu0 0.0
    %458 = vmatprep.subr.mxu0 0.0
    %459 = vmatpush1.msra.mxu0 0.0
    %460 = vmatprep.subr.mxu0 0.0
    %461 = vmatpush1.msra.mxu0 0.0
    %462 = vmatprep.subr.mxu0 0.0
    %463 = vmatpush1.msra.mxu0 0.0
    %464 = vmatprep.subr.mxu0 0.0
    %465 = vmatpush1.msra.mxu0 0.0
    %466 = vmatprep.subr.mxu0 0.0
    %467 = vmatpush1.msra.mxu0 0.0
    %468 = vmatprep.subr.mxu0 0.0
    %469 = vmatpush1.msra.mxu0 0.0
    %470 = vmatprep.subr.mxu0 0.0
    %471 = vmatpush1.msra.mxu0 0.0
    %472 = vmatprep.subr.mxu0 0.0
    %473 = vmatpush1.msra.mxu0 0.0
    %474 = vmatprep.subr.mxu0 0.0
    %475 = vmatpush1.msra.mxu0 0.0
    %476 = vmatprep.subr.mxu0 0.0
    %477 = vmatpush1.msra.mxu0 0.0
    %478 = vmatprep.subr.mxu0 0.0
    %479 = vmatpush1.msra.mxu0 0.0
    %480 = vmatprep.subr.mxu0 0.0
    %481 = vmatpush1.msra.mxu0 0.0
    %482 = vmatprep.subr.mxu0 0.0
    %483 = vmatpush1.msra.mxu0 0.0
    %484 = vmatprep.mubr.f32.mxu0 0.0
    %485 = vmatmul.mubr.f32.gmra.mrb[0].mxu0 %v418
    %v486 = vpop.f32.mrb[0].mxu0
    %v487 = vadd.f32 0.0, %v486
    %v488 = vpop.f32.mrb[0].mxu0
    %489 = vdwg.mxu0
    %v490 = vadd.f32 %v415, %v487
    %v491 = vxor.u32 %v490, 2147483648
    %v492 = vmul.f32 %v491, 1.442695
    %v493 = vpow.pop %v492
    %v494 = vadd.f32 %v493, 1.0
    %v495 = vrcp.pop %v494
    %v496 = vmul.f32 1.0, %v495
    %v497 = vtanh.pop %v490
    %v498 = vmul.f32 %v496, 0.0
    %500 = vrot.lane.b32.xlu0 %v497, 64
    %v501 = vpop.permute.xlu0 %500
    %v503 = vmul.f32 %v496, %v501
    %505 = vrot.lane.b32.xlu0 %v503, 32
    %v506 = vpop.permute.xlu0 %505
    %v508 = vadd.f32 %v498, %v506
    %v509 = vtanh.pop %v508
    %511 = vrot.lane.b32.xlu0 %v509, 64
    %v512 = vpop.permute.xlu0 %511
    %v514 = vmul.f32 %v496, %v512
    %516 = vrot.lane.b32.xlu0 %v514, 32
    %v517 = vpop.permute.xlu0 %516
    %519 = vst.msk [vmem:[#allocation3] sm:$0xff] %vm416, %v517
    %v520 = vld [vmem:[#allocation2 + $0x8] sm:$0xff]
    %v521 = vsel %vm416, %v517, 0
    %523 = vmatprep.subr.mxu0 0.0
    %524 = vmatpush1.msra.mxu0 %v411
    %525 = vmatprep.subr.mxu0 0.0
    %526 = vmatpush1.msra.mxu0 %v412
    %527 = vmatprep.subr.mxu0 0.0
    %528 = vmatpush1.msra.mxu0 %v413
    %529 = vmatprep.subr.mxu0 0.0
    %530 = vmatpush1.msra.mxu0 %v414
    %531 = vmatprep.subr.mxu0 0.0
    %532 = vmatpush1.msra.mxu0 0.0
    %533 = vmatprep.subr.mxu0 0.0
    %534 = vmatpush1.msra.mxu0 0.0
    %535 = vmatprep.subr.mxu0 0.0
    %536 = vmatpush1.msra.mxu0 0.0
    %537 = vmatprep.subr.mxu0 0.0
    %538 = vmatpush1.msra.mxu0 0.0
    %539 = vmatprep.subr.mxu0 0.0
    %540 = vmatpush1.msra.mxu0 0.0
    %541 = vmatprep.subr.mxu0 0.0
    %542 = vmatpush1.msra.mxu0 0.0
    %543 = vmatprep.subr.mxu0 0.0
    %544 = vmatpush1.msra.mxu0 0.0
    %545 = vmatprep.subr.mxu0 0.0
    %546 = vmatpush1.msra.mxu0 0.0
    %547 = vmatprep.subr.mxu0 0.0
    %548 = vmatpush1.msra.mxu0 0.0
    %549 = vmatprep.subr.mxu0 0.0
    %550 = vmatpush1.msra.mxu0 0.0
    %551 = vmatprep.subr.mxu0 0.0
    %552 = vmatpush1.msra.mxu0 0.0
    %553 = vmatprep.subr.mxu0 0.0
    %554 = vmatpush1.msra.mxu0 0.0
    %555 = vmatprep.subr.mxu0 0.0
    %556 = vmatpush1.msra.mxu0 0.0
    %557 = vmatprep.subr.mxu0 0.0
    %558 = vmatpush1.msra.mxu0 0.0
    %559 = vmatprep.subr.mxu0 0.0
    %560 = vmatpush1.msra.mxu0 0.0
    %561 = vmatprep.subr.mxu0 0.0
    %562 = vmatpush1.msra.mxu0 0.0
    %563 = vmatprep.subr.mxu0 0.0
    %564 = vmatpush1.msra.mxu0 0.0
    %565 = vmatprep.subr.mxu0 0.0
    %566 = vmatpush1.msra.mxu0 0.0
    %567 = vmatprep.subr.mxu0 0.0
    %568 = vmatpush1.msra.mxu0 0.0
    %569 = vmatprep.subr.mxu0 0.0
    %570 = vmatpush1.msra.mxu0 0.0
    %571 = vmatprep.subr.mxu0 0.0
    %572 = vmatpush1.msra.mxu0 0.0
    %573 = vmatprep.subr.mxu0 0.0
    %574 = vmatpush1.msra.mxu0 0.0
    %575 = vmatprep.subr.mxu0 0.0
    %576 = vmatpush1.msra.mxu0 0.0
    %577 = vmatprep.subr.mxu0 0.0
    %578 = vmatpush1.msra.mxu0 0.0
    %579 = vmatprep.subr.mxu0 0.0
    %580 = vmatpush1.msra.mxu0 0.0
    %581 = vmatprep.subr.mxu0 0.0
    %582 = vmatpush1.msra.mxu0 0.0
    %583 = vmatprep.subr.mxu0 0.0
    %584 = vmatpush1.msra.mxu0 0.0
    %585 = vmatprep.subr.mxu0 0.0
    %586 = vmatpush1.msra.mxu0 0.0
    %587 = vmatprep.mubr.f32.mxu0 0.0
    %588 = vmatmul.mubr.f32.gmra.mrb[0].mxu0 %v521
    %v589 = vpop.f32.mrb[0].mxu0
    %v590 = vadd.f32 0.0, %v589
    %v591 = vpop.f32.mrb[0].mxu0
    %592 = vdwg.mxu0
    %v593 = vadd.f32 %v520, %v590
    %v594 = vxor.u32 %v593, 2147483648
    %v595 = vmul.f32 %v594, 1.442695
    %v596 = vpow.pop %v595
    %v597 = vadd.f32 %v596, 1.0
    %v598 = vrcp.pop %v597
    %v599 = vmul.f32 1.0, %v598
    %v600 = vtanh.pop %v593
    %v601 = vmul.f32 %v599, %v508
    %603 = vrot.lane.b32.xlu0 %v600, 64
    %v604 = vpop.permute.xlu0 %603
    %v606 = vmul.f32 %v599, %v604
    %608 = vrot.lane.b32.xlu0 %v606, 32
    %v609 = vpop.permute.xlu0 %608
    %v611 = vadd.f32 %v601, %v609
    %v612 = vtanh.pop %v611
    %614 = vrot.lane.b32.xlu0 %v612, 64
    %v615 = vpop.permute.xlu0 %614
    %v617 = vmul.f32 %v599, %v615
    %619 = vrot.lane.b32.xlu0 %v617, 32
    %v620 = vpop.permute.xlu0 %619
    %622 = vst.msk [vmem:[#allocation3 + $0x8] sm:$0xff] %vm416, %v620
    %v623 = vld [vmem:[#allocation2 + $0x10] sm:$0xff]
    %v624 = vsel %vm416, %v620, 0
    %626 = vmatprep.subr.mxu0 0.0
    %627 = vmatpush1.msra.mxu0 %v411
    %628 = vmatprep.subr.mxu0 0.0
    %629 = vmatpush1.msra.mxu0 %v412
    %630 = vmatprep.subr.mxu0 0.0
    %631 = vmatpush1.msra.mxu0 %v413
    %632 = vmatprep.subr.mxu0 0.0
    %633 = vmatpush1.msra.mxu0 %v414
    %634 = vmatprep.subr.mxu0 0.0
    %635 = vmatpush1.msra.mxu0 0.0
    %636 = vmatprep.subr.mxu0 0.0
    %637 = vmatpush1.msra.mxu0 0.0
    %638 = vmatprep.subr.mxu0 0.0
    %639 = vmatpush1.msra.mxu0 0.0
    %640 = vmatprep.subr.mxu0 0.0
    %641 = vmatpush1.msra.mxu0 0.0
    %642 = vmatprep.subr.mxu0 0.0
    %643 = vmatpush1.msra.mxu0 0.0
    %644 = vmatprep.subr.mxu0 0.0
    %645 = vmatpush1.msra.mxu0 0.0
    %646 = vmatprep.subr.mxu0 0.0
    %647 = vmatpush1.msra.mxu0 0.0
    %648 = vmatprep.subr.mxu0 0.0
    %649 = vmatpush1.msra.mxu0 0.0
    %650 = vmatprep.subr.mxu0 0.0
    %651 = vmatpush1.msra.mxu0 0.0
    %652 = vmatprep.subr.mxu0 0.0
    %653 = vmatpush1.msra.mxu0 0.0
    %654 = vmatprep.subr.mxu0 0.0
    %655 = vmatpush1.msra.mxu0 0.0
    %656 = vmatprep.subr.mxu0 0.0
    %657 = vmatpush1.msra.mxu0 0.0
    %658 = vmatprep.subr.mxu0 0.0
    %659 = vmatpush1.msra.mxu0 0.0
    %660 = vmatprep.subr.mxu0 0.0
    %661 = vmatpush1.msra.mxu0 0.0
    %662 = vmatprep.subr.mxu0 0.0
    %663 = vmatpush1.msra.mxu0 0.0
    %664 = vmatprep.subr.mxu0 0.0
    %665 = vmatpush1.msra.mxu0 0.0
    %666 = vmatprep.subr.mxu0 0.0
    %667 = vmatpush1.msra.mxu0 0.0
    %668 = vmatprep.subr.mxu0 0.0
    %669 = vmatpush1.msra.mxu0 0.0
    %670 = vmatprep.subr.mxu0 0.0
    %671 = vmatpush1.msra.mxu0 0.0
    %672 = vmatprep.subr.mxu0 0.0
    %673 = vmatpush1.msra.mxu0 0.0
    %674 = vmatprep.subr.mxu0 0.0
    %675 = vmatpush1.msra.mxu0 0.0
    %676 = vmatprep.subr.mxu0 0.0
    %677 = vmatpush1.msra.mxu0 0.0
    %678 = vmatprep.subr.mxu0 0.0
    %679 = vmatpush1.msra.mxu0 0.0
    %680 = vmatprep.subr.mxu0 0.0
    %681 = vmatpush1.msra.mxu0 0.0
    %682 = vmatprep.subr.mxu0 0.0
    %683 = vmatpush1.msra.mxu0 0.0
    %684 = vmatprep.subr.mxu0 0.0
    %685 = vmatpush1.msra.mxu0 0.0
    %686 = vmatprep.subr.mxu0 0.0
    %687 = vmatpush1.msra.mxu0 0.0
    %688 = vmatprep.subr.mxu0 0.0
    %689 = vmatpush1.msra.mxu0 0.0
    %690 = vmatprep.mubr.f32.mxu0 0.0
    %691 = vmatmul.mubr.f32.gmra.mrb[0].mxu0 %v624
    %v692 = vpop.f32.mrb[0].mxu0
    %v693 = vadd.f32 0.0, %v692
    %v694 = vpop.f32.mrb[0].mxu0
    %695 = vdwg.mxu0
    %v696 = vadd.f32 %v623, %v693
    %v697 = vxor.u32 %v696, 2147483648
    %v698 = vmul.f32 %v697, 1.442695
    %v699 = vpow.pop %v698
    %v700 = vadd.f32 %v699, 1.0
    %v701 = vrcp.pop %v700
    %v702 = vmul.f32 1.0, %v701
    %v703 = vtanh.pop %v696
    %v704 = vmul.f32 %v702, %v611
    %706 = vrot.lane.b32.xlu0 %v703, 64
    %v707 = vpop.permute.xlu0 %706
    %v709 = vmul.f32 %v702, %v707
    %711 = vrot.lane.b32.xlu0 %v709, 32
    %v712 = vpop.permute.xlu0 %711
    %v714 = vadd.f32 %v704, %v712
    %v715 = vtanh.pop %v714
    %717 = vrot.lane.b32.xlu0 %v715, 64
    %v718 = vpop.permute.xlu0 %717
    %v720 = vmul.f32 %v702, %v718
    %722 = vrot.lane.b32.xlu0 %v720, 32
    %v723 = vpop.permute.xlu0 %722
    %725 = vst.msk [vmem:[#allocation3 + $0x10] sm:$0xff] %vm416, %v723
    %v726 = vld [vmem:[#allocation2 + $0x18] sm:$0xff]
    %v727 = vsel %vm416, %v723, 0
    %729 = vmatprep.subr.mxu0 0.0
    %730 = vmatpush1.msra.mxu0 %v411
    %731 = vmatprep.subr.mxu0 0.0
    %732 = vmatpush1.msra.mxu0 %v412
    %733 = vmatprep.subr.mxu0 0.0
    %734 = vmatpush1.msra.mxu0 %v413
    %735 = vmatprep.subr.mxu0 0.0
    %736 = vmatpush1.msra.mxu0 %v414
    %737 = vmatprep.subr.mxu0 0.0
    %738 = vmatpush1.msra.mxu0 0.0
    %739 = vmatprep.subr.mxu0 0.0
    %740 = vmatpush1.msra.mxu0 0.0
    %741 = vmatprep.subr.mxu0 0.0
    %742 = vmatpush1.msra.mxu0 0.0
    %743 = vmatprep.subr.mxu0 0.0
    %744 = vmatpush1.msra.mxu0 0.0
    %745 = vmatprep.subr.mxu0 0.0
    %746 = vmatpush1.msra.mxu0 0.0
    %747 = vmatprep.subr.mxu0 0.0
    %748 = vmatpush1.msra.mxu0 0.0
    %749 = vmatprep.subr.mxu0 0.0
    %750 = vmatpush1.msra.mxu0 0.0
    %751 = vmatprep.subr.mxu0 0.0
    %752 = vmatpush1.msra.mxu0 0.0
    %753 = vmatprep.subr.mxu0 0.0
    %754 = vmatpush1.msra.mxu0 0.0
    %755 = vmatprep.subr.mxu0 0.0
    %756 = vmatpush1.msra.mxu0 0.0
    %757 = vmatprep.subr.mxu0 0.0
    %758 = vmatpush1.msra.mxu0 0.0
    %759 = vmatprep.subr.mxu0 0.0
    %760 = vmatpush1.msra.mxu0 0.0
    %761 = vmatprep.subr.mxu0 0.0
    %762 = vmatpush1.msra.mxu0 0.0
    %763 = vmatprep.subr.mxu0 0.0
    %764 = vmatpush1.msra.mxu0 0.0
    %765 = vmatprep.subr.mxu0 0.0
    %766 = vmatpush1.msra.mxu0 0.0
    %767 = vmatprep.subr.mxu0 0.0
    %768 = vmatpush1.msra.mxu0 0.0
    %769 = vmatprep.subr.mxu0 0.0
    %770 = vmatpush1.msra.mxu0 0.0
    %771 = vmatprep.subr.mxu0 0.0
    %772 = vmatpush1.msra.mxu0 0.0
    %773 = vmatprep.subr.mxu0 0.0
    %774 = vmatpush1.msra.mxu0 0.0
    %775 = vmatprep.subr.mxu0 0.0
    %776 = vmatpush1.msra.mxu0 0.0
    %777 = vmatprep.subr.mxu0 0.0
    %778 = vmatpush1.msra.mxu0 0.0
    %779 = vmatprep.subr.mxu0 0.0
    %780 = vmatpush1.msra.mxu0 0.0
    %781 = vmatprep.subr.mxu0 0.0
    %782 = vmatpush1.msra.mxu0 0.0
    %783 = vmatprep.subr.mxu0 0.0
    %784 = vmatpush1.msra.mxu0 0.0
    %785 = vmatprep.subr.mxu0 0.0
    %786 = vmatpush1.msra.mxu0 0.0
    %787 = vmatprep.subr.mxu0 0.0
    %788 = vmatpush1.msra.mxu0 0.0
    %789 = vmatprep.subr.mxu0 0.0
    %790 = vmatpush1.msra.mxu0 0.0
    %791 = vmatprep.subr.mxu0 0.0
    %792 = vmatpush1.msra.mxu0 0.0
    %793 = vmatprep.mubr.f32.mxu0 0.0
    %794 = vmatmul.mubr.f32.gmra.mrb[0].mxu0 %v727
    %v795 = vpop.f32.mrb[0].mxu0
    %v796 = vadd.f32 0.0, %v795
    %v797 = vpop.f32.mrb[0].mxu0
    %798 = vdwg.mxu0
    %v799 = vadd.f32 %v726, %v796
    %v800 = vxor.u32 %v799, 2147483648
    %v801 = vmul.f32 %v800, 1.442695
    %v802 = vpow.pop %v801
    %v803 = vadd.f32 %v802, 1.0
    %v804 = vrcp.pop %v803
    %v805 = vmul.f32 1.0, %v804
    %v806 = vtanh.pop %v799
    %v807 = vmul.f32 %v805, %v714
    %809 = vrot.lane.b32.xlu0 %v806, 64
    %v810 = vpop.permute.xlu0 %809
    %v812 = vmul.f32 %v805, %v810
    %814 = vrot.lane.b32.xlu0 %v812, 32
    %v815 = vpop.permute.xlu0 %814
    %v817 = vadd.f32 %v807, %v815
    %v818 = vtanh.pop %v817
    %820 = vrot.lane.b32.xlu0 %v818, 64
    %v821 = vpop.permute.xlu0 %820
    %v823 = vmul.f32 %v805, %v821
    %825 = vrot.lane.b32.xlu0 %v823, 32
    %v826 = vpop.permute.xlu0 %825
    %828 = vst.msk [vmem:[#allocation3 + $0x18] sm:$0xff] %vm416, %v826
    %v829 = vld [vmem:[#allocation2 + $0x20] sm:$0xff]
    %v830 = vsel %vm416, %v826, 0
    %832 = vmatprep.subr.mxu0 0.0
    %833 = vmatpush1.msra.mxu0 %v411
    %834 = vmatprep.subr.mxu0 0.0
    %835 = vmatpush1.msra.mxu0 %v412
    %836 = vmatprep.subr.mxu0 0.0
    %837 = vmatpush1.msra.mxu0 %v413
    %838 = vmatprep.subr.mxu0 0.0
    %839 = vmatpush1.msra.mxu0 %v414
    %840 = vmatprep.subr.mxu0 0.0
    %841 = vmatpush1.msra.mxu0 0.0
    %842 = vmatprep.subr.mxu0 0.0
    %843 = vmatpush1.msra.mxu0 0.0
    %844 = vmatprep.subr.mxu0 0.0
    %845 = vmatpush1.msra.mxu0 0.0
    %846 = vmatprep.subr.mxu0 0.0
    %847 = vmatpush1.msra.mxu0 0.0
    %848 = vmatprep.subr.mxu0 0.0
    %849 = vmatpush1.msra.mxu0 0.0
    %850 = vmatprep.subr.mxu0 0.0
    %851 = vmatpush1.msra.mxu0 0.0
    %852 = vmatprep.subr.mxu0 0.0
    %853 = vmatpush1.msra.mxu0 0.0
    %854 = vmatprep.subr.mxu0 0.0
    %855 = vmatpush1.msra.mxu0 0.0
    %856 = vmatprep.subr.mxu0 0.0
    %857 = vmatpush1.msra.mxu0 0.0
    %858 = vmatprep.subr.mxu0 0.0
    %859 = vmatpush1.msra.mxu0 0.0
    %860 = vmatprep.subr.mxu0 0.0
    %861 = vmatpush1.msra.mxu0 0.0
    %862 = vmatprep.subr.mxu0 0.0
    %863 = vmatpush1.msra.mxu0 0.0
    %864 = vmatprep.subr.mxu0 0.0
    %865 = vmatpush1.msra.mxu0 0.0
    %866 = vmatprep.subr.mxu0 0.0
    %867 = vmatpush1.msra.mxu0 0.0
    %868 = vmatprep.subr.mxu0 0.0
    %869 = vmatpush1.msra.mxu0 0.0
    %870 = vmatprep.subr.mxu0 0.0
    %871 = vmatpush1.msra.mxu0 0.0
    %872 = vmatprep.subr.mxu0 0.0
    %873 = vmatpush1.msra.mxu0 0.0
    %874 = vmatprep.subr.mxu0 0.0
    %875 = vmatpush1.msra.mxu0 0.0
    %876 = vmatprep.subr.mxu0 0.0
    %877 = vmatpush1.msra.mxu0 0.0
    %878 = vmatprep.subr.mxu0 0.0
    %879 = vmatpush1.msra.mxu0 0.0
    %880 = vmatprep.subr.mxu0 0.0
    %881 = vmatpush1.msra.mxu0 0.0
    %882 = vmatprep.subr.mxu0 0.0
    %883 = vmatpush1.msra.mxu0 0.0
    %884 = vmatprep.subr.mxu0 0.0
    %885 = vmatpush1.msra.mxu0 0.0
    %886 = vmatprep.subr.mxu0 0.0
    %887 = vmatpush1.msra.mxu0 0.0
    %888 = vmatprep.subr.mxu0 0.0
    %889 = vmatpush1.msra.mxu0 0.0
    %890 = vmatprep.subr.mxu0 0.0
    %891 = vmatpush1.msra.mxu0 0.0
    %892 = vmatprep.subr.mxu0 0.0
    %893 = vmatpush1.msra.mxu0 0.0
    %894 = vmatprep.subr.mxu0 0.0
    %895 = vmatpush1.msra.mxu0 0.0
    %896 = vmatprep.mubr.f32.mxu0 0.0
    %897 = vmatmul.mubr.f32.gmra.mrb[0].mxu0 %v830
    %v898 = vpop.f32.mrb[0].mxu0
    %v899 = vadd.f32 0.0, %v898
    %v900 = vpop.f32.mrb[0].mxu0
    %901 = vdwg.mxu0
    %v902 = vadd.f32 %v829, %v899
    %v903 = vxor.u32 %v902, 2147483648
    %v904 = vmul.f32 %v903, 1.442695
    %v905 = vpow.pop %v904
    %v906 = vadd.f32 %v905, 1.0
    %v907 = vrcp.pop %v906
    %v908 = vmul.f32 1.0, %v907
    %v909 = vtanh.pop %v902
    %v910 = vmul.f32 %v908, %v817
    %912 = vrot.lane.b32.xlu0 %v909, 64
    %v913 = vpop.permute.xlu0 %912
    %v915 = vmul.f32 %v908, %v913
    %917 = vrot.lane.b32.xlu0 %v915, 32
    %v918 = vpop.permute.xlu0 %917
    %v920 = vadd.f32 %v910, %v918
    %v921 = vtanh.pop %v920
    %923 = vrot.lane.b32.xlu0 %v921, 64
    %v924 = vpop.permute.xlu0 %923
    %v926 = vmul.f32 %v908, %v924
    %928 = vrot.lane.b32.xlu0 %v926, 32
    %v929 = vpop.permute.xlu0 %928
    %931 = vst.msk [vmem:[#allocation3 + $0x20] sm:$0xff] %vm416, %v929
    %v932 = vld [vmem:[#allocation2 + $0x28] sm:$0xff]
    %v933 = vsel %vm416, %v929, 0
    %935 = vmatprep.subr.mxu0 0.0
    %936 = vmatpush1.msra.mxu0 %v411
    %937 = vmatprep.subr.mxu0 0.0
    %938 = vmatpush1.msra.mxu0 %v412
    %939 = vmatprep.subr.mxu0 0.0
    %940 = vmatpush1.msra.mxu0 %v413
    %941 = vmatprep.subr.mxu0 0.0
    %942 = vmatpush1.msra.mxu0 %v414
    %943 = vmatprep.subr.mxu0 0.0
    %944 = vmatpush1.msra.mxu0 0.0
    %945 = vmatprep.subr.mxu0 0.0
    %946 = vmatpush1.msra.mxu0 0.0
    %947 = vmatprep.subr.mxu0 0.0
    %948 = vmatpush1.msra.mxu0 0.0
    %949 = vmatprep.subr.mxu0 0.0
    %950 = vmatpush1.msra.mxu0 0.0
    %951 = vmatprep.subr.mxu0 0.0
    %952 = vmatpush1.msra.mxu0 0.0
    %953 = vmatprep.subr.mxu0 0.0
    %954 = vmatpush1.msra.mxu0 0.0
    %955 = vmatprep.subr.mxu0 0.0
    %956 = vmatpush1.msra.mxu0 0.0
    %957 = vmatprep.subr.mxu0 0.0
    %958 = vmatpush1.msra.mxu0 0.0
    %959 = vmatprep.subr.mxu0 0.0
    %960 = vmatpush1.msra.mxu0 0.0
    %961 = vmatprep.subr.mxu0 0.0
    %962 = vmatpush1.msra.mxu0 0.0
    %963 = vmatprep.subr.mxu0 0.0
    %964 = vmatpush1.msra.mxu0 0.0
    %965 = vmatprep.subr.mxu0 0.0
    %966 = vmatpush1.msra.mxu0 0.0
    %967 = vmatprep.subr.mxu0 0.0
    %968 = vmatpush1.msra.mxu0 0.0
    %969 = vmatprep.subr.mxu0 0.0
    %970 = vmatpush1.msra.mxu0 0.0
    %971 = vmatprep.subr.mxu0 0.0
    %972 = vmatpush1.msra.mxu0 0.0
    %973 = vmatprep.subr.mxu0 0.0
    %974 = vmatpush1.msra.mxu0 0.0
    %975 = vmatprep.subr.mxu0 0.0
    %976 = vmatpush1.msra.mxu0 0.0
    %977 = vmatprep.subr.mxu0 0.0
    %978 = vmatpush1.msra.mxu0 0.0
    %979 = vmatprep.subr.mxu0 0.0
    %980 = vmatpush1.msra.mxu0 0.0
    %981 = vmatprep.subr.mxu0 0.0
    %982 = vmatpush1.msra.mxu0 0.0
    %983 = vmatprep.subr.mxu0 0.0
    %984 = vmatpush1.msra.mxu0 0.0
    %985 = vmatprep.subr.mxu0 0.0
    %986 = vmatpush1.msra.mxu0 0.0
    %987 = vmatprep.subr.mxu0 0.0
    %988 = vmatpush1.msra.mxu0 0.0
    %989 = vmatprep.subr.mxu0 0.0
    %990 = vmatpush1.msra.mxu0 0.0
    %991 = vmatprep.subr.mxu0 0.0
    %992 = vmatpush1.msra.mxu0 0.0
    %993 = vmatprep.subr.mxu0 0.0
    %994 = vmatpush1.msra.mxu0 0.0
    %995 = vmatprep.subr.mxu0 0.0
    %996 = vmatpush1.msra.mxu0 0.0
    %997 = vmatprep.subr.mxu0 0.0
    %998 = vmatpush1.msra.mxu0 0.0
    %999 = vmatprep.mubr.f32.mxu0 0.0
    %1000 = vmatmul.mubr.f32.gmra.mrb[0].mxu0 %v933
    %v1001 = vpop.f32.mrb[0].mxu0
    %v1002 = vadd.f32 0.0, %v1001
    %v1003 = vpop.f32.mrb[0].mxu0
    %1004 = vdwg.mxu0
    %v1005 = vadd.f32 %v932, %v1002
    %v1006 = vxor.u32 %v1005, 2147483648
    %v1007 = vmul.f32 %v1006, 1.442695
    %v1008 = vpow.pop %v1007
    %v1009 = vadd.f32 %v1008, 1.0
    %v1010 = vrcp.pop %v1009
    %v1011 = vmul.f32 1.0, %v1010
    %v1012 = vtanh.pop %v1005
    %v1013 = vmul.f32 %v1011, %v920
    %1015 = vrot.lane.b32.xlu0 %v1012, 64
    %v1016 = vpop.permute.xlu0 %1015
    %v1018 = vmul.f32 %v1011, %v1016
    %1020 = vrot.lane.b32.xlu0 %v1018, 32
    %v1021 = vpop.permute.xlu0 %1020
    %v1023 = vadd.f32 %v1013, %v1021
    %v1024 = vtanh.pop %v1023
    %1026 = vrot.lane.b32.xlu0 %v1024, 64
    %v1027 = vpop.permute.xlu0 %1026
    %v1029 = vmul.f32 %v1011, %v1027
    %1031 = vrot.lane.b32.xlu0 %v1029, 32
    %v1032 = vpop.permute.xlu0 %1031
    %1034 = vst.msk [vmem:[#allocation3 + $0x28] sm:$0xff] %vm416, %v1032
    %v1035 = vld [vmem:[#allocation2 + $0x30] sm:$0xff]
    %v1036 = vsel %vm416, %v1032, 0
    %1038 = vmatprep.subr.mxu0 0.0
    %1039 = vmatpush1.msra.mxu0 %v411
    %1040 = vmatprep.subr.mxu0 0.0
    %1041 = vmatpush1.msra.mxu0 %v412
    %1042 = vmatprep.subr.mxu0 0.0
    %1043 = vmatpush1.msra.mxu0 %v413
    %1044 = vmatprep.subr.mxu0 0.0
    %1045 = vmatpush1.msra.mxu0 %v414
    %1046 = vmatprep.subr.mxu0 0.0
    %1047 = vmatpush1.msra.mxu0 0.0
    %1048 = vmatprep.subr.mxu0 0.0
    %1049 = vmatpush1.msra.mxu0 0.0
    %1050 = vmatprep.subr.mxu0 0.0
    %1051 = vmatpush1.msra.mxu0 0.0
    %1052 = vmatprep.subr.mxu0 0.0
    %1053 = vmatpush1.msra.mxu0 0.0
    %1054 = vmatprep.subr.mxu0 0.0
    %1055 = vmatpush1.msra.mxu0 0.0
    %1056 = vmatprep.subr.mxu0 0.0
    %1057 = vmatpush1.msra.mxu0 0.0
    %1058 = vmatprep.subr.mxu0 0.0
    %1059 = vmatpush1.msra.mxu0 0.0
    %1060 = vmatprep.subr.mxu0 0.0
    %1061 = vmatpush1.msra.mxu0 0.0
    %1062 = vmatprep.subr.mxu0 0.0
    %1063 = vmatpush1.msra.mxu0 0.0
    %1064 = vmatprep.subr.mxu0 0.0
    %1065 = vmatpush1.msra.mxu0 0.0
    %1066 = vmatprep.subr.mxu0 0.0
    %1067 = vmatpush1.msra.mxu0 0.0
    %1068 = vmatprep.subr.mxu0 0.0
    %1069 = vmatpush1.msra.mxu0 0.0
    %1070 = vmatprep.subr.mxu0 0.0
    %1071 = vmatpush1.msra.mxu0 0.0
    %1072 = vmatprep.subr.mxu0 0.0
    %1073 = vmatpush1.msra.mxu0 0.0
    %1074 = vmatprep.subr.mxu0 0.0
    %1075 = vmatpush1.msra.mxu0 0.0
    %1076 = vmatprep.subr.mxu0 0.0
    %1077 = vmatpush1.msra.mxu0 0.0
    %1078 = vmatprep.subr.mxu0 0.0
    %1079 = vmatpush1.msra.mxu0 0.0
    %1080 = vmatprep.subr.mxu0 0.0
    %1081 = vmatpush1.msra.mxu0 0.0
    %1082 = vmatprep.subr.mxu0 0.0
    %1083 = vmatpush1.msra.mxu0 0.0
    %1084 = vmatprep.subr.mxu0 0.0
    %1085 = vmatpush1.msra.mxu0 0.0
    %1086 = vmatprep.subr.mxu0 0.0
    %1087 = vmatpush1.msra.mxu0 0.0
    %1088 = vmatprep.subr.mxu0 0.0
    %1089 = vmatpush1.msra.mxu0 0.0
    %1090 = vmatprep.subr.mxu0 0.0
    %1091 = vmatpush1.msra.mxu0 0.0
    %1092 = vmatprep.subr.mxu0 0.0
    %1093 = vmatpush1.msra.mxu0 0.0
    %1094 = vmatprep.subr.mxu0 0.0
    %1095 = vmatpush1.msra.mxu0 0.0
    %1096 = vmatprep.subr.mxu0 0.0
    %1097 = vmatpush1.msra.mxu0 0.0
    %1098 = vmatprep.subr.mxu0 0.0
    %1099 = vmatpush1.msra.mxu0 0.0
    %1100 = vmatprep.subr.mxu0 0.0
    %1101 = vmatpush1.msra.mxu0 0.0
    %1102 = vmatprep.mubr.f32.mxu0 0.0
    %1103 = vmatmul.mubr.f32.gmra.mrb[0].mxu0 %v1036
    %v1104 = vpop.f32.mrb[0].mxu0
    %v1105 = vadd.f32 0.0, %v1104
    %v1106 = vpop.f32.mrb[0].mxu0
    %1107 = vdwg.mxu0
    %v1108 = vadd.f32 %v1035, %v1105
    %v1109 = vxor.u32 %v1108, 2147483648
    %v1110 = vmul.f32 %v1109, 1.442695
    %v1111 = vpow.pop %v1110
    %v1112 = vadd.f32 %v1111, 1.0
    %v1113 = vrcp.pop %v1112
    %v1114 = vmul.f32 1.0, %v1113
    %v1115 = vtanh.pop %v1108
    %v1116 = vmul.f32 %v1114, %v1023
    %1118 = vrot.lane.b32.xlu0 %v1115, 64
    %v1119 = vpop.permute.xlu0 %1118
    %v1121 = vmul.f32 %v1114, %v1119
    %1123 = vrot.lane.b32.xlu0 %v1121, 32
    %v1124 = vpop.permute.xlu0 %1123
    %v1126 = vadd.f32 %v1116, %v1124
    %v1127 = vtanh.pop %v1126
    %1129 = vrot.lane.b32.xlu0 %v1127, 64
    %v1130 = vpop.permute.xlu0 %1129
    %v1132 = vmul.f32 %v1114, %v1130
    %1134 = vrot.lane.b32.xlu0 %v1132, 32
    %v1135 = vpop.permute.xlu0 %1134
    %1137 = vst.msk [vmem:[#allocation3 + $0x30] sm:$0xff] %vm416, %v1135
    %v1138 = vld [vmem:[#allocation2 + $0x38] sm:$0xff]
    %v1139 = vsel %vm416, %v1135, 0
    %1141 = vmatprep.subr.mxu0 0.0
    %1142 = vmatpush1.msra.mxu0 %v411
    %1143 = vmatprep.subr.mxu0 0.0
    %1144 = vmatpush1.msra.mxu0 %v412
    %1145 = vmatprep.subr.mxu0 0.0
    %1146 = vmatpush1.msra.mxu0 %v413
    %1147 = vmatprep.subr.mxu0 0.0
    %1148 = vmatpush1.msra.mxu0 %v414
    %1149 = vmatprep.subr.mxu0 0.0
    %1150 = vmatpush1.msra.mxu0 0.0
    %1151 = vmatprep.subr.mxu0 0.0
    %1152 = vmatpush1.msra.mxu0 0.0
    %1153 = vmatprep.subr.mxu0 0.0
    %1154 = vmatpush1.msra.mxu0 0.0
    %1155 = vmatprep.subr.mxu0 0.0
    %1156 = vmatpush1.msra.mxu0 0.0
    %1157 = vmatprep.subr.mxu0 0.0
    %1158 = vmatpush1.msra.mxu0 0.0
    %1159 = vmatprep.subr.mxu0 0.0
    %1160 = vmatpush1.msra.mxu0 0.0
    %1161 = vmatprep.subr.mxu0 0.0
    %1162 = vmatpush1.msra.mxu0 0.0
    %1163 = vmatprep.subr.mxu0 0.0
    %1164 = vmatpush1.msra.mxu0 0.0
    %1165 = vmatprep.subr.mxu0 0.0
    %1166 = vmatpush1.msra.mxu0 0.0
    %1167 = vmatprep.subr.mxu0 0.0
    %1168 = vmatpush1.msra.mxu0 0.0
    %1169 = vmatprep.subr.mxu0 0.0
    %1170 = vmatpush1.msra.mxu0 0.0
    %1171 = vmatprep.subr.mxu0 0.0
    %1172 = vmatpush1.msra.mxu0 0.0
    %1173 = vmatprep.subr.mxu0 0.0
    %1174 = vmatpush1.msra.mxu0 0.0
    %1175 = vmatprep.subr.mxu0 0.0
    %1176 = vmatpush1.msra.mxu0 0.0
    %1177 = vmatprep.subr.mxu0 0.0
    %1178 = vmatpush1.msra.mxu0 0.0
    %1179 = vmatprep.subr.mxu0 0.0
    %1180 = vmatpush1.msra.mxu0 0.0
    %1181 = vmatprep.subr.mxu0 0.0
    %1182 = vmatpush1.msra.mxu0 0.0
    %1183 = vmatprep.subr.mxu0 0.0
    %1184 = vmatpush1.msra.mxu0 0.0
    %1185 = vmatprep.subr.mxu0 0.0
    %1186 = vmatpush1.msra.mxu0 0.0
    %1187 = vmatprep.subr.mxu0 0.0
    %1188 = vmatpush1.msra.mxu0 0.0
    %1189 = vmatprep.subr.mxu0 0.0
    %1190 = vmatpush1.msra.mxu0 0.0
    %1191 = vmatprep.subr.mxu0 0.0
    %1192 = vmatpush1.msra.mxu0 0.0
    %1193 = vmatprep.subr.mxu0 0.0
    %1194 = vmatpush1.msra.mxu0 0.0
    %1195 = vmatprep.subr.mxu0 0.0
    %1196 = vmatpush1.msra.mxu0 0.0
    %1197 = vmatprep.subr.mxu0 0.0
    %1198 = vmatpush1.msra.mxu0 0.0
    %1199 = vmatprep.subr.mxu0 0.0
    %1200 = vmatpush1.msra.mxu0 0.0
    %1201 = vmatprep.subr.mxu0 0.0
    %1202 = vmatpush1.msra.mxu0 0.0
    %1203 = vmatprep.subr.mxu0 0.0
    %1204 = vmatpush1.msra.mxu0 0.0
    %1205 = vmatprep.mubr.f32.mxu0 0.0
    %1206 = vmatmul.mubr.f32.gmra.mrb[0].mxu0 %v1139
    %v1207 = vpop.f32.mrb[0].mxu0
    %v1208 = vadd.f32 0.0, %v1207
    %v1209 = vpop.f32.mrb[0].mxu0
    %1210 = vdwg.mxu0
    %v1211 = vadd.f32 %v1138, %v1208
    %v1212 = vxor.u32 %v1211, 2147483648
    %v1213 = vmul.f32 %v1212, 1.442695
    %v1214 = vpow.pop %v1213
    %v1215 = vadd.f32 %v1214, 1.0
    %v1216 = vrcp.pop %v1215
    %v1217 = vmul.f32 1.0, %v1216
    %v1218 = vtanh.pop %v1211
    %v1219 = vmul.f32 %v1217, %v1126
    %1221 = vrot.lane.b32.xlu0 %v1218, 64
    %v1222 = vpop.permute.xlu0 %1221
    %v1224 = vmul.f32 %v1217, %v1222
    %1226 = vrot.lane.b32.xlu0 %v1224, 32
    %v1227 = vpop.permute.xlu0 %1226
    %v1229 = vadd.f32 %v1219, %v1227
    %v1230 = vtanh.pop %v1229
    %1232 = vrot.lane.b32.xlu0 %v1230, 64
    %v1233 = vpop.permute.xlu0 %1232
    %v1235 = vmul.f32 %v1217, %v1233
    %1237 = vrot.lane.b32.xlu0 %v1235, 32
    %v1238 = vpop.permute.xlu0 %1237
    %1240 = vst.msk [vmem:[#allocation3 + $0x38] sm:$0xff] %vm416, %v1238
    %v1241 = vld [vmem:[#allocation2 + $0x40] sm:$0xff]
    %v1242 = vsel %vm416, %v1238, 0
    %1244 = vmatprep.subr.mxu0 0.0
    %1245 = vmatpush1.msra.mxu0 %v411
    %1246 = vmatprep.subr.mxu0 0.0
    %1247 = vmatpush1.msra.mxu0 %v412
    %1248 = vmatprep.subr.mxu0 0.0
    %1249 = vmatpush1.msra.mxu0 %v413
    %1250 = vmatprep.subr.mxu0 0.0
    %1251 = vmatpush1.msra.mxu0 %v414
    %1252 = vmatprep.subr.mxu0 0.0
    %1253 = vmatpush1.msra.mxu0 0.0
    %1254 = vmatprep.subr.mxu0 0.0
    %1255 = vmatpush1.msra.mxu0 0.0
    %1256 = vmatprep.subr.mxu0 0.0
    %1257 = vmatpush1.msra.mxu0 0.0
    %1258 = vmatprep.subr.mxu0 0.0
    %1259 = vmatpush1.msra.mxu0 0.0
    %1260 = vmatprep.subr.mxu0 0.0
    %1261 = vmatpush1.msra.mxu0 0.0
    %1262 = vmatprep.subr.mxu0 0.0
    %1263 = vmatpush1.msra.mxu0 0.0
    %1264 = vmatprep.subr.mxu0 0.0
    %1265 = vmatpush1.msra.mxu0 0.0
    %1266 = vmatprep.subr.mxu0 0.0
    %1267 = vmatpush1.msra.mxu0 0.0
    %1268 = vmatprep.subr.mxu0 0.0
    %1269 = vmatpush1.msra.mxu0 0.0
    %1270 = vmatprep.subr.mxu0 0.0
    %1271 = vmatpush1.msra.mxu0 0.0
    %1272 = vmatprep.subr.mxu0 0.0
    %1273 = vmatpush1.msra.mxu0 0.0
    %1274 = vmatprep.subr.mxu0 0.0
    %1275 = vmatpush1.msra.mxu0 0.0
    %1276 = vmatprep.subr.mxu0 0.0
    %1277 = vmatpush1.msra.mxu0 0.0
    %1278 = vmatprep.subr.mxu0 0.0
    %1279 = vmatpush1.msra.mxu0 0.0
    %1280 = vmatprep.subr.mxu0 0.0
    %1281 = vmatpush1.msra.mxu0 0.0
    %1282 = vmatprep.subr.mxu0 0.0
    %1283 = vmatpush1.msra.mxu0 0.0
    %1284 = vmatprep.subr.mxu0 0.0
    %1285 = vmatpush1.msra.mxu0 0.0
    %1286 = vmatprep.subr.mxu0 0.0
    %1287 = vmatpush1.msra.mxu0 0.0
    %1288 = vmatprep.subr.mxu0 0.0
    %1289 = vmatpush1.msra.mxu0 0.0
    %1290 = vmatprep.subr.mxu0 0.0
    %1291 = vmatpush1.msra.mxu0 0.0
    %1292 = vmatprep.subr.mxu0 0.0
    %1293 = vmatpush1.msra.mxu0 0.0
    %1294 = vmatprep.subr.mxu0 0.0
    %1295 = vmatpush1.msra.mxu0 0.0
    %1296 = vmatprep.subr.mxu0 0.0
    %1297 = vmatpush1.msra.mxu0 0.0
    %1298 = vmatprep.subr.mxu0 0.0
    %1299 = vmatpush1.msra.mxu0 0.0
    %1300 = vmatprep.subr.mxu0 0.0
    %1301 = vmatpush1.msra.mxu0 0.0
    %1302 = vmatprep.subr.mxu0 0.0
    %1303 = vmatpush1.msra.mxu0 0.0
    %1304 = vmatprep.subr.mxu0 0.0
    %1305 = vmatpush1.msra.mxu0 0.0
    %1306 = vmatprep.subr.mxu0 0.0
    %1307 = vmatpush1.msra.mxu0 0.0
    %1308 = vmatprep.mubr.f32.mxu0 0.0
    %1309 = vmatmul.mubr.f32.gmra.mrb[0].mxu0 %v1242
    %v1310 = vpop.f32.mrb[0].mxu0
    %v1311 = vadd.f32 0.0, %v1310
    %v1312 = vpop.f32.mrb[0].mxu0
    %1313 = vdwg.mxu0
    %v1314 = vadd.f32 %v1241, %v1311
    %v1315 = vxor.u32 %v1314, 2147483648
    %v1316 = vmul.f32 %v1315, 1.442695
    %v1317 = vpow.pop %v1316
    %v1318 = vadd.f32 %v1317, 1.0
    %v1319 = vrcp.pop %v1318
    %v1320 = vmul.f32 1.0, %v1319
    %v1321 = vtanh.pop %v1314
    %v1322 = vmul.f32 %v1320, %v1229
    %1324 = vrot.lane.b32.xlu0 %v1321, 64
    %v1325 = vpop.permute.xlu0 %1324
    %v1327 = vmul.f32 %v1320, %v1325
    %1329 = vrot.lane.b32.xlu0 %v1327, 32
    %v1330 = vpop.permute.xlu0 %1329
    %v1332 = vadd.f32 %v1322, %v1330
    %v1333 = vtanh.pop %v1332
    %1335 = vrot.lane.b32.xlu0 %v1333, 64
    %v1336 = vpop.permute.xlu0 %1335
    %v1338 = vmul.f32 %v1320, %v1336
    %1340 = vrot.lane.b32.xlu0 %v1338, 32
    %v1341 = vpop.permute.xlu0 %1340
    %1343 = vst.msk [vmem:[#allocation3 + $0x40] sm:$0xff] %vm416, %v1341
    %v1344 = vld [vmem:[#allocation2 + $0x48] sm:$0xff]
    %v1345 = vsel %vm416, %v1341, 0
    %1347 = vmatprep.subr.mxu0 0.0
    %1348 = vmatpush1.msra.mxu0 %v411
    %1349 = vmatprep.subr.mxu0 0.0
    %1350 = vmatpush1.msra.mxu0 %v412
    %1351 = vmatprep.subr.mxu0 0.0
    %1352 = vmatpush1.msra.mxu0 %v413
    %1353 = vmatprep.subr.mxu0 0.0
    %1354 = vmatpush1.msra.mxu0 %v414
    %1355 = vmatprep.subr.mxu0 0.0
    %1356 = vmatpush1.msra.mxu0 0.0
    %1357 = vmatprep.subr.mxu0 0.0
    %1358 = vmatpush1.msra.mxu0 0.0
    %1359 = vmatprep.subr.mxu0 0.0
    %1360 = vmatpush1.msra.mxu0 0.0
    %1361 = vmatprep.subr.mxu0 0.0
    %1362 = vmatpush1.msra.mxu0 0.0
    %1363 = vmatprep.subr.mxu0 0.0
    %1364 = vmatpush1.msra.mxu0 0.0
    %1365 = vmatprep.subr.mxu0 0.0
    %1366 = vmatpush1.msra.mxu0 0.0
    %1367 = vmatprep.subr.mxu0 0.0
    %1368 = vmatpush1.msra.mxu0 0.0
    %1369 = vmatprep.subr.mxu0 0.0
    %1370 = vmatpush1.msra.mxu0 0.0
    %1371 = vmatprep.subr.mxu0 0.0
    %1372 = vmatpush1.msra.mxu0 0.0
    %1373 = vmatprep.subr.mxu0 0.0
    %1374 = vmatpush1.msra.mxu0 0.0
    %1375 = vmatprep.subr.mxu0 0.0
    %1376 = vmatpush1.msra.mxu0 0.0
    %1377 = vmatprep.subr.mxu0 0.0
    %1378 = vmatpush1.msra.mxu0 0.0
    %1379 = vmatprep.subr.mxu0 0.0
    %1380 = vmatpush1.msra.mxu0 0.0
    %1381 = vmatprep.subr.mxu0 0.0
    %1382 = vmatpush1.msra.mxu0 0.0
    %1383 = vmatprep.subr.mxu0 0.0
    %1384 = vmatpush1.msra.mxu0 0.0
    %1385 = vmatprep.subr.mxu0 0.0
    %1386 = vmatpush1.msra.mxu0 0.0
    %1387 = vmatprep.subr.mxu0 0.0
    %1388 = vmatpush1.msra.mxu0 0.0
    %1389 = vmatprep.subr.mxu0 0.0
    %1390 = vmatpush1.msra.mxu0 0.0
    %1391 = vmatprep.subr.mxu0 0.0
    %1392 = vmatpush1.msra.mxu0 0.0
    %1393 = vmatprep.subr.mxu0 0.0
    %1394 = vmatpush1.msra.mxu0 0.0
    %1395 = vmatprep.subr.mxu0 0.0
    %1396 = vmatpush1.msra.mxu0 0.0
    %1397 = vmatprep.subr.mxu0 0.0
    %1398 = vmatpush1.msra.mxu0 0.0
    %1399 = vmatprep.subr.mxu0 0.0
    %1400 = vmatpush1.msra.mxu0 0.0
    %1401 = vmatprep.subr.mxu0 0.0
    %1402 = vmatpush1.msra.mxu0 0.0
    %1403 = vmatprep.subr.mxu0 0.0
    %1404 = vmatpush1.msra.mxu0 0.0
    %1405 = vmatprep.subr.mxu0 0.0
    %1406 = vmatpush1.msra.mxu0 0.0
    %1407 = vmatprep.subr.mxu0 0.0
    %1408 = vmatpush1.msra.mxu0 0.0
    %1409 = vmatprep.subr.mxu0 0.0
    %1410 = vmatpush1.msra.mxu0 0.0
    %1411 = vmatprep.mubr.f32.mxu0 0.0
    %1412 = vmatmul.mubr.f32.gmra.mrb[0].mxu0 %v1345
    %v1413 = vpop.f32.mrb[0].mxu0
    %v1414 = vadd.f32 0.0, %v1413
    %v1415 = vpop.f32.mrb[0].mxu0
    %1416 = vdwg.mxu0
    %v1417 = vadd.f32 %v1344, %v1414
    %v1418 = vxor.u32 %v1417, 2147483648
    %v1419 = vmul.f32 %v1418, 1.442695
    %v1420 = vpow.pop %v1419
    %v1421 = vadd.f32 %v1420, 1.0
    %v1422 = vrcp.pop %v1421
    %v1423 = vmul.f32 1.0, %v1422
    %v1424 = vtanh.pop %v1417
    %v1425 = vmul.f32 %v1423, %v1332
    %1427 = vrot.lane.b32.xlu0 %v1424, 64
    %v1428 = vpop.permute.xlu0 %1427
    %v1430 = vmul.f32 %v1423, %v1428
    %1432 = vrot.lane.b32.xlu0 %v1430, 32
    %v1433 = vpop.permute.xlu0 %1432
    %v1435 = vadd.f32 %v1425, %v1433
    %v1436 = vtanh.pop %v1435
    %1438 = vrot.lane.b32.xlu0 %v1436, 64
    %v1439 = vpop.permute.xlu0 %1438
    %v1441 = vmul.f32 %v1423, %v1439
    %1443 = vrot.lane.b32.xlu0 %v1441, 32
    %v1444 = vpop.permute.xlu0 %1443
    %1446 = vst.msk [vmem:[#allocation3 + $0x48] sm:$0xff] %vm416, %v1444
    %v1447 = vld [vmem:[#allocation2 + $0x50] sm:$0xff]
    %v1448 = vsel %vm416, %v1444, 0
    %1450 = vmatprep.subr.mxu0 0.0
    %1451 = vmatpush1.msra.mxu0 %v411
    %1452 = vmatprep.subr.mxu0 0.0
    %1453 = vmatpush1.msra.mxu0 %v412
    %1454 = vmatprep.subr.mxu0 0.0
    %1455 = vmatpush1.msra.mxu0 %v413
    %1456 = vmatprep.subr.mxu0 0.0
    %1457 = vmatpush1.msra.mxu0 %v414
    %1458 = vmatprep.subr.mxu0 0.0
    %1459 = vmatpush1.msra.mxu0 0.0
    %1460 = vmatprep.subr.mxu0 0.0
    %1461 = vmatpush1.msra.mxu0 0.0
    %1462 = vmatprep.subr.mxu0 0.0
    %1463 = vmatpush1.msra.mxu0 0.0
    %1464 = vmatprep.subr.mxu0 0.0
    %1465 = vmatpush1.msra.mxu0 0.0
    %1466 = vmatprep.subr.mxu0 0.0
    %1467 = vmatpush1.msra.mxu0 0.0
    %1468 = vmatprep.subr.mxu0 0.0
    %1469 = vmatpush1.msra.mxu0 0.0
    %1470 = vmatprep.subr.mxu0 0.0
    %1471 = vmatpush1.msra.mxu0 0.0
    %1472 = vmatprep.subr.mxu0 0.0
    %1473 = vmatpush1.msra.mxu0 0.0
    %1474 = vmatprep.subr.mxu0 0.0
    %1475 = vmatpush1.msra.mxu0 0.0
    %1476 = vmatprep.subr.mxu0 0.0
    %1477 = vmatpush1.msra.mxu0 0.0
    %1478 = vmatprep.subr.mxu0 0.0
    %1479 = vmatpush1.msra.mxu0 0.0
    %1480 = vmatprep.subr.mxu0 0.0
    %1481 = vmatpush1.msra.mxu0 0.0
    %1482 = vmatprep.subr.mxu0 0.0
    %1483 = vmatpush1.msra.mxu0 0.0
    %1484 = vmatprep.subr.mxu0 0.0
    %1485 = vmatpush1.msra.mxu0 0.0
    %1486 = vmatprep.subr.mxu0 0.0
    %1487 = vmatpush1.msra.mxu0 0.0
    %1488 = vmatprep.subr.mxu0 0.0
    %1489 = vmatpush1.msra.mxu0 0.0
    %1490 = vmatprep.subr.mxu0 0.0
    %1491 = vmatpush1.msra.mxu0 0.0
    %1492 = vmatprep.subr.mxu0 0.0
    %1493 = vmatpush1.msra.mxu0 0.0
    %1494 = vmatprep.subr.mxu0 0.0
    %1495 = vmatpush1.msra.mxu0 0.0
    %1496 = vmatprep.subr.mxu0 0.0
    %1497 = vmatpush1.msra.mxu0 0.0
    %1498 = vmatprep.subr.mxu0 0.0
    %1499 = vmatpush1.msra.mxu0 0.0
    %1500 = vmatprep.subr.mxu0 0.0
    %1501 = vmatpush1.msra.mxu0 0.0
    %1502 = vmatprep.subr.mxu0 0.0
    %1503 = vmatpush1.msra.mxu0 0.0
    %1504 = vmatprep.subr.mxu0 0.0
    %1505 = vmatpush1.msra.mxu0 0.0
    %1506 = vmatprep.subr.mxu0 0.0
    %1507 = vmatpush1.msra.mxu0 0.0
    %1508 = vmatprep.subr.mxu0 0.0
    %1509 = vmatpush1.msra.mxu0 0.0
    %1510 = vmatprep.subr.mxu0 0.0
    %1511 = vmatpush1.msra.mxu0 0.0
    %1512 = vmatprep.subr.mxu0 0.0
    %1513 = vmatpush1.msra.mxu0 0.0
    %1514 = vmatprep.mubr.f32.mxu0 0.0
    %1515 = vmatmul.mubr.f32.gmra.mrb[0].mxu0 %v1448
    %v1516 = vpop.f32.mrb[0].mxu0
    %v1517 = vadd.f32 0.0, %v1516
    %v1518 = vpop.f32.mrb[0].mxu0
    %1519 = vdwg.mxu0
    %v1520 = vadd.f32 %v1447, %v1517
    %v1521 = vxor.u32 %v1520, 2147483648
    %v1522 = vmul.f32 %v1521, 1.442695
    %v1523 = vpow.pop %v1522
    %v1524 = vadd.f32 %v1523, 1.0
    %v1525 = vrcp.pop %v1524
    %v1526 = vmul.f32 1.0, %v1525
    %v1527 = vtanh.pop %v1520
    %v1528 = vmul.f32 %v1526, %v1435
    %1530 = vrot.lane.b32.xlu0 %v1527, 64
    %v1531 = vpop.permute.xlu0 %1530
    %v1533 = vmul.f32 %v1526, %v1531
    %1535 = vrot.lane.b32.xlu0 %v1533, 32
    %v1536 = vpop.permute.xlu0 %1535
    %v1538 = vadd.f32 %v1528, %v1536
    %v1539 = vtanh.pop %v1538
    %1541 = vrot.lane.b32.xlu0 %v1539, 64
    %v1542 = vpop.permute.xlu0 %1541
    %v1544 = vmul.f32 %v1526, %v1542
    %1546 = vrot.lane.b32.xlu0 %v1544, 32
    %v1547 = vpop.permute.xlu0 %1546
    %1549 = vst.msk [vmem:[#allocation3 + $0x50] sm:$0xff] %vm416, %v1547
    %v1550 = vld [vmem:[#allocation2 + $0x58] sm:$0xff]
    %v1551 = vsel %vm416, %v1547, 0
    %1553 = vmatprep.subr.mxu0 0.0
    %1554 = vmatpush1.msra.mxu0 %v411
    %1555 = vmatprep.subr.mxu0 0.0
    %1556 = vmatpush1.msra.mxu0 %v412
    %1557 = vmatprep.subr.mxu0 0.0
    %1558 = vmatpush1.msra.mxu0 %v413
    %1559 = vmatprep.subr.mxu0 0.0
    %1560 = vmatpush1.msra.mxu0 %v414
    %1561 = vmatprep.subr.mxu0 0.0
    %1562 = vmatpush1.msra.mxu0 0.0
    %1563 = vmatprep.subr.mxu0 0.0
    %1564 = vmatpush1.msra.mxu0 0.0
    %1565 = vmatprep.subr.mxu0 0.0
    %1566 = vmatpush1.msra.mxu0 0.0
    %1567 = vmatprep.subr.mxu0 0.0
    %1568 = vmatpush1.msra.mxu0 0.0
    %1569 = vmatprep.subr.mxu0 0.0
    %1570 = vmatpush1.msra.mxu0 0.0
    %1571 = vmatprep.subr.mxu0 0.0
    %1572 = vmatpush1.msra.mxu0 0.0
    %1573 = vmatprep.subr.mxu0 0.0
    %1574 = vmatpush1.msra.mxu0 0.0
    %1575 = vmatprep.subr.mxu0 0.0
    %1576 = vmatpush1.msra.mxu0 0.0
    %1577 = vmatprep.subr.mxu0 0.0
    %1578 = vmatpush1.msra.mxu0 0.0
    %1579 = vmatprep.subr.mxu0 0.0
    %1580 = vmatpush1.msra.mxu0 0.0
    %1581 = vmatprep.subr.mxu0 0.0
    %1582 = vmatpush1.msra.mxu0 0.0
    %1583 = vmatprep.subr.mxu0 0.0
    %1584 = vmatpush1.msra.mxu0 0.0
    %1585 = vmatprep.subr.mxu0 0.0
    %1586 = vmatpush1.msra.mxu0 0.0
    %1587 = vmatprep.subr.mxu0 0.0
    %1588 = vmatpush1.msra.mxu0 0.0
    %1589 = vmatprep.subr.mxu0 0.0
    %1590 = vmatpush1.msra.mxu0 0.0
    %1591 = vmatprep.subr.mxu0 0.0
    %1592 = vmatpush1.msra.mxu0 0.0
    %1593 = vmatprep.subr.mxu0 0.0
    %1594 = vmatpush1.msra.mxu0 0.0
    %1595 = vmatprep.subr.mxu0 0.0
    %1596 = vmatpush1.msra.mxu0 0.0
    %1597 = vmatprep.subr.mxu0 0.0
    %1598 = vmatpush1.msra.mxu0 0.0
    %1599 = vmatprep.subr.mxu0 0.0
    %1600 = vmatpush1.msra.mxu0 0.0
    %1601 = vmatprep.subr.mxu0 0.0
    %1602 = vmatpush1.msra.mxu0 0.0
    %1603 = vmatprep.subr.mxu0 0.0
    %1604 = vmatpush1.msra.mxu0 0.0
    %1605 = vmatprep.subr.mxu0 0.0
    %1606 = vmatpush1.msra.mxu0 0.0
    %1607 = vmatprep.subr.mxu0 0.0
    %1608 = vmatpush1.msra.mxu0 0.0
    %1609 = vmatprep.subr.mxu0 0.0
    %1610 = vmatpush1.msra.mxu0 0.0
    %1611 = vmatprep.subr.mxu0 0.0
    %1612 = vmatpush1.msra.mxu0 0.0
    %1613 = vmatprep.subr.mxu0 0.0
    %1614 = vmatpush1.msra.mxu0 0.0
    %1615 = vmatprep.subr.mxu0 0.0
    %1616 = vmatpush1.msra.mxu0 0.0
    %1617 = vmatprep.mubr.f32.mxu0 0.0
    %1618 = vmatmul.mubr.f32.gmra.mrb[0].mxu0 %v1551
    %v1619 = vpop.f32.mrb[0].mxu0
    %v1620 = vadd.f32 0.0, %v1619
    %v1621 = vpop.f32.mrb[0].mxu0
    %1622 = vdwg.mxu0
    %v1623 = vadd.f32 %v1550, %v1620
    %v1624 = vxor.u32 %v1623, 2147483648
    %v1625 = vmul.f32 %v1624, 1.442695
    %v1626 = vpow.pop %v1625
    %v1627 = vadd.f32 %v1626, 1.0
    %v1628 = vrcp.pop %v1627
    %v1629 = vmul.f32 1.0, %v1628
    %v1630 = vtanh.pop %v1623
    %v1631 = vmul.f32 %v1629, %v1538
    %1633 = vrot.lane.b32.xlu0 %v1630, 64
    %v1634 = vpop.permute.xlu0 %1633
    %v1636 = vmul.f32 %v1629, %v1634
    %1638 = vrot.lane.b32.xlu0 %v1636, 32
    %v1639 = vpop.permute.xlu0 %1638
    %v1641 = vadd.f32 %v1631, %v1639
    %v1642 = vtanh.pop %v1641
    %1644 = vrot.lane.b32.xlu0 %v1642, 64
    %v1645 = vpop.permute.xlu0 %1644
    %v1647 = vmul.f32 %v1629, %v1645
    %1649 = vrot.lane.b32.xlu0 %v1647, 32
    %v1650 = vpop.permute.xlu0 %1649
    %1652 = vst.msk [vmem:[#allocation3 + $0x58] sm:$0xff] %vm416, %v1650
    %v1653 = vld [vmem:[#allocation2 + $0x60] sm:$0xff]
    %v1654 = vsel %vm416, %v1650, 0
    %1656 = vmatprep.subr.mxu0 0.0
    %1657 = vmatpush1.msra.mxu0 %v411
    %1658 = vmatprep.subr.mxu0 0.0
    %1659 = vmatpush1.msra.mxu0 %v412
    %1660 = vmatprep.subr.mxu0 0.0
    %1661 = vmatpush1.msra.mxu0 %v413
    %1662 = vmatprep.subr.mxu0 0.0
    %1663 = vmatpush1.msra.mxu0 %v414
    %1664 = vmatprep.subr.mxu0 0.0
    %1665 = vmatpush1.msra.mxu0 0.0
    %1666 = vmatprep.subr.mxu0 0.0
    %1667 = vmatpush1.msra.mxu0 0.0
    %1668 = vmatprep.subr.mxu0 0.0
    %1669 = vmatpush1.msra.mxu0 0.0
    %1670 = vmatprep.subr.mxu0 0.0
    %1671 = vmatpush1.msra.mxu0 0.0
    %1672 = vmatprep.subr.mxu0 0.0
    %1673 = vmatpush1.msra.mxu0 0.0
    %1674 = vmatprep.subr.mxu0 0.0
    %1675 = vmatpush1.msra.mxu0 0.0
    %1676 = vmatprep.subr.mxu0 0.0
    %1677 = vmatpush1.msra.mxu0 0.0
    %1678 = vmatprep.subr.mxu0 0.0
    %1679 = vmatpush1.msra.mxu0 0.0
    %1680 = vmatprep.subr.mxu0 0.0
    %1681 = vmatpush1.msra.mxu0 0.0
    %1682 = vmatprep.subr.mxu0 0.0
    %1683 = vmatpush1.msra.mxu0 0.0
    %1684 = vmatprep.subr.mxu0 0.0
    %1685 = vmatpush1.msra.mxu0 0.0
    %1686 = vmatprep.subr.mxu0 0.0
    %1687 = vmatpush1.msra.mxu0 0.0
    %1688 = vmatprep.subr.mxu0 0.0
    %1689 = vmatpush1.msra.mxu0 0.0
    %1690 = vmatprep.subr.mxu0 0.0
    %1691 = vmatpush1.msra.mxu0 0.0
    %1692 = vmatprep.subr.mxu0 0.0
    %1693 = vmatpush1.msra.mxu0 0.0
    %1694 = vmatprep.subr.mxu0 0.0
    %1695 = vmatpush1.msra.mxu0 0.0
    %1696 = vmatprep.subr.mxu0 0.0
    %1697 = vmatpush1.msra.mxu0 0.0
    %1698 = vmatprep.subr.mxu0 0.0
    %1699 = vmatpush1.msra.mxu0 0.0
    %1700 = vmatprep.subr.mxu0 0.0
    %1701 = vmatpush1.msra.mxu0 0.0
    %1702 = vmatprep.subr.mxu0 0.0
    %1703 = vmatpush1.msra.mxu0 0.0
    %1704 = vmatprep.subr.mxu0 0.0
    %1705 = vmatpush1.msra.mxu0 0.0
    %1706 = vmatprep.subr.mxu0 0.0
    %1707 = vmatpush1.msra.mxu0 0.0
    %1708 = vmatprep.subr.mxu0 0.0
    %1709 = vmatpush1.msra.mxu0 0.0
    %1710 = vmatprep.subr.mxu0 0.0
    %1711 = vmatpush1.msra.mxu0 0.0
    %1712 = vmatprep.subr.mxu0 0.0
    %1713 = vmatpush1.msra.mxu0 0.0
    %1714 = vmatprep.subr.mxu0 0.0
    %1715 = vmatpush1.msra.mxu0 0.0
    %1716 = vmatprep.subr.mxu0 0.0
    %1717 = vmatpush1.msra.mxu0 0.0
    %1718 = vmatprep.subr.mxu0 0.0
    %1719 = vmatpush1.msra.mxu0 0.0
    %1720 = vmatprep.mubr.f32.mxu0 0.0
    %1721 = vmatmul.mubr.f32.gmra.mrb[0].mxu0 %v1654
    %v1722 = vpop.f32.mrb[0].mxu0
    %v1723 = vadd.f32 0.0, %v1722
    %v1724 = vpop.f32.mrb[0].mxu0
    %1725 = vdwg.mxu0
    %v1726 = vadd.f32 %v1653, %v1723
    %v1727 = vxor.u32 %v1726, 2147483648
    %v1728 = vmul.f32 %v1727, 1.442695
    %v1729 = vpow.pop %v1728
    %v1730 = vadd.f32 %v1729, 1.0
    %v1731 = vrcp.pop %v1730
    %v1732 = vmul.f32 1.0, %v1731
    %v1733 = vtanh.pop %v1726
    %v1734 = vmul.f32 %v1732, %v1641
    %1736 = vrot.lane.b32.xlu0 %v1733, 64
    %v1737 = vpop.permute.xlu0 %1736
    %v1739 = vmul.f32 %v1732, %v1737
    %1741 = vrot.lane.b32.xlu0 %v1739, 32
    %v1742 = vpop.permute.xlu0 %1741
    %v1744 = vadd.f32 %v1734, %v1742
    %v1745 = vtanh.pop %v1744
    %1747 = vrot.lane.b32.xlu0 %v1745, 64
    %v1748 = vpop.permute.xlu0 %1747
    %v1750 = vmul.f32 %v1732, %v1748
    %1752 = vrot.lane.b32.xlu0 %v1750, 32
    %v1753 = vpop.permute.xlu0 %1752
    %1755 = vst.msk [vmem:[#allocation3 + $0x60] sm:$0xff] %vm416, %v1753
    %v1756 = vld [vmem:[#allocation2 + $0x68] sm:$0xff]
    %v1757 = vsel %vm416, %v1753, 0
    %1759 = vmatprep.subr.mxu0 0.0
    %1760 = vmatpush1.msra.mxu0 %v411
    %1761 = vmatprep.subr.mxu0 0.0
    %1762 = vmatpush1.msra.mxu0 %v412
    %1763 = vmatprep.subr.mxu0 0.0
    %1764 = vmatpush1.msra.mxu0 %v413
    %1765 = vmatprep.subr.mxu0 0.0
    %1766 = vmatpush1.msra.mxu0 %v414
    %1767 = vmatprep.subr.mxu0 0.0
    %1768 = vmatpush1.msra.mxu0 0.0
    %1769 = vmatprep.subr.mxu0 0.0
    %1770 = vmatpush1.msra.mxu0 0.0
    %1771 = vmatprep.subr.mxu0 0.0
    %1772 = vmatpush1.msra.mxu0 0.0
    %1773 = vmatprep.subr.mxu0 0.0
    %1774 = vmatpush1.msra.mxu0 0.0
    %1775 = vmatprep.subr.mxu0 0.0
    %1776 = vmatpush1.msra.mxu0 0.0
    %1777 = vmatprep.subr.mxu0 0.0
    %1778 = vmatpush1.msra.mxu0 0.0
    %1779 = vmatprep.subr.mxu0 0.0
    %1780 = vmatpush1.msra.mxu0 0.0
    %1781 = vmatprep.subr.mxu0 0.0
    %1782 = vmatpush1.msra.mxu0 0.0
    %1783 = vmatprep.subr.mxu0 0.0
    %1784 = vmatpush1.msra.mxu0 0.0
    %1785 = vmatprep.subr.mxu0 0.0
    %1786 = vmatpush1.msra.mxu0 0.0
    %1787 = vmatprep.subr.mxu0 0.0
    %1788 = vmatpush1.msra.mxu0 0.0
    %1789 = vmatprep.subr.mxu0 0.0
    %1790 = vmatpush1.msra.mxu0 0.0
    %1791 = vmatprep.subr.mxu0 0.0
    %1792 = vmatpush1.msra.mxu0 0.0
    %1793 = vmatprep.subr.mxu0 0.0
    %1794 = vmatpush1.msra.mxu0 0.0
    %1795 = vmatprep.subr.mxu0 0.0
    %1796 = vmatpush1.msra.mxu0 0.0
    %1797 = vmatprep.subr.mxu0 0.0
    %1798 = vmatpush1.msra.mxu0 0.0
    %1799 = vmatprep.subr.mxu0 0.0
    %1800 = vmatpush1.msra.mxu0 0.0
    %1801 = vmatprep.subr.mxu0 0.0
    %1802 = vmatpush1.msra.mxu0 0.0
    %1803 = vmatprep.subr.mxu0 0.0
    %1804 = vmatpush1.msra.mxu0 0.0
    %1805 = vmatprep.subr.mxu0 0.0
    %1806 = vmatpush1.msra.mxu0 0.0
    %1807 = vmatprep.subr.mxu0 0.0
    %1808 = vmatpush1.msra.mxu0 0.0
    %1809 = vmatprep.subr.mxu0 0.0
    %1810 = vmatpush1.msra.mxu0 0.0
    %1811 = vmatprep.subr.mxu0 0.0
    %1812 = vmatpush1.msra.mxu0 0.0
    %1813 = vmatprep.subr.mxu0 0.0
    %1814 = vmatpush1.msra.mxu0 0.0
    %1815 = vmatprep.subr.mxu0 0.0
    %1816 = vmatpush1.msra.mxu0 0.0
    %1817 = vmatprep.subr.mxu0 0.0
    %1818 = vmatpush1.msra.mxu0 0.0
    %1819 = vmatprep.subr.mxu0 0.0
    %1820 = vmatpush1.msra.mxu0 0.0
    %1821 = vmatprep.subr.mxu0 0.0
    %1822 = vmatpush1.msra.mxu0 0.0
    %1823 = vmatprep.mubr.f32.mxu0 0.0
    %1824 = vmatmul.mubr.f32.gmra.mrb[0].mxu0 %v1757
    %v1825 = vpop.f32.mrb[0].mxu0
    %v1826 = vadd.f32 0.0, %v1825
    %v1827 = vpop.f32.mrb[0].mxu0
    %1828 = vdwg.mxu0
    %v1829 = vadd.f32 %v1756, %v1826
    %v1830 = vxor.u32 %v1829, 2147483648
    %v1831 = vmul.f32 %v1830, 1.442695
    %v1832 = vpow.pop %v1831
    %v1833 = vadd.f32 %v1832, 1.0
    %v1834 = vrcp.pop %v1833
    %v1835 = vmul.f32 1.0, %v1834
    %v1836 = vtanh.pop %v1829
    %v1837 = vmul.f32 %v1835, %v1744
    %1839 = vrot.lane.b32.xlu0 %v1836, 64
    %v1840 = vpop.permute.xlu0 %1839
    %v1842 = vmul.f32 %v1835, %v1840
    %1844 = vrot.lane.b32.xlu0 %v1842, 32
    %v1845 = vpop.permute.xlu0 %1844
    %v1847 = vadd.f32 %v1837, %v1845
    %v1848 = vtanh.pop %v1847
    %1850 = vrot.lane.b32.xlu0 %v1848, 64
    %v1851 = vpop.permute.xlu0 %1850
    %v1853 = vmul.f32 %v1835, %v1851
    %1855 = vrot.lane.b32.xlu0 %v1853, 32
    %v1856 = vpop.permute.xlu0 %1855
    %1858 = vst.msk [vmem:[#allocation3 + $0x68] sm:$0xff] %vm416, %v1856
    %v1859 = vld [vmem:[#allocation2 + $0x70] sm:$0xff]
    %v1860 = vsel %vm416, %v1856, 0
    %1862 = vmatprep.subr.mxu0 0.0
    %1863 = vmatpush1.msra.mxu0 %v411
    %1864 = vmatprep.subr.mxu0 0.0
    %1865 = vmatpush1.msra.mxu0 %v412
    %1866 = vmatprep.subr.mxu0 0.0
    %1867 = vmatpush1.msra.mxu0 %v413
    %1868 = vmatprep.subr.mxu0 0.0
    %1869 = vmatpush1.msra.mxu0 %v414
    %1870 = vmatprep.subr.mxu0 0.0
    %1871 = vmatpush1.msra.mxu0 0.0
    %1872 = vmatprep.subr.mxu0 0.0
    %1873 = vmatpush1.msra.mxu0 0.0
    %1874 = vmatprep.subr.mxu0 0.0
    %1875 = vmatpush1.msra.mxu0 0.0
    %1876 = vmatprep.subr.mxu0 0.0
    %1877 = vmatpush1.msra.mxu0 0.0
    %1878 = vmatprep.subr.mxu0 0.0
    %1879 = vmatpush1.msra.mxu0 0.0
    %1880 = vmatprep.subr.mxu0 0.0
    %1881 = vmatpush1.msra.mxu0 0.0
    %1882 = vmatprep.subr.mxu0 0.0
    %1883 = vmatpush1.msra.mxu0 0.0
    %1884 = vmatprep.subr.mxu0 0.0
    %1885 = vmatpush1.msra.mxu0 0.0
    %1886 = vmatprep.subr.mxu0 0.0
    %1887 = vmatpush1.msra.mxu0 0.0
    %1888 = vmatprep.subr.mxu0 0.0
    %1889 = vmatpush1.msra.mxu0 0.0
    %1890 = vmatprep.subr.mxu0 0.0
    %1891 = vmatpush1.msra.mxu0 0.0
    %1892 = vmatprep.subr.mxu0 0.0
    %1893 = vmatpush1.msra.mxu0 0.0
    %1894 = vmatprep.subr.mxu0 0.0
    %1895 = vmatpush1.msra.mxu0 0.0
    %1896 = vmatprep.subr.mxu0 0.0
    %1897 = vmatpush1.msra.mxu0 0.0
    %1898 = vmatprep.subr.mxu0 0.0
    %1899 = vmatpush1.msra.mxu0 0.0
    %1900 = vmatprep.subr.mxu0 0.0
    %1901 = vmatpush1.msra.mxu0 0.0
    %1902 = vmatprep.subr.mxu0 0.0
    %1903 = vmatpush1.msra.mxu0 0.0
    %1904 = vmatprep.subr.mxu0 0.0
    %1905 = vmatpush1.msra.mxu0 0.0
    %1906 = vmatprep.subr.mxu0 0.0
    %1907 = vmatpush1.msra.mxu0 0.0
    %1908 = vmatprep.subr.mxu0 0.0
    %1909 = vmatpush1.msra.mxu0 0.0
    %1910 = vmatprep.subr.mxu0 0.0
    %1911 = vmatpush1.msra.mxu0 0.0
    %1912 = vmatprep.subr.mxu0 0.0
    %1913 = vmatpush1.msra.mxu0 0.0
    %1914 = vmatprep.subr.mxu0 0.0
    %1915 = vmatpush1.msra.mxu0 0.0
    %1916 = vmatprep.subr.mxu0 0.0
    %1917 = vmatpush1.msra.mxu0 0.0
    %1918 = vmatprep.subr.mxu0 0.0
    %1919 = vmatpush1.msra.mxu0 0.0
    %1920 = vmatprep.subr.mxu0 0.0
    %1921 = vmatpush1.msra.mxu0 0.0
    %1922 = vmatprep.subr.mxu0 0.0
    %1923 = vmatpush1.msra.mxu0 0.0
    %1924 = vmatprep.subr.mxu0 0.0
    %1925 = vmatpush1.msra.mxu0 0.0
    %1926 = vmatprep.mubr.f32.mxu0 0.0
    %1927 = vmatmul.mubr.f32.gmra.mrb[0].mxu0 %v1860
    %v1928 = vpop.f32.mrb[0].mxu0
    %v1929 = vadd.f32 0.0, %v1928
    %v1930 = vpop.f32.mrb[0].mxu0
    %1931 = vdwg.mxu0
    %v1932 = vadd.f32 %v1859, %v1929
    %v1933 = vxor.u32 %v1932, 2147483648
    %v1934 = vmul.f32 %v1933, 1.442695
    %v1935 = vpow.pop %v1934
    %v1936 = vadd.f32 %v1935, 1.0
    %v1937 = vrcp.pop %v1936
    %v1938 = vmul.f32 1.0, %v1937
    %v1939 = vtanh.pop %v1932
    %v1940 = vmul.f32 %v1938, %v1847
    %1942 = vrot.lane.b32.xlu0 %v1939, 64
    %v1943 = vpop.permute.xlu0 %1942
    %v1945 = vmul.f32 %v1938, %v1943
    %1947 = vrot.lane.b32.xlu0 %v1945, 32
    %v1948 = vpop.permute.xlu0 %1947
    %v1950 = vadd.f32 %v1940, %v1948
    %v1951 = vtanh.pop %v1950
    %1953 = vrot.lane.b32.xlu0 %v1951, 64
    %v1954 = vpop.permute.xlu0 %1953
    %v1956 = vmul.f32 %v1938, %v1954
    %1958 = vrot.lane.b32.xlu0 %v1956, 32
    %v1959 = vpop.permute.xlu0 %1958
    %1961 = vst.msk [vmem:[#allocation3 + $0x70] sm:$0xff] %vm416, %v1959
    %v1962 = vld [vmem:[#allocation2 + $0x78] sm:$0xff]
    %v1963 = vsel %vm416, %v1959, 0
    %1965 = vmatprep.subr.mxu0 0.0
    %1966 = vmatpush1.msra.mxu0 %v411
    %1967 = vmatprep.subr.mxu0 0.0
    %1968 = vmatpush1.msra.mxu0 %v412
    %1969 = vmatprep.subr.mxu0 0.0
    %1970 = vmatpush1.msra.mxu0 %v413
    %1971 = vmatprep.subr.mxu0 0.0
    %1972 = vmatpush1.msra.mxu0 %v414
    %1973 = vmatprep.subr.mxu0 0.0
    %1974 = vmatpush1.msra.mxu0 0.0
    %1975 = vmatprep.subr.mxu0 0.0
    %1976 = vmatpush1.msra.mxu0 0.0
    %1977 = vmatprep.subr.mxu0 0.0
    %1978 = vmatpush1.msra.mxu0 0.0
    %1979 = vmatprep.subr.mxu0 0.0
    %1980 = vmatpush1.msra.mxu0 0.0
    %1981 = vmatprep.subr.mxu0 0.0
    %1982 = vmatpush1.msra.mxu0 0.0
    %1983 = vmatprep.subr.mxu0 0.0
    %1984 = vmatpush1.msra.mxu0 0.0
    %1985 = vmatprep.subr.mxu0 0.0
    %1986 = vmatpush1.msra.mxu0 0.0
    %1987 = vmatprep.subr.mxu0 0.0
    %1988 = vmatpush1.msra.mxu0 0.0
    %1989 = vmatprep.subr.mxu0 0.0
    %1990 = vmatpush1.msra.mxu0 0.0
    %1991 = vmatprep.subr.mxu0 0.0
    %1992 = vmatpush1.msra.mxu0 0.0
    %1993 = vmatprep.subr.mxu0 0.0
    %1994 = vmatpush1.msra.mxu0 0.0
    %1995 = vmatprep.subr.mxu0 0.0
    %1996 = vmatpush1.msra.mxu0 0.0
    %1997 = vmatprep.subr.mxu0 0.0
    %1998 = vmatpush1.msra.mxu0 0.0
    %1999 = vmatprep.subr.mxu0 0.0
    %2000 = vmatpush1.msra.mxu0 0.0
    %2001 = vmatprep.subr.mxu0 0.0
    %2002 = vmatpush1.msra.mxu0 0.0
    %2003 = vmatprep.subr.mxu0 0.0
    %2004 = vmatpush1.msra.mxu0 0.0
    %2005 = vmatprep.subr.mxu0 0.0
    %2006 = vmatpush1.msra.mxu0 0.0
    %2007 = vmatprep.subr.mxu0 0.0
    %2008 = vmatpush1.msra.mxu0 0.0
    %2009 = vmatprep.subr.mxu0 0.0
    %2010 = vmatpush1.msra.mxu0 0.0
    %2011 = vmatprep.subr.mxu0 0.0
    %2012 = vmatpush1.msra.mxu0 0.0
    %2013 = vmatprep.subr.mxu0 0.0
    %2014 = vmatpush1.msra.mxu0 0.0
    %2015 = vmatprep.subr.mxu0 0.0
    %2016 = vmatpush1.msra.mxu0 0.0
    %2017 = vmatprep.subr.mxu0 0.0
    %2018 = vmatpush1.msra.mxu0 0.0
    %2019 = vmatprep.subr.mxu0 0.0
    %2020 = vmatpush1.msra.mxu0 0.0
    %2021 = vmatprep.subr.mxu0 0.0
    %2022 = vmatpush1.msra.mxu0 0.0
    %2023 = vmatprep.subr.mxu0 0.0
    %2024 = vmatpush1.msra.mxu0 0.0
    %2025 = vmatprep.subr.mxu0 0.0
    %2026 = vmatpush1.msra.mxu0 0.0
    %2027 = vmatprep.subr.mxu0 0.0
    %2028 = vmatpush1.msra.mxu0 0.0
    %2029 = vmatprep.mubr.f32.mxu0 0.0
    %2030 = vmatmul.mubr.f32.gmra.mrb[0].mxu0 %v1963
    %v2031 = vpop.f32.mrb[0].mxu0
    %v2032 = vadd.f32 0.0, %v2031
    %v2033 = vpop.f32.mrb[0].mxu0
    %2034 = vdwg.mxu0
    %v2035 = vadd.f32 %v1962, %v2032
    %v2036 = vxor.u32 %v2035, 2147483648
    %v2037 = vmul.f32 %v2036, 1.442695
    %v2038 = vpow.pop %v2037
    %v2039 = vadd.f32 %v2038, 1.0
    %v2040 = vrcp.pop %v2039
    %v2041 = vmul.f32 1.0, %v2040
    %v2042 = vtanh.pop %v2035
    %v2043 = vmul.f32 %v2041, %v1950
    %2045 = vrot.lane.b32.xlu0 %v2042, 64
    %v2046 = vpop.permute.xlu0 %2045
    %v2048 = vmul.f32 %v2041, %v2046
    %2050 = vrot.lane.b32.xlu0 %v2048, 32
    %v2051 = vpop.permute.xlu0 %2050
    %v2053 = vadd.f32 %v2043, %v2051
    %v2054 = vtanh.pop %v2053
    %2056 = vrot.lane.b32.xlu0 %v2054, 64
    %v2057 = vpop.permute.xlu0 %2056
    %v2059 = vmul.f32 %v2041, %v2057
    %2061 = vrot.lane.b32.xlu0 %v2059, 32
    %v2062 = vpop.permute.xlu0 %2061
    %2064 = vst.msk [vmem:[#allocation3 + $0x78] sm:$0xff] %vm416, %v2062
    %v2065 = vld [vmem:[#allocation3] sm:$0xff]
    %v2066 = vld [vmem:[#allocation3 + $0x8] sm:$0xff]
    %v2067 = vld [vmem:[#allocation3 + $0x10] sm:$0xff]
    %v2068 = vld [vmem:[#allocation3 + $0x18] sm:$0xff]
    %v2069 = vld [vmem:[#allocation3 + $0x20] sm:$0xff]
    %v2070 = vld [vmem:[#allocation3 + $0x28] sm:$0xff]
    %v2071 = vld [vmem:[#allocation3 + $0x30] sm:$0xff]
    %v2072 = vld [vmem:[#allocation3 + $0x38] sm:$0xff]
    %v2073 = vld [vmem:[#allocation3 + $0x40] sm:$0xff]
    %v2074 = vld [vmem:[#allocation3 + $0x48] sm:$0xff]
    %v2075 = vld [vmem:[#allocation3 + $0x50] sm:$0xff]
    %v2076 = vld [vmem:[#allocation3 + $0x58] sm:$0xff]
    %v2077 = vld [vmem:[#allocation3 + $0x60] sm:$0xff]
    %v2078 = vld [vmem:[#allocation3 + $0x68] sm:$0xff]
    %v2079 = vld [vmem:[#allocation3 + $0x70] sm:$0xff]
    %v2080 = vld [vmem:[#allocation3 + $0x78] sm:$0xff]
    %v2081 = vld [vmem:[#allocation4] sm:$0xff]
    %v2082 = vld [vmem:[#allocation4 + $0x8] sm:$0xff]
    %v2083 = vld [vmem:[#allocation4 + $0x10] sm:$0xff]
    %v2084 = vld [vmem:[#allocation4 + $0x18] sm:$0xff]
    %v2085 = vld [vmem:[#allocation7 + $0x1] sm:$0x1]
    %v2086 = vlaneseq
    %v2087 = vshrl.u32 %v2086, 7
    %v2088 = vsub.s32 0, %v2087
    %v2089 = vrot.slane %v2085, %v2088
    %v2091 = vsel %vm416, %v2065, 0
    %v2094 = vsel %vm416, %v2066, 0
    %v2097 = vsel %vm416, %v2067, 0
    %v2100 = vsel %vm416, %v2068, 0
    %v2103 = vsel %vm416, %v2069, 0
    %v2106 = vsel %vm416, %v2070, 0
    %v2109 = vsel %vm416, %v2071, 0
    %v2112 = vsel %vm416, %v2072, 0
    %v2115 = vsel %vm416, %v2073, 0
    %v2118 = vsel %vm416, %v2074, 0
    %v2121 = vsel %vm416, %v2075, 0
    %v2124 = vsel %vm416, %v2076, 0
    %v2127 = vsel %vm416, %v2077, 0
    %v2130 = vsel %vm416, %v2078, 0
    %v2133 = vsel %vm416, %v2079, 0
    %v2136 = vsel %vm416, %v2080, 0
    %2138 = vmatprep.subr.mxu0 0.0
    %2139 = vmatpush1.msra.mxu0 %v2081
    %2140 = vmatprep.subr.mxu0 0.0
    %2141 = vmatpush1.msra.mxu0 %v2082
    %2142 = vmatprep.subr.mxu0 0.0
    %2143 = vmatpush1.msra.mxu0 %v2083
    %2144 = vmatprep.subr.mxu0 0.0
    %2145 = vmatpush1.msra.mxu0 %v2084
    %2146 = vmatprep.subr.mxu0 0.0
    %2147 = vmatpush1.msra.mxu0 0.0
    %2148 = vmatprep.subr.mxu0 0.0
    %2149 = vmatpush1.msra.mxu0 0.0
    %2150 = vmatprep.subr.mxu0 0.0
    %2151 = vmatpush1.msra.mxu0 0.0
    %2152 = vmatprep.subr.mxu0 0.0
    %2153 = vmatpush1.msra.mxu0 0.0
    %2154 = vmatprep.subr.mxu0 0.0
    %2155 = vmatpush1.msra.mxu0 0.0
    %2156 = vmatprep.subr.mxu0 0.0
    %2157 = vmatpush1.msra.mxu0 0.0
    %2158 = vmatprep.subr.mxu0 0.0
    %2159 = vmatpush1.msra.mxu0 0.0
    %2160 = vmatprep.subr.mxu0 0.0
    %2161 = vmatpush1.msra.mxu0 0.0
    %2162 = vmatprep.subr.mxu0 0.0
    %2163 = vmatpush1.msra.mxu0 0.0
    %2164 = vmatprep.subr.mxu0 0.0
    %2165 = vmatpush1.msra.mxu0 0.0
    %2166 = vmatprep.subr.mxu0 0.0
    %2167 = vmatpush1.msra.mxu0 0.0
    %2168 = vmatprep.subr.mxu0 0.0
    %2169 = vmatpush1.msra.mxu0 0.0
    %2170 = vmatprep.subr.mxu0 0.0
    %2171 = vmatpush1.msra.mxu0 0.0
    %2172 = vmatprep.subr.mxu0 0.0
    %2173 = vmatpush1.msra.mxu0 0.0
    %2174 = vmatprep.subr.mxu0 0.0
    %2175 = vmatpush1.msra.mxu0 0.0
    %2176 = vmatprep.subr.mxu0 0.0
    %2177 = vmatpush1.msra.mxu0 0.0
    %2178 = vmatprep.subr.mxu0 0.0
    %2179 = vmatpush1.msra.mxu0 0.0
    %2180 = vmatprep.subr.mxu0 0.0
    %2181 = vmatpush1.msra.mxu0 0.0
    %2182 = vmatprep.subr.mxu0 0.0
    %2183 = vmatpush1.msra.mxu0 0.0
    %2184 = vmatprep.subr.mxu0 0.0
    %2185 = vmatpush1.msra.mxu0 0.0
    %2186 = vmatprep.subr.mxu0 0.0
    %2187 = vmatpush1.msra.mxu0 0.0
    %2188 = vmatprep.subr.mxu0 0.0
    %2189 = vmatpush1.msra.mxu0 0.0
    %2190 = vmatprep.subr.mxu0 0.0
    %2191 = vmatpush1.msra.mxu0 0.0
    %2192 = vmatprep.subr.mxu0 0.0
    %2193 = vmatpush1.msra.mxu0 0.0
    %2194 = vmatprep.subr.mxu0 0.0
    %2195 = vmatpush1.msra.mxu0 0.0
    %2196 = vmatprep.subr.mxu0 0.0
    %2197 = vmatpush1.msra.mxu0 0.0
    %2198 = vmatprep.subr.mxu0 0.0
    %2199 = vmatpush1.msra.mxu0 0.0
    %2200 = vmatprep.subr.mxu0 0.0
    %2201 = vmatpush1.msra.mxu0 0.0
    %2202 = vmatprep.mubr.f32.mxu0 0.0
    %2203 = vmatmul.mubr.f32.gmra.mrb[0].mxu0 %v2091
    %v2204 = vpop.f32.mrb[0].mxu0
    %v2205 = vadd.f32 %v2089, %v2204
    %v2206 = vpop.f32.mrb[0].mxu0
    %2207 = vmatprep.mubr.f32.mxu0 0.0
    %2208 = vmatmul.mubr.f32.gmra.mrb[0].mxu0 %v2094
    %v2209 = vpop.f32.mrb[0].mxu0
    %v2210 = vadd.f32 %v2089, %v2209
    %v2211 = vpop.f32.mrb[0].mxu0
    %2212 = vmatprep.mubr.f32.mxu0 0.0
    %2213 = vmatmul.mubr.f32.gmra.mrb[0].mxu0 %v2097
    %v2214 = vpop.f32.mrb[0].mxu0
    %v2215 = vadd.f32 %v2089, %v2214
    %v2216 = vpop.f32.mrb[0].mxu0
    %2217 = vmatprep.mubr.f32.mxu0 0.0
    %2218 = vmatmul.mubr.f32.gmra.mrb[0].mxu0 %v2100
    %v2219 = vpop.f32.mrb[0].mxu0
    %v2220 = vadd.f32 %v2089, %v2219
    %v2221 = vpop.f32.mrb[0].mxu0
    %2222 = vmatprep.mubr.f32.mxu0 0.0
    %2223 = vmatmul.mubr.f32.gmra.mrb[0].mxu0 %v2103
    %v2224 = vpop.f32.mrb[0].mxu0
    %v2225 = vadd.f32 %v2089, %v2224
    %v2226 = vpop.f32.mrb[0].mxu0
    %2227 = vmatprep.mubr.f32.mxu0 0.0
    %2228 = vmatmul.mubr.f32.gmra.mrb[0].mxu0 %v2106
    %v2229 = vpop.f32.mrb[0].mxu0
    %v2230 = vadd.f32 %v2089, %v2229
    %v2231 = vpop.f32.mrb[0].mxu0
    %2232 = vmatprep.mubr.f32.mxu0 0.0
    %2233 = vmatmul.mubr.f32.gmra.mrb[0].mxu0 %v2109
    %v2234 = vpop.f32.mrb[0].mxu0
    %v2235 = vadd.f32 %v2089, %v2234
    %v2236 = vpop.f32.mrb[0].mxu0
    %2237 = vmatprep.mubr.f32.mxu0 0.0
    %2238 = vmatmul.mubr.f32.gmra.mrb[0].mxu0 %v2112
    %v2239 = vpop.f32.mrb[0].mxu0
    %v2240 = vadd.f32 %v2089, %v2239
    %v2241 = vpop.f32.mrb[0].mxu0
    %2242 = vmatprep.mubr.f32.mxu0 0.0
    %2243 = vmatmul.mubr.f32.gmra.mrb[0].mxu0 %v2115
    %v2244 = vpop.f32.mrb[0].mxu0
    %v2245 = vadd.f32 %v2089, %v2244
    %v2246 = vpop.f32.mrb[0].mxu0
    %2247 = vmatprep.mubr.f32.mxu0 0.0
    %2248 = vmatmul.mubr.f32.gmra.mrb[0].mxu0 %v2118
    %v2249 = vpop.f32.mrb[0].mxu0
    %v2250 = vadd.f32 %v2089, %v2249
    %v2251 = vpop.f32.mrb[0].mxu0
    %2252 = vmatprep.mubr.f32.mxu0 0.0
    %2253 = vmatmul.mubr.f32.gmra.mrb[0].mxu0 %v2121
    %v2254 = vpop.f32.mrb[0].mxu0
    %v2255 = vadd.f32 %v2089, %v2254
    %v2256 = vpop.f32.mrb[0].mxu0
    %2257 = vmatprep.mubr.f32.mxu0 0.0
    %2258 = vmatmul.mubr.f32.gmra.mrb[0].mxu0 %v2124
    %v2259 = vpop.f32.mrb[0].mxu0
    %v2260 = vadd.f32 %v2089, %v2259
    %v2261 = vpop.f32.mrb[0].mxu0
    %2262 = vmatprep.mubr.f32.mxu0 0.0
    %2263 = vmatmul.mubr.f32.gmra.mrb[0].mxu0 %v2127
    %v2264 = vpop.f32.mrb[0].mxu0
    %v2265 = vadd.f32 %v2089, %v2264
    %v2266 = vpop.f32.mrb[0].mxu0
    %2267 = vmatprep.mubr.f32.mxu0 0.0
    %2268 = vmatmul.mubr.f32.gmra.mrb[0].mxu0 %v2130
    %v2269 = vpop.f32.mrb[0].mxu0
    %v2270 = vadd.f32 %v2089, %v2269
    %v2271 = vpop.f32.mrb[0].mxu0
    %2272 = vmatprep.mubr.f32.mxu0 0.0
    %2273 = vmatmul.mubr.f32.gmra.mrb[0].mxu0 %v2133
    %v2274 = vpop.f32.mrb[0].mxu0
    %v2275 = vadd.f32 %v2089, %v2274
    %v2276 = vpop.f32.mrb[0].mxu0
    %2277 = vmatprep.mubr.f32.mxu0 0.0
    %2278 = vmatmul.mubr.f32.gmra.mrb[0].mxu0 %v2136
    %v2279 = vpop.f32.mrb[0].mxu0
    %v2280 = vadd.f32 %v2089, %v2279
    %v2281 = vpop.f32.mrb[0].mxu0
    %2282 = vdwg.mxu0
    %2283 = vst [vmem:[#allocation2] sm:$0xff] %v2205
    %2284 = vst [vmem:[#allocation2 + $0x8] sm:$0xff] %v2210
    %2285 = vst [vmem:[#allocation2 + $0x10] sm:$0xff] %v2215
    %2286 = vst [vmem:[#allocation2 + $0x18] sm:$0xff] %v2220
    %2287 = vst [vmem:[#allocation2 + $0x20] sm:$0xff] %v2225
    %2288 = vst [vmem:[#allocation2 + $0x28] sm:$0xff] %v2230
    %2289 = vst [vmem:[#allocation2 + $0x30] sm:$0xff] %v2235
    %2290 = vst [vmem:[#allocation2 + $0x38] sm:$0xff] %v2240
    %2291 = vst [vmem:[#allocation2 + $0x40] sm:$0xff] %v2245
    %2292 = vst [vmem:[#allocation2 + $0x48] sm:$0xff] %v2250
    %2293 = vst [vmem:[#allocation2 + $0x50] sm:$0xff] %v2255
    %2294 = vst [vmem:[#allocation2 + $0x58] sm:$0xff] %v2260
    %2295 = vst [vmem:[#allocation2 + $0x60] sm:$0xff] %v2265
    %2296 = vst [vmem:[#allocation2 + $0x68] sm:$0xff] %v2270
    %2297 = vst [vmem:[#allocation2 + $0x70] sm:$0xff] %v2275
    %2298 = vst [vmem:[#allocation2 + $0x78] sm:$0xff] %v2280
    %s2299 = scalar_lea.vmem %s3, 32
    %v2300 = vld [vmem:[%s2299] sm:$0xff]
    %v2301 = vld [vmem:[%s2299 + $0x8] sm:$0xff]
    %v2302 = vld [vmem:[%s2299 + $0x10] sm:$0xff]
    %v2303 = vld [vmem:[%s2299 + $0x18] sm:$0xff]
    %v2304 = vld [vmem:[#allocation2] sm:$0xff]
    %2305 = vmatprep.subr.mxu0 0.0
    %2306 = vmatpush1.msra.mxu0 %v2300
    %2307 = vmatprep.subr.mxu0 0.0
    %2308 = vmatpush1.msra.mxu0 %v2301
    %2309 = vmatprep.subr.mxu0 0.0
    %2310 = vmatpush1.msra.mxu0 %v2302
    %2311 = vmatprep.subr.mxu0 0.0
    %2312 = vmatpush1.msra.mxu0 %v2303
    %2313 = vmatprep.subr.mxu0 0.0
    %2314 = vmatpush1.msra.mxu0 0.0
    %2315 = vmatprep.subr.mxu0 0.0
    %2316 = vmatpush1.msra.mxu0 0.0
    %2317 = vmatprep.subr.mxu0 0.0
    %2318 = vmatpush1.msra.mxu0 0.0
    %2319 = vmatprep.subr.mxu0 0.0
    %2320 = vmatpush1.msra.mxu0 0.0
    %2321 = vmatprep.subr.mxu0 0.0
    %2322 = vmatpush1.msra.mxu0 0.0
    %2323 = vmatprep.subr.mxu0 0.0
    %2324 = vmatpush1.msra.mxu0 0.0
    %2325 = vmatprep.subr.mxu0 0.0
    %2326 = vmatpush1.msra.mxu0 0.0
    %2327 = vmatprep.subr.mxu0 0.0
    %2328 = vmatpush1.msra.mxu0 0.0
    %2329 = vmatprep.subr.mxu0 0.0
    %2330 = vmatpush1.msra.mxu0 0.0
    %2331 = vmatprep.subr.mxu0 0.0
    %2332 = vmatpush1.msra.mxu0 0.0
    %2333 = vmatprep.subr.mxu0 0.0
    %2334 = vmatpush1.msra.mxu0 0.0
    %2335 = vmatprep.subr.mxu0 0.0
    %2336 = vmatpush1.msra.mxu0 0.0
    %2337 = vmatprep.subr.mxu0 0.0
    %2338 = vmatpush1.msra.mxu0 0.0
    %2339 = vmatprep.subr.mxu0 0.0
    %2340 = vmatpush1.msra.mxu0 0.0
    %2341 = vmatprep.subr.mxu0 0.0
    %2342 = vmatpush1.msra.mxu0 0.0
    %2343 = vmatprep.subr.mxu0 0.0
    %2344 = vmatpush1.msra.mxu0 0.0
    %2345 = vmatprep.subr.mxu0 0.0
    %2346 = vmatpush1.msra.mxu0 0.0
    %2347 = vmatprep.subr.mxu0 0.0
    %2348 = vmatpush1.msra.mxu0 0.0
    %2349 = vmatprep.subr.mxu0 0.0
    %2350 = vmatpush1.msra.mxu0 0.0
    %2351 = vmatprep.subr.mxu0 0.0
    %2352 = vmatpush1.msra.mxu0 0.0
    %2353 = vmatprep.subr.mxu0 0.0
    %2354 = vmatpush1.msra.mxu0 0.0
    %2355 = vmatprep.subr.mxu0 0.0
    %2356 = vmatpush1.msra.mxu0 0.0
    %2357 = vmatprep.subr.mxu0 0.0
    %2358 = vmatpush1.msra.mxu0 0.0
    %2359 = vmatprep.subr.mxu0 0.0
    %2360 = vmatpush1.msra.mxu0 0.0
    %2361 = vmatprep.subr.mxu0 0.0
    %2362 = vmatpush1.msra.mxu0 0.0
    %2363 = vmatprep.subr.mxu0 0.0
    %2364 = vmatpush1.msra.mxu0 0.0
    %2365 = vmatprep.subr.mxu0 0.0
    %2366 = vmatpush1.msra.mxu0 0.0
    %2367 = vmatprep.subr.mxu0 0.0
    %2368 = vmatpush1.msra.mxu0 0.0
    %2369 = vmatprep.mubr.f32.mxu0 0.0
    %2370 = vmatmul.mubr.f32.gmra.mrb[0].mxu0 %v418
    %v2371 = vpop.f32.mrb[0].mxu0
    %v2372 = vadd.f32 0.0, %v2371
    %v2373 = vpop.f32.mrb[0].mxu0
    %2374 = vdwg.mxu0
    %v2375 = vadd.f32 %v2304, %v2372
    %v2376 = vxor.u32 %v2375, 2147483648
    %v2377 = vmul.f32 %v2376, 1.442695
    %v2378 = vpow.pop %v2377
    %v2379 = vadd.f32 %v2378, 1.0
    %v2380 = vrcp.pop %v2379
    %v2381 = vmul.f32 1.0, %v2380
    %v2382 = vtanh.pop %v2375
    %v2383 = vmul.f32 %v2381, 0.0
    %2385 = vrot.lane.b32.xlu0 %v2382, 64
    %v2386 = vpop.permute.xlu0 %2385
    %v2388 = vmul.f32 %v2381, %v2386
    %2390 = vrot.lane.b32.xlu0 %v2388, 32
    %v2391 = vpop.permute.xlu0 %2390
    %v2393 = vadd.f32 %v2383, %v2391
    %v2394 = vtanh.pop %v2393
    %2396 = vrot.lane.b32.xlu0 %v2394, 64
    %v2397 = vpop.permute.xlu0 %2396
    %v2399 = vmul.f32 %v2381, %v2397
    %2401 = vrot.lane.b32.xlu0 %v2399, 32
    %v2402 = vpop.permute.xlu0 %2401
    %2404 = vst.msk [vmem:[#allocation3] sm:$0xff] %vm416, %v2402
    %v2405 = vld [vmem:[#allocation2 + $0x8] sm:$0xff]
    %v2406 = vsel %vm416, %v2402, 0
    %2408 = vmatprep.subr.mxu0 0.0
    %2409 = vmatpush1.msra.mxu0 %v2300
    %2410 = vmatprep.subr.mxu0 0.0
    %2411 = vmatpush1.msra.mxu0 %v2301
    %2412 = vmatprep.subr.mxu0 0.0
    %2413 = vmatpush1.msra.mxu0 %v2302
    %2414 = vmatprep.subr.mxu0 0.0
    %2415 = vmatpush1.msra.mxu0 %v2303
    %2416 = vmatprep.subr.mxu0 0.0
    %2417 = vmatpush1.msra.mxu0 0.0
    %2418 = vmatprep.subr.mxu0 0.0
    %2419 = vmatpush1.msra.mxu0 0.0
    %2420 = vmatprep.subr.mxu0 0.0
    %2421 = vmatpush1.msra.mxu0 0.0
    %2422 = vmatprep.subr.mxu0 0.0
    %2423 = vmatpush1.msra.mxu0 0.0
    %2424 = vmatprep.subr.mxu0 0.0
    %2425 = vmatpush1.msra.mxu0 0.0
    %2426 = vmatprep.subr.mxu0 0.0
    %2427 = vmatpush1.msra.mxu0 0.0
    %2428 = vmatprep.subr.mxu0 0.0
    %2429 = vmatpush1.msra.mxu0 0.0
    %2430 = vmatprep.subr.mxu0 0.0
    %2431 = vmatpush1.msra.mxu0 0.0
    %2432 = vmatprep.subr.mxu0 0.0
    %2433 = vmatpush1.msra.mxu0 0.0
    %2434 = vmatprep.subr.mxu0 0.0
    %2435 = vmatpush1.msra.mxu0 0.0
    %2436 = vmatprep.subr.mxu0 0.0
    %2437 = vmatpush1.msra.mxu0 0.0
    %2438 = vmatprep.subr.mxu0 0.0
    %2439 = vmatpush1.msra.mxu0 0.0
    %2440 = vmatprep.subr.mxu0 0.0
    %2441 = vmatpush1.msra.mxu0 0.0
    %2442 = vmatprep.subr.mxu0 0.0
    %2443 = vmatpush1.msra.mxu0 0.0
    %2444 = vmatprep.subr.mxu0 0.0
    %2445 = vmatpush1.msra.mxu0 0.0
    %2446 = vmatprep.subr.mxu0 0.0
    %2447 = vmatpush1.msra.mxu0 0.0
    %2448 = vmatprep.subr.mxu0 0.0
    %2449 = vmatpush1.msra.mxu0 0.0
    %2450 = vmatprep.subr.mxu0 0.0
    %2451 = vmatpush1.msra.mxu0 0.0
    %2452 = vmatprep.subr.mxu0 0.0
    %2453 = vmatpush1.msra.mxu0 0.0
    %2454 = vmatprep.subr.mxu0 0.0
    %2455 = vmatpush1.msra.mxu0 0.0
    %2456 = vmatprep.subr.mxu0 0.0
    %2457 = vmatpush1.msra.mxu0 0.0
    %2458 = vmatprep.subr.mxu0 0.0
    %2459 = vmatpush1.msra.mxu0 0.0
    %2460 = vmatprep.subr.mxu0 0.0
    %2461 = vmatpush1.msra.mxu0 0.0
    %2462 = vmatprep.subr.mxu0 0.0
    %2463 = vmatpush1.msra.mxu0 0.0
    %2464 = vmatprep.subr.mxu0 0.0
    %2465 = vmatpush1.msra.mxu0 0.0
    %2466 = vmatprep.subr.mxu0 0.0
    %2467 = vmatpush1.msra.mxu0 0.0
    %2468 = vmatprep.subr.mxu0 0.0
    %2469 = vmatpush1.msra.mxu0 0.0
    %2470 = vmatprep.subr.mxu0 0.0
    %2471 = vmatpush1.msra.mxu0 0.0
    %2472 = vmatprep.mubr.f32.mxu0 0.0
    %2473 = vmatmul.mubr.f32.gmra.mrb[0].mxu0 %v2406
    %v2474 = vpop.f32.mrb[0].mxu0
    %v2475 = vadd.f32 0.0, %v2474
    %v2476 = vpop.f32.mrb[0].mxu0
    %2477 = vdwg.mxu0
    %v2478 = vadd.f32 %v2405, %v2475
    %v2479 = vxor.u32 %v2478, 2147483648
    %v2480 = vmul.f32 %v2479, 1.442695
    %v2481 = vpow.pop %v2480
    %v2482 = vadd.f32 %v2481, 1.0
    %v2483 = vrcp.pop %v2482
    %v2484 = vmul.f32 1.0, %v2483
    %v2485 = vtanh.pop %v2478
    %v2486 = vmul.f32 %v2484, %v2393
    %2488 = vrot.lane.b32.xlu0 %v2485, 64
    %v2489 = vpop.permute.xlu0 %2488
    %v2491 = vmul.f32 %v2484, %v2489
    %2493 = vrot.lane.b32.xlu0 %v2491, 32
    %v2494 = vpop.permute.xlu0 %2493
    %v2496 = vadd.f32 %v2486, %v2494
    %v2497 = vtanh.pop %v2496
    %2499 = vrot.lane.b32.xlu0 %v2497, 64
    %v2500 = vpop.permute.xlu0 %2499
    %v2502 = vmul.f32 %v2484, %v2500
    %2504 = vrot.lane.b32.xlu0 %v2502, 32
    %v2505 = vpop.permute.xlu0 %2504
    %2507 = vst.msk [vmem:[#allocation3 + $0x8] sm:$0xff] %vm416, %v2505
    %v2508 = vld [vmem:[#allocation2 + $0x10] sm:$0xff]
    %v2509 = vsel %vm416, %v2505, 0
    %2511 = vmatprep.subr.mxu0 0.0
    %2512 = vmatpush1.msra.mxu0 %v2300
    %2513 = vmatprep.subr.mxu0 0.0
    %2514 = vmatpush1.msra.mxu0 %v2301
    %2515 = vmatprep.subr.mxu0 0.0
    %2516 = vmatpush1.msra.mxu0 %v2302
    %2517 = vmatprep.subr.mxu0 0.0
    %2518 = vmatpush1.msra.mxu0 %v2303
    %2519 = vmatprep.subr.mxu0 0.0
    %2520 = vmatpush1.msra.mxu0 0.0
    %2521 = vmatprep.subr.mxu0 0.0
    %2522 = vmatpush1.msra.mxu0 0.0
    %2523 = vmatprep.subr.mxu0 0.0
    %2524 = vmatpush1.msra.mxu0 0.0
    %2525 = vmatprep.subr.mxu0 0.0
    %2526 = vmatpush1.msra.mxu0 0.0
    %2527 = vmatprep.subr.mxu0 0.0
    %2528 = vmatpush1.msra.mxu0 0.0
    %2529 = vmatprep.subr.mxu0 0.0
    %2530 = vmatpush1.msra.mxu0 0.0
    %2531 = vmatprep.subr.mxu0 0.0
    %2532 = vmatpush1.msra.mxu0 0.0
    %2533 = vmatprep.subr.mxu0 0.0
    %2534 = vmatpush1.msra.mxu0 0.0
    %2535 = vmatprep.subr.mxu0 0.0
    %2536 = vmatpush1.msra.mxu0 0.0
    %2537 = vmatprep.subr.mxu0 0.0
    %2538 = vmatpush1.msra.mxu0 0.0
    %2539 = vmatprep.subr.mxu0 0.0
    %2540 = vmatpush1.msra.mxu0 0.0
    %2541 = vmatprep.subr.mxu0 0.0
    %2542 = vmatpush1.msra.mxu0 0.0
    %2543 = vmatprep.subr.mxu0 0.0
    %2544 = vmatpush1.msra.mxu0 0.0
    %2545 = vmatprep.subr.mxu0 0.0
    %2546 = vmatpush1.msra.mxu0 0.0
    %2547 = vmatprep.subr.mxu0 0.0
    %2548 = vmatpush1.msra.mxu0 0.0
    %2549 = vmatprep.subr.mxu0 0.0
    %2550 = vmatpush1.msra.mxu0 0.0
    %2551 = vmatprep.subr.mxu0 0.0
    %2552 = vmatpush1.msra.mxu0 0.0
    %2553 = vmatprep.subr.mxu0 0.0
    %2554 = vmatpush1.msra.mxu0 0.0
    %2555 = vmatprep.subr.mxu0 0.0
    %2556 = vmatpush1.msra.mxu0 0.0
    %2557 = vmatprep.subr.mxu0 0.0
    %2558 = vmatpush1.msra.mxu0 0.0
    %2559 = vmatprep.subr.mxu0 0.0
    %2560 = vmatpush1.msra.mxu0 0.0
    %2561 = vmatprep.subr.mxu0 0.0
    %2562 = vmatpush1.msra.mxu0 0.0
    %2563 = vmatprep.subr.mxu0 0.0
    %2564 = vmatpush1.msra.mxu0 0.0
    %2565 = vmatprep.subr.mxu0 0.0
    %2566 = vmatpush1.msra.mxu0 0.0
    %2567 = vmatprep.subr.mxu0 0.0
    %2568 = vmatpush1.msra.mxu0 0.0
    %2569 = vmatprep.subr.mxu0 0.0
    %2570 = vmatpush1.msra.mxu0 0.0
    %2571 = vmatprep.subr.mxu0 0.0
    %2572 = vmatpush1.msra.mxu0 0.0
    %2573 = vmatprep.subr.mxu0 0.0
    %2574 = vmatpush1.msra.mxu0 0.0
    %2575 = vmatprep.mubr.f32.mxu0 0.0
    %2576 = vmatmul.mubr.f32.gmra.mrb[0].mxu0 %v2509
    %v2577 = vpop.f32.mrb[0].mxu0
    %v2578 = vadd.f32 0.0, %v2577
    %v2579 = vpop.f32.mrb[0].mxu0
    %2580 = vdwg.mxu0
    %v2581 = vadd.f32 %v2508, %v2578
    %v2582 = vxor.u32 %v2581, 2147483648
    %v2583 = vmul.f32 %v2582, 1.442695
    %v2584 = vpow.pop %v2583
    %v2585 = vadd.f32 %v2584, 1.0
    %v2586 = vrcp.pop %v2585
    %v2587 = vmul.f32 1.0, %v2586
    %v2588 = vtanh.pop %v2581
    %v2589 = vmul.f32 %v2587, %v2496
    %2591 = vrot.lane.b32.xlu0 %v2588, 64
    %v2592 = vpop.permute.xlu0 %2591
    %v2594 = vmul.f32 %v2587, %v2592
    %2596 = vrot.lane.b32.xlu0 %v2594, 32
    %v2597 = vpop.permute.xlu0 %2596
    %v2599 = vadd.f32 %v2589, %v2597
    %v2600 = vtanh.pop %v2599
    %2602 = vrot.lane.b32.xlu0 %v2600, 64
    %v2603 = vpop.permute.xlu0 %2602
    %v2605 = vmul.f32 %v2587, %v2603
    %2607 = vrot.lane.b32.xlu0 %v2605, 32
    %v2608 = vpop.permute.xlu0 %2607
    %2610 = vst.msk [vmem:[#allocation3 + $0x10] sm:$0xff] %vm416, %v2608
    %v2611 = vld [vmem:[#allocation2 + $0x18] sm:$0xff]
    %v2612 = vsel %vm416, %v2608, 0
    %2614 = vmatprep.subr.mxu0 0.0
    %2615 = vmatpush1.msra.mxu0 %v2300
    %2616 = vmatprep.subr.mxu0 0.0
    %2617 = vmatpush1.msra.mxu0 %v2301
    %2618 = vmatprep.subr.mxu0 0.0
    %2619 = vmatpush1.msra.mxu0 %v2302
    %2620 = vmatprep.subr.mxu0 0.0
    %2621 = vmatpush1.msra.mxu0 %v2303
    %2622 = vmatprep.subr.mxu0 0.0
    %2623 = vmatpush1.msra.mxu0 0.0
    %2624 = vmatprep.subr.mxu0 0.0
    %2625 = vmatpush1.msra.mxu0 0.0
    %2626 = vmatprep.subr.mxu0 0.0
    %2627 = vmatpush1.msra.mxu0 0.0
    %2628 = vmatprep.subr.mxu0 0.0
    %2629 = vmatpush1.msra.mxu0 0.0
    %2630 = vmatprep.subr.mxu0 0.0
    %2631 = vmatpush1.msra.mxu0 0.0
    %2632 = vmatprep.subr.mxu0 0.0
    %2633 = vmatpush1.msra.mxu0 0.0
    %2634 = vmatprep.subr.mxu0 0.0
    %2635 = vmatpush1.msra.mxu0 0.0
    %2636 = vmatprep.subr.mxu0 0.0
    %2637 = vmatpush1.msra.mxu0 0.0
    %2638 = vmatprep.subr.mxu0 0.0
    %2639 = vmatpush1.msra.mxu0 0.0
    %2640 = vmatprep.subr.mxu0 0.0
    %2641 = vmatpush1.msra.mxu0 0.0
    %2642 = vmatprep.subr.mxu0 0.0
    %2643 = vmatpush1.msra.mxu0 0.0
    %2644 = vmatprep.subr.mxu0 0.0
    %2645 = vmatpush1.msra.mxu0 0.0
    %2646 = vmatprep.subr.mxu0 0.0
    %2647 = vmatpush1.msra.mxu0 0.0
    %2648 = vmatprep.subr.mxu0 0.0
    %2649 = vmatpush1.msra.mxu0 0.0
    %2650 = vmatprep.subr.mxu0 0.0
    %2651 = vmatpush1.msra.mxu0 0.0
    %2652 = vmatprep.subr.mxu0 0.0
    %2653 = vmatpush1.msra.mxu0 0.0
    %2654 = vmatprep.subr.mxu0 0.0
    %2655 = vmatpush1.msra.mxu0 0.0
    %2656 = vmatprep.subr.mxu0 0.0
    %2657 = vmatpush1.msra.mxu0 0.0
    %2658 = vmatprep.subr.mxu0 0.0
    %2659 = vmatpush1.msra.mxu0 0.0
    %2660 = vmatprep.subr.mxu0 0.0
    %2661 = vmatpush1.msra.mxu0 0.0
    %2662 = vmatprep.subr.mxu0 0.0
    %2663 = vmatpush1.msra.mxu0 0.0
    %2664 = vmatprep.subr.mxu0 0.0
    %2665 = vmatpush1.msra.mxu0 0.0
    %2666 = vmatprep.subr.mxu0 0.0
    %2667 = vmatpush1.msra.mxu0 0.0
    %2668 = vmatprep.subr.mxu0 0.0
    %2669 = vmatpush1.msra.mxu0 0.0
    %2670 = vmatprep.subr.mxu0 0.0
    %2671 = vmatpush1.msra.mxu0 0.0
    %2672 = vmatprep.subr.mxu0 0.0
    %2673 = vmatpush1.msra.mxu0 0.0
    %2674 = vmatprep.subr.mxu0 0.0
    %2675 = vmatpush1.msra.mxu0 0.0
    %2676 = vmatprep.subr.mxu0 0.0
    %2677 = vmatpush1.msra.mxu0 0.0
    %2678 = vmatprep.mubr.f32.mxu0 0.0
    %2679 = vmatmul.mubr.f32.gmra.mrb[0].mxu0 %v2612
    %v2680 = vpop.f32.mrb[0].mxu0
    %v2681 = vadd.f32 0.0, %v2680
    %v2682 = vpop.f32.mrb[0].mxu0
    %2683 = vdwg.mxu0
    %v2684 = vadd.f32 %v2611, %v2681
    %v2685 = vxor.u32 %v2684, 2147483648
    %v2686 = vmul.f32 %v2685, 1.442695
    %v2687 = vpow.pop %v2686
    %v2688 = vadd.f32 %v2687, 1.0
    %v2689 = vrcp.pop %v2688
    %v2690 = vmul.f32 1.0, %v2689
    %v2691 = vtanh.pop %v2684
    %v2692 = vmul.f32 %v2690, %v2599
    %2694 = vrot.lane.b32.xlu0 %v2691, 64
    %v2695 = vpop.permute.xlu0 %2694
    %v2697 = vmul.f32 %v2690, %v2695
    %2699 = vrot.lane.b32.xlu0 %v2697, 32
    %v2700 = vpop.permute.xlu0 %2699
    %v2702 = vadd.f32 %v2692, %v2700
    %v2703 = vtanh.pop %v2702
    %2705 = vrot.lane.b32.xlu0 %v2703, 64
    %v2706 = vpop.permute.xlu0 %2705
    %v2708 = vmul.f32 %v2690, %v2706
    %2710 = vrot.lane.b32.xlu0 %v2708, 32
    %v2711 = vpop.permute.xlu0 %2710
    %2713 = vst.msk [vmem:[#allocation3 + $0x18] sm:$0xff] %vm416, %v2711
    %v2714 = vld [vmem:[#allocation2 + $0x20] sm:$0xff]
    %v2715 = vsel %vm416, %v2711, 0
    %2717 = vmatprep.subr.mxu0 0.0
    %2718 = vmatpush1.msra.mxu0 %v2300
    %2719 = vmatprep.subr.mxu0 0.0
    %2720 = vmatpush1.msra.mxu0 %v2301
    %2721 = vmatprep.subr.mxu0 0.0
    %2722 = vmatpush1.msra.mxu0 %v2302
    %2723 = vmatprep.subr.mxu0 0.0
    %2724 = vmatpush1.msra.mxu0 %v2303
    %2725 = vmatprep.subr.mxu0 0.0
    %2726 = vmatpush1.msra.mxu0 0.0
    %2727 = vmatprep.subr.mxu0 0.0
    %2728 = vmatpush1.msra.mxu0 0.0
    %2729 = vmatprep.subr.mxu0 0.0
    %2730 = vmatpush1.msra.mxu0 0.0
    %2731 = vmatprep.subr.mxu0 0.0
    %2732 = vmatpush1.msra.mxu0 0.0
    %2733 = vmatprep.subr.mxu0 0.0
    %2734 = vmatpush1.msra.mxu0 0.0
    %2735 = vmatprep.subr.mxu0 0.0
    %2736 = vmatpush1.msra.mxu0 0.0
    %2737 = vmatprep.subr.mxu0 0.0
    %2738 = vmatpush1.msra.mxu0 0.0
    %2739 = vmatprep.subr.mxu0 0.0
    %2740 = vmatpush1.msra.mxu0 0.0
    %2741 = vmatprep.subr.mxu0 0.0
    %2742 = vmatpush1.msra.mxu0 0.0
    %2743 = vmatprep.subr.mxu0 0.0
    %2744 = vmatpush1.msra.mxu0 0.0
    %2745 = vmatprep.subr.mxu0 0.0
    %2746 = vmatpush1.msra.mxu0 0.0
    %2747 = vmatprep.subr.mxu0 0.0
    %2748 = vmatpush1.msra.mxu0 0.0
    %2749 = vmatprep.subr.mxu0 0.0
    %2750 = vmatpush1.msra.mxu0 0.0
    %2751 = vmatprep.subr.mxu0 0.0
    %2752 = vmatpush1.msra.mxu0 0.0
    %2753 = vmatprep.subr.mxu0 0.0
    %2754 = vmatpush1.msra.mxu0 0.0
    %2755 = vmatprep.subr.mxu0 0.0
    %2756 = vmatpush1.msra.mxu0 0.0
    %2757 = vmatprep.subr.mxu0 0.0
    %2758 = vmatpush1.msra.mxu0 0.0
    %2759 = vmatprep.subr.mxu0 0.0
    %2760 = vmatpush1.msra.mxu0 0.0
    %2761 = vmatprep.subr.mxu0 0.0
    %2762 = vmatpush1.msra.mxu0 0.0
    %2763 = vmatprep.subr.mxu0 0.0
    %2764 = vmatpush1.msra.mxu0 0.0
    %2765 = vmatprep.subr.mxu0 0.0
    %2766 = vmatpush1.msra.mxu0 0.0
    %2767 = vmatprep.subr.mxu0 0.0
    %2768 = vmatpush1.msra.mxu0 0.0
    %2769 = vmatprep.subr.mxu0 0.0
    %2770 = vmatpush1.msra.mxu0 0.0
    %2771 = vmatprep.subr.mxu0 0.0
    %2772 = vmatpush1.msra.mxu0 0.0
    %2773 = vmatprep.subr.mxu0 0.0
    %2774 = vmatpush1.msra.mxu0 0.0
    %2775 = vmatprep.subr.mxu0 0.0
    %2776 = vmatpush1.msra.mxu0 0.0
    %2777 = vmatprep.subr.mxu0 0.0
    %2778 = vmatpush1.msra.mxu0 0.0
    %2779 = vmatprep.subr.mxu0 0.0
    %2780 = vmatpush1.msra.mxu0 0.0
    %2781 = vmatprep.mubr.f32.mxu0 0.0
    %2782 = vmatmul.mubr.f32.gmra.mrb[0].mxu0 %v2715
    %v2783 = vpop.f32.mrb[0].mxu0
    %v2784 = vadd.f32 0.0, %v2783
    %v2785 = vpop.f32.mrb[0].mxu0
    %2786 = vdwg.mxu0
    %v2787 = vadd.f32 %v2714, %v2784
    %v2788 = vxor.u32 %v2787, 2147483648
    %v2789 = vmul.f32 %v2788, 1.442695
    %v2790 = vpow.pop %v2789
    %v2791 = vadd.f32 %v2790, 1.0
    %v2792 = vrcp.pop %v2791
    %v2793 = vmul.f32 1.0, %v2792
    %v2794 = vtanh.pop %v2787
    %v2795 = vmul.f32 %v2793, %v2702
    %2797 = vrot.lane.b32.xlu0 %v2794, 64
    %v2798 = vpop.permute.xlu0 %2797
    %v2800 = vmul.f32 %v2793, %v2798
    %2802 = vrot.lane.b32.xlu0 %v2800, 32
    %v2803 = vpop.permute.xlu0 %2802
    %v2805 = vadd.f32 %v2795, %v2803
    %v2806 = vtanh.pop %v2805
    %2808 = vrot.lane.b32.xlu0 %v2806, 64
    %v2809 = vpop.permute.xlu0 %2808
    %v2811 = vmul.f32 %v2793, %v2809
    %2813 = vrot.lane.b32.xlu0 %v2811, 32
    %v2814 = vpop.permute.xlu0 %2813
    %2816 = vst.msk [vmem:[#allocation3 + $0x20] sm:$0xff] %vm416, %v2814
    %v2817 = vld [vmem:[#allocation2 + $0x28] sm:$0xff]
    %v2818 = vsel %vm416, %v2814, 0
    %2820 = vmatprep.subr.mxu0 0.0
    %2821 = vmatpush1.msra.mxu0 %v2300
    %2822 = vmatprep.subr.mxu0 0.0
    %2823 = vmatpush1.msra.mxu0 %v2301
    %2824 = vmatprep.subr.mxu0 0.0
    %2825 = vmatpush1.msra.mxu0 %v2302
    %2826 = vmatprep.subr.mxu0 0.0
    %2827 = vmatpush1.msra.mxu0 %v2303
    %2828 = vmatprep.subr.mxu0 0.0
    %2829 = vmatpush1.msra.mxu0 0.0
    %2830 = vmatprep.subr.mxu0 0.0
    %2831 = vmatpush1.msra.mxu0 0.0
    %2832 = vmatprep.subr.mxu0 0.0
    %2833 = vmatpush1.msra.mxu0 0.0
    %2834 = vmatprep.subr.mxu0 0.0
    %2835 = vmatpush1.msra.mxu0 0.0
    %2836 = vmatprep.subr.mxu0 0.0
    %2837 = vmatpush1.msra.mxu0 0.0
    %2838 = vmatprep.subr.mxu0 0.0
    %2839 = vmatpush1.msra.mxu0 0.0
    %2840 = vmatprep.subr.mxu0 0.0
    %2841 = vmatpush1.msra.mxu0 0.0
    %2842 = vmatprep.subr.mxu0 0.0
    %2843 = vmatpush1.msra.mxu0 0.0
    %2844 = vmatprep.subr.mxu0 0.0
    %2845 = vmatpush1.msra.mxu0 0.0
    %2846 = vmatprep.subr.mxu0 0.0
    %2847 = vmatpush1.msra.mxu0 0.0
    %2848 = vmatprep.subr.mxu0 0.0
    %2849 = vmatpush1.msra.mxu0 0.0
    %2850 = vmatprep.subr.mxu0 0.0
    %2851 = vmatpush1.msra.mxu0 0.0
    %2852 = vmatprep.subr.mxu0 0.0
    %2853 = vmatpush1.msra.mxu0 0.0
    %2854 = vmatprep.subr.mxu0 0.0
    %2855 = vmatpush1.msra.mxu0 0.0
    %2856 = vmatprep.subr.mxu0 0.0
    %2857 = vmatpush1.msra.mxu0 0.0
    %2858 = vmatprep.subr.mxu0 0.0
    %2859 = vmatpush1.msra.mxu0 0.0
    %2860 = vmatprep.subr.mxu0 0.0
    %2861 = vmatpush1.msra.mxu0 0.0
    %2862 = vmatprep.subr.mxu0 0.0
    %2863 = vmatpush1.msra.mxu0 0.0
    %2864 = vmatprep.subr.mxu0 0.0
    %2865 = vmatpush1.msra.mxu0 0.0
    %2866 = vmatprep.subr.mxu0 0.0
    %2867 = vmatpush1.msra.mxu0 0.0
    %2868 = vmatprep.subr.mxu0 0.0
    %2869 = vmatpush1.msra.mxu0 0.0
    %2870 = vmatprep.subr.mxu0 0.0
    %2871 = vmatpush1.msra.mxu0 0.0
    %2872 = vmatprep.subr.mxu0 0.0
    %2873 = vmatpush1.msra.mxu0 0.0
    %2874 = vmatprep.subr.mxu0 0.0
    %2875 = vmatpush1.msra.mxu0 0.0
    %2876 = vmatprep.subr.mxu0 0.0
    %2877 = vmatpush1.msra.mxu0 0.0
    %2878 = vmatprep.subr.mxu0 0.0
    %2879 = vmatpush1.msra.mxu0 0.0
    %2880 = vmatprep.subr.mxu0 0.0
    %2881 = vmatpush1.msra.mxu0 0.0
    %2882 = vmatprep.subr.mxu0 0.0
    %2883 = vmatpush1.msra.mxu0 0.0
    %2884 = vmatprep.mubr.f32.mxu0 0.0
    %2885 = vmatmul.mubr.f32.gmra.mrb[0].mxu0 %v2818
    %v2886 = vpop.f32.mrb[0].mxu0
    %v2887 = vadd.f32 0.0, %v2886
    %v2888 = vpop.f32.mrb[0].mxu0
    %2889 = vdwg.mxu0
    %v2890 = vadd.f32 %v2817, %v2887
    %v2891 = vxor.u32 %v2890, 2147483648
    %v2892 = vmul.f32 %v2891, 1.442695
    %v2893 = vpow.pop %v2892
    %v2894 = vadd.f32 %v2893, 1.0
    %v2895 = vrcp.pop %v2894
    %v2896 = vmul.f32 1.0, %v2895
    %v2897 = vtanh.pop %v2890
    %v2898 = vmul.f32 %v2896, %v2805
    %2900 = vrot.lane.b32.xlu0 %v2897, 64
    %v2901 = vpop.permute.xlu0 %2900
    %v2903 = vmul.f32 %v2896, %v2901
    %2905 = vrot.lane.b32.xlu0 %v2903, 32
    %v2906 = vpop.permute.xlu0 %2905
    %v2908 = vadd.f32 %v2898, %v2906
    %v2909 = vtanh.pop %v2908
    %2911 = vrot.lane.b32.xlu0 %v2909, 64
    %v2912 = vpop.permute.xlu0 %2911
    %v2914 = vmul.f32 %v2896, %v2912
    %2916 = vrot.lane.b32.xlu0 %v2914, 32
    %v2917 = vpop.permute.xlu0 %2916
    %2919 = vst.msk [vmem:[#allocation3 + $0x28] sm:$0xff] %vm416, %v2917
    %v2920 = vld [vmem:[#allocation2 + $0x30] sm:$0xff]
    %v2921 = vsel %vm416, %v2917, 0
    %2923 = vmatprep.subr.mxu0 0.0
    %2924 = vmatpush1.msra.mxu0 %v2300
    %2925 = vmatprep.subr.mxu0 0.0
    %2926 = vmatpush1.msra.mxu0 %v2301
    %2927 = vmatprep.subr.mxu0 0.0
    %2928 = vmatpush1.msra.mxu0 %v2302
    %2929 = vmatprep.subr.mxu0 0.0
    %2930 = vmatpush1.msra.mxu0 %v2303
    %2931 = vmatprep.subr.mxu0 0.0
    %2932 = vmatpush1.msra.mxu0 0.0
    %2933 = vmatprep.subr.mxu0 0.0
    %2934 = vmatpush1.msra.mxu0 0.0
    %2935 = vmatprep.subr.mxu0 0.0
    %2936 = vmatpush1.msra.mxu0 0.0
    %2937 = vmatprep.subr.mxu0 0.0
    %2938 = vmatpush1.msra.mxu0 0.0
    %2939 = vmatprep.subr.mxu0 0.0
    %2940 = vmatpush1.msra.mxu0 0.0
    %2941 = vmatprep.subr.mxu0 0.0
    %2942 = vmatpush1.msra.mxu0 0.0
    %2943 = vmatprep.subr.mxu0 0.0
    %2944 = vmatpush1.msra.mxu0 0.0
    %2945 = vmatprep.subr.mxu0 0.0
    %2946 = vmatpush1.msra.mxu0 0.0
    %2947 = vmatprep.subr.mxu0 0.0
    %2948 = vmatpush1.msra.mxu0 0.0
    %2949 = vmatprep.subr.mxu0 0.0
    %2950 = vmatpush1.msra.mxu0 0.0
    %2951 = vmatprep.subr.mxu0 0.0
    %2952 = vmatpush1.msra.mxu0 0.0
    %2953 = vmatprep.subr.mxu0 0.0
    %2954 = vmatpush1.msra.mxu0 0.0
    %2955 = vmatprep.subr.mxu0 0.0
    %2956 = vmatpush1.msra.mxu0 0.0
    %2957 = vmatprep.subr.mxu0 0.0
    %2958 = vmatpush1.msra.mxu0 0.0
    %2959 = vmatprep.subr.mxu0 0.0
    %2960 = vmatpush1.msra.mxu0 0.0
    %2961 = vmatprep.subr.mxu0 0.0
    %2962 = vmatpush1.msra.mxu0 0.0
    %2963 = vmatprep.subr.mxu0 0.0
    %2964 = vmatpush1.msra.mxu0 0.0
    %2965 = vmatprep.subr.mxu0 0.0
    %2966 = vmatpush1.msra.mxu0 0.0
    %2967 = vmatprep.subr.mxu0 0.0
    %2968 = vmatpush1.msra.mxu0 0.0
    %2969 = vmatprep.subr.mxu0 0.0
    %2970 = vmatpush1.msra.mxu0 0.0
    %2971 = vmatprep.subr.mxu0 0.0
    %2972 = vmatpush1.msra.mxu0 0.0
    %2973 = vmatprep.subr.mxu0 0.0
    %2974 = vmatpush1.msra.mxu0 0.0
    %2975 = vmatprep.subr.mxu0 0.0
    %2976 = vmatpush1.msra.mxu0 0.0
    %2977 = vmatprep.subr.mxu0 0.0
    %2978 = vmatpush1.msra.mxu0 0.0
    %2979 = vmatprep.subr.mxu0 0.0
    %2980 = vmatpush1.msra.mxu0 0.0
    %2981 = vmatprep.subr.mxu0 0.0
    %2982 = vmatpush1.msra.mxu0 0.0
    %2983 = vmatprep.subr.mxu0 0.0
    %2984 = vmatpush1.msra.mxu0 0.0
    %2985 = vmatprep.subr.mxu0 0.0
    %2986 = vmatpush1.msra.mxu0 0.0
    %2987 = vmatprep.mubr.f32.mxu0 0.0
    %2988 = vmatmul.mubr.f32.gmra.mrb[0].mxu0 %v2921
    %v2989 = vpop.f32.mrb[0].mxu0
    %v2990 = vadd.f32 0.0, %v2989
    %v2991 = vpop.f32.mrb[0].mxu0
    %2992 = vdwg.mxu0
    %v2993 = vadd.f32 %v2920, %v2990
    %v2994 = vxor.u32 %v2993, 2147483648
    %v2995 = vmul.f32 %v2994, 1.442695
    %v2996 = vpow.pop %v2995
    %v2997 = vadd.f32 %v2996, 1.0
    %v2998 = vrcp.pop %v2997
    %v2999 = vmul.f32 1.0, %v2998
    %v3000 = vtanh.pop %v2993
    %v3001 = vmul.f32 %v2999, %v2908
    %3003 = vrot.lane.b32.xlu0 %v3000, 64
    %v3004 = vpop.permute.xlu0 %3003
    %v3006 = vmul.f32 %v2999, %v3004
    %3008 = vrot.lane.b32.xlu0 %v3006, 32
    %v3009 = vpop.permute.xlu0 %3008
    %v3011 = vadd.f32 %v3001, %v3009
    %v3012 = vtanh.pop %v3011
    %3014 = vrot.lane.b32.xlu0 %v3012, 64
    %v3015 = vpop.permute.xlu0 %3014
    %v3017 = vmul.f32 %v2999, %v3015
    %3019 = vrot.lane.b32.xlu0 %v3017, 32
    %v3020 = vpop.permute.xlu0 %3019
    %3022 = vst.msk [vmem:[#allocation3 + $0x30] sm:$0xff] %vm416, %v3020
    %v3023 = vld [vmem:[#allocation2 + $0x38] sm:$0xff]
    %v3024 = vsel %vm416, %v3020, 0
    %3026 = vmatprep.subr.mxu0 0.0
    %3027 = vmatpush1.msra.mxu0 %v2300
    %3028 = vmatprep.subr.mxu0 0.0
    %3029 = vmatpush1.msra.mxu0 %v2301
    %3030 = vmatprep.subr.mxu0 0.0
    %3031 = vmatpush1.msra.mxu0 %v2302
    %3032 = vmatprep.subr.mxu0 0.0
    %3033 = vmatpush1.msra.mxu0 %v2303
    %3034 = vmatprep.subr.mxu0 0.0
    %3035 = vmatpush1.msra.mxu0 0.0
    %3036 = vmatprep.subr.mxu0 0.0
    %3037 = vmatpush1.msra.mxu0 0.0
    %3038 = vmatprep.subr.mxu0 0.0
    %3039 = vmatpush1.msra.mxu0 0.0
    %3040 = vmatprep.subr.mxu0 0.0
    %3041 = vmatpush1.msra.mxu0 0.0
    %3042 = vmatprep.subr.mxu0 0.0
    %3043 = vmatpush1.msra.mxu0 0.0
    %3044 = vmatprep.subr.mxu0 0.0
    %3045 = vmatpush1.msra.mxu0 0.0
    %3046 = vmatprep.subr.mxu0 0.0
    %3047 = vmatpush1.msra.mxu0 0.0
    %3048 = vmatprep.subr.mxu0 0.0
    %3049 = vmatpush1.msra.mxu0 0.0
    %3050 = vmatprep.subr.mxu0 0.0
    %3051 = vmatpush1.msra.mxu0 0.0
    %3052 = vmatprep.subr.mxu0 0.0
    %3053 = vmatpush1.msra.mxu0 0.0
    %3054 = vmatprep.subr.mxu0 0.0
    %3055 = vmatpush1.msra.mxu0 0.0
    %3056 = vmatprep.subr.mxu0 0.0
    %3057 = vmatpush1.msra.mxu0 0.0
    %3058 = vmatprep.subr.mxu0 0.0
    %3059 = vmatpush1.msra.mxu0 0.0
    %3060 = vmatprep.subr.mxu0 0.0
    %3061 = vmatpush1.msra.mxu0 0.0
    %3062 = vmatprep.subr.mxu0 0.0
    %3063 = vmatpush1.msra.mxu0 0.0
    %3064 = vmatprep.subr.mxu0 0.0
    %3065 = vmatpush1.msra.mxu0 0.0
    %3066 = vmatprep.subr.mxu0 0.0
    %3067 = vmatpush1.msra.mxu0 0.0
    %3068 = vmatprep.subr.mxu0 0.0
    %3069 = vmatpush1.msra.mxu0 0.0
    %3070 = vmatprep.subr.mxu0 0.0
    %3071 = vmatpush1.msra.mxu0 0.0
    %3072 = vmatprep.subr.mxu0 0.0
    %3073 = vmatpush1.msra.mxu0 0.0
    %3074 = vmatprep.subr.mxu0 0.0
    %3075 = vmatpush1.msra.mxu0 0.0
    %3076 = vmatprep.subr.mxu0 0.0
    %3077 = vmatpush1.msra.mxu0 0.0
    %3078 = vmatprep.subr.mxu0 0.0
    %3079 = vmatpush1.msra.mxu0 0.0
    %3080 = vmatprep.subr.mxu0 0.0
    %3081 = vmatpush1.msra.mxu0 0.0
    %3082 = vmatprep.subr.mxu0 0.0
    %3083 = vmatpush1.msra.mxu0 0.0
    %3084 = vmatprep.subr.mxu0 0.0
    %3085 = vmatpush1.msra.mxu0 0.0
    %3086 = vmatprep.subr.mxu0 0.0
    %3087 = vmatpush1.msra.mxu0 0.0
    %3088 = vmatprep.subr.mxu0 0.0
    %3089 = vmatpush1.msra.mxu0 0.0
    %3090 = vmatprep.mubr.f32.mxu0 0.0
    %3091 = vmatmul.mubr.f32.gmra.mrb[0].mxu0 %v3024
    %v3092 = vpop.f32.mrb[0].mxu0
    %v3093 = vadd.f32 0.0, %v3092
    %v3094 = vpop.f32.mrb[0].mxu0
    %3095 = vdwg.mxu0
    %v3096 = vadd.f32 %v3023, %v3093
    %v3097 = vxor.u32 %v3096, 2147483648
    %v3098 = vmul.f32 %v3097, 1.442695
    %v3099 = vpow.pop %v3098
    %v3100 = vadd.f32 %v3099, 1.0
    %v3101 = vrcp.pop %v3100
    %v3102 = vmul.f32 1.0, %v3101
    %v3103 = vtanh.pop %v3096
    %v3104 = vmul.f32 %v3102, %v3011
    %3106 = vrot.lane.b32.xlu0 %v3103, 64
    %v3107 = vpop.permute.xlu0 %3106
    %v3109 = vmul.f32 %v3102, %v3107
    %3111 = vrot.lane.b32.xlu0 %v3109, 32
    %v3112 = vpop.permute.xlu0 %3111
    %v3114 = vadd.f32 %v3104, %v3112
    %v3115 = vtanh.pop %v3114
    %3117 = vrot.lane.b32.xlu0 %v3115, 64
    %v3118 = vpop.permute.xlu0 %3117
    %v3120 = vmul.f32 %v3102, %v3118
    %3122 = vrot.lane.b32.xlu0 %v3120, 32
    %v3123 = vpop.permute.xlu0 %3122
    %3125 = vst.msk [vmem:[#allocation3 + $0x38] sm:$0xff] %vm416, %v3123
    %v3126 = vld [vmem:[#allocation2 + $0x40] sm:$0xff]
    %v3127 = vsel %vm416, %v3123, 0
    %3129 = vmatprep.subr.mxu0 0.0
    %3130 = vmatpush1.msra.mxu0 %v2300
    %3131 = vmatprep.subr.mxu0 0.0
    %3132 = vmatpush1.msra.mxu0 %v2301
    %3133 = vmatprep.subr.mxu0 0.0
    %3134 = vmatpush1.msra.mxu0 %v2302
    %3135 = vmatprep.subr.mxu0 0.0
    %3136 = vmatpush1.msra.mxu0 %v2303
    %3137 = vmatprep.subr.mxu0 0.0
    %3138 = vmatpush1.msra.mxu0 0.0
    %3139 = vmatprep.subr.mxu0 0.0
    %3140 = vmatpush1.msra.mxu0 0.0
    %3141 = vmatprep.subr.mxu0 0.0
    %3142 = vmatpush1.msra.mxu0 0.0
    %3143 = vmatprep.subr.mxu0 0.0
    %3144 = vmatpush1.msra.mxu0 0.0
    %3145 = vmatprep.subr.mxu0 0.0
    %3146 = vmatpush1.msra.mxu0 0.0
    %3147 = vmatprep.subr.mxu0 0.0
    %3148 = vmatpush1.msra.mxu0 0.0
    %3149 = vmatprep.subr.mxu0 0.0
    %3150 = vmatpush1.msra.mxu0 0.0
    %3151 = vmatprep.subr.mxu0 0.0
    %3152 = vmatpush1.msra.mxu0 0.0
    %3153 = vmatprep.subr.mxu0 0.0
    %3154 = vmatpush1.msra.mxu0 0.0
    %3155 = vmatprep.subr.mxu0 0.0
    %3156 = vmatpush1.msra.mxu0 0.0
    %3157 = vmatprep.subr.mxu0 0.0
    %3158 = vmatpush1.msra.mxu0 0.0
    %3159 = vmatprep.subr.mxu0 0.0
    %3160 = vmatpush1.msra.mxu0 0.0
    %3161 = vmatprep.subr.mxu0 0.0
    %3162 = vmatpush1.msra.mxu0 0.0
    %3163 = vmatprep.subr.mxu0 0.0
    %3164 = vmatpush1.msra.mxu0 0.0
    %3165 = vmatprep.subr.mxu0 0.0
    %3166 = vmatpush1.msra.mxu0 0.0
    %3167 = vmatprep.subr.mxu0 0.0
    %3168 = vmatpush1.msra.mxu0 0.0
    %3169 = vmatprep.subr.mxu0 0.0
    %3170 = vmatpush1.msra.mxu0 0.0
    %3171 = vmatprep.subr.mxu0 0.0
    %3172 = vmatpush1.msra.mxu0 0.0
    %3173 = vmatprep.subr.mxu0 0.0
    %3174 = vmatpush1.msra.mxu0 0.0
    %3175 = vmatprep.subr.mxu0 0.0
    %3176 = vmatpush1.msra.mxu0 0.0
    %3177 = vmatprep.subr.mxu0 0.0
    %3178 = vmatpush1.msra.mxu0 0.0
    %3179 = vmatprep.subr.mxu0 0.0
    %3180 = vmatpush1.msra.mxu0 0.0
    %3181 = vmatprep.subr.mxu0 0.0
    %3182 = vmatpush1.msra.mxu0 0.0
    %3183 = vmatprep.subr.mxu0 0.0
    %3184 = vmatpush1.msra.mxu0 0.0
    %3185 = vmatprep.subr.mxu0 0.0
    %3186 = vmatpush1.msra.mxu0 0.0
    %3187 = vmatprep.subr.mxu0 0.0
    %3188 = vmatpush1.msra.mxu0 0.0
    %3189 = vmatprep.subr.mxu0 0.0
    %3190 = vmatpush1.msra.mxu0 0.0
    %3191 = vmatprep.subr.mxu0 0.0
    %3192 = vmatpush1.msra.mxu0 0.0
    %3193 = vmatprep.mubr.f32.mxu0 0.0
    %3194 = vmatmul.mubr.f32.gmra.mrb[0].mxu0 %v3127
    %v3195 = vpop.f32.mrb[0].mxu0
    %v3196 = vadd.f32 0.0, %v3195
    %v3197 = vpop.f32.mrb[0].mxu0
    %3198 = vdwg.mxu0
    %v3199 = vadd.f32 %v3126, %v3196
    %v3200 = vxor.u32 %v3199, 2147483648
    %v3201 = vmul.f32 %v3200, 1.442695
    %v3202 = vpow.pop %v3201
    %v3203 = vadd.f32 %v3202, 1.0
    %v3204 = vrcp.pop %v3203
    %v3205 = vmul.f32 1.0, %v3204
    %v3206 = vtanh.pop %v3199
    %v3207 = vmul.f32 %v3205, %v3114
    %3209 = vrot.lane.b32.xlu0 %v3206, 64
    %v3210 = vpop.permute.xlu0 %3209
    %v3212 = vmul.f32 %v3205, %v3210
    %3214 = vrot.lane.b32.xlu0 %v3212, 32
    %v3215 = vpop.permute.xlu0 %3214
    %v3217 = vadd.f32 %v3207, %v3215
    %v3218 = vtanh.pop %v3217
    %3220 = vrot.lane.b32.xlu0 %v3218, 64
    %v3221 = vpop.permute.xlu0 %3220
    %v3223 = vmul.f32 %v3205, %v3221
    %3225 = vrot.lane.b32.xlu0 %v3223, 32
    %v3226 = vpop.permute.xlu0 %3225
    %3228 = vst.msk [vmem:[#allocation3 + $0x40] sm:$0xff] %vm416, %v3226
    %v3229 = vld [vmem:[#allocation2 + $0x48] sm:$0xff]
    %v3230 = vsel %vm416, %v3226, 0
    %3232 = vmatprep.subr.mxu0 0.0
    %3233 = vmatpush1.msra.mxu0 %v2300
    %3234 = vmatprep.subr.mxu0 0.0
    %3235 = vmatpush1.msra.mxu0 %v2301
    %3236 = vmatprep.subr.mxu0 0.0
    %3237 = vmatpush1.msra.mxu0 %v2302
    %3238 = vmatprep.subr.mxu0 0.0
    %3239 = vmatpush1.msra.mxu0 %v2303
    %3240 = vmatprep.subr.mxu0 0.0
    %3241 = vmatpush1.msra.mxu0 0.0
    %3242 = vmatprep.subr.mxu0 0.0
    %3243 = vmatpush1.msra.mxu0 0.0
    %3244 = vmatprep.subr.mxu0 0.0
    %3245 = vmatpush1.msra.mxu0 0.0
    %3246 = vmatprep.subr.mxu0 0.0
    %3247 = vmatpush1.msra.mxu0 0.0
    %3248 = vmatprep.subr.mxu0 0.0
    %3249 = vmatpush1.msra.mxu0 0.0
    %3250 = vmatprep.subr.mxu0 0.0
    %3251 = vmatpush1.msra.mxu0 0.0
    %3252 = vmatprep.subr.mxu0 0.0
    %3253 = vmatpush1.msra.mxu0 0.0
    %3254 = vmatprep.subr.mxu0 0.0
    %3255 = vmatpush1.msra.mxu0 0.0
    %3256 = vmatprep.subr.mxu0 0.0
    %3257 = vmatpush1.msra.mxu0 0.0
    %3258 = vmatprep.subr.mxu0 0.0
    %3259 = vmatpush1.msra.mxu0 0.0
    %3260 = vmatprep.subr.mxu0 0.0
    %3261 = vmatpush1.msra.mxu0 0.0
    %3262 = vmatprep.subr.mxu0 0.0
    %3263 = vmatpush1.msra.mxu0 0.0
    %3264 = vmatprep.subr.mxu0 0.0
    %3265 = vmatpush1.msra.mxu0 0.0
    %3266 = vmatprep.subr.mxu0 0.0
    %3267 = vmatpush1.msra.mxu0 0.0
    %3268 = vmatprep.subr.mxu0 0.0
    %3269 = vmatpush1.msra.mxu0 0.0
    %3270 = vmatprep.subr.mxu0 0.0
    %3271 = vmatpush1.msra.mxu0 0.0
    %3272 = vmatprep.subr.mxu0 0.0
    %3273 = vmatpush1.msra.mxu0 0.0
    %3274 = vmatprep.subr.mxu0 0.0
    %3275 = vmatpush1.msra.mxu0 0.0
    %3276 = vmatprep.subr.mxu0 0.0
    %3277 = vmatpush1.msra.mxu0 0.0
    %3278 = vmatprep.subr.mxu0 0.0
    %3279 = vmatpush1.msra.mxu0 0.0
    %3280 = vmatprep.subr.mxu0 0.0
    %3281 = vmatpush1.msra.mxu0 0.0
    %3282 = vmatprep.subr.mxu0 0.0
    %3283 = vmatpush1.msra.mxu0 0.0
    %3284 = vmatprep.subr.mxu0 0.0
    %3285 = vmatpush1.msra.mxu0 0.0
    %3286 = vmatprep.subr.mxu0 0.0
    %3287 = vmatpush1.msra.mxu0 0.0
    %3288 = vmatprep.subr.mxu0 0.0
    %3289 = vmatpush1.msra.mxu0 0.0
    %3290 = vmatprep.subr.mxu0 0.0
    %3291 = vmatpush1.msra.mxu0 0.0
    %3292 = vmatprep.subr.mxu0 0.0
    %3293 = vmatpush1.msra.mxu0 0.0
    %3294 = vmatprep.subr.mxu0 0.0
    %3295 = vmatpush1.msra.mxu0 0.0
    %3296 = vmatprep.mubr.f32.mxu0 0.0
    %3297 = vmatmul.mubr.f32.gmra.mrb[0].mxu0 %v3230
    %v3298 = vpop.f32.mrb[0].mxu0
    %v3299 = vadd.f32 0.0, %v3298
    %v3300 = vpop.f32.mrb[0].mxu0
    %3301 = vdwg.mxu0
    %v3302 = vadd.f32 %v3229, %v3299
    %v3303 = vxor.u32 %v3302, 2147483648
    %v3304 = vmul.f32 %v3303, 1.442695
    %v3305 = vpow.pop %v3304
    %v3306 = vadd.f32 %v3305, 1.0
    %v3307 = vrcp.pop %v3306
    %v3308 = vmul.f32 1.0, %v3307
    %v3309 = vtanh.pop %v3302
    %v3310 = vmul.f32 %v3308, %v3217
    %3312 = vrot.lane.b32.xlu0 %v3309, 64
    %v3313 = vpop.permute.xlu0 %3312
    %v3315 = vmul.f32 %v3308, %v3313
    %3317 = vrot.lane.b32.xlu0 %v3315, 32
    %v3318 = vpop.permute.xlu0 %3317
    %v3320 = vadd.f32 %v3310, %v3318
    %v3321 = vtanh.pop %v3320
    %3323 = vrot.lane.b32.xlu0 %v3321, 64
    %v3324 = vpop.permute.xlu0 %3323
    %v3326 = vmul.f32 %v3308, %v3324
    %3328 = vrot.lane.b32.xlu0 %v3326, 32
    %v3329 = vpop.permute.xlu0 %3328
    %3331 = vst.msk [vmem:[#allocation3 + $0x48] sm:$0xff] %vm416, %v3329
    %v3332 = vld [vmem:[#allocation2 + $0x50] sm:$0xff]
    %v3333 = vsel %vm416, %v3329, 0
    %3335 = vmatprep.subr.mxu0 0.0
    %3336 = vmatpush1.msra.mxu0 %v2300
    %3337 = vmatprep.subr.mxu0 0.0
    %3338 = vmatpush1.msra.mxu0 %v2301
    %3339 = vmatprep.subr.mxu0 0.0
    %3340 = vmatpush1.msra.mxu0 %v2302
    %3341 = vmatprep.subr.mxu0 0.0
    %3342 = vmatpush1.msra.mxu0 %v2303
    %3343 = vmatprep.subr.mxu0 0.0
    %3344 = vmatpush1.msra.mxu0 0.0
    %3345 = vmatprep.subr.mxu0 0.0
    %3346 = vmatpush1.msra.mxu0 0.0
    %3347 = vmatprep.subr.mxu0 0.0
    %3348 = vmatpush1.msra.mxu0 0.0
    %3349 = vmatprep.subr.mxu0 0.0
    %3350 = vmatpush1.msra.mxu0 0.0
    %3351 = vmatprep.subr.mxu0 0.0
    %3352 = vmatpush1.msra.mxu0 0.0
    %3353 = vmatprep.subr.mxu0 0.0
    %3354 = vmatpush1.msra.mxu0 0.0
    %3355 = vmatprep.subr.mxu0 0.0
    %3356 = vmatpush1.msra.mxu0 0.0
    %3357 = vmatprep.subr.mxu0 0.0
    %3358 = vmatpush1.msra.mxu0 0.0
    %3359 = vmatprep.subr.mxu0 0.0
    %3360 = vmatpush1.msra.mxu0 0.0
    %3361 = vmatprep.subr.mxu0 0.0
    %3362 = vmatpush1.msra.mxu0 0.0
    %3363 = vmatprep.subr.mxu0 0.0
    %3364 = vmatpush1.msra.mxu0 0.0
    %3365 = vmatprep.subr.mxu0 0.0
    %3366 = vmatpush1.msra.mxu0 0.0
    %3367 = vmatprep.subr.mxu0 0.0
    %3368 = vmatpush1.msra.mxu0 0.0
    %3369 = vmatprep.subr.mxu0 0.0
    %3370 = vmatpush1.msra.mxu0 0.0
    %3371 = vmatprep.subr.mxu0 0.0
    %3372 = vmatpush1.msra.mxu0 0.0
    %3373 = vmatprep.subr.mxu0 0.0
    %3374 = vmatpush1.msra.mxu0 0.0
    %3375 = vmatprep.subr.mxu0 0.0
    %3376 = vmatpush1.msra.mxu0 0.0
    %3377 = vmatprep.subr.mxu0 0.0
    %3378 = vmatpush1.msra.mxu0 0.0
    %3379 = vmatprep.subr.mxu0 0.0
    %3380 = vmatpush1.msra.mxu0 0.0
    %3381 = vmatprep.subr.mxu0 0.0
    %3382 = vmatpush1.msra.mxu0 0.0
    %3383 = vmatprep.subr.mxu0 0.0
    %3384 = vmatpush1.msra.mxu0 0.0
    %3385 = vmatprep.subr.mxu0 0.0
    %3386 = vmatpush1.msra.mxu0 0.0
    %3387 = vmatprep.subr.mxu0 0.0
    %3388 = vmatpush1.msra.mxu0 0.0
    %3389 = vmatprep.subr.mxu0 0.0
    %3390 = vmatpush1.msra.mxu0 0.0
    %3391 = vmatprep.subr.mxu0 0.0
    %3392 = vmatpush1.msra.mxu0 0.0
    %3393 = vmatprep.subr.mxu0 0.0
    %3394 = vmatpush1.msra.mxu0 0.0
    %3395 = vmatprep.subr.mxu0 0.0
    %3396 = vmatpush1.msra.mxu0 0.0
    %3397 = vmatprep.subr.mxu0 0.0
    %3398 = vmatpush1.msra.mxu0 0.0
    %3399 = vmatprep.mubr.f32.mxu0 0.0
    %3400 = vmatmul.mubr.f32.gmra.mrb[0].mxu0 %v3333
    %v3401 = vpop.f32.mrb[0].mxu0
    %v3402 = vadd.f32 0.0, %v3401
    %v3403 = vpop.f32.mrb[0].mxu0
    %3404 = vdwg.mxu0
    %v3405 = vadd.f32 %v3332, %v3402
    %v3406 = vxor.u32 %v3405, 2147483648
    %v3407 = vmul.f32 %v3406, 1.442695
    %v3408 = vpow.pop %v3407
    %v3409 = vadd.f32 %v3408, 1.0
    %v3410 = vrcp.pop %v3409
    %v3411 = vmul.f32 1.0, %v3410
    %v3412 = vtanh.pop %v3405
    %v3413 = vmul.f32 %v3411, %v3320
    %3415 = vrot.lane.b32.xlu0 %v3412, 64
    %v3416 = vpop.permute.xlu0 %3415
    %v3418 = vmul.f32 %v3411, %v3416
    %3420 = vrot.lane.b32.xlu0 %v3418, 32
    %v3421 = vpop.permute.xlu0 %3420
    %v3423 = vadd.f32 %v3413, %v3421
    %v3424 = vtanh.pop %v3423
    %3426 = vrot.lane.b32.xlu0 %v3424, 64
    %v3427 = vpop.permute.xlu0 %3426
    %v3429 = vmul.f32 %v3411, %v3427
    %3431 = vrot.lane.b32.xlu0 %v3429, 32
    %v3432 = vpop.permute.xlu0 %3431
    %3434 = vst.msk [vmem:[#allocation3 + $0x50] sm:$0xff] %vm416, %v3432
    %v3435 = vld [vmem:[#allocation2 + $0x58] sm:$0xff]
    %v3436 = vsel %vm416, %v3432, 0
    %3438 = vmatprep.subr.mxu0 0.0
    %3439 = vmatpush1.msra.mxu0 %v2300
    %3440 = vmatprep.subr.mxu0 0.0
    %3441 = vmatpush1.msra.mxu0 %v2301
    %3442 = vmatprep.subr.mxu0 0.0
    %3443 = vmatpush1.msra.mxu0 %v2302
    %3444 = vmatprep.subr.mxu0 0.0
    %3445 = vmatpush1.msra.mxu0 %v2303
    %3446 = vmatprep.subr.mxu0 0.0
    %3447 = vmatpush1.msra.mxu0 0.0
    %3448 = vmatprep.subr.mxu0 0.0
    %3449 = vmatpush1.msra.mxu0 0.0
    %3450 = vmatprep.subr.mxu0 0.0
    %3451 = vmatpush1.msra.mxu0 0.0
    %3452 = vmatprep.subr.mxu0 0.0
    %3453 = vmatpush1.msra.mxu0 0.0
    %3454 = vmatprep.subr.mxu0 0.0
    %3455 = vmatpush1.msra.mxu0 0.0
    %3456 = vmatprep.subr.mxu0 0.0
    %3457 = vmatpush1.msra.mxu0 0.0
    %3458 = vmatprep.subr.mxu0 0.0
    %3459 = vmatpush1.msra.mxu0 0.0
    %3460 = vmatprep.subr.mxu0 0.0
    %3461 = vmatpush1.msra.mxu0 0.0
    %3462 = vmatprep.subr.mxu0 0.0
    %3463 = vmatpush1.msra.mxu0 0.0
    %3464 = vmatprep.subr.mxu0 0.0
    %3465 = vmatpush1.msra.mxu0 0.0
    %3466 = vmatprep.subr.mxu0 0.0
    %3467 = vmatpush1.msra.mxu0 0.0
    %3468 = vmatprep.subr.mxu0 0.0
    %3469 = vmatpush1.msra.mxu0 0.0
    %3470 = vmatprep.subr.mxu0 0.0
    %3471 = vmatpush1.msra.mxu0 0.0
    %3472 = vmatprep.subr.mxu0 0.0
    %3473 = vmatpush1.msra.mxu0 0.0
    %3474 = vmatprep.subr.mxu0 0.0
    %3475 = vmatpush1.msra.mxu0 0.0
    %3476 = vmatprep.subr.mxu0 0.0
    %3477 = vmatpush1.msra.mxu0 0.0
    %3478 = vmatprep.subr.mxu0 0.0
    %3479 = vmatpush1.msra.mxu0 0.0
    %3480 = vmatprep.subr.mxu0 0.0
    %3481 = vmatpush1.msra.mxu0 0.0
    %3482 = vmatprep.subr.mxu0 0.0
    %3483 = vmatpush1.msra.mxu0 0.0
    %3484 = vmatprep.subr.mxu0 0.0
    %3485 = vmatpush1.msra.mxu0 0.0
    %3486 = vmatprep.subr.mxu0 0.0
    %3487 = vmatpush1.msra.mxu0 0.0
    %3488 = vmatprep.subr.mxu0 0.0
    %3489 = vmatpush1.msra.mxu0 0.0
    %3490 = vmatprep.subr.mxu0 0.0
    %3491 = vmatpush1.msra.mxu0 0.0
    %3492 = vmatprep.subr.mxu0 0.0
    %3493 = vmatpush1.msra.mxu0 0.0
    %3494 = vmatprep.subr.mxu0 0.0
    %3495 = vmatpush1.msra.mxu0 0.0
    %3496 = vmatprep.subr.mxu0 0.0
    %3497 = vmatpush1.msra.mxu0 0.0
    %3498 = vmatprep.subr.mxu0 0.0
    %3499 = vmatpush1.msra.mxu0 0.0
    %3500 = vmatprep.subr.mxu0 0.0
    %3501 = vmatpush1.msra.mxu0 0.0
    %3502 = vmatprep.mubr.f32.mxu0 0.0
    %3503 = vmatmul.mubr.f32.gmra.mrb[0].mxu0 %v3436
    %v3504 = vpop.f32.mrb[0].mxu0
    %v3505 = vadd.f32 0.0, %v3504
    %v3506 = vpop.f32.mrb[0].mxu0
    %3507 = vdwg.mxu0
    %v3508 = vadd.f32 %v3435, %v3505
    %v3509 = vxor.u32 %v3508, 2147483648
    %v3510 = vmul.f32 %v3509, 1.442695
    %v3511 = vpow.pop %v3510
    %v3512 = vadd.f32 %v3511, 1.0
    %v3513 = vrcp.pop %v3512
    %v3514 = vmul.f32 1.0, %v3513
    %v3515 = vtanh.pop %v3508
    %v3516 = vmul.f32 %v3514, %v3423
    %3518 = vrot.lane.b32.xlu0 %v3515, 64
    %v3519 = vpop.permute.xlu0 %3518
    %v3521 = vmul.f32 %v3514, %v3519
    %3523 = vrot.lane.b32.xlu0 %v3521, 32
    %v3524 = vpop.permute.xlu0 %3523
    %v3526 = vadd.f32 %v3516, %v3524
    %v3527 = vtanh.pop %v3526
    %3529 = vrot.lane.b32.xlu0 %v3527, 64
    %v3530 = vpop.permute.xlu0 %3529
    %v3532 = vmul.f32 %v3514, %v3530
    %3534 = vrot.lane.b32.xlu0 %v3532, 32
    %v3535 = vpop.permute.xlu0 %3534
    %3537 = vst.msk [vmem:[#allocation3 + $0x58] sm:$0xff] %vm416, %v3535
    %v3538 = vld [vmem:[#allocation2 + $0x60] sm:$0xff]
    %v3539 = vsel %vm416, %v3535, 0
    %3541 = vmatprep.subr.mxu0 0.0
    %3542 = vmatpush1.msra.mxu0 %v2300
    %3543 = vmatprep.subr.mxu0 0.0
    %3544 = vmatpush1.msra.mxu0 %v2301
    %3545 = vmatprep.subr.mxu0 0.0
    %3546 = vmatpush1.msra.mxu0 %v2302
    %3547 = vmatprep.subr.mxu0 0.0
    %3548 = vmatpush1.msra.mxu0 %v2303
    %3549 = vmatprep.subr.mxu0 0.0
    %3550 = vmatpush1.msra.mxu0 0.0
    %3551 = vmatprep.subr.mxu0 0.0
    %3552 = vmatpush1.msra.mxu0 0.0
    %3553 = vmatprep.subr.mxu0 0.0
    %3554 = vmatpush1.msra.mxu0 0.0
    %3555 = vmatprep.subr.mxu0 0.0
    %3556 = vmatpush1.msra.mxu0 0.0
    %3557 = vmatprep.subr.mxu0 0.0
    %3558 = vmatpush1.msra.mxu0 0.0
    %3559 = vmatprep.subr.mxu0 0.0
    %3560 = vmatpush1.msra.mxu0 0.0
    %3561 = vmatprep.subr.mxu0 0.0
    %3562 = vmatpush1.msra.mxu0 0.0
    %3563 = vmatprep.subr.mxu0 0.0
    %3564 = vmatpush1.msra.mxu0 0.0
    %3565 = vmatprep.subr.mxu0 0.0
    %3566 = vmatpush1.msra.mxu0 0.0
    %3567 = vmatprep.subr.mxu0 0.0
    %3568 = vmatpush1.msra.mxu0 0.0
    %3569 = vmatprep.subr.mxu0 0.0
    %3570 = vmatpush1.msra.mxu0 0.0
    %3571 = vmatprep.subr.mxu0 0.0
    %3572 = vmatpush1.msra.mxu0 0.0
    %3573 = vmatprep.subr.mxu0 0.0
    %3574 = vmatpush1.msra.mxu0 0.0
    %3575 = vmatprep.subr.mxu0 0.0
    %3576 = vmatpush1.msra.mxu0 0.0
    %3577 = vmatprep.subr.mxu0 0.0
    %3578 = vmatpush1.msra.mxu0 0.0
    %3579 = vmatprep.subr.mxu0 0.0
    %3580 = vmatpush1.msra.mxu0 0.0
    %3581 = vmatprep.subr.mxu0 0.0
    %3582 = vmatpush1.msra.mxu0 0.0
    %3583 = vmatprep.subr.mxu0 0.0
    %3584 = vmatpush1.msra.mxu0 0.0
    %3585 = vmatprep.subr.mxu0 0.0
    %3586 = vmatpush1.msra.mxu0 0.0
    %3587 = vmatprep.subr.mxu0 0.0
    %3588 = vmatpush1.msra.mxu0 0.0
    %3589 = vmatprep.subr.mxu0 0.0
    %3590 = vmatpush1.msra.mxu0 0.0
    %3591 = vmatprep.subr.mxu0 0.0
    %3592 = vmatpush1.msra.mxu0 0.0
    %3593 = vmatprep.subr.mxu0 0.0
    %3594 = vmatpush1.msra.mxu0 0.0
    %3595 = vmatprep.subr.mxu0 0.0
    %3596 = vmatpush1.msra.mxu0 0.0
    %3597 = vmatprep.subr.mxu0 0.0
    %3598 = vmatpush1.msra.mxu0 0.0
    %3599 = vmatprep.subr.mxu0 0.0
    %3600 = vmatpush1.msra.mxu0 0.0
    %3601 = vmatprep.subr.mxu0 0.0
    %3602 = vmatpush1.msra.mxu0 0.0
    %3603 = vmatprep.subr.mxu0 0.0
    %3604 = vmatpush1.msra.mxu0 0.0
    %3605 = vmatprep.mubr.f32.mxu0 0.0
    %3606 = vmatmul.mubr.f32.gmra.mrb[0].mxu0 %v3539
    %v3607 = vpop.f32.mrb[0].mxu0
    %v3608 = vadd.f32 0.0, %v3607
    %v3609 = vpop.f32.mrb[0].mxu0
    %3610 = vdwg.mxu0
    %v3611 = vadd.f32 %v3538, %v3608
    %v3612 = vxor.u32 %v3611, 2147483648
    %v3613 = vmul.f32 %v3612, 1.442695
    %v3614 = vpow.pop %v3613
    %v3615 = vadd.f32 %v3614, 1.0
    %v3616 = vrcp.pop %v3615
    %v3617 = vmul.f32 1.0, %v3616
    %v3618 = vtanh.pop %v3611
    %v3619 = vmul.f32 %v3617, %v3526
    %3621 = vrot.lane.b32.xlu0 %v3618, 64
    %v3622 = vpop.permute.xlu0 %3621
    %v3624 = vmul.f32 %v3617, %v3622
    %3626 = vrot.lane.b32.xlu0 %v3624, 32
    %v3627 = vpop.permute.xlu0 %3626
    %v3629 = vadd.f32 %v3619, %v3627
    %v3630 = vtanh.pop %v3629
    %3632 = vrot.lane.b32.xlu0 %v3630, 64
    %v3633 = vpop.permute.xlu0 %3632
    %v3635 = vmul.f32 %v3617, %v3633
    %3637 = vrot.lane.b32.xlu0 %v3635, 32
    %v3638 = vpop.permute.xlu0 %3637
    %3640 = vst.msk [vmem:[#allocation3 + $0x60] sm:$0xff] %vm416, %v3638
    %v3641 = vld [vmem:[#allocation2 + $0x68] sm:$0xff]
    %v3642 = vsel %vm416, %v3638, 0
    %3644 = vmatprep.subr.mxu0 0.0
    %3645 = vmatpush1.msra.mxu0 %v2300
    %3646 = vmatprep.subr.mxu0 0.0
    %3647 = vmatpush1.msra.mxu0 %v2301
    %3648 = vmatprep.subr.mxu0 0.0
    %3649 = vmatpush1.msra.mxu0 %v2302
    %3650 = vmatprep.subr.mxu0 0.0
    %3651 = vmatpush1.msra.mxu0 %v2303
    %3652 = vmatprep.subr.mxu0 0.0
    %3653 = vmatpush1.msra.mxu0 0.0
    %3654 = vmatprep.subr.mxu0 0.0
    %3655 = vmatpush1.msra.mxu0 0.0
    %3656 = vmatprep.subr.mxu0 0.0
    %3657 = vmatpush1.msra.mxu0 0.0
    %3658 = vmatprep.subr.mxu0 0.0
    %3659 = vmatpush1.msra.mxu0 0.0
    %3660 = vmatprep.subr.mxu0 0.0
    %3661 = vmatpush1.msra.mxu0 0.0
    %3662 = vmatprep.subr.mxu0 0.0
    %3663 = vmatpush1.msra.mxu0 0.0
    %3664 = vmatprep.subr.mxu0 0.0
    %3665 = vmatpush1.msra.mxu0 0.0
    %3666 = vmatprep.subr.mxu0 0.0
    %3667 = vmatpush1.msra.mxu0 0.0
    %3668 = vmatprep.subr.mxu0 0.0
    %3669 = vmatpush1.msra.mxu0 0.0
    %3670 = vmatprep.subr.mxu0 0.0
    %3671 = vmatpush1.msra.mxu0 0.0
    %3672 = vmatprep.subr.mxu0 0.0
    %3673 = vmatpush1.msra.mxu0 0.0
    %3674 = vmatprep.subr.mxu0 0.0
    %3675 = vmatpush1.msra.mxu0 0.0
    %3676 = vmatprep.subr.mxu0 0.0
    %3677 = vmatpush1.msra.mxu0 0.0
    %3678 = vmatprep.subr.mxu0 0.0
    %3679 = vmatpush1.msra.mxu0 0.0
    %3680 = vmatprep.subr.mxu0 0.0
    %3681 = vmatpush1.msra.mxu0 0.0
    %3682 = vmatprep.subr.mxu0 0.0
    %3683 = vmatpush1.msra.mxu0 0.0
    %3684 = vmatprep.subr.mxu0 0.0
    %3685 = vmatpush1.msra.mxu0 0.0
    %3686 = vmatprep.subr.mxu0 0.0
    %3687 = vmatpush1.msra.mxu0 0.0
    %3688 = vmatprep.subr.mxu0 0.0
    %3689 = vmatpush1.msra.mxu0 0.0
    %3690 = vmatprep.subr.mxu0 0.0
    %3691 = vmatpush1.msra.mxu0 0.0
    %3692 = vmatprep.subr.mxu0 0.0
    %3693 = vmatpush1.msra.mxu0 0.0
    %3694 = vmatprep.subr.mxu0 0.0
    %3695 = vmatpush1.msra.mxu0 0.0
    %3696 = vmatprep.subr.mxu0 0.0
    %3697 = vmatpush1.msra.mxu0 0.0
    %3698 = vmatprep.subr.mxu0 0.0
    %3699 = vmatpush1.msra.mxu0 0.0
    %3700 = vmatprep.subr.mxu0 0.0
    %3701 = vmatpush1.msra.mxu0 0.0
    %3702 = vmatprep.subr.mxu0 0.0
    %3703 = vmatpush1.msra.mxu0 0.0
    %3704 = vmatprep.subr.mxu0 0.0
    %3705 = vmatpush1.msra.mxu0 0.0
    %3706 = vmatprep.subr.mxu0 0.0
    %3707 = vmatpush1.msra.mxu0 0.0
    %3708 = vmatprep.mubr.f32.mxu0 0.0
    %3709 = vmatmul.mubr.f32.gmra.mrb[0].mxu0 %v3642
    %v3710 = vpop.f32.mrb[0].mxu0
    %v3711 = vadd.f32 0.0, %v3710
    %v3712 = vpop.f32.mrb[0].mxu0
    %3713 = vdwg.mxu0
    %v3714 = vadd.f32 %v3641, %v3711
    %v3715 = vxor.u32 %v3714, 2147483648
    %v3716 = vmul.f32 %v3715, 1.442695
    %v3717 = vpow.pop %v3716
    %v3718 = vadd.f32 %v3717, 1.0
    %v3719 = vrcp.pop %v3718
    %v3720 = vmul.f32 1.0, %v3719
    %v3721 = vtanh.pop %v3714
    %v3722 = vmul.f32 %v3720, %v3629
    %3724 = vrot.lane.b32.xlu0 %v3721, 64
    %v3725 = vpop.permute.xlu0 %3724
    %v3727 = vmul.f32 %v3720, %v3725
    %3729 = vrot.lane.b32.xlu0 %v3727, 32
    %v3730 = vpop.permute.xlu0 %3729
    %v3732 = vadd.f32 %v3722, %v3730
    %v3733 = vtanh.pop %v3732
    %3735 = vrot.lane.b32.xlu0 %v3733, 64
    %v3736 = vpop.permute.xlu0 %3735
    %v3738 = vmul.f32 %v3720, %v3736
    %3740 = vrot.lane.b32.xlu0 %v3738, 32
    %v3741 = vpop.permute.xlu0 %3740
    %3743 = vst.msk [vmem:[#allocation3 + $0x68] sm:$0xff] %vm416, %v3741
    %v3744 = vld [vmem:[#allocation2 + $0x70] sm:$0xff]
    %v3745 = vsel %vm416, %v3741, 0
    %3747 = vmatprep.subr.mxu0 0.0
    %3748 = vmatpush1.msra.mxu0 %v2300
    %3749 = vmatprep.subr.mxu0 0.0
    %3750 = vmatpush1.msra.mxu0 %v2301
    %3751 = vmatprep.subr.mxu0 0.0
    %3752 = vmatpush1.msra.mxu0 %v2302
    %3753 = vmatprep.subr.mxu0 0.0
    %3754 = vmatpush1.msra.mxu0 %v2303
    %3755 = vmatprep.subr.mxu0 0.0
    %3756 = vmatpush1.msra.mxu0 0.0
    %3757 = vmatprep.subr.mxu0 0.0
    %3758 = vmatpush1.msra.mxu0 0.0
    %3759 = vmatprep.subr.mxu0 0.0
    %3760 = vmatpush1.msra.mxu0 0.0
    %3761 = vmatprep.subr.mxu0 0.0
    %3762 = vmatpush1.msra.mxu0 0.0
    %3763 = vmatprep.subr.mxu0 0.0
    %3764 = vmatpush1.msra.mxu0 0.0
    %3765 = vmatprep.subr.mxu0 0.0
    %3766 = vmatpush1.msra.mxu0 0.0
    %3767 = vmatprep.subr.mxu0 0.0
    %3768 = vmatpush1.msra.mxu0 0.0
    %3769 = vmatprep.subr.mxu0 0.0
    %3770 = vmatpush1.msra.mxu0 0.0
    %3771 = vmatprep.subr.mxu0 0.0
    %3772 = vmatpush1.msra.mxu0 0.0
    %3773 = vmatprep.subr.mxu0 0.0
    %3774 = vmatpush1.msra.mxu0 0.0
    %3775 = vmatprep.subr.mxu0 0.0
    %3776 = vmatpush1.msra.mxu0 0.0
    %3777 = vmatprep.subr.mxu0 0.0
    %3778 = vmatpush1.msra.mxu0 0.0
    %3779 = vmatprep.subr.mxu0 0.0
    %3780 = vmatpush1.msra.mxu0 0.0
    %3781 = vmatprep.subr.mxu0 0.0
    %3782 = vmatpush1.msra.mxu0 0.0
    %3783 = vmatprep.subr.mxu0 0.0
    %3784 = vmatpush1.msra.mxu0 0.0
    %3785 = vmatprep.subr.mxu0 0.0
    %3786 = vmatpush1.msra.mxu0 0.0
    %3787 = vmatprep.subr.mxu0 0.0
    %3788 = vmatpush1.msra.mxu0 0.0
    %3789 = vmatprep.subr.mxu0 0.0
    %3790 = vmatpush1.msra.mxu0 0.0
    %3791 = vmatprep.subr.mxu0 0.0
    %3792 = vmatpush1.msra.mxu0 0.0
    %3793 = vmatprep.subr.mxu0 0.0
    %3794 = vmatpush1.msra.mxu0 0.0
    %3795 = vmatprep.subr.mxu0 0.0
    %3796 = vmatpush1.msra.mxu0 0.0
    %3797 = vmatprep.subr.mxu0 0.0
    %3798 = vmatpush1.msra.mxu0 0.0
    %3799 = vmatprep.subr.mxu0 0.0
    %3800 = vmatpush1.msra.mxu0 0.0
    %3801 = vmatprep.subr.mxu0 0.0
    %3802 = vmatpush1.msra.mxu0 0.0
    %3803 = vmatprep.subr.mxu0 0.0
    %3804 = vmatpush1.msra.mxu0 0.0
    %3805 = vmatprep.subr.mxu0 0.0
    %3806 = vmatpush1.msra.mxu0 0.0
    %3807 = vmatprep.subr.mxu0 0.0
    %3808 = vmatpush1.msra.mxu0 0.0
    %3809 = vmatprep.subr.mxu0 0.0
    %3810 = vmatpush1.msra.mxu0 0.0
    %3811 = vmatprep.mubr.f32.mxu0 0.0
    %3812 = vmatmul.mubr.f32.gmra.mrb[0].mxu0 %v3745
    %v3813 = vpop.f32.mrb[0].mxu0
    %v3814 = vadd.f32 0.0, %v3813
    %v3815 = vpop.f32.mrb[0].mxu0
    %3816 = vdwg.mxu0
    %v3817 = vadd.f32 %v3744, %v3814
    %v3818 = vxor.u32 %v3817, 2147483648
    %v3819 = vmul.f32 %v3818, 1.442695
    %v3820 = vpow.pop %v3819
    %v3821 = vadd.f32 %v3820, 1.0
    %v3822 = vrcp.pop %v3821
    %v3823 = vmul.f32 1.0, %v3822
    %v3824 = vtanh.pop %v3817
    %v3825 = vmul.f32 %v3823, %v3732
    %3827 = vrot.lane.b32.xlu0 %v3824, 64
    %v3828 = vpop.permute.xlu0 %3827
    %v3830 = vmul.f32 %v3823, %v3828
    %3832 = vrot.lane.b32.xlu0 %v3830, 32
    %v3833 = vpop.permute.xlu0 %3832
    %v3835 = vadd.f32 %v3825, %v3833
    %v3836 = vtanh.pop %v3835
    %3838 = vrot.lane.b32.xlu0 %v3836, 64
    %v3839 = vpop.permute.xlu0 %3838
    %v3841 = vmul.f32 %v3823, %v3839
    %3843 = vrot.lane.b32.xlu0 %v3841, 32
    %v3844 = vpop.permute.xlu0 %3843
    %3846 = vst.msk [vmem:[#allocation3 + $0x70] sm:$0xff] %vm416, %v3844
    %v3847 = vld [vmem:[#allocation2 + $0x78] sm:$0xff]
    %v3848 = vsel %vm416, %v3844, 0
    %3850 = vmatprep.subr.mxu0 0.0
    %3851 = vmatpush1.msra.mxu0 %v2300
    %3852 = vmatprep.subr.mxu0 0.0
    %3853 = vmatpush1.msra.mxu0 %v2301
    %3854 = vmatprep.subr.mxu0 0.0
    %3855 = vmatpush1.msra.mxu0 %v2302
    %3856 = vmatprep.subr.mxu0 0.0
    %3857 = vmatpush1.msra.mxu0 %v2303
    %3858 = vmatprep.subr.mxu0 0.0
    %3859 = vmatpush1.msra.mxu0 0.0
    %3860 = vmatprep.subr.mxu0 0.0
    %3861 = vmatpush1.msra.mxu0 0.0
    %3862 = vmatprep.subr.mxu0 0.0
    %3863 = vmatpush1.msra.mxu0 0.0
    %3864 = vmatprep.subr.mxu0 0.0
    %3865 = vmatpush1.msra.mxu0 0.0
    %3866 = vmatprep.subr.mxu0 0.0
    %3867 = vmatpush1.msra.mxu0 0.0
    %3868 = vmatprep.subr.mxu0 0.0
    %3869 = vmatpush1.msra.mxu0 0.0
    %3870 = vmatprep.subr.mxu0 0.0
    %3871 = vmatpush1.msra.mxu0 0.0
    %3872 = vmatprep.subr.mxu0 0.0
    %3873 = vmatpush1.msra.mxu0 0.0
    %3874 = vmatprep.subr.mxu0 0.0
    %3875 = vmatpush1.msra.mxu0 0.0
    %3876 = vmatprep.subr.mxu0 0.0
    %3877 = vmatpush1.msra.mxu0 0.0
    %3878 = vmatprep.subr.mxu0 0.0
    %3879 = vmatpush1.msra.mxu0 0.0
    %3880 = vmatprep.subr.mxu0 0.0
    %3881 = vmatpush1.msra.mxu0 0.0
    %3882 = vmatprep.subr.mxu0 0.0
    %3883 = vmatpush1.msra.mxu0 0.0
    %3884 = vmatprep.subr.mxu0 0.0
    %3885 = vmatpush1.msra.mxu0 0.0
    %3886 = vmatprep.subr.mxu0 0.0
    %3887 = vmatpush1.msra.mxu0 0.0
    %3888 = vmatprep.subr.mxu0 0.0
    %3889 = vmatpush1.msra.mxu0 0.0
    %3890 = vmatprep.subr.mxu0 0.0
    %3891 = vmatpush1.msra.mxu0 0.0
    %3892 = vmatprep.subr.mxu0 0.0
    %3893 = vmatpush1.msra.mxu0 0.0
    %3894 = vmatprep.subr.mxu0 0.0
    %3895 = vmatpush1.msra.mxu0 0.0
    %3896 = vmatprep.subr.mxu0 0.0
    %3897 = vmatpush1.msra.mxu0 0.0
    %3898 = vmatprep.subr.mxu0 0.0
    %3899 = vmatpush1.msra.mxu0 0.0
    %3900 = vmatprep.subr.mxu0 0.0
    %3901 = vmatpush1.msra.mxu0 0.0
    %3902 = vmatprep.subr.mxu0 0.0
    %3903 = vmatpush1.msra.mxu0 0.0
    %3904 = vmatprep.subr.mxu0 0.0
    %3905 = vmatpush1.msra.mxu0 0.0
    %3906 = vmatprep.subr.mxu0 0.0
    %3907 = vmatpush1.msra.mxu0 0.0
    %3908 = vmatprep.subr.mxu0 0.0
    %3909 = vmatpush1.msra.mxu0 0.0
    %3910 = vmatprep.subr.mxu0 0.0
    %3911 = vmatpush1.msra.mxu0 0.0
    %3912 = vmatprep.subr.mxu0 0.0
    %3913 = vmatpush1.msra.mxu0 0.0
    %3914 = vmatprep.mubr.f32.mxu0 0.0
    %3915 = vmatmul.mubr.f32.gmra.mrb[0].mxu0 %v3848
    %v3916 = vpop.f32.mrb[0].mxu0
    %v3917 = vadd.f32 0.0, %v3916
    %v3918 = vpop.f32.mrb[0].mxu0
    %3919 = vdwg.mxu0
    %v3920 = vadd.f32 %v3847, %v3917
    %v3921 = vxor.u32 %v3920, 2147483648
    %v3922 = vmul.f32 %v3921, 1.442695
    %v3923 = vpow.pop %v3922
    %v3924 = vadd.f32 %v3923, 1.0
    %v3925 = vrcp.pop %v3924
    %v3926 = vmul.f32 1.0, %v3925
    %v3927 = vtanh.pop %v3920
    %v3928 = vmul.f32 %v3926, %v3835
    %3930 = vrot.lane.b32.xlu0 %v3927, 64
    %v3931 = vpop.permute.xlu0 %3930
    %v3933 = vmul.f32 %v3926, %v3931
    %3935 = vrot.lane.b32.xlu0 %v3933, 32
    %v3936 = vpop.permute.xlu0 %3935
    %v3938 = vadd.f32 %v3928, %v3936
    %v3939 = vtanh.pop %v3938
    %3941 = vrot.lane.b32.xlu0 %v3939, 64
    %v3942 = vpop.permute.xlu0 %3941
    %v3944 = vmul.f32 %v3926, %v3942
    %3946 = vrot.lane.b32.xlu0 %v3944, 32
    %v3947 = vpop.permute.xlu0 %3946
    %3949 = vst.msk [vmem:[#allocation3 + $0x78] sm:$0xff] %vm416, %v3947
    %v3950 = vld [vmem:[#allocation3] sm:$0xff]
    %v3951 = vld [vmem:[#allocation3 + $0x8] sm:$0xff]
    %v3952 = vld [vmem:[#allocation3 + $0x10] sm:$0xff]
    %v3953 = vld [vmem:[#allocation3 + $0x18] sm:$0xff]
    %v3954 = vld [vmem:[#allocation3 + $0x20] sm:$0xff]
    %v3955 = vld [vmem:[#allocation3 + $0x28] sm:$0xff]
    %v3956 = vld [vmem:[#allocation3 + $0x30] sm:$0xff]
    %v3957 = vld [vmem:[#allocation3 + $0x38] sm:$0xff]
    %v3958 = vld [vmem:[#allocation3 + $0x40] sm:$0xff]
    %v3959 = vld [vmem:[#allocation3 + $0x48] sm:$0xff]
    %v3960 = vld [vmem:[#allocation3 + $0x50] sm:$0xff]
    %v3961 = vld [vmem:[#allocation3 + $0x58] sm:$0xff]
    %v3962 = vld [vmem:[#allocation3 + $0x60] sm:$0xff]
    %v3963 = vld [vmem:[#allocation3 + $0x68] sm:$0xff]
    %v3964 = vld [vmem:[#allocation3 + $0x70] sm:$0xff]
    %v3965 = vld [vmem:[#allocation3 + $0x78] sm:$0xff]
    %s3966 = scalar_lea.vmem [#allocation4], 32
    %v3967 = vld [vmem:[%s3966] sm:$0xff]
    %v3968 = vld [vmem:[%s3966 + $0x8] sm:$0xff]
    %v3969 = vld [vmem:[%s3966 + $0x10] sm:$0xff]
    %v3970 = vld [vmem:[%s3966 + $0x18] sm:$0xff]
    %v3971 = vld [vmem:[#allocation7 + $0x2] sm:$0x1]
    %v3972 = vlaneseq
    %v3973 = vshrl.u32 %v3972, 7
    %v3974 = vsub.s32 0, %v3973
    %v3975 = vrot.slane %v3971, %v3974
    %v3977 = vsel %vm416, %v3950, 0
    %v3980 = vsel %vm416, %v3951, 0
    %v3983 = vsel %vm416, %v3952, 0
    %v3986 = vsel %vm416, %v3953, 0
    %v3989 = vsel %vm416, %v3954, 0
    %v3992 = vsel %vm416, %v3955, 0
    %v3995 = vsel %vm416, %v3956, 0
    %v3998 = vsel %vm416, %v3957, 0
    %v4001 = vsel %vm416, %v3958, 0
    %v4004 = vsel %vm416, %v3959, 0
    %v4007 = vsel %vm416, %v3960, 0
    %v4010 = vsel %vm416, %v3961, 0
    %v4013 = vsel %vm416, %v3962, 0
    %v4016 = vsel %vm416, %v3963, 0
    %v4019 = vsel %vm416, %v3964, 0
    %v4022 = vsel %vm416, %v3965, 0
    %4024 = vmatprep.subr.mxu0 0.0
    %4025 = vmatpush1.msra.mxu0 %v3967
    %4026 = vmatprep.subr.mxu0 0.0
    %4027 = vmatpush1.msra.mxu0 %v3968
    %4028 = vmatprep.subr.mxu0 0.0
    %4029 = vmatpush1.msra.mxu0 %v3969
    %4030 = vmatprep.subr.mxu0 0.0
    %4031 = vmatpush1.msra.mxu0 %v3970
    %4032 = vmatprep.subr.mxu0 0.0
    %4033 = vmatpush1.msra.mxu0 0.0
    %4034 = vmatprep.subr.mxu0 0.0
    %4035 = vmatpush1.msra.mxu0 0.0
    %4036 = vmatprep.subr.mxu0 0.0
    %4037 = vmatpush1.msra.mxu0 0.0
    %4038 = vmatprep.subr.mxu0 0.0
    %4039 = vmatpush1.msra.mxu0 0.0
    %4040 = vmatprep.subr.mxu0 0.0
    %4041 = vmatpush1.msra.mxu0 0.0
    %4042 = vmatprep.subr.mxu0 0.0
    %4043 = vmatpush1.msra.mxu0 0.0
    %4044 = vmatprep.subr.mxu0 0.0
    %4045 = vmatpush1.msra.mxu0 0.0
    %4046 = vmatprep.subr.mxu0 0.0
    %4047 = vmatpush1.msra.mxu0 0.0
    %4048 = vmatprep.subr.mxu0 0.0
    %4049 = vmatpush1.msra.mxu0 0.0
    %4050 = vmatprep.subr.mxu0 0.0
    %4051 = vmatpush1.msra.mxu0 0.0
    %4052 = vmatprep.subr.mxu0 0.0
    %4053 = vmatpush1.msra.mxu0 0.0
    %4054 = vmatprep.subr.mxu0 0.0
    %4055 = vmatpush1.msra.mxu0 0.0
    %4056 = vmatprep.subr.mxu0 0.0
    %4057 = vmatpush1.msra.mxu0 0.0
    %4058 = vmatprep.subr.mxu0 0.0
    %4059 = vmatpush1.msra.mxu0 0.0
    %4060 = vmatprep.subr.mxu0 0.0
    %4061 = vmatpush1.msra.mxu0 0.0
    %4062 = vmatprep.subr.mxu0 0.0
    %4063 = vmatpush1.msra.mxu0 0.0
    %4064 = vmatprep.subr.mxu0 0.0
    %4065 = vmatpush1.msra.mxu0 0.0
    %4066 = vmatprep.subr.mxu0 0.0
    %4067 = vmatpush1.msra.mxu0 0.0
    %4068 = vmatprep.subr.mxu0 0.0
    %4069 = vmatpush1.msra.mxu0 0.0
    %4070 = vmatprep.subr.mxu0 0.0
    %4071 = vmatpush1.msra.mxu0 0.0
    %4072 = vmatprep.subr.mxu0 0.0
    %4073 = vmatpush1.msra.mxu0 0.0
    %4074 = vmatprep.subr.mxu0 0.0
    %4075 = vmatpush1.msra.mxu0 0.0
    %4076 = vmatprep.subr.mxu0 0.0
    %4077 = vmatpush1.msra.mxu0 0.0
    %4078 = vmatprep.subr.mxu0 0.0
    %4079 = vmatpush1.msra.mxu0 0.0
    %4080 = vmatprep.subr.mxu0 0.0
    %4081 = vmatpush1.msra.mxu0 0.0
    %4082 = vmatprep.subr.mxu0 0.0
    %4083 = vmatpush1.msra.mxu0 0.0
    %4084 = vmatprep.subr.mxu0 0.0
    %4085 = vmatpush1.msra.mxu0 0.0
    %4086 = vmatprep.subr.mxu0 0.0
    %4087 = vmatpush1.msra.mxu0 0.0
    %4088 = vmatprep.mubr.f32.mxu0 0.0
    %4089 = vmatmul.mubr.f32.gmra.mrb[0].mxu0 %v3977
    %v4090 = vpop.f32.mrb[0].mxu0
    %v4091 = vadd.f32 %v3975, %v4090
    %v4092 = vpop.f32.mrb[0].mxu0
    %4093 = vmatprep.mubr.f32.mxu0 0.0
    %4094 = vmatmul.mubr.f32.gmra.mrb[0].mxu0 %v3980
    %v4095 = vpop.f32.mrb[0].mxu0
    %v4096 = vadd.f32 %v3975, %v4095
    %v4097 = vpop.f32.mrb[0].mxu0
    %4098 = vmatprep.mubr.f32.mxu0 0.0
    %4099 = vmatmul.mubr.f32.gmra.mrb[0].mxu0 %v3983
    %v4100 = vpop.f32.mrb[0].mxu0
    %v4101 = vadd.f32 %v3975, %v4100
    %v4102 = vpop.f32.mrb[0].mxu0
    %4103 = vmatprep.mubr.f32.mxu0 0.0
    %4104 = vmatmul.mubr.f32.gmra.mrb[0].mxu0 %v3986
    %v4105 = vpop.f32.mrb[0].mxu0
    %v4106 = vadd.f32 %v3975, %v4105
    %v4107 = vpop.f32.mrb[0].mxu0
    %4108 = vmatprep.mubr.f32.mxu0 0.0
    %4109 = vmatmul.mubr.f32.gmra.mrb[0].mxu0 %v3989
    %v4110 = vpop.f32.mrb[0].mxu0
    %v4111 = vadd.f32 %v3975, %v4110
    %v4112 = vpop.f32.mrb[0].mxu0
    %4113 = vmatprep.mubr.f32.mxu0 0.0
    %4114 = vmatmul.mubr.f32.gmra.mrb[0].mxu0 %v3992
    %v4115 = vpop.f32.mrb[0].mxu0
    %v4116 = vadd.f32 %v3975, %v4115
    %v4117 = vpop.f32.mrb[0].mxu0
    %4118 = vmatprep.mubr.f32.mxu0 0.0
    %4119 = vmatmul.mubr.f32.gmra.mrb[0].mxu0 %v3995
    %v4120 = vpop.f32.mrb[0].mxu0
    %v4121 = vadd.f32 %v3975, %v4120
    %v4122 = vpop.f32.mrb[0].mxu0
    %4123 = vmatprep.mubr.f32.mxu0 0.0
    %4124 = vmatmul.mubr.f32.gmra.mrb[0].mxu0 %v3998
    %v4125 = vpop.f32.mrb[0].mxu0
    %v4126 = vadd.f32 %v3975, %v4125
    %v4127 = vpop.f32.mrb[0].mxu0
    %4128 = vmatprep.mubr.f32.mxu0 0.0
    %4129 = vmatmul.mubr.f32.gmra.mrb[0].mxu0 %v4001
    %v4130 = vpop.f32.mrb[0].mxu0
    %v4131 = vadd.f32 %v3975, %v4130
    %v4132 = vpop.f32.mrb[0].mxu0
    %4133 = vmatprep.mubr.f32.mxu0 0.0
    %4134 = vmatmul.mubr.f32.gmra.mrb[0].mxu0 %v4004
    %v4135 = vpop.f32.mrb[0].mxu0
    %v4136 = vadd.f32 %v3975, %v4135
    %v4137 = vpop.f32.mrb[0].mxu0
    %4138 = vmatprep.mubr.f32.mxu0 0.0
    %4139 = vmatmul.mubr.f32.gmra.mrb[0].mxu0 %v4007
    %v4140 = vpop.f32.mrb[0].mxu0
    %v4141 = vadd.f32 %v3975, %v4140
    %v4142 = vpop.f32.mrb[0].mxu0
    %4143 = vmatprep.mubr.f32.mxu0 0.0
    %4144 = vmatmul.mubr.f32.gmra.mrb[0].mxu0 %v4010
    %v4145 = vpop.f32.mrb[0].mxu0
    %v4146 = vadd.f32 %v3975, %v4145
    %v4147 = vpop.f32.mrb[0].mxu0
    %4148 = vmatprep.mubr.f32.mxu0 0.0
    %4149 = vmatmul.mubr.f32.gmra.mrb[0].mxu0 %v4013
    %v4150 = vpop.f32.mrb[0].mxu0
    %v4151 = vadd.f32 %v3975, %v4150
    %v4152 = vpop.f32.mrb[0].mxu0
    %4153 = vmatprep.mubr.f32.mxu0 0.0
    %4154 = vmatmul.mubr.f32.gmra.mrb[0].mxu0 %v4016
    %v4155 = vpop.f32.mrb[0].mxu0
    %v4156 = vadd.f32 %v3975, %v4155
    %v4157 = vpop.f32.mrb[0].mxu0
    %4158 = vmatprep.mubr.f32.mxu0 0.0
    %4159 = vmatmul.mubr.f32.gmra.mrb[0].mxu0 %v4019
    %v4160 = vpop.f32.mrb[0].mxu0
    %v4161 = vadd.f32 %v3975, %v4160
    %v4162 = vpop.f32.mrb[0].mxu0
    %4163 = vmatprep.mubr.f32.mxu0 0.0
    %4164 = vmatmul.mubr.f32.gmra.mrb[0].mxu0 %v4022
    %v4165 = vpop.f32.mrb[0].mxu0
    %v4166 = vadd.f32 %v3975, %v4165
    %v4167 = vpop.f32.mrb[0].mxu0
    %4168 = vdwg.mxu0
    %4169 = vst [vmem:[#allocation2] sm:$0xff] %v4091
    %4170 = vst [vmem:[#allocation2 + $0x8] sm:$0xff] %v4096
    %4171 = vst [vmem:[#allocation2 + $0x10] sm:$0xff] %v4101
    %4172 = vst [vmem:[#allocation2 + $0x18] sm:$0xff] %v4106
    %4173 = vst [vmem:[#allocation2 + $0x20] sm:$0xff] %v4111
    %4174 = vst [vmem:[#allocation2 + $0x28] sm:$0xff] %v4116
    %4175 = vst [vmem:[#allocation2 + $0x30] sm:$0xff] %v4121
    %4176 = vst [vmem:[#allocation2 + $0x38] sm:$0xff] %v4126
    %4177 = vst [vmem:[#allocation2 + $0x40] sm:$0xff] %v4131
    %4178 = vst [vmem:[#allocation2 + $0x48] sm:$0xff] %v4136
    %4179 = vst [vmem:[#allocation2 + $0x50] sm:$0xff] %v4141
    %4180 = vst [vmem:[#allocation2 + $0x58] sm:$0xff] %v4146
    %4181 = vst [vmem:[#allocation2 + $0x60] sm:$0xff] %v4151
    %4182 = vst [vmem:[#allocation2 + $0x68] sm:$0xff] %v4156
    %4183 = vst [vmem:[#allocation2 + $0x70] sm:$0xff] %v4161
    %4184 = vst [vmem:[#allocation2 + $0x78] sm:$0xff] %v4166
    %s4185 = scalar_lea.vmem %s3, 64
    %v4186 = vld [vmem:[%s4185] sm:$0xff]
    %v4187 = vld [vmem:[%s4185 + $0x8] sm:$0xff]
    %v4188 = vld [vmem:[%s4185 + $0x10] sm:$0xff]
    %v4189 = vld [vmem:[%s4185 + $0x18] sm:$0xff]
    %v4190 = vld [vmem:[#allocation2] sm:$0xff]
    %4191 = vmatprep.subr.mxu0 0.0
    %4192 = vmatpush1.msra.mxu0 %v4186
    %4193 = vmatprep.subr.mxu0 0.0
    %4194 = vmatpush1.msra.mxu0 %v4187
    %4195 = vmatprep.subr.mxu0 0.0
    %4196 = vmatpush1.msra.mxu0 %v4188
    %4197 = vmatprep.subr.mxu0 0.0
    %4198 = vmatpush1.msra.mxu0 %v4189
    %4199 = vmatprep.subr.mxu0 0.0
    %4200 = vmatpush1.msra.mxu0 0.0
    %4201 = vmatprep.subr.mxu0 0.0
    %4202 = vmatpush1.msra.mxu0 0.0
    %4203 = vmatprep.subr.mxu0 0.0
    %4204 = vmatpush1.msra.mxu0 0.0
    %4205 = vmatprep.subr.mxu0 0.0
    %4206 = vmatpush1.msra.mxu0 0.0
    %4207 = vmatprep.subr.mxu0 0.0
    %4208 = vmatpush1.msra.mxu0 0.0
    %4209 = vmatprep.subr.mxu0 0.0
    %4210 = vmatpush1.msra.mxu0 0.0
    %4211 = vmatprep.subr.mxu0 0.0
    %4212 = vmatpush1.msra.mxu0 0.0
    %4213 = vmatprep.subr.mxu0 0.0
    %4214 = vmatpush1.msra.mxu0 0.0
    %4215 = vmatprep.subr.mxu0 0.0
    %4216 = vmatpush1.msra.mxu0 0.0
    %4217 = vmatprep.subr.mxu0 0.0
    %4218 = vmatpush1.msra.mxu0 0.0
    %4219 = vmatprep.subr.mxu0 0.0
    %4220 = vmatpush1.msra.mxu0 0.0
    %4221 = vmatprep.subr.mxu0 0.0
    %4222 = vmatpush1.msra.mxu0 0.0
    %4223 = vmatprep.subr.mxu0 0.0
    %4224 = vmatpush1.msra.mxu0 0.0
    %4225 = vmatprep.subr.mxu0 0.0
    %4226 = vmatpush1.msra.mxu0 0.0
    %4227 = vmatprep.subr.mxu0 0.0
    %4228 = vmatpush1.msra.mxu0 0.0
    %4229 = vmatprep.subr.mxu0 0.0
    %4230 = vmatpush1.msra.mxu0 0.0
    %4231 = vmatprep.subr.mxu0 0.0
    %4232 = vmatpush1.msra.mxu0 0.0
    %4233 = vmatprep.subr.mxu0 0.0
    %4234 = vmatpush1.msra.mxu0 0.0
    %4235 = vmatprep.subr.mxu0 0.0
    %4236 = vmatpush1.msra.mxu0 0.0
    %4237 = vmatprep.subr.mxu0 0.0
    %4238 = vmatpush1.msra.mxu0 0.0
    %4239 = vmatprep.subr.mxu0 0.0
    %4240 = vmatpush1.msra.mxu0 0.0
    %4241 = vmatprep.subr.mxu0 0.0
    %4242 = vmatpush1.msra.mxu0 0.0
    %4243 = vmatprep.subr.mxu0 0.0
    %4244 = vmatpush1.msra.mxu0 0.0
    %4245 = vmatprep.subr.mxu0 0.0
    %4246 = vmatpush1.msra.mxu0 0.0
    %4247 = vmatprep.subr.mxu0 0.0
    %4248 = vmatpush1.msra.mxu0 0.0
    %4249 = vmatprep.subr.mxu0 0.0
    %4250 = vmatpush1.msra.mxu0 0.0
    %4251 = vmatprep.subr.mxu0 0.0
    %4252 = vmatpush1.msra.mxu0 0.0
    %4253 = vmatprep.subr.mxu0 0.0
    %4254 = vmatpush1.msra.mxu0 0.0
    %4255 = vmatprep.mubr.f32.mxu0 0.0
    %4256 = vmatmul.mubr.f32.gmra.mrb[0].mxu0 %v418
    %v4257 = vpop.f32.mrb[0].mxu0
    %v4258 = vadd.f32 0.0, %v4257
    %v4259 = vpop.f32.mrb[0].mxu0
    %4260 = vdwg.mxu0
    %v4261 = vadd.f32 %v4190, %v4258
    %v4262 = vxor.u32 %v4261, 2147483648
    %v4263 = vmul.f32 %v4262, 1.442695
    %v4264 = vpow.pop %v4263
    %v4265 = vadd.f32 %v4264, 1.0
    %v4266 = vrcp.pop %v4265
    %v4267 = vmul.f32 1.0, %v4266
    %v4268 = vtanh.pop %v4261
    %v4269 = vmul.f32 %v4267, 0.0
    %4271 = vrot.lane.b32.xlu0 %v4268, 64
    %v4272 = vpop.permute.xlu0 %4271
    %v4274 = vmul.f32 %v4267, %v4272
    %4276 = vrot.lane.b32.xlu0 %v4274, 32
    %v4277 = vpop.permute.xlu0 %4276
    %v4279 = vadd.f32 %v4269, %v4277
    %v4280 = vtanh.pop %v4279
    %4282 = vrot.lane.b32.xlu0 %v4280, 64
    %v4283 = vpop.permute.xlu0 %4282
    %v4285 = vmul.f32 %v4267, %v4283
    %v4286 = vmax.f32 %v4285, 0.0
    %v4287 = vadd.f32 %v4286, 0.0
    %v4288 = vld [vmem:[#allocation2 + $0x8] sm:$0xff]
    %4290 = vrot.lane.b32.xlu0 %v4285, 32
    %v4291 = vpop.permute.xlu0 %4290
    %v4292 = vsel %vm416, %v4291, 0
    %4294 = vmatprep.subr.mxu0 0.0
    %4295 = vmatpush1.msra.mxu0 %v4186
    %4296 = vmatprep.subr.mxu0 0.0
    %4297 = vmatpush1.msra.mxu0 %v4187
    %4298 = vmatprep.subr.mxu0 0.0
    %4299 = vmatpush1.msra.mxu0 %v4188
    %4300 = vmatprep.subr.mxu0 0.0
    %4301 = vmatpush1.msra.mxu0 %v4189
    %4302 = vmatprep.subr.mxu0 0.0
    %4303 = vmatpush1.msra.mxu0 0.0
    %4304 = vmatprep.subr.mxu0 0.0
    %4305 = vmatpush1.msra.mxu0 0.0
    %4306 = vmatprep.subr.mxu0 0.0
    %4307 = vmatpush1.msra.mxu0 0.0
    %4308 = vmatprep.subr.mxu0 0.0
    %4309 = vmatpush1.msra.mxu0 0.0
    %4310 = vmatprep.subr.mxu0 0.0
    %4311 = vmatpush1.msra.mxu0 0.0
    %4312 = vmatprep.subr.mxu0 0.0
    %4313 = vmatpush1.msra.mxu0 0.0
    %4314 = vmatprep.subr.mxu0 0.0
    %4315 = vmatpush1.msra.mxu0 0.0
    %4316 = vmatprep.subr.mxu0 0.0
    %4317 = vmatpush1.msra.mxu0 0.0
    %4318 = vmatprep.subr.mxu0 0.0
    %4319 = vmatpush1.msra.mxu0 0.0
    %4320 = vmatprep.subr.mxu0 0.0
    %4321 = vmatpush1.msra.mxu0 0.0
    %4322 = vmatprep.subr.mxu0 0.0
    %4323 = vmatpush1.msra.mxu0 0.0
    %4324 = vmatprep.subr.mxu0 0.0
    %4325 = vmatpush1.msra.mxu0 0.0
    %4326 = vmatprep.subr.mxu0 0.0
    %4327 = vmatpush1.msra.mxu0 0.0
    %4328 = vmatprep.subr.mxu0 0.0
    %4329 = vmatpush1.msra.mxu0 0.0
    %4330 = vmatprep.subr.mxu0 0.0
    %4331 = vmatpush1.msra.mxu0 0.0
    %4332 = vmatprep.subr.mxu0 0.0
    %4333 = vmatpush1.msra.mxu0 0.0
    %4334 = vmatprep.subr.mxu0 0.0
    %4335 = vmatpush1.msra.mxu0 0.0
    %4336 = vmatprep.subr.mxu0 0.0
    %4337 = vmatpush1.msra.mxu0 0.0
    %4338 = vmatprep.subr.mxu0 0.0
    %4339 = vmatpush1.msra.mxu0 0.0
    %4340 = vmatprep.subr.mxu0 0.0
    %4341 = vmatpush1.msra.mxu0 0.0
    %4342 = vmatprep.subr.mxu0 0.0
    %4343 = vmatpush1.msra.mxu0 0.0
    %4344 = vmatprep.subr.mxu0 0.0
    %4345 = vmatpush1.msra.mxu0 0.0
    %4346 = vmatprep.subr.mxu0 0.0
    %4347 = vmatpush1.msra.mxu0 0.0
    %4348 = vmatprep.subr.mxu0 0.0
    %4349 = vmatpush1.msra.mxu0 0.0
    %4350 = vmatprep.subr.mxu0 0.0
    %4351 = vmatpush1.msra.mxu0 0.0
    %4352 = vmatprep.subr.mxu0 0.0
    %4353 = vmatpush1.msra.mxu0 0.0
    %4354 = vmatprep.subr.mxu0 0.0
    %4355 = vmatpush1.msra.mxu0 0.0
    %4356 = vmatprep.subr.mxu0 0.0
    %4357 = vmatpush1.msra.mxu0 0.0
    %4358 = vmatprep.mubr.f32.mxu0 0.0
    %4359 = vmatmul.mubr.f32.gmra.mrb[0].mxu0 %v4292
    %v4360 = vpop.f32.mrb[0].mxu0
    %v4361 = vadd.f32 0.0, %v4360
    %v4362 = vpop.f32.mrb[0].mxu0
    %4363 = vdwg.mxu0
    %v4364 = vadd.f32 %v4288, %v4361
    %v4365 = vxor.u32 %v4364, 2147483648
    %v4366 = vmul.f32 %v4365, 1.442695
    %v4367 = vpow.pop %v4366
    %v4368 = vadd.f32 %v4367, 1.0
    %v4369 = vrcp.pop %v4368
    %v4370 = vmul.f32 1.0, %v4369
    %v4371 = vtanh.pop %v4364
    %v4372 = vmul.f32 %v4370, %v4279
    %4374 = vrot.lane.b32.xlu0 %v4371, 64
    %v4375 = vpop.permute.xlu0 %4374
    %v4377 = vmul.f32 %v4370, %v4375
    %4379 = vrot.lane.b32.xlu0 %v4377, 32
    %v4380 = vpop.permute.xlu0 %4379
    %v4382 = vadd.f32 %v4372, %v4380
    %v4383 = vtanh.pop %v4382
    %4385 = vrot.lane.b32.xlu0 %v4383, 64
    %v4386 = vpop.permute.xlu0 %4385
    %v4388 = vmul.f32 %v4370, %v4386
    %v4389 = vmax.f32 %v4388, 0.0
    %v4390 = vadd.f32 %v4287, %v4389
    %v4391 = vld [vmem:[#allocation2 + $0x10] sm:$0xff]
    %4393 = vrot.lane.b32.xlu0 %v4388, 32
    %v4394 = vpop.permute.xlu0 %4393
    %v4395 = vsel %vm416, %v4394, 0
    %4397 = vmatprep.subr.mxu0 0.0
    %4398 = vmatpush1.msra.mxu0 %v4186
    %4399 = vmatprep.subr.mxu0 0.0
    %4400 = vmatpush1.msra.mxu0 %v4187
    %4401 = vmatprep.subr.mxu0 0.0
    %4402 = vmatpush1.msra.mxu0 %v4188
    %4403 = vmatprep.subr.mxu0 0.0
    %4404 = vmatpush1.msra.mxu0 %v4189
    %4405 = vmatprep.subr.mxu0 0.0
    %4406 = vmatpush1.msra.mxu0 0.0
    %4407 = vmatprep.subr.mxu0 0.0
    %4408 = vmatpush1.msra.mxu0 0.0
    %4409 = vmatprep.subr.mxu0 0.0
    %4410 = vmatpush1.msra.mxu0 0.0
    %4411 = vmatprep.subr.mxu0 0.0
    %4412 = vmatpush1.msra.mxu0 0.0
    %4413 = vmatprep.subr.mxu0 0.0
    %4414 = vmatpush1.msra.mxu0 0.0
    %4415 = vmatprep.subr.mxu0 0.0
    %4416 = vmatpush1.msra.mxu0 0.0
    %4417 = vmatprep.subr.mxu0 0.0
    %4418 = vmatpush1.msra.mxu0 0.0
    %4419 = vmatprep.subr.mxu0 0.0
    %4420 = vmatpush1.msra.mxu0 0.0
    %4421 = vmatprep.subr.mxu0 0.0
    %4422 = vmatpush1.msra.mxu0 0.0
    %4423 = vmatprep.subr.mxu0 0.0
    %4424 = vmatpush1.msra.mxu0 0.0
    %4425 = vmatprep.subr.mxu0 0.0
    %4426 = vmatpush1.msra.mxu0 0.0
    %4427 = vmatprep.subr.mxu0 0.0
    %4428 = vmatpush1.msra.mxu0 0.0
    %4429 = vmatprep.subr.mxu0 0.0
    %4430 = vmatpush1.msra.mxu0 0.0
    %4431 = vmatprep.subr.mxu0 0.0
    %4432 = vmatpush1.msra.mxu0 0.0
    %4433 = vmatprep.subr.mxu0 0.0
    %4434 = vmatpush1.msra.mxu0 0.0
    %4435 = vmatprep.subr.mxu0 0.0
    %4436 = vmatpush1.msra.mxu0 0.0
    %4437 = vmatprep.subr.mxu0 0.0
    %4438 = vmatpush1.msra.mxu0 0.0
    %4439 = vmatprep.subr.mxu0 0.0
    %4440 = vmatpush1.msra.mxu0 0.0
    %4441 = vmatprep.subr.mxu0 0.0
    %4442 = vmatpush1.msra.mxu0 0.0
    %4443 = vmatprep.subr.mxu0 0.0
    %4444 = vmatpush1.msra.mxu0 0.0
    %4445 = vmatprep.subr.mxu0 0.0
    %4446 = vmatpush1.msra.mxu0 0.0
    %4447 = vmatprep.subr.mxu0 0.0
    %4448 = vmatpush1.msra.mxu0 0.0
    %4449 = vmatprep.subr.mxu0 0.0
    %4450 = vmatpush1.msra.mxu0 0.0
    %4451 = vmatprep.subr.mxu0 0.0
    %4452 = vmatpush1.msra.mxu0 0.0
    %4453 = vmatprep.subr.mxu0 0.0
    %4454 = vmatpush1.msra.mxu0 0.0
    %4455 = vmatprep.subr.mxu0 0.0
    %4456 = vmatpush1.msra.mxu0 0.0
    %4457 = vmatprep.subr.mxu0 0.0
    %4458 = vmatpush1.msra.mxu0 0.0
    %4459 = vmatprep.subr.mxu0 0.0
    %4460 = vmatpush1.msra.mxu0 0.0
    %4461 = vmatprep.mubr.f32.mxu0 0.0
    %4462 = vmatmul.mubr.f32.gmra.mrb[0].mxu0 %v4395
    %v4463 = vpop.f32.mrb[0].mxu0
    %v4464 = vadd.f32 0.0, %v4463
    %v4465 = vpop.f32.mrb[0].mxu0
    %4466 = vdwg.mxu0
    %v4467 = vadd.f32 %v4391, %v4464
    %v4468 = vxor.u32 %v4467, 2147483648
    %v4469 = vmul.f32 %v4468, 1.442695
    %v4470 = vpow.pop %v4469
    %v4471 = vadd.f32 %v4470, 1.0
    %v4472 = vrcp.pop %v4471
    %v4473 = vmul.f32 1.0, %v4472
    %v4474 = vtanh.pop %v4467
    %v4475 = vmul.f32 %v4473, %v4382
    %4477 = vrot.lane.b32.xlu0 %v4474, 64
    %v4478 = vpop.permute.xlu0 %4477
    %v4480 = vmul.f32 %v4473, %v4478
    %4482 = vrot.lane.b32.xlu0 %v4480, 32
    %v4483 = vpop.permute.xlu0 %4482
    %v4485 = vadd.f32 %v4475, %v4483
    %v4486 = vtanh.pop %v4485
    %4488 = vrot.lane.b32.xlu0 %v4486, 64
    %v4489 = vpop.permute.xlu0 %4488
    %v4491 = vmul.f32 %v4473, %v4489
    %v4492 = vmax.f32 %v4491, 0.0
    %v4493 = vadd.f32 %v4390, %v4492
    %v4494 = vld [vmem:[#allocation2 + $0x18] sm:$0xff]
    %4496 = vrot.lane.b32.xlu0 %v4491, 32
    %v4497 = vpop.permute.xlu0 %4496
    %v4498 = vsel %vm416, %v4497, 0
    %4500 = vmatprep.subr.mxu0 0.0
    %4501 = vmatpush1.msra.mxu0 %v4186
    %4502 = vmatprep.subr.mxu0 0.0
    %4503 = vmatpush1.msra.mxu0 %v4187
    %4504 = vmatprep.subr.mxu0 0.0
    %4505 = vmatpush1.msra.mxu0 %v4188
    %4506 = vmatprep.subr.mxu0 0.0
    %4507 = vmatpush1.msra.mxu0 %v4189
    %4508 = vmatprep.subr.mxu0 0.0
    %4509 = vmatpush1.msra.mxu0 0.0
    %4510 = vmatprep.subr.mxu0 0.0
    %4511 = vmatpush1.msra.mxu0 0.0
    %4512 = vmatprep.subr.mxu0 0.0
    %4513 = vmatpush1.msra.mxu0 0.0
    %4514 = vmatprep.subr.mxu0 0.0
    %4515 = vmatpush1.msra.mxu0 0.0
    %4516 = vmatprep.subr.mxu0 0.0
    %4517 = vmatpush1.msra.mxu0 0.0
    %4518 = vmatprep.subr.mxu0 0.0
    %4519 = vmatpush1.msra.mxu0 0.0
    %4520 = vmatprep.subr.mxu0 0.0
    %4521 = vmatpush1.msra.mxu0 0.0
    %4522 = vmatprep.subr.mxu0 0.0
    %4523 = vmatpush1.msra.mxu0 0.0
    %4524 = vmatprep.subr.mxu0 0.0
    %4525 = vmatpush1.msra.mxu0 0.0
    %4526 = vmatprep.subr.mxu0 0.0
    %4527 = vmatpush1.msra.mxu0 0.0
    %4528 = vmatprep.subr.mxu0 0.0
    %4529 = vmatpush1.msra.mxu0 0.0
    %4530 = vmatprep.subr.mxu0 0.0
    %4531 = vmatpush1.msra.mxu0 0.0
    %4532 = vmatprep.subr.mxu0 0.0
    %4533 = vmatpush1.msra.mxu0 0.0
    %4534 = vmatprep.subr.mxu0 0.0
    %4535 = vmatpush1.msra.mxu0 0.0
    %4536 = vmatprep.subr.mxu0 0.0
    %4537 = vmatpush1.msra.mxu0 0.0
    %4538 = vmatprep.subr.mxu0 0.0
    %4539 = vmatpush1.msra.mxu0 0.0
    %4540 = vmatprep.subr.mxu0 0.0
    %4541 = vmatpush1.msra.mxu0 0.0
    %4542 = vmatprep.subr.mxu0 0.0
    %4543 = vmatpush1.msra.mxu0 0.0
    %4544 = vmatprep.subr.mxu0 0.0
    %4545 = vmatpush1.msra.mxu0 0.0
    %4546 = vmatprep.subr.mxu0 0.0
    %4547 = vmatpush1.msra.mxu0 0.0
    %4548 = vmatprep.subr.mxu0 0.0
    %4549 = vmatpush1.msra.mxu0 0.0
    %4550 = vmatprep.subr.mxu0 0.0
    %4551 = vmatpush1.msra.mxu0 0.0
    %4552 = vmatprep.subr.mxu0 0.0
    %4553 = vmatpush1.msra.mxu0 0.0
    %4554 = vmatprep.subr.mxu0 0.0
    %4555 = vmatpush1.msra.mxu0 0.0
    %4556 = vmatprep.subr.mxu0 0.0
    %4557 = vmatpush1.msra.mxu0 0.0
    %4558 = vmatprep.subr.mxu0 0.0
    %4559 = vmatpush1.msra.mxu0 0.0
    %4560 = vmatprep.subr.mxu0 0.0
    %4561 = vmatpush1.msra.mxu0 0.0
    %4562 = vmatprep.subr.mxu0 0.0
    %4563 = vmatpush1.msra.mxu0 0.0
    %4564 = vmatprep.mubr.f32.mxu0 0.0
    %4565 = vmatmul.mubr.f32.gmra.mrb[0].mxu0 %v4498
    %v4566 = vpop.f32.mrb[0].mxu0
    %v4567 = vadd.f32 0.0, %v4566
    %v4568 = vpop.f32.mrb[0].mxu0
    %4569 = vdwg.mxu0
    %v4570 = vadd.f32 %v4494, %v4567
    %v4571 = vxor.u32 %v4570, 2147483648
    %v4572 = vmul.f32 %v4571, 1.442695
    %v4573 = vpow.pop %v4572
    %v4574 = vadd.f32 %v4573, 1.0
    %v4575 = vrcp.pop %v4574
    %v4576 = vmul.f32 1.0, %v4575
    %v4577 = vtanh.pop %v4570
    %v4578 = vmul.f32 %v4576, %v4485
    %4580 = vrot.lane.b32.xlu0 %v4577, 64
    %v4581 = vpop.permute.xlu0 %4580
    %v4583 = vmul.f32 %v4576, %v4581
    %4585 = vrot.lane.b32.xlu0 %v4583, 32
    %v4586 = vpop.permute.xlu0 %4585
    %v4588 = vadd.f32 %v4578, %v4586
    %v4589 = vtanh.pop %v4588
    %4591 = vrot.lane.b32.xlu0 %v4589, 64
    %v4592 = vpop.permute.xlu0 %4591
    %v4594 = vmul.f32 %v4576, %v4592
    %v4595 = vmax.f32 %v4594, 0.0
    %v4596 = vadd.f32 %v4493, %v4595
    %v4597 = vld [vmem:[#allocation2 + $0x20] sm:$0xff]
    %4599 = vrot.lane.b32.xlu0 %v4594, 32
    %v4600 = vpop.permute.xlu0 %4599
    %v4601 = vsel %vm416, %v4600, 0
    %4603 = vmatprep.subr.mxu0 0.0
    %4604 = vmatpush1.msra.mxu0 %v4186
    %4605 = vmatprep.subr.mxu0 0.0
    %4606 = vmatpush1.msra.mxu0 %v4187
    %4607 = vmatprep.subr.mxu0 0.0
    %4608 = vmatpush1.msra.mxu0 %v4188
    %4609 = vmatprep.subr.mxu0 0.0
    %4610 = vmatpush1.msra.mxu0 %v4189
    %4611 = vmatprep.subr.mxu0 0.0
    %4612 = vmatpush1.msra.mxu0 0.0
    %4613 = vmatprep.subr.mxu0 0.0
    %4614 = vmatpush1.msra.mxu0 0.0
    %4615 = vmatprep.subr.mxu0 0.0
    %4616 = vmatpush1.msra.mxu0 0.0
    %4617 = vmatprep.subr.mxu0 0.0
    %4618 = vmatpush1.msra.mxu0 0.0
    %4619 = vmatprep.subr.mxu0 0.0
    %4620 = vmatpush1.msra.mxu0 0.0
    %4621 = vmatprep.subr.mxu0 0.0
    %4622 = vmatpush1.msra.mxu0 0.0
    %4623 = vmatprep.subr.mxu0 0.0
    %4624 = vmatpush1.msra.mxu0 0.0
    %4625 = vmatprep.subr.mxu0 0.0
    %4626 = vmatpush1.msra.mxu0 0.0
    %4627 = vmatprep.subr.mxu0 0.0
    %4628 = vmatpush1.msra.mxu0 0.0
    %4629 = vmatprep.subr.mxu0 0.0
    %4630 = vmatpush1.msra.mxu0 0.0
    %4631 = vmatprep.subr.mxu0 0.0
    %4632 = vmatpush1.msra.mxu0 0.0
    %4633 = vmatprep.subr.mxu0 0.0
    %4634 = vmatpush1.msra.mxu0 0.0
    %4635 = vmatprep.subr.mxu0 0.0
    %4636 = vmatpush1.msra.mxu0 0.0
    %4637 = vmatprep.subr.mxu0 0.0
    %4638 = vmatpush1.msra.mxu0 0.0
    %4639 = vmatprep.subr.mxu0 0.0
    %4640 = vmatpush1.msra.mxu0 0.0
    %4641 = vmatprep.subr.mxu0 0.0
    %4642 = vmatpush1.msra.mxu0 0.0
    %4643 = vmatprep.subr.mxu0 0.0
    %4644 = vmatpush1.msra.mxu0 0.0
    %4645 = vmatprep.subr.mxu0 0.0
    %4646 = vmatpush1.msra.mxu0 0.0
    %4647 = vmatprep.subr.mxu0 0.0
    %4648 = vmatpush1.msra.mxu0 0.0
    %4649 = vmatprep.subr.mxu0 0.0
    %4650 = vmatpush1.msra.mxu0 0.0
    %4651 = vmatprep.subr.mxu0 0.0
    %4652 = vmatpush1.msra.mxu0 0.0
    %4653 = vmatprep.subr.mxu0 0.0
    %4654 = vmatpush1.msra.mxu0 0.0
    %4655 = vmatprep.subr.mxu0 0.0
    %4656 = vmatpush1.msra.mxu0 0.0
    %4657 = vmatprep.subr.mxu0 0.0
    %4658 = vmatpush1.msra.mxu0 0.0
    %4659 = vmatprep.subr.mxu0 0.0
    %4660 = vmatpush1.msra.mxu0 0.0
    %4661 = vmatprep.subr.mxu0 0.0
    %4662 = vmatpush1.msra.mxu0 0.0
    %4663 = vmatprep.subr.mxu0 0.0
    %4664 = vmatpush1.msra.mxu0 0.0
    %4665 = vmatprep.subr.mxu0 0.0
    %4666 = vmatpush1.msra.mxu0 0.0
    %4667 = vmatprep.mubr.f32.mxu0 0.0
    %4668 = vmatmul.mubr.f32.gmra.mrb[0].mxu0 %v4601
    %v4669 = vpop.f32.mrb[0].mxu0
    %v4670 = vadd.f32 0.0, %v4669
    %v4671 = vpop.f32.mrb[0].mxu0
    %4672 = vdwg.mxu0
    %v4673 = vadd.f32 %v4597, %v4670
    %v4674 = vxor.u32 %v4673, 2147483648
    %v4675 = vmul.f32 %v4674, 1.442695
    %v4676 = vpow.pop %v4675
    %v4677 = vadd.f32 %v4676, 1.0
    %v4678 = vrcp.pop %v4677
    %v4679 = vmul.f32 1.0, %v4678
    %v4680 = vtanh.pop %v4673
    %v4681 = vmul.f32 %v4679, %v4588
    %4683 = vrot.lane.b32.xlu0 %v4680, 64
    %v4684 = vpop.permute.xlu0 %4683
    %v4686 = vmul.f32 %v4679, %v4684
    %4688 = vrot.lane.b32.xlu0 %v4686, 32
    %v4689 = vpop.permute.xlu0 %4688
    %v4691 = vadd.f32 %v4681, %v4689
    %v4692 = vtanh.pop %v4691
    %4694 = vrot.lane.b32.xlu0 %v4692, 64
    %v4695 = vpop.permute.xlu0 %4694
    %v4697 = vmul.f32 %v4679, %v4695
    %v4698 = vmax.f32 %v4697, 0.0
    %v4699 = vadd.f32 %v4596, %v4698
    %v4700 = vld [vmem:[#allocation2 + $0x28] sm:$0xff]
    %4702 = vrot.lane.b32.xlu0 %v4697, 32
    %v4703 = vpop.permute.xlu0 %4702
    %v4704 = vsel %vm416, %v4703, 0
    %4706 = vmatprep.subr.mxu0 0.0
    %4707 = vmatpush1.msra.mxu0 %v4186
    %4708 = vmatprep.subr.mxu0 0.0
    %4709 = vmatpush1.msra.mxu0 %v4187
    %4710 = vmatprep.subr.mxu0 0.0
    %4711 = vmatpush1.msra.mxu0 %v4188
    %4712 = vmatprep.subr.mxu0 0.0
    %4713 = vmatpush1.msra.mxu0 %v4189
    %4714 = vmatprep.subr.mxu0 0.0
    %4715 = vmatpush1.msra.mxu0 0.0
    %4716 = vmatprep.subr.mxu0 0.0
    %4717 = vmatpush1.msra.mxu0 0.0
    %4718 = vmatprep.subr.mxu0 0.0
    %4719 = vmatpush1.msra.mxu0 0.0
    %4720 = vmatprep.subr.mxu0 0.0
    %4721 = vmatpush1.msra.mxu0 0.0
    %4722 = vmatprep.subr.mxu0 0.0
    %4723 = vmatpush1.msra.mxu0 0.0
    %4724 = vmatprep.subr.mxu0 0.0
    %4725 = vmatpush1.msra.mxu0 0.0
    %4726 = vmatprep.subr.mxu0 0.0
    %4727 = vmatpush1.msra.mxu0 0.0
    %4728 = vmatprep.subr.mxu0 0.0
    %4729 = vmatpush1.msra.mxu0 0.0
    %4730 = vmatprep.subr.mxu0 0.0
    %4731 = vmatpush1.msra.mxu0 0.0
    %4732 = vmatprep.subr.mxu0 0.0
    %4733 = vmatpush1.msra.mxu0 0.0
    %4734 = vmatprep.subr.mxu0 0.0
    %4735 = vmatpush1.msra.mxu0 0.0
    %4736 = vmatprep.subr.mxu0 0.0
    %4737 = vmatpush1.msra.mxu0 0.0
    %4738 = vmatprep.subr.mxu0 0.0
    %4739 = vmatpush1.msra.mxu0 0.0
    %4740 = vmatprep.subr.mxu0 0.0
    %4741 = vmatpush1.msra.mxu0 0.0
    %4742 = vmatprep.subr.mxu0 0.0
    %4743 = vmatpush1.msra.mxu0 0.0
    %4744 = vmatprep.subr.mxu0 0.0
    %4745 = vmatpush1.msra.mxu0 0.0
    %4746 = vmatprep.subr.mxu0 0.0
    %4747 = vmatpush1.msra.mxu0 0.0
    %4748 = vmatprep.subr.mxu0 0.0
    %4749 = vmatpush1.msra.mxu0 0.0
    %4750 = vmatprep.subr.mxu0 0.0
    %4751 = vmatpush1.msra.mxu0 0.0
    %4752 = vmatprep.subr.mxu0 0.0
    %4753 = vmatpush1.msra.mxu0 0.0
    %4754 = vmatprep.subr.mxu0 0.0
    %4755 = vmatpush1.msra.mxu0 0.0
    %4756 = vmatprep.subr.mxu0 0.0
    %4757 = vmatpush1.msra.mxu0 0.0
    %4758 = vmatprep.subr.mxu0 0.0
    %4759 = vmatpush1.msra.mxu0 0.0
    %4760 = vmatprep.subr.mxu0 0.0
    %4761 = vmatpush1.msra.mxu0 0.0
    %4762 = vmatprep.subr.mxu0 0.0
    %4763 = vmatpush1.msra.mxu0 0.0
    %4764 = vmatprep.subr.mxu0 0.0
    %4765 = vmatpush1.msra.mxu0 0.0
    %4766 = vmatprep.subr.mxu0 0.0
    %4767 = vmatpush1.msra.mxu0 0.0
    %4768 = vmatprep.subr.mxu0 0.0
    %4769 = vmatpush1.msra.mxu0 0.0
    %4770 = vmatprep.mubr.f32.mxu0 0.0
    %4771 = vmatmul.mubr.f32.gmra.mrb[0].mxu0 %v4704
    %v4772 = vpop.f32.mrb[0].mxu0
    %v4773 = vadd.f32 0.0, %v4772
    %v4774 = vpop.f32.mrb[0].mxu0
    %4775 = vdwg.mxu0
    %v4776 = vadd.f32 %v4700, %v4773
    %v4777 = vxor.u32 %v4776, 2147483648
    %v4778 = vmul.f32 %v4777, 1.442695
    %v4779 = vpow.pop %v4778
    %v4780 = vadd.f32 %v4779, 1.0
    %v4781 = vrcp.pop %v4780
    %v4782 = vmul.f32 1.0, %v4781
    %v4783 = vtanh.pop %v4776
    %v4784 = vmul.f32 %v4782, %v4691
    %4786 = vrot.lane.b32.xlu0 %v4783, 64
    %v4787 = vpop.permute.xlu0 %4786
    %v4789 = vmul.f32 %v4782, %v4787
    %4791 = vrot.lane.b32.xlu0 %v4789, 32
    %v4792 = vpop.permute.xlu0 %4791
    %v4794 = vadd.f32 %v4784, %v4792
    %v4795 = vtanh.pop %v4794
    %4797 = vrot.lane.b32.xlu0 %v4795, 64
    %v4798 = vpop.permute.xlu0 %4797
    %v4800 = vmul.f32 %v4782, %v4798
    %v4801 = vmax.f32 %v4800, 0.0
    %v4802 = vadd.f32 %v4699, %v4801
    %v4803 = vld [vmem:[#allocation2 + $0x30] sm:$0xff]
    %4805 = vrot.lane.b32.xlu0 %v4800, 32
    %v4806 = vpop.permute.xlu0 %4805
    %v4807 = vsel %vm416, %v4806, 0
    %4809 = vmatprep.subr.mxu0 0.0
    %4810 = vmatpush1.msra.mxu0 %v4186
    %4811 = vmatprep.subr.mxu0 0.0
    %4812 = vmatpush1.msra.mxu0 %v4187
    %4813 = vmatprep.subr.mxu0 0.0
    %4814 = vmatpush1.msra.mxu0 %v4188
    %4815 = vmatprep.subr.mxu0 0.0
    %4816 = vmatpush1.msra.mxu0 %v4189
    %4817 = vmatprep.subr.mxu0 0.0
    %4818 = vmatpush1.msra.mxu0 0.0
    %4819 = vmatprep.subr.mxu0 0.0
    %4820 = vmatpush1.msra.mxu0 0.0
    %4821 = vmatprep.subr.mxu0 0.0
    %4822 = vmatpush1.msra.mxu0 0.0
    %4823 = vmatprep.subr.mxu0 0.0
    %4824 = vmatpush1.msra.mxu0 0.0
    %4825 = vmatprep.subr.mxu0 0.0
    %4826 = vmatpush1.msra.mxu0 0.0
    %4827 = vmatprep.subr.mxu0 0.0
    %4828 = vmatpush1.msra.mxu0 0.0
    %4829 = vmatprep.subr.mxu0 0.0
    %4830 = vmatpush1.msra.mxu0 0.0
    %4831 = vmatprep.subr.mxu0 0.0
    %4832 = vmatpush1.msra.mxu0 0.0
    %4833 = vmatprep.subr.mxu0 0.0
    %4834 = vmatpush1.msra.mxu0 0.0
    %4835 = vmatprep.subr.mxu0 0.0
    %4836 = vmatpush1.msra.mxu0 0.0
    %4837 = vmatprep.subr.mxu0 0.0
    %4838 = vmatpush1.msra.mxu0 0.0
    %4839 = vmatprep.subr.mxu0 0.0
    %4840 = vmatpush1.msra.mxu0 0.0
    %4841 = vmatprep.subr.mxu0 0.0
    %4842 = vmatpush1.msra.mxu0 0.0
    %4843 = vmatprep.subr.mxu0 0.0
    %4844 = vmatpush1.msra.mxu0 0.0
    %4845 = vmatprep.subr.mxu0 0.0
    %4846 = vmatpush1.msra.mxu0 0.0
    %4847 = vmatprep.subr.mxu0 0.0
    %4848 = vmatpush1.msra.mxu0 0.0
    %4849 = vmatprep.subr.mxu0 0.0
    %4850 = vmatpush1.msra.mxu0 0.0
    %4851 = vmatprep.subr.mxu0 0.0
    %4852 = vmatpush1.msra.mxu0 0.0
    %4853 = vmatprep.subr.mxu0 0.0
    %4854 = vmatpush1.msra.mxu0 0.0
    %4855 = vmatprep.subr.mxu0 0.0
    %4856 = vmatpush1.msra.mxu0 0.0
    %4857 = vmatprep.subr.mxu0 0.0
    %4858 = vmatpush1.msra.mxu0 0.0
    %4859 = vmatprep.subr.mxu0 0.0
    %4860 = vmatpush1.msra.mxu0 0.0
    %4861 = vmatprep.subr.mxu0 0.0
    %4862 = vmatpush1.msra.mxu0 0.0
    %4863 = vmatprep.subr.mxu0 0.0
    %4864 = vmatpush1.msra.mxu0 0.0
    %4865 = vmatprep.subr.mxu0 0.0
    %4866 = vmatpush1.msra.mxu0 0.0
    %4867 = vmatprep.subr.mxu0 0.0
    %4868 = vmatpush1.msra.mxu0 0.0
    %4869 = vmatprep.subr.mxu0 0.0
    %4870 = vmatpush1.msra.mxu0 0.0
    %4871 = vmatprep.subr.mxu0 0.0
    %4872 = vmatpush1.msra.mxu0 0.0
    %4873 = vmatprep.mubr.f32.mxu0 0.0
    %4874 = vmatmul.mubr.f32.gmra.mrb[0].mxu0 %v4807
    %v4875 = vpop.f32.mrb[0].mxu0
    %v4876 = vadd.f32 0.0, %v4875
    %v4877 = vpop.f32.mrb[0].mxu0
    %4878 = vdwg.mxu0
    %v4879 = vadd.f32 %v4803, %v4876
    %v4880 = vxor.u32 %v4879, 2147483648
    %v4881 = vmul.f32 %v4880, 1.442695
    %v4882 = vpow.pop %v4881
    %v4883 = vadd.f32 %v4882, 1.0
    %v4884 = vrcp.pop %v4883
    %v4885 = vmul.f32 1.0, %v4884
    %v4886 = vtanh.pop %v4879
    %v4887 = vmul.f32 %v4885, %v4794
    %4889 = vrot.lane.b32.xlu0 %v4886, 64
    %v4890 = vpop.permute.xlu0 %4889
    %v4892 = vmul.f32 %v4885, %v4890
    %4894 = vrot.lane.b32.xlu0 %v4892, 32
    %v4895 = vpop.permute.xlu0 %4894
    %v4897 = vadd.f32 %v4887, %v4895
    %v4898 = vtanh.pop %v4897
    %4900 = vrot.lane.b32.xlu0 %v4898, 64
    %v4901 = vpop.permute.xlu0 %4900
    %v4903 = vmul.f32 %v4885, %v4901
    %v4904 = vmax.f32 %v4903, 0.0
    %v4905 = vadd.f32 %v4802, %v4904
    %v4906 = vld [vmem:[#allocation2 + $0x38] sm:$0xff]
    %4908 = vrot.lane.b32.xlu0 %v4903, 32
    %v4909 = vpop.permute.xlu0 %4908
    %v4910 = vsel %vm416, %v4909, 0
    %4912 = vmatprep.subr.mxu0 0.0
    %4913 = vmatpush1.msra.mxu0 %v4186
    %4914 = vmatprep.subr.mxu0 0.0
    %4915 = vmatpush1.msra.mxu0 %v4187
    %4916 = vmatprep.subr.mxu0 0.0
    %4917 = vmatpush1.msra.mxu0 %v4188
    %4918 = vmatprep.subr.mxu0 0.0
    %4919 = vmatpush1.msra.mxu0 %v4189
    %4920 = vmatprep.subr.mxu0 0.0
    %4921 = vmatpush1.msra.mxu0 0.0
    %4922 = vmatprep.subr.mxu0 0.0
    %4923 = vmatpush1.msra.mxu0 0.0
    %4924 = vmatprep.subr.mxu0 0.0
    %4925 = vmatpush1.msra.mxu0 0.0
    %4926 = vmatprep.subr.mxu0 0.0
    %4927 = vmatpush1.msra.mxu0 0.0
    %4928 = vmatprep.subr.mxu0 0.0
    %4929 = vmatpush1.msra.mxu0 0.0
    %4930 = vmatprep.subr.mxu0 0.0
    %4931 = vmatpush1.msra.mxu0 0.0
    %4932 = vmatprep.subr.mxu0 0.0
    %4933 = vmatpush1.msra.mxu0 0.0
    %4934 = vmatprep.subr.mxu0 0.0
    %4935 = vmatpush1.msra.mxu0 0.0
    %4936 = vmatprep.subr.mxu0 0.0
    %4937 = vmatpush1.msra.mxu0 0.0
    %4938 = vmatprep.subr.mxu0 0.0
    %4939 = vmatpush1.msra.mxu0 0.0
    %4940 = vmatprep.subr.mxu0 0.0
    %4941 = vmatpush1.msra.mxu0 0.0
    %4942 = vmatprep.subr.mxu0 0.0
    %4943 = vmatpush1.msra.mxu0 0.0
    %4944 = vmatprep.subr.mxu0 0.0
    %4945 = vmatpush1.msra.mxu0 0.0
    %4946 = vmatprep.subr.mxu0 0.0
    %4947 = vmatpush1.msra.mxu0 0.0
    %4948 = vmatprep.subr.mxu0 0.0
    %4949 = vmatpush1.msra.mxu0 0.0
    %4950 = vmatprep.subr.mxu0 0.0
    %4951 = vmatpush1.msra.mxu0 0.0
    %4952 = vmatprep.subr.mxu0 0.0
    %4953 = vmatpush1.msra.mxu0 0.0
    %4954 = vmatprep.subr.mxu0 0.0
    %4955 = vmatpush1.msra.mxu0 0.0
    %4956 = vmatprep.subr.mxu0 0.0
    %4957 = vmatpush1.msra.mxu0 0.0
    %4958 = vmatprep.subr.mxu0 0.0
    %4959 = vmatpush1.msra.mxu0 0.0
    %4960 = vmatprep.subr.mxu0 0.0
    %4961 = vmatpush1.msra.mxu0 0.0
    %4962 = vmatprep.subr.mxu0 0.0
    %4963 = vmatpush1.msra.mxu0 0.0
    %4964 = vmatprep.subr.mxu0 0.0
    %4965 = vmatpush1.msra.mxu0 0.0
    %4966 = vmatprep.subr.mxu0 0.0
    %4967 = vmatpush1.msra.mxu0 0.0
    %4968 = vmatprep.subr.mxu0 0.0
    %4969 = vmatpush1.msra.mxu0 0.0
    %4970 = vmatprep.subr.mxu0 0.0
    %4971 = vmatpush1.msra.mxu0 0.0
    %4972 = vmatprep.subr.mxu0 0.0
    %4973 = vmatpush1.msra.mxu0 0.0
    %4974 = vmatprep.subr.mxu0 0.0
    %4975 = vmatpush1.msra.mxu0 0.0
    %4976 = vmatprep.mubr.f32.mxu0 0.0
    %4977 = vmatmul.mubr.f32.gmra.mrb[0].mxu0 %v4910
    %v4978 = vpop.f32.mrb[0].mxu0
    %v4979 = vadd.f32 0.0, %v4978
    %v4980 = vpop.f32.mrb[0].mxu0
    %4981 = vdwg.mxu0
    %v4982 = vadd.f32 %v4906, %v4979
    %v4983 = vxor.u32 %v4982, 2147483648
    %v4984 = vmul.f32 %v4983, 1.442695
    %v4985 = vpow.pop %v4984
    %v4986 = vadd.f32 %v4985, 1.0
    %v4987 = vrcp.pop %v4986
    %v4988 = vmul.f32 1.0, %v4987
    %v4989 = vtanh.pop %v4982
    %v4990 = vmul.f32 %v4988, %v4897
    %4992 = vrot.lane.b32.xlu0 %v4989, 64
    %v4993 = vpop.permute.xlu0 %4992
    %v4995 = vmul.f32 %v4988, %v4993
    %4997 = vrot.lane.b32.xlu0 %v4995, 32
    %v4998 = vpop.permute.xlu0 %4997
    %v5000 = vadd.f32 %v4990, %v4998
    %v5001 = vtanh.pop %v5000
    %5003 = vrot.lane.b32.xlu0 %v5001, 64
    %v5004 = vpop.permute.xlu0 %5003
    %v5006 = vmul.f32 %v4988, %v5004
    %v5007 = vmax.f32 %v5006, 0.0
    %v5008 = vadd.f32 %v4905, %v5007
    %v5009 = vld [vmem:[#allocation2 + $0x40] sm:$0xff]
    %5011 = vrot.lane.b32.xlu0 %v5006, 32
    %v5012 = vpop.permute.xlu0 %5011
    %v5013 = vsel %vm416, %v5012, 0
    %5015 = vmatprep.subr.mxu0 0.0
    %5016 = vmatpush1.msra.mxu0 %v4186
    %5017 = vmatprep.subr.mxu0 0.0
    %5018 = vmatpush1.msra.mxu0 %v4187
    %5019 = vmatprep.subr.mxu0 0.0
    %5020 = vmatpush1.msra.mxu0 %v4188
    %5021 = vmatprep.subr.mxu0 0.0
    %5022 = vmatpush1.msra.mxu0 %v4189
    %5023 = vmatprep.subr.mxu0 0.0
    %5024 = vmatpush1.msra.mxu0 0.0
    %5025 = vmatprep.subr.mxu0 0.0
    %5026 = vmatpush1.msra.mxu0 0.0
    %5027 = vmatprep.subr.mxu0 0.0
    %5028 = vmatpush1.msra.mxu0 0.0
    %5029 = vmatprep.subr.mxu0 0.0
    %5030 = vmatpush1.msra.mxu0 0.0
    %5031 = vmatprep.subr.mxu0 0.0
    %5032 = vmatpush1.msra.mxu0 0.0
    %5033 = vmatprep.subr.mxu0 0.0
    %5034 = vmatpush1.msra.mxu0 0.0
    %5035 = vmatprep.subr.mxu0 0.0
    %5036 = vmatpush1.msra.mxu0 0.0
    %5037 = vmatprep.subr.mxu0 0.0
    %5038 = vmatpush1.msra.mxu0 0.0
    %5039 = vmatprep.subr.mxu0 0.0
    %5040 = vmatpush1.msra.mxu0 0.0
    %5041 = vmatprep.subr.mxu0 0.0
    %5042 = vmatpush1.msra.mxu0 0.0
    %5043 = vmatprep.subr.mxu0 0.0
    %5044 = vmatpush1.msra.mxu0 0.0
    %5045 = vmatprep.subr.mxu0 0.0
    %5046 = vmatpush1.msra.mxu0 0.0
    %5047 = vmatprep.subr.mxu0 0.0
    %5048 = vmatpush1.msra.mxu0 0.0
    %5049 = vmatprep.subr.mxu0 0.0
    %5050 = vmatpush1.msra.mxu0 0.0
    %5051 = vmatprep.subr.mxu0 0.0
    %5052 = vmatpush1.msra.mxu0 0.0
    %5053 = vmatprep.subr.mxu0 0.0
    %5054 = vmatpush1.msra.mxu0 0.0
    %5055 = vmatprep.subr.mxu0 0.0
    %5056 = vmatpush1.msra.mxu0 0.0
    %5057 = vmatprep.subr.mxu0 0.0
    %5058 = vmatpush1.msra.mxu0 0.0
    %5059 = vmatprep.subr.mxu0 0.0
    %5060 = vmatpush1.msra.mxu0 0.0
    %5061 = vmatprep.subr.mxu0 0.0
    %5062 = vmatpush1.msra.mxu0 0.0
    %5063 = vmatprep.subr.mxu0 0.0
    %5064 = vmatpush1.msra.mxu0 0.0
    %5065 = vmatprep.subr.mxu0 0.0
    %5066 = vmatpush1.msra.mxu0 0.0
    %5067 = vmatprep.subr.mxu0 0.0
    %5068 = vmatpush1.msra.mxu0 0.0
    %5069 = vmatprep.subr.mxu0 0.0
    %5070 = vmatpush1.msra.mxu0 0.0
    %5071 = vmatprep.subr.mxu0 0.0
    %5072 = vmatpush1.msra.mxu0 0.0
    %5073 = vmatprep.subr.mxu0 0.0
    %5074 = vmatpush1.msra.mxu0 0.0
    %5075 = vmatprep.subr.mxu0 0.0
    %5076 = vmatpush1.msra.mxu0 0.0
    %5077 = vmatprep.subr.mxu0 0.0
    %5078 = vmatpush1.msra.mxu0 0.0
    %5079 = vmatprep.mubr.f32.mxu0 0.0
    %5080 = vmatmul.mubr.f32.gmra.mrb[0].mxu0 %v5013
    %v5081 = vpop.f32.mrb[0].mxu0
    %v5082 = vadd.f32 0.0, %v5081
    %v5083 = vpop.f32.mrb[0].mxu0
    %5084 = vdwg.mxu0
    %v5085 = vadd.f32 %v5009, %v5082
    %v5086 = vxor.u32 %v5085, 2147483648
    %v5087 = vmul.f32 %v5086, 1.442695
    %v5088 = vpow.pop %v5087
    %v5089 = vadd.f32 %v5088, 1.0
    %v5090 = vrcp.pop %v5089
    %v5091 = vmul.f32 1.0, %v5090
    %v5092 = vtanh.pop %v5085
    %v5093 = vmul.f32 %v5091, %v5000
    %5095 = vrot.lane.b32.xlu0 %v5092, 64
    %v5096 = vpop.permute.xlu0 %5095
    %v5098 = vmul.f32 %v5091, %v5096
    %5100 = vrot.lane.b32.xlu0 %v5098, 32
    %v5101 = vpop.permute.xlu0 %5100
    %v5103 = vadd.f32 %v5093, %v5101
    %v5104 = vtanh.pop %v5103
    %5106 = vrot.lane.b32.xlu0 %v5104, 64
    %v5107 = vpop.permute.xlu0 %5106
    %v5109 = vmul.f32 %v5091, %v5107
    %v5110 = vmax.f32 %v5109, 0.0
    %v5111 = vadd.f32 %v5008, %v5110
    %v5112 = vld [vmem:[#allocation2 + $0x48] sm:$0xff]
    %5114 = vrot.lane.b32.xlu0 %v5109, 32
    %v5115 = vpop.permute.xlu0 %5114
    %v5116 = vsel %vm416, %v5115, 0
    %5118 = vmatprep.subr.mxu0 0.0
    %5119 = vmatpush1.msra.mxu0 %v4186
    %5120 = vmatprep.subr.mxu0 0.0
    %5121 = vmatpush1.msra.mxu0 %v4187
    %5122 = vmatprep.subr.mxu0 0.0
    %5123 = vmatpush1.msra.mxu0 %v4188
    %5124 = vmatprep.subr.mxu0 0.0
    %5125 = vmatpush1.msra.mxu0 %v4189
    %5126 = vmatprep.subr.mxu0 0.0
    %5127 = vmatpush1.msra.mxu0 0.0
    %5128 = vmatprep.subr.mxu0 0.0
    %5129 = vmatpush1.msra.mxu0 0.0
    %5130 = vmatprep.subr.mxu0 0.0
    %5131 = vmatpush1.msra.mxu0 0.0
    %5132 = vmatprep.subr.mxu0 0.0
    %5133 = vmatpush1.msra.mxu0 0.0
    %5134 = vmatprep.subr.mxu0 0.0
    %5135 = vmatpush1.msra.mxu0 0.0
    %5136 = vmatprep.subr.mxu0 0.0
    %5137 = vmatpush1.msra.mxu0 0.0
    %5138 = vmatprep.subr.mxu0 0.0
    %5139 = vmatpush1.msra.mxu0 0.0
    %5140 = vmatprep.subr.mxu0 0.0
    %5141 = vmatpush1.msra.mxu0 0.0
    %5142 = vmatprep.subr.mxu0 0.0
    %5143 = vmatpush1.msra.mxu0 0.0
    %5144 = vmatprep.subr.mxu0 0.0
    %5145 = vmatpush1.msra.mxu0 0.0
    %5146 = vmatprep.subr.mxu0 0.0
    %5147 = vmatpush1.msra.mxu0 0.0
    %5148 = vmatprep.subr.mxu0 0.0
    %5149 = vmatpush1.msra.mxu0 0.0
    %5150 = vmatprep.subr.mxu0 0.0
    %5151 = vmatpush1.msra.mxu0 0.0
    %5152 = vmatprep.subr.mxu0 0.0
    %5153 = vmatpush1.msra.mxu0 0.0
    %5154 = vmatprep.subr.mxu0 0.0
    %5155 = vmatpush1.msra.mxu0 0.0
    %5156 = vmatprep.subr.mxu0 0.0
    %5157 = vmatpush1.msra.mxu0 0.0
    %5158 = vmatprep.subr.mxu0 0.0
    %5159 = vmatpush1.msra.mxu0 0.0
    %5160 = vmatprep.subr.mxu0 0.0
    %5161 = vmatpush1.msra.mxu0 0.0
    %5162 = vmatprep.subr.mxu0 0.0
    %5163 = vmatpush1.msra.mxu0 0.0
    %5164 = vmatprep.subr.mxu0 0.0
    %5165 = vmatpush1.msra.mxu0 0.0
    %5166 = vmatprep.subr.mxu0 0.0
    %5167 = vmatpush1.msra.mxu0 0.0
    %5168 = vmatprep.subr.mxu0 0.0
    %5169 = vmatpush1.msra.mxu0 0.0
    %5170 = vmatprep.subr.mxu0 0.0
    %5171 = vmatpush1.msra.mxu0 0.0
    %5172 = vmatprep.subr.mxu0 0.0
    %5173 = vmatpush1.msra.mxu0 0.0
    %5174 = vmatprep.subr.mxu0 0.0
    %5175 = vmatpush1.msra.mxu0 0.0
    %5176 = vmatprep.subr.mxu0 0.0
    %5177 = vmatpush1.msra.mxu0 0.0
    %5178 = vmatprep.subr.mxu0 0.0
    %5179 = vmatpush1.msra.mxu0 0.0
    %5180 = vmatprep.subr.mxu0 0.0
    %5181 = vmatpush1.msra.mxu0 0.0
    %5182 = vmatprep.mubr.f32.mxu0 0.0
    %5183 = vmatmul.mubr.f32.gmra.mrb[0].mxu0 %v5116
    %v5184 = vpop.f32.mrb[0].mxu0
    %v5185 = vadd.f32 0.0, %v5184
    %v5186 = vpop.f32.mrb[0].mxu0
    %5187 = vdwg.mxu0
    %v5188 = vadd.f32 %v5112, %v5185
    %v5189 = vxor.u32 %v5188, 2147483648
    %v5190 = vmul.f32 %v5189, 1.442695
    %v5191 = vpow.pop %v5190
    %v5192 = vadd.f32 %v5191, 1.0
    %v5193 = vrcp.pop %v5192
    %v5194 = vmul.f32 1.0, %v5193
    %v5195 = vtanh.pop %v5188
    %v5196 = vmul.f32 %v5194, %v5103
    %5198 = vrot.lane.b32.xlu0 %v5195, 64
    %v5199 = vpop.permute.xlu0 %5198
    %v5201 = vmul.f32 %v5194, %v5199
    %5203 = vrot.lane.b32.xlu0 %v5201, 32
    %v5204 = vpop.permute.xlu0 %5203
    %v5206 = vadd.f32 %v5196, %v5204
    %v5207 = vtanh.pop %v5206
    %5209 = vrot.lane.b32.xlu0 %v5207, 64
    %v5210 = vpop.permute.xlu0 %5209
    %v5212 = vmul.f32 %v5194, %v5210
    %v5213 = vmax.f32 %v5212, 0.0
    %v5214 = vadd.f32 %v5111, %v5213
    %v5215 = vld [vmem:[#allocation2 + $0x50] sm:$0xff]
    %5217 = vrot.lane.b32.xlu0 %v5212, 32
    %v5218 = vpop.permute.xlu0 %5217
    %v5219 = vsel %vm416, %v5218, 0
    %5221 = vmatprep.subr.mxu0 0.0
    %5222 = vmatpush1.msra.mxu0 %v4186
    %5223 = vmatprep.subr.mxu0 0.0
    %5224 = vmatpush1.msra.mxu0 %v4187
    %5225 = vmatprep.subr.mxu0 0.0
    %5226 = vmatpush1.msra.mxu0 %v4188
    %5227 = vmatprep.subr.mxu0 0.0
    %5228 = vmatpush1.msra.mxu0 %v4189
    %5229 = vmatprep.subr.mxu0 0.0
    %5230 = vmatpush1.msra.mxu0 0.0
    %5231 = vmatprep.subr.mxu0 0.0
    %5232 = vmatpush1.msra.mxu0 0.0
    %5233 = vmatprep.subr.mxu0 0.0
    %5234 = vmatpush1.msra.mxu0 0.0
    %5235 = vmatprep.subr.mxu0 0.0
    %5236 = vmatpush1.msra.mxu0 0.0
    %5237 = vmatprep.subr.mxu0 0.0
    %5238 = vmatpush1.msra.mxu0 0.0
    %5239 = vmatprep.subr.mxu0 0.0
    %5240 = vmatpush1.msra.mxu0 0.0
    %5241 = vmatprep.subr.mxu0 0.0
    %5242 = vmatpush1.msra.mxu0 0.0
    %5243 = vmatprep.subr.mxu0 0.0
    %5244 = vmatpush1.msra.mxu0 0.0
    %5245 = vmatprep.subr.mxu0 0.0
    %5246 = vmatpush1.msra.mxu0 0.0
    %5247 = vmatprep.subr.mxu0 0.0
    %5248 = vmatpush1.msra.mxu0 0.0
    %5249 = vmatprep.subr.mxu0 0.0
    %5250 = vmatpush1.msra.mxu0 0.0
    %5251 = vmatprep.subr.mxu0 0.0
    %5252 = vmatpush1.msra.mxu0 0.0
    %5253 = vmatprep.subr.mxu0 0.0
    %5254 = vmatpush1.msra.mxu0 0.0
    %5255 = vmatprep.subr.mxu0 0.0
    %5256 = vmatpush1.msra.mxu0 0.0
    %5257 = vmatprep.subr.mxu0 0.0
    %5258 = vmatpush1.msra.mxu0 0.0
    %5259 = vmatprep.subr.mxu0 0.0
    %5260 = vmatpush1.msra.mxu0 0.0
    %5261 = vmatprep.subr.mxu0 0.0
    %5262 = vmatpush1.msra.mxu0 0.0
    %5263 = vmatprep.subr.mxu0 0.0
    %5264 = vmatpush1.msra.mxu0 0.0
    %5265 = vmatprep.subr.mxu0 0.0
    %5266 = vmatpush1.msra.mxu0 0.0
    %5267 = vmatprep.subr.mxu0 0.0
    %5268 = vmatpush1.msra.mxu0 0.0
    %5269 = vmatprep.subr.mxu0 0.0
    %5270 = vmatpush1.msra.mxu0 0.0
    %5271 = vmatprep.subr.mxu0 0.0
    %5272 = vmatpush1.msra.mxu0 0.0
    %5273 = vmatprep.subr.mxu0 0.0
    %5274 = vmatpush1.msra.mxu0 0.0
    %5275 = vmatprep.subr.mxu0 0.0
    %5276 = vmatpush1.msra.mxu0 0.0
    %5277 = vmatprep.subr.mxu0 0.0
    %5278 = vmatpush1.msra.mxu0 0.0
    %5279 = vmatprep.subr.mxu0 0.0
    %5280 = vmatpush1.msra.mxu0 0.0
    %5281 = vmatprep.subr.mxu0 0.0
    %5282 = vmatpush1.msra.mxu0 0.0
    %5283 = vmatprep.subr.mxu0 0.0
    %5284 = vmatpush1.msra.mxu0 0.0
    %5285 = vmatprep.mubr.f32.mxu0 0.0
    %5286 = vmatmul.mubr.f32.gmra.mrb[0].mxu0 %v5219
    %v5287 = vpop.f32.mrb[0].mxu0
    %v5288 = vadd.f32 0.0, %v5287
    %v5289 = vpop.f32.mrb[0].mxu0
    %5290 = vdwg.mxu0
    %v5291 = vadd.f32 %v5215, %v5288
    %v5292 = vxor.u32 %v5291, 2147483648
    %v5293 = vmul.f32 %v5292, 1.442695
    %v5294 = vpow.pop %v5293
    %v5295 = vadd.f32 %v5294, 1.0
    %v5296 = vrcp.pop %v5295
    %v5297 = vmul.f32 1.0, %v5296
    %v5298 = vtanh.pop %v5291
    %v5299 = vmul.f32 %v5297, %v5206
    %5301 = vrot.lane.b32.xlu0 %v5298, 64
    %v5302 = vpop.permute.xlu0 %5301
    %v5304 = vmul.f32 %v5297, %v5302
    %5306 = vrot.lane.b32.xlu0 %v5304, 32
    %v5307 = vpop.permute.xlu0 %5306
    %v5309 = vadd.f32 %v5299, %v5307
    %v5310 = vtanh.pop %v5309
    %5312 = vrot.lane.b32.xlu0 %v5310, 64
    %v5313 = vpop.permute.xlu0 %5312
    %v5315 = vmul.f32 %v5297, %v5313
    %v5316 = vmax.f32 %v5315, 0.0
    %v5317 = vadd.f32 %v5214, %v5316
    %v5318 = vld [vmem:[#allocation2 + $0x58] sm:$0xff]
    %5320 = vrot.lane.b32.xlu0 %v5315, 32
    %v5321 = vpop.permute.xlu0 %5320
    %v5322 = vsel %vm416, %v5321, 0
    %5324 = vmatprep.subr.mxu0 0.0
    %5325 = vmatpush1.msra.mxu0 %v4186
    %5326 = vmatprep.subr.mxu0 0.0
    %5327 = vmatpush1.msra.mxu0 %v4187
    %5328 = vmatprep.subr.mxu0 0.0
    %5329 = vmatpush1.msra.mxu0 %v4188
    %5330 = vmatprep.subr.mxu0 0.0
    %5331 = vmatpush1.msra.mxu0 %v4189
    %5332 = vmatprep.subr.mxu0 0.0
    %5333 = vmatpush1.msra.mxu0 0.0
    %5334 = vmatprep.subr.mxu0 0.0
    %5335 = vmatpush1.msra.mxu0 0.0
    %5336 = vmatprep.subr.mxu0 0.0
    %5337 = vmatpush1.msra.mxu0 0.0
    %5338 = vmatprep.subr.mxu0 0.0
    %5339 = vmatpush1.msra.mxu0 0.0
    %5340 = vmatprep.subr.mxu0 0.0
    %5341 = vmatpush1.msra.mxu0 0.0
    %5342 = vmatprep.subr.mxu0 0.0
    %5343 = vmatpush1.msra.mxu0 0.0
    %5344 = vmatprep.subr.mxu0 0.0
    %5345 = vmatpush1.msra.mxu0 0.0
    %5346 = vmatprep.subr.mxu0 0.0
    %5347 = vmatpush1.msra.mxu0 0.0
    %5348 = vmatprep.subr.mxu0 0.0
    %5349 = vmatpush1.msra.mxu0 0.0
    %5350 = vmatprep.subr.mxu0 0.0
    %5351 = vmatpush1.msra.mxu0 0.0
    %5352 = vmatprep.subr.mxu0 0.0
    %5353 = vmatpush1.msra.mxu0 0.0
    %5354 = vmatprep.subr.mxu0 0.0
    %5355 = vmatpush1.msra.mxu0 0.0
    %5356 = vmatprep.subr.mxu0 0.0
    %5357 = vmatpush1.msra.mxu0 0.0
    %5358 = vmatprep.subr.mxu0 0.0
    %5359 = vmatpush1.msra.mxu0 0.0
    %5360 = vmatprep.subr.mxu0 0.0
    %5361 = vmatpush1.msra.mxu0 0.0
    %5362 = vmatprep.subr.mxu0 0.0
    %5363 = vmatpush1.msra.mxu0 0.0
    %5364 = vmatprep.subr.mxu0 0.0
    %5365 = vmatpush1.msra.mxu0 0.0
    %5366 = vmatprep.subr.mxu0 0.0
    %5367 = vmatpush1.msra.mxu0 0.0
    %5368 = vmatprep.subr.mxu0 0.0
    %5369 = vmatpush1.msra.mxu0 0.0
    %5370 = vmatprep.subr.mxu0 0.0
    %5371 = vmatpush1.msra.mxu0 0.0
    %5372 = vmatprep.subr.mxu0 0.0
    %5373 = vmatpush1.msra.mxu0 0.0
    %5374 = vmatprep.subr.mxu0 0.0
    %5375 = vmatpush1.msra.mxu0 0.0
    %5376 = vmatprep.subr.mxu0 0.0
    %5377 = vmatpush1.msra.mxu0 0.0
    %5378 = vmatprep.subr.mxu0 0.0
    %5379 = vmatpush1.msra.mxu0 0.0
    %5380 = vmatprep.subr.mxu0 0.0
    %5381 = vmatpush1.msra.mxu0 0.0
    %5382 = vmatprep.subr.mxu0 0.0
    %5383 = vmatpush1.msra.mxu0 0.0
    %5384 = vmatprep.subr.mxu0 0.0
    %5385 = vmatpush1.msra.mxu0 0.0
    %5386 = vmatprep.subr.mxu0 0.0
    %5387 = vmatpush1.msra.mxu0 0.0
    %5388 = vmatprep.mubr.f32.mxu0 0.0
    %5389 = vmatmul.mubr.f32.gmra.mrb[0].mxu0 %v5322
    %v5390 = vpop.f32.mrb[0].mxu0
    %v5391 = vadd.f32 0.0, %v5390
    %v5392 = vpop.f32.mrb[0].mxu0
    %5393 = vdwg.mxu0
    %v5394 = vadd.f32 %v5318, %v5391
    %v5395 = vxor.u32 %v5394, 2147483648
    %v5396 = vmul.f32 %v5395, 1.442695
    %v5397 = vpow.pop %v5396
    %v5398 = vadd.f32 %v5397, 1.0
    %v5399 = vrcp.pop %v5398
    %v5400 = vmul.f32 1.0, %v5399
    %v5401 = vtanh.pop %v5394
    %v5402 = vmul.f32 %v5400, %v5309
    %5404 = vrot.lane.b32.xlu0 %v5401, 64
    %v5405 = vpop.permute.xlu0 %5404
    %v5407 = vmul.f32 %v5400, %v5405
    %5409 = vrot.lane.b32.xlu0 %v5407, 32
    %v5410 = vpop.permute.xlu0 %5409
    %v5412 = vadd.f32 %v5402, %v5410
    %v5413 = vtanh.pop %v5412
    %5415 = vrot.lane.b32.xlu0 %v5413, 64
    %v5416 = vpop.permute.xlu0 %5415
    %v5418 = vmul.f32 %v5400, %v5416
    %v5419 = vmax.f32 %v5418, 0.0
    %v5420 = vadd.f32 %v5317, %v5419
    %v5421 = vld [vmem:[#allocation2 + $0x60] sm:$0xff]
    %5423 = vrot.lane.b32.xlu0 %v5418, 32
    %v5424 = vpop.permute.xlu0 %5423
    %v5425 = vsel %vm416, %v5424, 0
    %5427 = vmatprep.subr.mxu0 0.0
    %5428 = vmatpush1.msra.mxu0 %v4186
    %5429 = vmatprep.subr.mxu0 0.0
    %5430 = vmatpush1.msra.mxu0 %v4187
    %5431 = vmatprep.subr.mxu0 0.0
    %5432 = vmatpush1.msra.mxu0 %v4188
    %5433 = vmatprep.subr.mxu0 0.0
    %5434 = vmatpush1.msra.mxu0 %v4189
    %5435 = vmatprep.subr.mxu0 0.0
    %5436 = vmatpush1.msra.mxu0 0.0
    %5437 = vmatprep.subr.mxu0 0.0
    %5438 = vmatpush1.msra.mxu0 0.0
    %5439 = vmatprep.subr.mxu0 0.0
    %5440 = vmatpush1.msra.mxu0 0.0
    %5441 = vmatprep.subr.mxu0 0.0
    %5442 = vmatpush1.msra.mxu0 0.0
    %5443 = vmatprep.subr.mxu0 0.0
    %5444 = vmatpush1.msra.mxu0 0.0
    %5445 = vmatprep.subr.mxu0 0.0
    %5446 = vmatpush1.msra.mxu0 0.0
    %5447 = vmatprep.subr.mxu0 0.0
    %5448 = vmatpush1.msra.mxu0 0.0
    %5449 = vmatprep.subr.mxu0 0.0
    %5450 = vmatpush1.msra.mxu0 0.0
    %5451 = vmatprep.subr.mxu0 0.0
    %5452 = vmatpush1.msra.mxu0 0.0
    %5453 = vmatprep.subr.mxu0 0.0
    %5454 = vmatpush1.msra.mxu0 0.0
    %5455 = vmatprep.subr.mxu0 0.0
    %5456 = vmatpush1.msra.mxu0 0.0
    %5457 = vmatprep.subr.mxu0 0.0
    %5458 = vmatpush1.msra.mxu0 0.0
    %5459 = vmatprep.subr.mxu0 0.0
    %5460 = vmatpush1.msra.mxu0 0.0
    %5461 = vmatprep.subr.mxu0 0.0
    %5462 = vmatpush1.msra.mxu0 0.0
    %5463 = vmatprep.subr.mxu0 0.0
    %5464 = vmatpush1.msra.mxu0 0.0
    %5465 = vmatprep.subr.mxu0 0.0
    %5466 = vmatpush1.msra.mxu0 0.0
    %5467 = vmatprep.subr.mxu0 0.0
    %5468 = vmatpush1.msra.mxu0 0.0
    %5469 = vmatprep.subr.mxu0 0.0
    %5470 = vmatpush1.msra.mxu0 0.0
    %5471 = vmatprep.subr.mxu0 0.0
    %5472 = vmatpush1.msra.mxu0 0.0
    %5473 = vmatprep.subr.mxu0 0.0
    %5474 = vmatpush1.msra.mxu0 0.0
    %5475 = vmatprep.subr.mxu0 0.0
    %5476 = vmatpush1.msra.mxu0 0.0
    %5477 = vmatprep.subr.mxu0 0.0
    %5478 = vmatpush1.msra.mxu0 0.0
    %5479 = vmatprep.subr.mxu0 0.0
    %5480 = vmatpush1.msra.mxu0 0.0
    %5481 = vmatprep.subr.mxu0 0.0
    %5482 = vmatpush1.msra.mxu0 0.0
    %5483 = vmatprep.subr.mxu0 0.0
    %5484 = vmatpush1.msra.mxu0 0.0
    %5485 = vmatprep.subr.mxu0 0.0
    %5486 = vmatpush1.msra.mxu0 0.0
    %5487 = vmatprep.subr.mxu0 0.0
    %5488 = vmatpush1.msra.mxu0 0.0
    %5489 = vmatprep.subr.mxu0 0.0
    %5490 = vmatpush1.msra.mxu0 0.0
    %5491 = vmatprep.mubr.f32.mxu0 0.0
    %5492 = vmatmul.mubr.f32.gmra.mrb[0].mxu0 %v5425
    %v5493 = vpop.f32.mrb[0].mxu0
    %v5494 = vadd.f32 0.0, %v5493
    %v5495 = vpop.f32.mrb[0].mxu0
    %5496 = vdwg.mxu0
    %v5497 = vadd.f32 %v5421, %v5494
    %v5498 = vxor.u32 %v5497, 2147483648
    %v5499 = vmul.f32 %v5498, 1.442695
    %v5500 = vpow.pop %v5499
    %v5501 = vadd.f32 %v5500, 1.0
    %v5502 = vrcp.pop %v5501
    %v5503 = vmul.f32 1.0, %v5502
    %v5504 = vtanh.pop %v5497
    %v5505 = vmul.f32 %v5503, %v5412
    %5507 = vrot.lane.b32.xlu0 %v5504, 64
    %v5508 = vpop.permute.xlu0 %5507
    %v5510 = vmul.f32 %v5503, %v5508
    %5512 = vrot.lane.b32.xlu0 %v5510, 32
    %v5513 = vpop.permute.xlu0 %5512
    %v5515 = vadd.f32 %v5505, %v5513
    %v5516 = vtanh.pop %v5515
    %5518 = vrot.lane.b32.xlu0 %v5516, 64
    %v5519 = vpop.permute.xlu0 %5518
    %v5521 = vmul.f32 %v5503, %v5519
    %v5522 = vmax.f32 %v5521, 0.0
    %v5523 = vadd.f32 %v5420, %v5522
    %v5524 = vld [vmem:[#allocation2 + $0x68] sm:$0xff]
    %5526 = vrot.lane.b32.xlu0 %v5521, 32
    %v5527 = vpop.permute.xlu0 %5526
    %v5528 = vsel %vm416, %v5527, 0
    %5530 = vmatprep.subr.mxu0 0.0
    %5531 = vmatpush1.msra.mxu0 %v4186
    %5532 = vmatprep.subr.mxu0 0.0
    %5533 = vmatpush1.msra.mxu0 %v4187
    %5534 = vmatprep.subr.mxu0 0.0
    %5535 = vmatpush1.msra.mxu0 %v4188
    %5536 = vmatprep.subr.mxu0 0.0
    %5537 = vmatpush1.msra.mxu0 %v4189
    %5538 = vmatprep.subr.mxu0 0.0
    %5539 = vmatpush1.msra.mxu0 0.0
    %5540 = vmatprep.subr.mxu0 0.0
    %5541 = vmatpush1.msra.mxu0 0.0
    %5542 = vmatprep.subr.mxu0 0.0
    %5543 = vmatpush1.msra.mxu0 0.0
    %5544 = vmatprep.subr.mxu0 0.0
    %5545 = vmatpush1.msra.mxu0 0.0
    %5546 = vmatprep.subr.mxu0 0.0
    %5547 = vmatpush1.msra.mxu0 0.0
    %5548 = vmatprep.subr.mxu0 0.0
    %5549 = vmatpush1.msra.mxu0 0.0
    %5550 = vmatprep.subr.mxu0 0.0
    %5551 = vmatpush1.msra.mxu0 0.0
    %5552 = vmatprep.subr.mxu0 0.0
    %5553 = vmatpush1.msra.mxu0 0.0
    %5554 = vmatprep.subr.mxu0 0.0
    %5555 = vmatpush1.msra.mxu0 0.0
    %5556 = vmatprep.subr.mxu0 0.0
    %5557 = vmatpush1.msra.mxu0 0.0
    %5558 = vmatprep.subr.mxu0 0.0
    %5559 = vmatpush1.msra.mxu0 0.0
    %5560 = vmatprep.subr.mxu0 0.0
    %5561 = vmatpush1.msra.mxu0 0.0
    %5562 = vmatprep.subr.mxu0 0.0
    %5563 = vmatpush1.msra.mxu0 0.0
    %5564 = vmatprep.subr.mxu0 0.0
    %5565 = vmatpush1.msra.mxu0 0.0
    %5566 = vmatprep.subr.mxu0 0.0
    %5567 = vmatpush1.msra.mxu0 0.0
    %5568 = vmatprep.subr.mxu0 0.0
    %5569 = vmatpush1.msra.mxu0 0.0
    %5570 = vmatprep.subr.mxu0 0.0
    %5571 = vmatpush1.msra.mxu0 0.0
    %5572 = vmatprep.subr.mxu0 0.0
    %5573 = vmatpush1.msra.mxu0 0.0
    %5574 = vmatprep.subr.mxu0 0.0
    %5575 = vmatpush1.msra.mxu0 0.0
    %5576 = vmatprep.subr.mxu0 0.0
    %5577 = vmatpush1.msra.mxu0 0.0
    %5578 = vmatprep.subr.mxu0 0.0
    %5579 = vmatpush1.msra.mxu0 0.0
    %5580 = vmatprep.subr.mxu0 0.0
    %5581 = vmatpush1.msra.mxu0 0.0
    %5582 = vmatprep.subr.mxu0 0.0
    %5583 = vmatpush1.msra.mxu0 0.0
    %5584 = vmatprep.subr.mxu0 0.0
    %5585 = vmatpush1.msra.mxu0 0.0
    %5586 = vmatprep.subr.mxu0 0.0
    %5587 = vmatpush1.msra.mxu0 0.0
    %5588 = vmatprep.subr.mxu0 0.0
    %5589 = vmatpush1.msra.mxu0 0.0
    %5590 = vmatprep.subr.mxu0 0.0
    %5591 = vmatpush1.msra.mxu0 0.0
    %5592 = vmatprep.subr.mxu0 0.0
    %5593 = vmatpush1.msra.mxu0 0.0
    %5594 = vmatprep.mubr.f32.mxu0 0.0
    %5595 = vmatmul.mubr.f32.gmra.mrb[0].mxu0 %v5528
    %v5596 = vpop.f32.mrb[0].mxu0
    %v5597 = vadd.f32 0.0, %v5596
    %v5598 = vpop.f32.mrb[0].mxu0
    %5599 = vdwg.mxu0
    %v5600 = vadd.f32 %v5524, %v5597
    %v5601 = vxor.u32 %v5600, 2147483648
    %v5602 = vmul.f32 %v5601, 1.442695
    %v5603 = vpow.pop %v5602
    %v5604 = vadd.f32 %v5603, 1.0
    %v5605 = vrcp.pop %v5604
    %v5606 = vmul.f32 1.0, %v5605
    %v5607 = vtanh.pop %v5600
    %v5608 = vmul.f32 %v5606, %v5515
    %5610 = vrot.lane.b32.xlu0 %v5607, 64
    %v5611 = vpop.permute.xlu0 %5610
    %v5613 = vmul.f32 %v5606, %v5611
    %5615 = vrot.lane.b32.xlu0 %v5613, 32
    %v5616 = vpop.permute.xlu0 %5615
    %v5618 = vadd.f32 %v5608, %v5616
    %v5619 = vtanh.pop %v5618
    %5621 = vrot.lane.b32.xlu0 %v5619, 64
    %v5622 = vpop.permute.xlu0 %5621
    %v5624 = vmul.f32 %v5606, %v5622
    %v5625 = vmax.f32 %v5624, 0.0
    %v5626 = vadd.f32 %v5523, %v5625
    %v5627 = vld [vmem:[#allocation2 + $0x70] sm:$0xff]
    %5629 = vrot.lane.b32.xlu0 %v5624, 32
    %v5630 = vpop.permute.xlu0 %5629
    %v5631 = vsel %vm416, %v5630, 0
    %5633 = vmatprep.subr.mxu0 0.0
    %5634 = vmatpush1.msra.mxu0 %v4186
    %5635 = vmatprep.subr.mxu0 0.0
    %5636 = vmatpush1.msra.mxu0 %v4187
    %5637 = vmatprep.subr.mxu0 0.0
    %5638 = vmatpush1.msra.mxu0 %v4188
    %5639 = vmatprep.subr.mxu0 0.0
    %5640 = vmatpush1.msra.mxu0 %v4189
    %5641 = vmatprep.subr.mxu0 0.0
    %5642 = vmatpush1.msra.mxu0 0.0
    %5643 = vmatprep.subr.mxu0 0.0
    %5644 = vmatpush1.msra.mxu0 0.0
    %5645 = vmatprep.subr.mxu0 0.0
    %5646 = vmatpush1.msra.mxu0 0.0
    %5647 = vmatprep.subr.mxu0 0.0
    %5648 = vmatpush1.msra.mxu0 0.0
    %5649 = vmatprep.subr.mxu0 0.0
    %5650 = vmatpush1.msra.mxu0 0.0
    %5651 = vmatprep.subr.mxu0 0.0
    %5652 = vmatpush1.msra.mxu0 0.0
    %5653 = vmatprep.subr.mxu0 0.0
    %5654 = vmatpush1.msra.mxu0 0.0
    %5655 = vmatprep.subr.mxu0 0.0
    %5656 = vmatpush1.msra.mxu0 0.0
    %5657 = vmatprep.subr.mxu0 0.0
    %5658 = vmatpush1.msra.mxu0 0.0
    %5659 = vmatprep.subr.mxu0 0.0
    %5660 = vmatpush1.msra.mxu0 0.0
    %5661 = vmatprep.subr.mxu0 0.0
    %5662 = vmatpush1.msra.mxu0 0.0
    %5663 = vmatprep.subr.mxu0 0.0
    %5664 = vmatpush1.msra.mxu0 0.0
    %5665 = vmatprep.subr.mxu0 0.0
    %5666 = vmatpush1.msra.mxu0 0.0
    %5667 = vmatprep.subr.mxu0 0.0
    %5668 = vmatpush1.msra.mxu0 0.0
    %5669 = vmatprep.subr.mxu0 0.0
    %5670 = vmatpush1.msra.mxu0 0.0
    %5671 = vmatprep.subr.mxu0 0.0
    %5672 = vmatpush1.msra.mxu0 0.0
    %5673 = vmatprep.subr.mxu0 0.0
    %5674 = vmatpush1.msra.mxu0 0.0
    %5675 = vmatprep.subr.mxu0 0.0
    %5676 = vmatpush1.msra.mxu0 0.0
    %5677 = vmatprep.subr.mxu0 0.0
    %5678 = vmatpush1.msra.mxu0 0.0
    %5679 = vmatprep.subr.mxu0 0.0
    %5680 = vmatpush1.msra.mxu0 0.0
    %5681 = vmatprep.subr.mxu0 0.0
    %5682 = vmatpush1.msra.mxu0 0.0
    %5683 = vmatprep.subr.mxu0 0.0
    %5684 = vmatpush1.msra.mxu0 0.0
    %5685 = vmatprep.subr.mxu0 0.0
    %5686 = vmatpush1.msra.mxu0 0.0
    %5687 = vmatprep.subr.mxu0 0.0
    %5688 = vmatpush1.msra.mxu0 0.0
    %5689 = vmatprep.subr.mxu0 0.0
    %5690 = vmatpush1.msra.mxu0 0.0
    %5691 = vmatprep.subr.mxu0 0.0
    %5692 = vmatpush1.msra.mxu0 0.0
    %5693 = vmatprep.subr.mxu0 0.0
    %5694 = vmatpush1.msra.mxu0 0.0
    %5695 = vmatprep.subr.mxu0 0.0
    %5696 = vmatpush1.msra.mxu0 0.0
    %5697 = vmatprep.mubr.f32.mxu0 0.0
    %5698 = vmatmul.mubr.f32.gmra.mrb[0].mxu0 %v5631
    %v5699 = vpop.f32.mrb[0].mxu0
    %v5700 = vadd.f32 0.0, %v5699
    %v5701 = vpop.f32.mrb[0].mxu0
    %5702 = vdwg.mxu0
    %v5703 = vadd.f32 %v5627, %v5700
    %v5704 = vxor.u32 %v5703, 2147483648
    %v5705 = vmul.f32 %v5704, 1.442695
    %v5706 = vpow.pop %v5705
    %v5707 = vadd.f32 %v5706, 1.0
    %v5708 = vrcp.pop %v5707
    %v5709 = vmul.f32 1.0, %v5708
    %v5710 = vtanh.pop %v5703
    %v5711 = vmul.f32 %v5709, %v5618
    %5713 = vrot.lane.b32.xlu0 %v5710, 64
    %v5714 = vpop.permute.xlu0 %5713
    %v5716 = vmul.f32 %v5709, %v5714
    %5718 = vrot.lane.b32.xlu0 %v5716, 32
    %v5719 = vpop.permute.xlu0 %5718
    %v5721 = vadd.f32 %v5711, %v5719
    %v5722 = vtanh.pop %v5721
    %5724 = vrot.lane.b32.xlu0 %v5722, 64
    %v5725 = vpop.permute.xlu0 %5724
    %v5727 = vmul.f32 %v5709, %v5725
    %v5728 = vmax.f32 %v5727, 0.0
    %v5729 = vadd.f32 %v5626, %v5728
    %v5730 = vld [vmem:[#allocation2 + $0x78] sm:$0xff]
    %5732 = vrot.lane.b32.xlu0 %v5727, 32
    %v5733 = vpop.permute.xlu0 %5732
    %v5734 = vsel %vm416, %v5733, 0
    %5736 = vmatprep.subr.mxu0 0.0
    %5737 = vmatpush1.msra.mxu0 %v4186
    %5738 = vmatprep.subr.mxu0 0.0
    %5739 = vmatpush1.msra.mxu0 %v4187
    %5740 = vmatprep.subr.mxu0 0.0
    %5741 = vmatpush1.msra.mxu0 %v4188
    %5742 = vmatprep.subr.mxu0 0.0
    %5743 = vmatpush1.msra.mxu0 %v4189
    %5744 = vmatprep.subr.mxu0 0.0
    %5745 = vmatpush1.msra.mxu0 0.0
    %5746 = vmatprep.subr.mxu0 0.0
    %5747 = vmatpush1.msra.mxu0 0.0
    %5748 = vmatprep.subr.mxu0 0.0
    %5749 = vmatpush1.msra.mxu0 0.0
    %5750 = vmatprep.subr.mxu0 0.0
    %5751 = vmatpush1.msra.mxu0 0.0
    %5752 = vmatprep.subr.mxu0 0.0
    %5753 = vmatpush1.msra.mxu0 0.0
    %5754 = vmatprep.subr.mxu0 0.0
    %5755 = vmatpush1.msra.mxu0 0.0
    %5756 = vmatprep.subr.mxu0 0.0
    %5757 = vmatpush1.msra.mxu0 0.0
    %5758 = vmatprep.subr.mxu0 0.0
    %5759 = vmatpush1.msra.mxu0 0.0
    %5760 = vmatprep.subr.mxu0 0.0
    %5761 = vmatpush1.msra.mxu0 0.0
    %5762 = vmatprep.subr.mxu0 0.0
    %5763 = vmatpush1.msra.mxu0 0.0
    %5764 = vmatprep.subr.mxu0 0.0
    %5765 = vmatpush1.msra.mxu0 0.0
    %5766 = vmatprep.subr.mxu0 0.0
    %5767 = vmatpush1.msra.mxu0 0.0
    %5768 = vmatprep.subr.mxu0 0.0
    %5769 = vmatpush1.msra.mxu0 0.0
    %5770 = vmatprep.subr.mxu0 0.0
    %5771 = vmatpush1.msra.mxu0 0.0
    %5772 = vmatprep.subr.mxu0 0.0
    %5773 = vmatpush1.msra.mxu0 0.0
    %5774 = vmatprep.subr.mxu0 0.0
    %5775 = vmatpush1.msra.mxu0 0.0
    %5776 = vmatprep.subr.mxu0 0.0
    %5777 = vmatpush1.msra.mxu0 0.0
    %5778 = vmatprep.subr.mxu0 0.0
    %5779 = vmatpush1.msra.mxu0 0.0
    %5780 = vmatprep.subr.mxu0 0.0
    %5781 = vmatpush1.msra.mxu0 0.0
    %5782 = vmatprep.subr.mxu0 0.0
    %5783 = vmatpush1.msra.mxu0 0.0
    %5784 = vmatprep.subr.mxu0 0.0
    %5785 = vmatpush1.msra.mxu0 0.0
    %5786 = vmatprep.subr.mxu0 0.0
    %5787 = vmatpush1.msra.mxu0 0.0
    %5788 = vmatprep.subr.mxu0 0.0
    %5789 = vmatpush1.msra.mxu0 0.0
    %5790 = vmatprep.subr.mxu0 0.0
    %5791 = vmatpush1.msra.mxu0 0.0
    %5792 = vmatprep.subr.mxu0 0.0
    %5793 = vmatpush1.msra.mxu0 0.0
    %5794 = vmatprep.subr.mxu0 0.0
    %5795 = vmatpush1.msra.mxu0 0.0
    %5796 = vmatprep.subr.mxu0 0.0
    %5797 = vmatpush1.msra.mxu0 0.0
    %5798 = vmatprep.subr.mxu0 0.0
    %5799 = vmatpush1.msra.mxu0 0.0
    %5800 = vmatprep.mubr.f32.mxu0 0.0
    %5801 = vmatmul.mubr.f32.gmra.mrb[0].mxu0 %v5734
    %v5802 = vpop.f32.mrb[0].mxu0
    %v5803 = vadd.f32 0.0, %v5802
    %v5804 = vpop.f32.mrb[0].mxu0
    %5805 = vdwg.mxu0
    %v5806 = vadd.f32 %v5730, %v5803
    %v5807 = vxor.u32 %v5806, 2147483648
    %v5808 = vmul.f32 %v5807, 1.442695
    %v5809 = vpow.pop %v5808
    %v5810 = vadd.f32 %v5809, 1.0
    %v5811 = vrcp.pop %v5810
    %v5812 = vmul.f32 1.0, %v5811
    %v5813 = vtanh.pop %v5806
    %v5814 = vmul.f32 %v5812, %v5721
    %5816 = vrot.lane.b32.xlu0 %v5813, 64
    %v5817 = vpop.permute.xlu0 %5816
    %v5819 = vmul.f32 %v5812, %v5817
    %5821 = vrot.lane.b32.xlu0 %v5819, 32
    %v5822 = vpop.permute.xlu0 %5821
    %v5824 = vadd.f32 %v5814, %v5822
    %v5825 = vtanh.pop %v5824
    %5827 = vrot.lane.b32.xlu0 %v5825, 64
    %v5828 = vpop.permute.xlu0 %5827
    %v5830 = vmul.f32 %v5812, %v5828
    %v5831 = vmax.f32 %v5830, 0.0
    %v5832 = vadd.f32 %v5729, %v5831
    %v5833 = vld [vmem:[%s19] sm:$0xff]
    %v5834 = vld [vmem:[%s19 + $0x8] sm:$0xff]
    %v5835 = vld [vmem:[%s19 + $0x10] sm:$0xff]
    %v5836 = vld [vmem:[%s19 + $0x18] sm:$0xff]
    %v5837 = vld [vmem:[#allocation9] sm:$0xff]
    %v5838 = vld [vmem:[%s6] sm:$0xff]
    %v5839 = vld [vmem:[%s6 + $0x8] sm:$0xff]
    %v5840 = vld [vmem:[%s6 + $0x10] sm:$0xff]
    %v5841 = vld [vmem:[%s6 + $0x18] sm:$0xff]
    %v5842 = vld [vmem:[#allocation10] sm:$0x3]
    %v5844 = vlaneseq
    %v5845 = vshrl.u32 %v5844, 7
    %v5846 = vsub.s32 0, %v5845
    %v5847 = vrot.slane %v5842, %v5846
    %v5848 = vlaneseq
    %v5849 = vshrl.u32 %v5848, 7
    %v5850 = vsub.s32 1, %v5849
    %v5851 = vrot.slane %v5842, %v5850
    %vm5854 = vcmask 130048
    %v5856 = vsel %vm5854, %v5837, 0
    %5858 = vmatprep.subr.mxu0 %v5839
    %5859 = vmatpush1.msra.mxu0 %v5838
    %5860 = vmatprep.subr.mxu0 %v5841
    %5861 = vmatpush1.msra.mxu0 %v5840
    %5862 = vmatprep.subr.mxu0 0.0
    %5863 = vmatpush1.msra.mxu0 0.0
    %5864 = vmatprep.subr.mxu0 0.0
    %5865 = vmatpush1.msra.mxu0 0.0
    %5866 = vmatprep.subr.mxu0 0.0
    %5867 = vmatpush1.msra.mxu0 0.0
    %5868 = vmatprep.subr.mxu0 0.0
    %5869 = vmatpush1.msra.mxu0 0.0
    %5870 = vmatprep.subr.mxu0 0.0
    %5871 = vmatpush1.msra.mxu0 0.0
    %5872 = vmatprep.subr.mxu0 0.0
    %5873 = vmatpush1.msra.mxu0 0.0
    %5874 = vmatprep.subr.mxu0 0.0
    %5875 = vmatpush1.msra.mxu0 0.0
    %5876 = vmatprep.subr.mxu0 0.0
    %5877 = vmatpush1.msra.mxu0 0.0
    %5878 = vmatprep.subr.mxu0 0.0
    %5879 = vmatpush1.msra.mxu0 0.0
    %5880 = vmatprep.subr.mxu0 0.0
    %5881 = vmatpush1.msra.mxu0 0.0
    %5882 = vmatprep.subr.mxu0 0.0
    %5883 = vmatpush1.msra.mxu0 0.0
    %5884 = vmatprep.subr.mxu0 0.0
    %5885 = vmatpush1.msra.mxu0 0.0
    %5886 = vmatprep.subr.mxu0 0.0
    %5887 = vmatpush1.msra.mxu0 0.0
    %5888 = vmatprep.subr.mxu0 0.0
    %5889 = vmatpush1.msra.mxu0 0.0
    %5890 = vmatprep.subr.mxu0 0.0
    %5891 = vmatpush1.msra.mxu0 0.0
    %5892 = vmatprep.subr.mxu0 0.0
    %5893 = vmatpush1.msra.mxu0 0.0
    %5894 = vmatprep.subr.mxu0 0.0
    %5895 = vmatpush1.msra.mxu0 0.0
    %5896 = vmatprep.subr.mxu0 0.0
    %5897 = vmatpush1.msra.mxu0 0.0
    %5898 = vmatprep.subr.mxu0 0.0
    %5899 = vmatpush1.msra.mxu0 0.0
    %5900 = vmatprep.subr.mxu0 0.0
    %5901 = vmatpush1.msra.mxu0 0.0
    %5902 = vmatprep.subr.mxu0 0.0
    %5903 = vmatpush1.msra.mxu0 0.0
    %5904 = vmatprep.subr.mxu0 0.0
    %5905 = vmatpush1.msra.mxu0 0.0
    %5906 = vmatprep.subr.mxu0 0.0
    %5907 = vmatpush1.msra.mxu0 0.0
    %5908 = vmatprep.subr.mxu0 0.0
    %5909 = vmatpush1.msra.mxu0 0.0
    %5910 = vmatprep.subr.mxu0 0.0
    %5911 = vmatpush1.msra.mxu0 0.0
    %5912 = vmatprep.subr.mxu0 0.0
    %5913 = vmatpush1.msra.mxu0 0.0
    %5914 = vmatprep.subr.mxu0 0.0
    %5915 = vmatpush1.msra.mxu0 0.0
    %5916 = vmatprep.subr.mxu0 0.0
    %5917 = vmatpush1.msra.mxu0 0.0
    %5918 = vmatprep.subr.mxu0 0.0
    %5919 = vmatpush1.msra.mxu0 0.0
    %5920 = vmatprep.subr.mxu0 0.0
    %5921 = vmatpush1.msra.mxu0 0.0
    %5922 = vmatprep.mubr.f32.mxu0 0.0
    %5923 = vmatmul.mubr.f32.gmra.mrb[0].mxu0 %v5856
    %v5924 = vpop.f32.mrb[0].mxu0
    %v5925 = vadd.f32 %v5847, %v5924
    %v5926 = vpop.f32.mrb[0].mxu0
    %v5927 = vadd.f32 %v5851, %v5926
    %5928 = vdwg.mxu0
    %v5929 = vmax.f32 %v5925, 0.0
    %v5930 = vmax.f32 %v5927, 0.0
    %v5931 = vld [vmem:[#allocation12] sm:$0x3]
    %v5933 = vlaneseq
    %v5934 = vshrl.u32 %v5933, 7
    %v5935 = vsub.s32 0, %v5934
    %v5936 = vrot.slane %v5931, %v5935
    %v5937 = vlaneseq
    %v5938 = vshrl.u32 %v5937, 7
    %v5939 = vsub.s32 1, %v5938
    %v5940 = vrot.slane %v5931, %v5939
    %v5943 = vmul.f32 %v5929, %v5936
    %v5944 = vmul.f32 %v5930, %v5940
    %v5945 = vld [vmem:[#allocation13] sm:$0x3]
    %v5947 = vlaneseq
    %v5948 = vshrl.u32 %v5947, 7
    %v5949 = vsub.s32 0, %v5948
    %v5950 = vrot.slane %v5945, %v5949
    %v5951 = vlaneseq
    %v5952 = vshrl.u32 %v5951, 7
    %v5953 = vsub.s32 1, %v5952
    %v5954 = vrot.slane %v5945, %v5953
    %v5957 = vadd.f32 %v5943, %v5950
    %v5958 = vadd.f32 %v5944, %v5954
    %v5959 = vmax.f32 %v5957, 0.0
    %v5960 = vmax.f32 %v5958, 0.0
    %v5961 = vld [vmem:[#allocation15] sm:$0xff]
    %v5962 = vld [vmem:[#allocation15 + $0x8] sm:$0xff]
    %v5963 = vld [vmem:[#allocation15 + $0x10] sm:$0xff]
    %v5964 = vld [vmem:[#allocation15 + $0x18] sm:$0xff]
    %v5965 = vld [vmem:[#allocation15 + $0x20] sm:$0xff]
    %v5966 = vld [vmem:[#allocation15 + $0x28] sm:$0xff]
    %v5967 = vld [vmem:[#allocation15 + $0x30] sm:$0xff]
    %v5968 = vld [vmem:[#allocation15 + $0x38] sm:$0xff]
    %v5969 = vld [vmem:[#allocation15 + $0x40] sm:$0xff]
    %v5970 = vld [vmem:[#allocation15 + $0x48] sm:$0xff]
    %v5971 = vld [vmem:[#allocation15 + $0x50] sm:$0xff]
    %v5972 = vld [vmem:[#allocation15 + $0x58] sm:$0xff]
    %v5973 = vld [vmem:[#allocation15 + $0x60] sm:$0xff]
    %v5974 = vld [vmem:[#allocation15 + $0x68] sm:$0xff]
    %v5975 = vld [vmem:[#allocation15 + $0x70] sm:$0xff]
    %v5976 = vld [vmem:[#allocation15 + $0x78] sm:$0xff]
    %v5977 = vld [vmem:[#allocation15 + $0x80] sm:$0xff]
    %v5978 = vld [vmem:[#allocation15 + $0x88] sm:$0xff]
    %v5979 = vld [vmem:[#allocation15 + $0x90] sm:$0xff]
    %v5980 = vld [vmem:[#allocation15 + $0x98] sm:$0xff]
    %v5981 = vld [vmem:[#allocation15 + $0xa0] sm:$0xff]
    %v5982 = vld [vmem:[#allocation15 + $0xa8] sm:$0xff]
    %v5983 = vld [vmem:[#allocation15 + $0xb0] sm:$0xff]
    %v5984 = vld [vmem:[#allocation15 + $0xb8] sm:$0xff]
    %v5985 = vld [vmem:[#allocation15 + $0xc0] sm:$0xff]
    %v5986 = vld [vmem:[#allocation15 + $0xc8] sm:$0xff]
    %v5987 = vld [vmem:[#allocation15 + $0xd0] sm:$0xff]
    %v5988 = vld [vmem:[#allocation15 + $0xd8] sm:$0xff]
    %v5989 = vld [vmem:[#allocation15 + $0xe0] sm:$0xff]
    %v5990 = vld [vmem:[#allocation15 + $0xe8] sm:$0xff]
    %v5991 = vld [vmem:[#allocation15 + $0xf0] sm:$0xff]
    %v5992 = vld [vmem:[#allocation15 + $0xf8] sm:$0xff]
    %v5993 = vld [vmem:[#allocation15 + $0x100] sm:$0xff]
    %v5994 = vld [vmem:[#allocation15 + $0x108] sm:$0xff]
    %v5995 = vld [vmem:[#allocation15 + $0x110] sm:$0xff]
    %v5996 = vld [vmem:[#allocation15 + $0x118] sm:$0xff]
    %v5997 = vld [vmem:[#allocation15 + $0x120] sm:$0xff]
    %v5998 = vld [vmem:[#allocation15 + $0x128] sm:$0xff]
    %v5999 = vld [vmem:[#allocation15 + $0x130] sm:$0xff]
    %v6000 = vld [vmem:[#allocation15 + $0x138] sm:$0xff]
    %v6001 = vld [vmem:[#allocation15 + $0x140] sm:$0xff]
    %v6002 = vld [vmem:[#allocation15 + $0x148] sm:$0xff]
    %v6003 = vld [vmem:[#allocation15 + $0x150] sm:$0xff]
    %v6004 = vld [vmem:[#allocation15 + $0x158] sm:$0xff]
    %v6005 = vld [vmem:[#allocation15 + $0x160] sm:$0xff]
    %v6006 = vld [vmem:[#allocation15 + $0x168] sm:$0xff]
    %v6007 = vld [vmem:[#allocation15 + $0x170] sm:$0xff]
    %v6008 = vld [vmem:[#allocation15 + $0x178] sm:$0xff]
    %v6009 = vld [vmem:[#allocation15 + $0x180] sm:$0xff]
    %v6010 = vld [vmem:[#allocation15 + $0x188] sm:$0xff]
    %v6011 = vld [vmem:[#allocation15 + $0x190] sm:$0xff]
    %v6012 = vld [vmem:[#allocation15 + $0x198] sm:$0xff]
    %v6013 = vld [vmem:[#allocation15 + $0x1a0] sm:$0xff]
    %v6014 = vld [vmem:[#allocation15 + $0x1a8] sm:$0xff]
    %v6015 = vld [vmem:[#allocation15 + $0x1b0] sm:$0xff]
    %v6016 = vld [vmem:[#allocation15 + $0x1b8] sm:$0xff]
    %v6017 = vld [vmem:[#allocation15 + $0x1c0] sm:$0xff]
    %v6018 = vld [vmem:[#allocation15 + $0x1c8] sm:$0xff]
    %v6019 = vld [vmem:[#allocation15 + $0x1d0] sm:$0xff]
    %v6020 = vld [vmem:[#allocation15 + $0x1d8] sm:$0xff]
    %v6021 = vld [vmem:[#allocation15 + $0x1e0] sm:$0xff]
    %v6022 = vld [vmem:[#allocation15 + $0x1e8] sm:$0xff]
    %v6023 = vld [vmem:[#allocation15 + $0x1f0] sm:$0xff]
    %v6024 = vld [vmem:[#allocation15 + $0x1f8] sm:$0xff]
    %v6025 = vld [vmem:[#allocation16] sm:$0x3]
    %v6027 = vlaneseq
    %v6028 = vshrl.u32 %v6027, 7
    %v6029 = vsub.s32 0, %v6028
    %v6030 = vrot.slane %v6025, %v6029
    %v6031 = vlaneseq
    %v6032 = vshrl.u32 %v6031, 7
    %v6033 = vsub.s32 1, %v6032
    %v6034 = vrot.slane %v6025, %v6033
    %6037 = vmatprep.subr.mxu0 %v5962
    %6038 = vmatpush1.msra.mxu0 %v5961
    %6039 = vmatprep.subr.mxu0 %v5964
    %6040 = vmatpush1.msra.mxu0 %v5963
    %6041 = vmatprep.subr.mxu0 %v5966
    %6042 = vmatpush1.msra.mxu0 %v5965
    %6043 = vmatprep.subr.mxu0 %v5968
    %6044 = vmatpush1.msra.mxu0 %v5967
    %6045 = vmatprep.subr.mxu0 %v5970
    %6046 = vmatpush1.msra.mxu0 %v5969
    %6047 = vmatprep.subr.mxu0 %v5972
    %6048 = vmatpush1.msra.mxu0 %v5971
    %6049 = vmatprep.subr.mxu0 %v5974
    %6050 = vmatpush1.msra.mxu0 %v5973
    %6051 = vmatprep.subr.mxu0 %v5976
    %6052 = vmatpush1.msra.mxu0 %v5975
    %6053 = vmatprep.subr.mxu0 %v5978
    %6054 = vmatpush1.msra.mxu0 %v5977
    %6055 = vmatprep.subr.mxu0 %v5980
    %6056 = vmatpush1.msra.mxu0 %v5979
    %6057 = vmatprep.subr.mxu0 %v5982
    %6058 = vmatpush1.msra.mxu0 %v5981
    %6059 = vmatprep.subr.mxu0 %v5984
    %6060 = vmatpush1.msra.mxu0 %v5983
    %6061 = vmatprep.subr.mxu0 %v5986
    %6062 = vmatpush1.msra.mxu0 %v5985
    %6063 = vmatprep.subr.mxu0 %v5988
    %6064 = vmatpush1.msra.mxu0 %v5987
    %6065 = vmatprep.subr.mxu0 %v5990
    %6066 = vmatpush1.msra.mxu0 %v5989
    %6067 = vmatprep.subr.mxu0 %v5992
    %6068 = vmatpush1.msra.mxu0 %v5991
    %6069 = vmatprep.subr.mxu0 %v5994
    %6070 = vmatpush1.msra.mxu0 %v5993
    %6071 = vmatprep.subr.mxu0 %v5996
    %6072 = vmatpush1.msra.mxu0 %v5995
    %6073 = vmatprep.subr.mxu0 %v5998
    %6074 = vmatpush1.msra.mxu0 %v5997
    %6075 = vmatprep.subr.mxu0 %v6000
    %6076 = vmatpush1.msra.mxu0 %v5999
    %6077 = vmatprep.subr.mxu0 %v6002
    %6078 = vmatpush1.msra.mxu0 %v6001
    %6079 = vmatprep.subr.mxu0 %v6004
    %6080 = vmatpush1.msra.mxu0 %v6003
    %6081 = vmatprep.subr.mxu0 %v6006
    %6082 = vmatpush1.msra.mxu0 %v6005
    %6083 = vmatprep.subr.mxu0 %v6008
    %6084 = vmatpush1.msra.mxu0 %v6007
    %6085 = vmatprep.subr.mxu0 %v6010
    %6086 = vmatpush1.msra.mxu0 %v6009
    %6087 = vmatprep.subr.mxu0 %v6012
    %6088 = vmatpush1.msra.mxu0 %v6011
    %6089 = vmatprep.subr.mxu0 %v6014
    %6090 = vmatpush1.msra.mxu0 %v6013
    %6091 = vmatprep.subr.mxu0 %v6016
    %6092 = vmatpush1.msra.mxu0 %v6015
    %6093 = vmatprep.subr.mxu0 %v6018
    %6094 = vmatpush1.msra.mxu0 %v6017
    %6095 = vmatprep.subr.mxu0 %v6020
    %6096 = vmatpush1.msra.mxu0 %v6019
    %6097 = vmatprep.subr.mxu0 %v6022
    %6098 = vmatpush1.msra.mxu0 %v6021
    %6099 = vmatprep.subr.mxu0 %v6024
    %6100 = vmatpush1.msra.mxu0 %v6023
    %6101 = vmatprep.mubr.f32.mxu0 %v5960
    %6102 = vmatmul.mubr.f32.gmra.mrb[0].mxu0 %v5959
    %v6103 = vpop.f32.mrb[0].mxu0
    %v6104 = vadd.f32 %v6030, %v6103
    %v6105 = vpop.f32.mrb[0].mxu0
    %v6106 = vadd.f32 %v6034, %v6105
    %6107 = vdwg.mxu0
    %v6108 = vmax.f32 %v6104, 0.0
    %v6109 = vmax.f32 %v6106, 0.0
    %v6110 = vld [vmem:[#allocation25] sm:$0xff]
    %v6111 = vld [vmem:[#allocation25 + $0x8] sm:$0xff]
    %v6112 = vld [vmem:[#allocation25 + $0x10] sm:$0xff]
    %v6113 = vld [vmem:[#allocation25 + $0x18] sm:$0xff]
    %v6114 = vld [vmem:[#allocation25 + $0x20] sm:$0xff]
    %v6115 = vld [vmem:[#allocation25 + $0x28] sm:$0xff]
    %v6116 = vld [vmem:[#allocation25 + $0x30] sm:$0xff]
    %v6117 = vld [vmem:[#allocation25 + $0x38] sm:$0xff]
    %v6118 = vld [vmem:[#allocation25 + $0x40] sm:$0xff]
    %v6119 = vld [vmem:[#allocation25 + $0x48] sm:$0xff]
    %v6120 = vld [vmem:[#allocation25 + $0x50] sm:$0xff]
    %v6121 = vld [vmem:[#allocation25 + $0x58] sm:$0xff]
    %v6122 = vld [vmem:[#allocation25 + $0x60] sm:$0xff]
    %v6123 = vld [vmem:[#allocation25 + $0x68] sm:$0xff]
    %v6124 = vld [vmem:[#allocation25 + $0x70] sm:$0xff]
    %v6125 = vld [vmem:[#allocation25 + $0x78] sm:$0xff]
    %v6126 = vld [vmem:[#allocation25 + $0x80] sm:$0xff]
    %v6127 = vld [vmem:[#allocation25 + $0x88] sm:$0xff]
    %v6128 = vld [vmem:[#allocation25 + $0x90] sm:$0xff]
    %v6129 = vld [vmem:[#allocation25 + $0x98] sm:$0xff]
    %v6130 = vld [vmem:[#allocation25 + $0xa0] sm:$0xff]
    %v6131 = vld [vmem:[#allocation25 + $0xa8] sm:$0xff]
    %v6132 = vld [vmem:[#allocation25 + $0xb0] sm:$0xff]
    %v6133 = vld [vmem:[#allocation25 + $0xb8] sm:$0xff]
    %v6134 = vld [vmem:[#allocation25 + $0xc0] sm:$0xff]
    %v6135 = vld [vmem:[#allocation25 + $0xc8] sm:$0xff]
    %v6136 = vld [vmem:[#allocation25 + $0xd0] sm:$0xff]
    %v6137 = vld [vmem:[#allocation25 + $0xd8] sm:$0xff]
    %v6138 = vld [vmem:[#allocation25 + $0xe0] sm:$0xff]
    %v6139 = vld [vmem:[#allocation25 + $0xe8] sm:$0xff]
    %v6140 = vld [vmem:[#allocation25 + $0xf0] sm:$0xff]
    %v6141 = vld [vmem:[#allocation25 + $0xf8] sm:$0xff]
    %6142 = vmatprep.subr.mxu0 0.0
    %6143 = vmatpush1.msra.mxu0 %v6110
    %6144 = vmatprep.subr.mxu0 0.0
    %6145 = vmatpush1.msra.mxu0 %v6111
    %6146 = vmatprep.subr.mxu0 0.0
    %6147 = vmatpush1.msra.mxu0 %v6112
    %6148 = vmatprep.subr.mxu0 0.0
    %6149 = vmatpush1.msra.mxu0 %v6113
    %6150 = vmatprep.subr.mxu0 0.0
    %6151 = vmatpush1.msra.mxu0 %v6114
    %6152 = vmatprep.subr.mxu0 0.0
    %6153 = vmatpush1.msra.mxu0 %v6115
    %6154 = vmatprep.subr.mxu0 0.0
    %6155 = vmatpush1.msra.mxu0 %v6116
    %6156 = vmatprep.subr.mxu0 0.0
    %6157 = vmatpush1.msra.mxu0 %v6117
    %6158 = vmatprep.subr.mxu0 0.0
    %6159 = vmatpush1.msra.mxu0 %v6118
    %6160 = vmatprep.subr.mxu0 0.0
    %6161 = vmatpush1.msra.mxu0 %v6119
    %6162 = vmatprep.subr.mxu0 0.0
    %6163 = vmatpush1.msra.mxu0 %v6120
    %6164 = vmatprep.subr.mxu0 0.0
    %6165 = vmatpush1.msra.mxu0 %v6121
    %6166 = vmatprep.subr.mxu0 0.0
    %6167 = vmatpush1.msra.mxu0 %v6122
    %6168 = vmatprep.subr.mxu0 0.0
    %6169 = vmatpush1.msra.mxu0 %v6123
    %6170 = vmatprep.subr.mxu0 0.0
    %6171 = vmatpush1.msra.mxu0 %v6124
    %6172 = vmatprep.subr.mxu0 0.0
    %6173 = vmatpush1.msra.mxu0 %v6125
    %6174 = vmatprep.subr.mxu0 0.0
    %6175 = vmatpush1.msra.mxu0 %v6126
    %6176 = vmatprep.subr.mxu0 0.0
    %6177 = vmatpush1.msra.mxu0 %v6127
    %6178 = vmatprep.subr.mxu0 0.0
    %6179 = vmatpush1.msra.mxu0 %v6128
    %6180 = vmatprep.subr.mxu0 0.0
    %6181 = vmatpush1.msra.mxu0 %v6129
    %6182 = vmatprep.subr.mxu0 0.0
    %6183 = vmatpush1.msra.mxu0 %v6130
    %6184 = vmatprep.subr.mxu0 0.0
    %6185 = vmatpush1.msra.mxu0 %v6131
    %6186 = vmatprep.subr.mxu0 0.0
    %6187 = vmatpush1.msra.mxu0 %v6132
    %6188 = vmatprep.subr.mxu0 0.0
    %6189 = vmatpush1.msra.mxu0 %v6133
    %6190 = vmatprep.subr.mxu0 0.0
    %6191 = vmatpush1.msra.mxu0 %v6134
    %6192 = vmatprep.subr.mxu0 0.0
    %6193 = vmatpush1.msra.mxu0 %v6135
    %6194 = vmatprep.subr.mxu0 0.0
    %6195 = vmatpush1.msra.mxu0 %v6136
    %6196 = vmatprep.subr.mxu0 0.0
    %6197 = vmatpush1.msra.mxu0 %v6137
    %6198 = vmatprep.subr.mxu0 0.0
    %6199 = vmatpush1.msra.mxu0 %v6138
    %6200 = vmatprep.subr.mxu0 0.0
    %6201 = vmatpush1.msra.mxu0 %v6139
    %6202 = vmatprep.subr.mxu0 0.0
    %6203 = vmatpush1.msra.mxu0 %v6140
    %6204 = vmatprep.subr.mxu0 0.0
    %6205 = vmatpush1.msra.mxu0 %v6141
    %6206 = vmatprep.mubr.f32.mxu0 %v6109
    %6207 = vmatmul.mubr.f32.gmra.mrb[0].mxu0 %v6108
    %v6208 = vpop.f32.mrb[0].mxu0
    %v6209 = vadd.f32 0.0, %v6208
    %v6210 = vpop.f32.mrb[0].mxu0
    %6211 = vdwg.mxu0
    %6213 = vrot.lane.b32.xlu0 %v5832, 32
    %v6214 = vpop.permute.xlu0 %6213
    %v6215 = vsel %vm416, %v6214, 0
    %6217 = vmatprep.subr.mxu0 0.0
    %6218 = vmatpush1.msra.mxu0 %v5833
    %6219 = vmatprep.subr.mxu0 0.0
    %6220 = vmatpush1.msra.mxu0 %v5834
    %6221 = vmatprep.subr.mxu0 0.0
    %6222 = vmatpush1.msra.mxu0 %v5835
    %6223 = vmatprep.subr.mxu0 0.0
    %6224 = vmatpush1.msra.mxu0 %v5836
    %6225 = vmatprep.subr.mxu0 0.0
    %6226 = vmatpush1.msra.mxu0 0.0
    %6227 = vmatprep.subr.mxu0 0.0
    %6228 = vmatpush1.msra.mxu0 0.0
    %6229 = vmatprep.subr.mxu0 0.0
    %6230 = vmatpush1.msra.mxu0 0.0
    %6231 = vmatprep.subr.mxu0 0.0
    %6232 = vmatpush1.msra.mxu0 0.0
    %6233 = vmatprep.subr.mxu0 0.0
    %6234 = vmatpush1.msra.mxu0 0.0
    %6235 = vmatprep.subr.mxu0 0.0
    %6236 = vmatpush1.msra.mxu0 0.0
    %6237 = vmatprep.subr.mxu0 0.0
    %6238 = vmatpush1.msra.mxu0 0.0
    %6239 = vmatprep.subr.mxu0 0.0
    %6240 = vmatpush1.msra.mxu0 0.0
    %6241 = vmatprep.subr.mxu0 0.0
    %6242 = vmatpush1.msra.mxu0 0.0
    %6243 = vmatprep.subr.mxu0 0.0
    %6244 = vmatpush1.msra.mxu0 0.0
    %6245 = vmatprep.subr.mxu0 0.0
    %6246 = vmatpush1.msra.mxu0 0.0
    %6247 = vmatprep.subr.mxu0 0.0
    %6248 = vmatpush1.msra.mxu0 0.0
    %6249 = vmatprep.subr.mxu0 0.0
    %6250 = vmatpush1.msra.mxu0 0.0
    %6251 = vmatprep.subr.mxu0 0.0
    %6252 = vmatpush1.msra.mxu0 0.0
    %6253 = vmatprep.subr.mxu0 0.0
    %6254 = vmatpush1.msra.mxu0 0.0
    %6255 = vmatprep.subr.mxu0 0.0
    %6256 = vmatpush1.msra.mxu0 0.0
    %6257 = vmatprep.subr.mxu0 0.0
    %6258 = vmatpush1.msra.mxu0 0.0
    %6259 = vmatprep.subr.mxu0 0.0
    %6260 = vmatpush1.msra.mxu0 0.0
    %6261 = vmatprep.subr.mxu0 0.0
    %6262 = vmatpush1.msra.mxu0 0.0
    %6263 = vmatprep.subr.mxu0 0.0
    %6264 = vmatpush1.msra.mxu0 0.0
    %6265 = vmatprep.subr.mxu0 0.0
    %6266 = vmatpush1.msra.mxu0 0.0
    %6267 = vmatprep.subr.mxu0 0.0
    %6268 = vmatpush1.msra.mxu0 0.0
    %6269 = vmatprep.subr.mxu0 0.0
    %6270 = vmatpush1.msra.mxu0 0.0
    %6271 = vmatprep.subr.mxu0 0.0
    %6272 = vmatpush1.msra.mxu0 0.0
    %6273 = vmatprep.subr.mxu0 0.0
    %6274 = vmatpush1.msra.mxu0 0.0
    %6275 = vmatprep.subr.mxu0 0.0
    %6276 = vmatpush1.msra.mxu0 0.0
    %6277 = vmatprep.subr.mxu0 0.0
    %6278 = vmatpush1.msra.mxu0 0.0
    %6279 = vmatprep.subr.mxu0 0.0
    %6280 = vmatpush1.msra.mxu0 0.0
    %6281 = vmatprep.mubr.f32.mxu0 0.0
    %6282 = vmatmul.mubr.f32.gmra.mrb[0].mxu0 %v6215
    %v6283 = vpop.f32.mrb[0].mxu0
    %v6284 = vadd.f32 %v6209, %v6283
    %v6285 = vpop.f32.mrb[0].mxu0
    %6286 = vdwg.mxu0
    %v6287 = vld [vmem:[#allocation18] sm:$0xff]
    %v6288 = vld [vmem:[%s13] sm:$0xff]
    %v6289 = vld [vmem:[%s13 + $0x8] sm:$0xff]
    %v6290 = vld [vmem:[%s13 + $0x10] sm:$0xff]
    %v6291 = vld [vmem:[%s13 + $0x18] sm:$0xff]
    %v6292 = vld [vmem:[#allocation19] sm:$0x3]
    %v6294 = vlaneseq
    %v6295 = vshrl.u32 %v6294, 7
    %v6296 = vsub.s32 0, %v6295
    %v6297 = vrot.slane %v6292, %v6296
    %v6298 = vlaneseq
    %v6299 = vshrl.u32 %v6298, 7
    %v6300 = vsub.s32 1, %v6299
    %v6301 = vrot.slane %v6292, %v6300
    %v6305 = vsel %vm5854, %v6287, 0
    %6307 = vmatprep.subr.mxu0 %v6289
    %6308 = vmatpush1.msra.mxu0 %v6288
    %6309 = vmatprep.subr.mxu0 %v6291
    %6310 = vmatpush1.msra.mxu0 %v6290
    %6311 = vmatprep.subr.mxu0 0.0
    %6312 = vmatpush1.msra.mxu0 0.0
    %6313 = vmatprep.subr.mxu0 0.0
    %6314 = vmatpush1.msra.mxu0 0.0
    %6315 = vmatprep.subr.mxu0 0.0
    %6316 = vmatpush1.msra.mxu0 0.0
    %6317 = vmatprep.subr.mxu0 0.0
    %6318 = vmatpush1.msra.mxu0 0.0
    %6319 = vmatprep.subr.mxu0 0.0
    %6320 = vmatpush1.msra.mxu0 0.0
    %6321 = vmatprep.subr.mxu0 0.0
    %6322 = vmatpush1.msra.mxu0 0.0
    %6323 = vmatprep.subr.mxu0 0.0
    %6324 = vmatpush1.msra.mxu0 0.0
    %6325 = vmatprep.subr.mxu0 0.0
    %6326 = vmatpush1.msra.mxu0 0.0
    %6327 = vmatprep.subr.mxu0 0.0
    %6328 = vmatpush1.msra.mxu0 0.0
    %6329 = vmatprep.subr.mxu0 0.0
    %6330 = vmatpush1.msra.mxu0 0.0
    %6331 = vmatprep.subr.mxu0 0.0
    %6332 = vmatpush1.msra.mxu0 0.0
    %6333 = vmatprep.subr.mxu0 0.0
    %6334 = vmatpush1.msra.mxu0 0.0
    %6335 = vmatprep.subr.mxu0 0.0
    %6336 = vmatpush1.msra.mxu0 0.0
    %6337 = vmatprep.subr.mxu0 0.0
    %6338 = vmatpush1.msra.mxu0 0.0
    %6339 = vmatprep.subr.mxu0 0.0
    %6340 = vmatpush1.msra.mxu0 0.0
    %6341 = vmatprep.subr.mxu0 0.0
    %6342 = vmatpush1.msra.mxu0 0.0
    %6343 = vmatprep.subr.mxu0 0.0
    %6344 = vmatpush1.msra.mxu0 0.0
    %6345 = vmatprep.subr.mxu0 0.0
    %6346 = vmatpush1.msra.mxu0 0.0
    %6347 = vmatprep.subr.mxu0 0.0
    %6348 = vmatpush1.msra.mxu0 0.0
    %6349 = vmatprep.subr.mxu0 0.0
    %6350 = vmatpush1.msra.mxu0 0.0
    %6351 = vmatprep.subr.mxu0 0.0
    %6352 = vmatpush1.msra.mxu0 0.0
    %6353 = vmatprep.subr.mxu0 0.0
    %6354 = vmatpush1.msra.mxu0 0.0
    %6355 = vmatprep.subr.mxu0 0.0
    %6356 = vmatpush1.msra.mxu0 0.0
    %6357 = vmatprep.subr.mxu0 0.0
    %6358 = vmatpush1.msra.mxu0 0.0
    %6359 = vmatprep.subr.mxu0 0.0
    %6360 = vmatpush1.msra.mxu0 0.0
    %6361 = vmatprep.subr.mxu0 0.0
    %6362 = vmatpush1.msra.mxu0 0.0
    %6363 = vmatprep.subr.mxu0 0.0
    %6364 = vmatpush1.msra.mxu0 0.0
    %6365 = vmatprep.subr.mxu0 0.0
    %6366 = vmatpush1.msra.mxu0 0.0
    %6367 = vmatprep.subr.mxu0 0.0
    %6368 = vmatpush1.msra.mxu0 0.0
    %6369 = vmatprep.subr.mxu0 0.0
    %6370 = vmatpush1.msra.mxu0 0.0
    %6371 = vmatprep.mubr.f32.mxu0 0.0
    %6372 = vmatmul.mubr.f32.gmra.mrb[0].mxu0 %v6305
    %v6373 = vpop.f32.mrb[0].mxu0
    %v6374 = vadd.f32 %v6297, %v6373
    %v6375 = vpop.f32.mrb[0].mxu0
    %v6376 = vadd.f32 %v6301, %v6375
    %6377 = vdwg.mxu0
    %v6378 = vmax.f32 %v6374, 0.0
    %v6379 = vmax.f32 %v6376, 0.0
    %v6380 = vld [vmem:[#allocation21] sm:$0x3]
    %v6382 = vlaneseq
    %v6383 = vshrl.u32 %v6382, 7
    %v6384 = vsub.s32 0, %v6383
    %v6385 = vrot.slane %v6380, %v6384
    %v6386 = vlaneseq
    %v6387 = vshrl.u32 %v6386, 7
    %v6388 = vsub.s32 1, %v6387
    %v6389 = vrot.slane %v6380, %v6388
    %v6392 = vmul.f32 %v6378, %v6385
    %v6393 = vmul.f32 %v6379, %v6389
    %v6394 = vld [vmem:[#allocation22] sm:$0x3]
    %v6396 = vlaneseq
    %v6397 = vshrl.u32 %v6396, 7
    %v6398 = vsub.s32 0, %v6397
    %v6399 = vrot.slane %v6394, %v6398
    %v6400 = vlaneseq
    %v6401 = vshrl.u32 %v6400, 7
    %v6402 = vsub.s32 1, %v6401
    %v6403 = vrot.slane %v6394, %v6402
    %v6406 = vadd.f32 %v6392, %v6399
    %v6407 = vadd.f32 %v6393, %v6403
    %v6408 = vmax.f32 %v6406, 0.0
    %v6409 = vmax.f32 %v6407, 0.0
    %v6410 = vld [vmem:[#allocation24] sm:$0xff]
    %v6411 = vld [vmem:[#allocation24 + $0x8] sm:$0xff]
    %v6412 = vld [vmem:[#allocation24 + $0x10] sm:$0xff]
    %v6413 = vld [vmem:[#allocation24 + $0x18] sm:$0xff]
    %v6414 = vld [vmem:[#allocation24 + $0x20] sm:$0xff]
    %v6415 = vld [vmem:[#allocation24 + $0x28] sm:$0xff]
    %v6416 = vld [vmem:[#allocation24 + $0x30] sm:$0xff]
    %v6417 = vld [vmem:[#allocation24 + $0x38] sm:$0xff]
    %v6418 = vld [vmem:[#allocation24 + $0x40] sm:$0xff]
    %v6419 = vld [vmem:[#allocation24 + $0x48] sm:$0xff]
    %v6420 = vld [vmem:[#allocation24 + $0x50] sm:$0xff]
    %v6421 = vld [vmem:[#allocation24 + $0x58] sm:$0xff]
    %v6422 = vld [vmem:[#allocation24 + $0x60] sm:$0xff]
    %v6423 = vld [vmem:[#allocation24 + $0x68] sm:$0xff]
    %v6424 = vld [vmem:[#allocation24 + $0x70] sm:$0xff]
    %v6425 = vld [vmem:[#allocation24 + $0x78] sm:$0xff]
    %v6426 = vld [vmem:[#allocation24 + $0x80] sm:$0xff]
    %v6427 = vld [vmem:[#allocation24 + $0x88] sm:$0xff]
    %v6428 = vld [vmem:[#allocation24 + $0x90] sm:$0xff]
    %v6429 = vld [vmem:[#allocation24 + $0x98] sm:$0xff]
    %v6430 = vld [vmem:[#allocation24 + $0xa0] sm:$0xff]
    %v6431 = vld [vmem:[#allocation24 + $0xa8] sm:$0xff]
    %v6432 = vld [vmem:[#allocation24 + $0xb0] sm:$0xff]
    %v6433 = vld [vmem:[#allocation24 + $0xb8] sm:$0xff]
    %v6434 = vld [vmem:[#allocation24 + $0xc0] sm:$0xff]
    %v6435 = vld [vmem:[#allocation24 + $0xc8] sm:$0xff]
    %v6436 = vld [vmem:[#allocation24 + $0xd0] sm:$0xff]
    %v6437 = vld [vmem:[#allocation24 + $0xd8] sm:$0xff]
    %v6438 = vld [vmem:[#allocation24 + $0xe0] sm:$0xff]
    %v6439 = vld [vmem:[#allocation24 + $0xe8] sm:$0xff]
    %v6440 = vld [vmem:[#allocation24 + $0xf0] sm:$0xff]
    %v6441 = vld [vmem:[#allocation24 + $0xf8] sm:$0xff]
    %v6442 = vld [vmem:[#allocation24 + $0x100] sm:$0xff]
    %v6443 = vld [vmem:[#allocation24 + $0x108] sm:$0xff]
    %v6444 = vld [vmem:[#allocation24 + $0x110] sm:$0xff]
    %v6445 = vld [vmem:[#allocation24 + $0x118] sm:$0xff]
    %v6446 = vld [vmem:[#allocation24 + $0x120] sm:$0xff]
    %v6447 = vld [vmem:[#allocation24 + $0x128] sm:$0xff]
    %v6448 = vld [vmem:[#allocation24 + $0x130] sm:$0xff]
    %v6449 = vld [vmem:[#allocation24 + $0x138] sm:$0xff]
    %v6450 = vld [vmem:[#allocation24 + $0x140] sm:$0xff]
    %v6451 = vld [vmem:[#allocation24 + $0x148] sm:$0xff]
    %v6452 = vld [vmem:[#allocation24 + $0x150] sm:$0xff]
    %v6453 = vld [vmem:[#allocation24 + $0x158] sm:$0xff]
    %v6454 = vld [vmem:[#allocation24 + $0x160] sm:$0xff]
    %v6455 = vld [vmem:[#allocation24 + $0x168] sm:$0xff]
    %v6456 = vld [vmem:[#allocation24 + $0x170] sm:$0xff]
    %v6457 = vld [vmem:[#allocation24 + $0x178] sm:$0xff]
    %v6458 = vld [vmem:[#allocation24 + $0x180] sm:$0xff]
    %v6459 = vld [vmem:[#allocation24 + $0x188] sm:$0xff]
    %v6460 = vld [vmem:[#allocation24 + $0x190] sm:$0xff]
    %v6461 = vld [vmem:[#allocation24 + $0x198] sm:$0xff]
    %v6462 = vld [vmem:[#allocation24 + $0x1a0] sm:$0xff]
    %v6463 = vld [vmem:[#allocation24 + $0x1a8] sm:$0xff]
    %v6464 = vld [vmem:[#allocation24 + $0x1b0] sm:$0xff]
    %v6465 = vld [vmem:[#allocation24 + $0x1b8] sm:$0xff]
    %v6466 = vld [vmem:[#allocation24 + $0x1c0] sm:$0xff]
    %v6467 = vld [vmem:[#allocation24 + $0x1c8] sm:$0xff]
    %v6468 = vld [vmem:[#allocation24 + $0x1d0] sm:$0xff]
    %v6469 = vld [vmem:[#allocation24 + $0x1d8] sm:$0xff]
    %v6470 = vld [vmem:[#allocation24 + $0x1e0] sm:$0xff]
    %v6471 = vld [vmem:[#allocation24 + $0x1e8] sm:$0xff]
    %v6472 = vld [vmem:[#allocation24 + $0x1f0] sm:$0xff]
    %v6473 = vld [vmem:[#allocation24 + $0x1f8] sm:$0xff]
    %v6474 = vld [vmem:[%s18] sm:$0x3]
    %v6476 = vlaneseq
    %v6477 = vshrl.u32 %v6476, 7
    %v6478 = vsub.s32 0, %v6477
    %v6479 = vrot.slane %v6474, %v6478
    %v6480 = vlaneseq
    %v6481 = vshrl.u32 %v6480, 7
    %v6482 = vsub.s32 1, %v6481
    %v6483 = vrot.slane %v6474, %v6482
    %6486 = vmatprep.subr.mxu0 %v6411
    %6487 = vmatpush1.msra.mxu0 %v6410
    %6488 = vmatprep.subr.mxu0 %v6413
    %6489 = vmatpush1.msra.mxu0 %v6412
    %6490 = vmatprep.subr.mxu0 %v6415
    %6491 = vmatpush1.msra.mxu0 %v6414
    %6492 = vmatprep.subr.mxu0 %v6417
    %6493 = vmatpush1.msra.mxu0 %v6416
    %6494 = vmatprep.subr.mxu0 %v6419
    %6495 = vmatpush1.msra.mxu0 %v6418
    %6496 = vmatprep.subr.mxu0 %v6421
    %6497 = vmatpush1.msra.mxu0 %v6420
    %6498 = vmatprep.subr.mxu0 %v6423
    %6499 = vmatpush1.msra.mxu0 %v6422
    %6500 = vmatprep.subr.mxu0 %v6425
    %6501 = vmatpush1.msra.mxu0 %v6424
    %6502 = vmatprep.subr.mxu0 %v6427
    %6503 = vmatpush1.msra.mxu0 %v6426
    %6504 = vmatprep.subr.mxu0 %v6429
    %6505 = vmatpush1.msra.mxu0 %v6428
    %6506 = vmatprep.subr.mxu0 %v6431
    %6507 = vmatpush1.msra.mxu0 %v6430
    %6508 = vmatprep.subr.mxu0 %v6433
    %6509 = vmatpush1.msra.mxu0 %v6432
    %6510 = vmatprep.subr.mxu0 %v6435
    %6511 = vmatpush1.msra.mxu0 %v6434
    %6512 = vmatprep.subr.mxu0 %v6437
    %6513 = vmatpush1.msra.mxu0 %v6436
    %6514 = vmatprep.subr.mxu0 %v6439
    %6515 = vmatpush1.msra.mxu0 %v6438
    %6516 = vmatprep.subr.mxu0 %v6441
    %6517 = vmatpush1.msra.mxu0 %v6440
    %6518 = vmatprep.subr.mxu0 %v6443
    %6519 = vmatpush1.msra.mxu0 %v6442
    %6520 = vmatprep.subr.mxu0 %v6445
    %6521 = vmatpush1.msra.mxu0 %v6444
    %6522 = vmatprep.subr.mxu0 %v6447
    %6523 = vmatpush1.msra.mxu0 %v6446
    %6524 = vmatprep.subr.mxu0 %v6449
    %6525 = vmatpush1.msra.mxu0 %v6448
    %6526 = vmatprep.subr.mxu0 %v6451
    %6527 = vmatpush1.msra.mxu0 %v6450
    %6528 = vmatprep.subr.mxu0 %v6453
    %6529 = vmatpush1.msra.mxu0 %v6452
    %6530 = vmatprep.subr.mxu0 %v6455
    %6531 = vmatpush1.msra.mxu0 %v6454
    %6532 = vmatprep.subr.mxu0 %v6457
    %6533 = vmatpush1.msra.mxu0 %v6456
    %6534 = vmatprep.subr.mxu0 %v6459
    %6535 = vmatpush1.msra.mxu0 %v6458
    %6536 = vmatprep.subr.mxu0 %v6461
    %6537 = vmatpush1.msra.mxu0 %v6460
    %6538 = vmatprep.subr.mxu0 %v6463
    %6539 = vmatpush1.msra.mxu0 %v6462
    %6540 = vmatprep.subr.mxu0 %v6465
    %6541 = vmatpush1.msra.mxu0 %v6464
    %6542 = vmatprep.subr.mxu0 %v6467
    %6543 = vmatpush1.msra.mxu0 %v6466
    %6544 = vmatprep.subr.mxu0 %v6469
    %6545 = vmatpush1.msra.mxu0 %v6468
    %6546 = vmatprep.subr.mxu0 %v6471
    %6547 = vmatpush1.msra.mxu0 %v6470
    %6548 = vmatprep.subr.mxu0 %v6473
    %6549 = vmatpush1.msra.mxu0 %v6472
    %6550 = vmatprep.mubr.f32.mxu0 %v6409
    %6551 = vmatmul.mubr.f32.gmra.mrb[0].mxu0 %v6408
    %v6552 = vpop.f32.mrb[0].mxu0
    %v6553 = vadd.f32 %v6479, %v6552
    %v6554 = vpop.f32.mrb[0].mxu0
    %v6555 = vadd.f32 %v6483, %v6554
    %6556 = vdwg.mxu0
    %v6557 = vmax.f32 %v6553, 0.0
    %v6558 = vmax.f32 %v6555, 0.0
    %v6559 = vld [vmem:[#allocation27] sm:$0xff]
    %v6560 = vld [vmem:[#allocation27 + $0x8] sm:$0xff]
    %v6561 = vld [vmem:[#allocation27 + $0x10] sm:$0xff]
    %v6562 = vld [vmem:[#allocation27 + $0x18] sm:$0xff]
    %v6563 = vld [vmem:[#allocation27 + $0x20] sm:$0xff]
    %v6564 = vld [vmem:[#allocation27 + $0x28] sm:$0xff]
    %v6565 = vld [vmem:[#allocation27 + $0x30] sm:$0xff]
    %v6566 = vld [vmem:[#allocation27 + $0x38] sm:$0xff]
    %v6567 = vld [vmem:[#allocation27 + $0x40] sm:$0xff]
    %v6568 = vld [vmem:[#allocation27 + $0x48] sm:$0xff]
    %v6569 = vld [vmem:[#allocation27 + $0x50] sm:$0xff]
    %v6570 = vld [vmem:[#allocation27 + $0x58] sm:$0xff]
    %v6571 = vld [vmem:[#allocation27 + $0x60] sm:$0xff]
    %v6572 = vld [vmem:[#allocation27 + $0x68] sm:$0xff]
    %v6573 = vld [vmem:[#allocation27 + $0x70] sm:$0xff]
    %v6574 = vld [vmem:[#allocation27 + $0x78] sm:$0xff]
    %v6575 = vld [vmem:[#allocation27 + $0x80] sm:$0xff]
    %v6576 = vld [vmem:[#allocation27 + $0x88] sm:$0xff]
    %v6577 = vld [vmem:[#allocation27 + $0x90] sm:$0xff]
    %v6578 = vld [vmem:[#allocation27 + $0x98] sm:$0xff]
    %v6579 = vld [vmem:[#allocation27 + $0xa0] sm:$0xff]
    %v6580 = vld [vmem:[#allocation27 + $0xa8] sm:$0xff]
    %v6581 = vld [vmem:[#allocation27 + $0xb0] sm:$0xff]
    %v6582 = vld [vmem:[#allocation27 + $0xb8] sm:$0xff]
    %v6583 = vld [vmem:[#allocation27 + $0xc0] sm:$0xff]
    %v6584 = vld [vmem:[#allocation27 + $0xc8] sm:$0xff]
    %v6585 = vld [vmem:[#allocation27 + $0xd0] sm:$0xff]
    %v6586 = vld [vmem:[#allocation27 + $0xd8] sm:$0xff]
    %v6587 = vld [vmem:[#allocation27 + $0xe0] sm:$0xff]
    %v6588 = vld [vmem:[#allocation27 + $0xe8] sm:$0xff]
    %v6589 = vld [vmem:[#allocation27 + $0xf0] sm:$0xff]
    %v6590 = vld [vmem:[#allocation27 + $0xf8] sm:$0xff]
    %6591 = vmatprep.subr.mxu0 0.0
    %6592 = vmatpush1.msra.mxu0 %v6559
    %6593 = vmatprep.subr.mxu0 0.0
    %6594 = vmatpush1.msra.mxu0 %v6560
    %6595 = vmatprep.subr.mxu0 0.0
    %6596 = vmatpush1.msra.mxu0 %v6561
    %6597 = vmatprep.subr.mxu0 0.0
    %6598 = vmatpush1.msra.mxu0 %v6562
    %6599 = vmatprep.subr.mxu0 0.0
    %6600 = vmatpush1.msra.mxu0 %v6563
    %6601 = vmatprep.subr.mxu0 0.0
    %6602 = vmatpush1.msra.mxu0 %v6564
    %6603 = vmatprep.subr.mxu0 0.0
    %6604 = vmatpush1.msra.mxu0 %v6565
    %6605 = vmatprep.subr.mxu0 0.0
    %6606 = vmatpush1.msra.mxu0 %v6566
    %6607 = vmatprep.subr.mxu0 0.0
    %6608 = vmatpush1.msra.mxu0 %v6567
    %6609 = vmatprep.subr.mxu0 0.0
    %6610 = vmatpush1.msra.mxu0 %v6568
    %6611 = vmatprep.subr.mxu0 0.0
    %6612 = vmatpush1.msra.mxu0 %v6569
    %6613 = vmatprep.subr.mxu0 0.0
    %6614 = vmatpush1.msra.mxu0 %v6570
    %6615 = vmatprep.subr.mxu0 0.0
    %6616 = vmatpush1.msra.mxu0 %v6571
    %6617 = vmatprep.subr.mxu0 0.0
    %6618 = vmatpush1.msra.mxu0 %v6572
    %6619 = vmatprep.subr.mxu0 0.0
    %6620 = vmatpush1.msra.mxu0 %v6573
    %6621 = vmatprep.subr.mxu0 0.0
    %6622 = vmatpush1.msra.mxu0 %v6574
    %6623 = vmatprep.subr.mxu0 0.0
    %6624 = vmatpush1.msra.mxu0 %v6575
    %6625 = vmatprep.subr.mxu0 0.0
    %6626 = vmatpush1.msra.mxu0 %v6576
    %6627 = vmatprep.subr.mxu0 0.0
    %6628 = vmatpush1.msra.mxu0 %v6577
    %6629 = vmatprep.subr.mxu0 0.0
    %6630 = vmatpush1.msra.mxu0 %v6578
    %6631 = vmatprep.subr.mxu0 0.0
    %6632 = vmatpush1.msra.mxu0 %v6579
    %6633 = vmatprep.subr.mxu0 0.0
    %6634 = vmatpush1.msra.mxu0 %v6580
    %6635 = vmatprep.subr.mxu0 0.0
    %6636 = vmatpush1.msra.mxu0 %v6581
    %6637 = vmatprep.subr.mxu0 0.0
    %6638 = vmatpush1.msra.mxu0 %v6582
    %6639 = vmatprep.subr.mxu0 0.0
    %6640 = vmatpush1.msra.mxu0 %v6583
    %6641 = vmatprep.subr.mxu0 0.0
    %6642 = vmatpush1.msra.mxu0 %v6584
    %6643 = vmatprep.subr.mxu0 0.0
    %6644 = vmatpush1.msra.mxu0 %v6585
    %6645 = vmatprep.subr.mxu0 0.0
    %6646 = vmatpush1.msra.mxu0 %v6586
    %6647 = vmatprep.subr.mxu0 0.0
    %6648 = vmatpush1.msra.mxu0 %v6587
    %6649 = vmatprep.subr.mxu0 0.0
    %6650 = vmatpush1.msra.mxu0 %v6588
    %6651 = vmatprep.subr.mxu0 0.0
    %6652 = vmatpush1.msra.mxu0 %v6589
    %6653 = vmatprep.subr.mxu0 0.0
    %6654 = vmatpush1.msra.mxu0 %v6590
    %6655 = vmatprep.mubr.f32.mxu0 %v6558
    %6656 = vmatmul.mubr.f32.gmra.mrb[0].mxu0 %v6557
    %v6657 = vpop.f32.mrb[0].mxu0
    %v6658 = vadd.f32 0.0, %v6657
    %v6659 = vpop.f32.mrb[0].mxu0
    %6660 = vdwg.mxu0
    %v6661 = vadd.f32 %v6284, %v6658
    %6662 = vst [vmem:[#allocation28] sm:$0xff] %v6661
    // Predicated region
    $region150: #{tpu_custom_call.1} parent=1 // pred_check
      _
    $region151: #{tpu_custom_call.1} parent=1 // pred_check_branch
      %6664 = sbr.rel (0) target = $region153
    $region152: #{tpu_custom_call.1} parent=1 // pred_region
      %s6666 = ssub.s32 128, 128
      %6667 = vsyncadd [#allocation6], %s6666
      %s6669 = sshll.u32 [#allocation28], 4
      %s6670 = int_to_ptr.vmem [resolvable:$true] %s6669
      %6672 = dma.vmem_to_hbm [thread:$0]  %s6670, 128, %s22, [#allocation6]
    $region153: #{tpu_custom_call.1} parent=1 // pred_fallthru
      _
    // Predicated region
    $region154: #{tpu_custom_call.1} parent=1 // pred_check
      _
    $region155: #{tpu_custom_call.1} parent=1 // pred_check_branch
      %6674 = sbr.rel (0) target = $region157
    $region156: #{tpu_custom_call.1} parent=1 // pred_region
      %6675 = dma.done [#allocation6], 128
    $region157: #{tpu_custom_call.1} parent=1 // pred_fallthru
      _
    %6676 = vsyncpa [#allocation5], 1
    %6677 = vsyncpa [#allocation8], 1
    %6678 = vsyncpa [#allocation11], 1
    %6679 = vsyncpa [#allocation14], 1
    %6680 = vsyncpa [#allocation17], 1
    %6681 = vsyncpa [#allocation20], 1
    %6682 = vsyncpa [#allocation23], 1
    %6683 = vsyncpa [#allocation26], 1
    %6684 = vsyncpa [#allocation6], 1

</llo_original>
